<compile_context>
chip_gen: v5e
topology: v5e:2x2
jax: 0.10.0
libtpu: 0.0.40
codegen_flags: <defaults>
</compile_context>

<pallas_src>
import functools

import jax
import jax.numpy as jnp
from jax.experimental import pallas as pl
from jax.experimental.pallas import tpu as pltpu


LANE = 128                 # pad every feature dim to a 128-lane multiple
SUBLANE = 8
DEFAULT_EDGE_TILE = 512    # review: tune toward 1024-2048 on v5e/v6e, 512-1024 on v7x


def _gelu(v, exact):
    # PyTorch nn.GELU() default is the erf-exact GELU; the tanh approximation is a
    # portability fallback (max abs diff ~1e-3) for builds without an erf lowering.
    return jax.nn.gelu(v, approximate=not exact)


def _round_up(v, m):
    return (v + m - 1) // m * m


def _pad2(a, rows, cols):
    return jnp.pad(a, ((0, rows - a.shape[0]), (0, cols - a.shape[1])))


def _vmem_limit_bytes(requested_bytes):
    # Derive the scoped-VMEM limit from the actual footprint and the physical per-core
    # capacity (64 MiB on v7x vs 128 MiB on v5e/v6e) instead of a hard-coded constant.
    try:
        phys = int(pltpu.get_tpu_info().vmem_capacity_bytes)
    except Exception:
        phys = 64 * 1024 * 1024
    return int(min(max(2 * requested_bytes, 16 * 1024 * 1024), phys * 3 // 4))


# --------------------------------------------------------------------------- #
# Kernel 1: per-node hoisted projections (node tiles, "parallel")              #
# --------------------------------------------------------------------------- #
def node_proj_kernel(x_ref, wn_ref, bn_ref, war_ref, wac_ref, w1r_ref, w1c_ref,
                     xr1_ref, xc1_ref, ar_ref, ac_ref):
    f32 = jnp.float32
    xb = x_ref[...].astype(jnp.bfloat16)                       # bf16 MXU operands
    xp = jnp.dot(xb, wn_ref[...], preferred_element_type=f32) + bn_ref[...]
    # Attention node contributions: VPU multiply + lane reduce (no width-1 matmul).
    ar_ref[...] = jnp.sum(xp * war_ref[...], axis=-1, keepdims=True)
    ac_ref[...] = jnp.sum(xp * wac_ref[...], axis=-1, keepdims=True)
    # Message-MLP layer-0 node terms, emitted in bf16 to halve the s1 HBM stream.
    xr1_ref[...] = jnp.dot(xb, w1r_ref[...],
                           preferred_element_type=f32).astype(xr1_ref.dtype)
    xc1_ref[...] = jnp.dot(xb, w1c_ref[...],
                           preferred_element_type=f32).astype(xc1_ref.dtype)


# --------------------------------------------------------------------------- #
# Kernel 2: streamed message MLP + attention-weighted scatter (edge tiles)     #
# --------------------------------------------------------------------------- #
def edge_msg_scatter_kernel(s1_ref, ea_ref, side_ref,
                            w1e_ref, b1_ref, w2_ref, b2_ref, w3_ref, b3_ref,
                            agg_ref, *, exact_gelu):
    f32 = jnp.float32
    bf16 = jnp.bfloat16
    t = pl.program_id(0)

    @pl.when(t == 0)
    def _init():
        agg_ref[...] = jnp.zeros_like(agg_ref)      # output block is the accumulator

    # Single lane-packed side stream: lane 0 = precomputed softmax weight alpha,
    # lane 1 = destination node id (replaces two separate (TE,1) streams / DMAs).
    side = side_ref[...]                            # [TE, 2] f32
    alpha = side[:, 0:1]                            # [TE, 1]
    col = side[:, 1:2].astype(jnp.int32)            # [TE, 1]

    # Message MLP: bf16 MXU operands, f32 accumulation, f32 elementwise.
    s1 = s1_ref[...].astype(f32)                    # hoisted x[row]@w1r + x[col]@w1c
    h1 = _gelu(s1 + jnp.dot(ea_ref[...], w1e_ref[...], preferred_element_type=f32)
               + b1_ref[...], exact_gelu)
    h2 = _gelu(jnp.dot(h1.astype(bf16), w2_ref[...], preferred_element_type=f32)
               + b2_ref[...], exact_gelu)
    msg = jnp.dot(h2.astype(bf16), w3_ref[...], preferred_element_type=f32) + b3_ref[...]

    # alpha of padded edges is 0, so they contribute nothing to the scatter.
    weighted = (alpha * msg).astype(bf16)           # [TE, DnP]

    # Scatter-add into the node accumulator via a bf16 one-hot on the MXU.
    te = weighted.shape[0]
    np_ = agg_ref.shape[0]
    node_ids = jax.lax.broadcasted_iota(jnp.int32, (te, np_), 1)
    one_hot = jnp.where(node_ids == col, 1.0, 0.0).astype(bf16)    # exact 0/1 values
    scat = jax.lax.dot_general(one_hot, weighted,
                               dimension_numbers=(((0,), (0,)), ((), ())),
                               preferred_element_type=f32)         # [NP, DnP]
    agg_ref[...] += scat


# --------------------------------------------------------------------------- #
# Kernel 3: GRUCell (fused gates) + reshape Linear (node tiles, "parallel")    #
# --------------------------------------------------------------------------- #
def gru_reshape_kernel(agg_ref, x_ref, wih_ref, whh_ref, bih_ref, bhh_ref,
                       wr_ref, br_ref, out_ref):
    f32 = jnp.float32
    bf16 = jnp.bfloat16
    d = x_ref.shape[-1]                             # padded node dim (128-lane slots)
    agg = agg_ref[...]                              # aggregated messages (GRU input)
    x = x_ref[...]                                  # hidden state
    # Two fused matmuls cover all three gates (r|z|n each in its own 128-lane slot).
    gi = jnp.dot(agg.astype(bf16), wih_ref[...], preferred_element_type=f32) + bih_ref[...]
    gh = jnp.dot(x.astype(bf16), whh_ref[...], preferred_element_type=f32) + bhh_ref[...]
    r = jax.nn.sigmoid(gi[:, 0:d] + gh[:, 0:d])
    z = jax.nn.sigmoid(gi[:, d:2 * d] + gh[:, d:2 * d])
    n = jnp.tanh(gi[:, 2 * d:3 * d] + r * gh[:, 2 * d:3 * d])
    h_new = (1.0 - z) * n + z * x
    out_ref[...] = (jnp.dot(h_new.astype(bf16), wr_ref[...],
                            preferred_element_type=f32) + br_ref[...])


# --------------------------------------------------------------------------- #
# Parameters (deterministic synthetic, shapes follow the PyTorch module)       #
# --------------------------------------------------------------------------- #
def make_params(key, node_dim, edge_dim, hidden_dim, out_dim):
    ks = jax.random.split(key, 16)
    s = 0.1

    def mat(k, shape):
        return jax.random.normal(k, shape, jnp.float32) * s

    p = {}
    # node_proj: Linear(node_dim, hidden)
    p["wn"] = mat(ks[0], (node_dim, hidden_dim)); p["bn"] = mat(ks[1], (1, hidden_dim))
    # edge_proj: Linear(edge_dim, hidden)
    p["we"] = mat(ks[2], (edge_dim, hidden_dim)); p["be"] = mat(ks[3], (1, hidden_dim))
    # attention: Linear(3*hidden, 1) -> split into three [hidden, 1] pieces
    wa = mat(ks[4], (3 * hidden_dim, 1))
    p["war"] = wa[0:hidden_dim]; p["wac"] = wa[hidden_dim:2 * hidden_dim]
    p["wae"] = wa[2 * hidden_dim:]; p["ba"] = mat(ks[5], (1, 1))
    # message_mlp[0]: Linear(2*node_dim + edge_dim, hidden) -> split
    w1 = mat(ks[6], (2 * node_dim + edge_dim, hidden_dim))
    p["w1r"] = w1[0:node_dim]; p["w1c"] = w1[node_dim:2 * node_dim]
    p["w1e"] = w1[2 * node_dim:]; p["b1"] = mat(ks[7], (1, hidden_dim))
    # message_mlp[2]: Linear(hidden, hidden)
    p["w2"] = mat(ks[8], (hidden_dim, hidden_dim)); p["b2"] = mat(ks[9], (1, hidden_dim))
    # message_mlp[4]: Linear(hidden, node_dim)
    p["w3"] = mat(ks[10], (hidden_dim, node_dim)); p["b3"] = mat(ks[11], (1, node_dim))
    # GRUCell(node_dim, node_dim): stored transposed [in, 3*hidden], gate order r|z|n
    p["wih"] = mat(ks[12], (node_dim, 3 * node_dim)); p["bih"] = mat(ks[13], (1, 3 * node_dim))
    p["whh"] = mat(ks[14], (node_dim, 3 * node_dim)); p["bhh"] = mat(ks[15], (1, 3 * node_dim))
    # reshape: Linear(node_dim, out_dim)
    k2 = jax.random.split(jax.random.fold_in(key, 99), 2)
    p["wr"] = mat(k2[0], (node_dim, out_dim)); p["br"] = mat(k2[1], (1, out_dim))
    return p


# --------------------------------------------------------------------------- #
# Forward wrapper                                                              #
# --------------------------------------------------------------------------- #
@functools.partial(jax.jit, static_argnames=("out_dim", "exact_gelu", "edge_tile"))
def gnn_layer_forward(x, edge_index, edge_attr, params, *, out_dim,
                      exact_gelu=True, edge_tile=DEFAULT_EDGE_TILE):
    f32 = jnp.float32
    bf16 = jnp.bfloat16
    N, Dn = x.shape
    E, De = edge_attr.shape
    H = params["wn"].shape[1]

    # Lane-dense padded sizes.
    DnP = _round_up(Dn, LANE)
    DeP = _round_up(De, LANE)
    HP = _round_up(H, LANE)
    OutP = _round_up(out_dim, LANE)
    NP = _round_up(N, LANE)
    TN = min(LANE, NP)
    TE = min(edge_tile, _round_up(E, SUBLANE))
    EP = _round_up(E, TE)
    n_edge_tiles = EP // TE

    row = edge_index[0].astype(jnp.int32)
    col = edge_index[1].astype(jnp.int32)

    x_p = _pad2(x.astype(f32), NP, DnP)
    ea_bf = _pad2(edge_attr.astype(bf16), EP, DeP)

    # --- parameter preprocessing (all exact): zero-pad to lane-dense shapes, bf16-cast
    #     the MXU weight operands, fold edge_proj+attention into one per-edge vector,
    #     fuse the three GRU gates into single [DnP, 3*DnP] matrices. --------------------
    wn_b = _pad2(params["wn"], DnP, HP).astype(bf16)
    bn_p = _pad2(params["bn"], 1, HP)
    war_r = _pad2(params["war"].T, 1, HP)
    wac_r = _pad2(params["wac"].T, 1, HP)
    w1r_b = _pad2(params["w1r"], DnP, HP).astype(bf16)
    w1c_b = _pad2(params["w1c"], DnP, HP).astype(bf16)
    w1e_b = _pad2(params["w1e"], DeP, HP).astype(bf16)
    b1_p = _pad2(params["b1"], 1, HP)
    w2_b = _pad2(params["w2"], HP, HP).astype(bf16)
    b2_p = _pad2(params["b2"], 1, HP)
    w3_b = _pad2(params["w3"], HP, DnP).astype(bf16)
    b3_p = _pad2(params["b3"], 1, DnP)

    def gate(w, g):
        return w[:, g * Dn:(g + 1) * Dn]

    wih3_b = jnp.concatenate(
        [_pad2(gate(params["wih"], g), DnP, DnP) for g in range(3)], axis=1).astype(bf16)
    whh3_b = jnp.concatenate(
        [_pad2(gate(params["whh"], g), DnP, DnP) for g in range(3)], axis=1).astype(bf16)
    bih3_p = jnp.concatenate(
        [_pad2(gate(params["bih"], g), 1, DnP) for g in range(3)], axis=1)
    bhh3_p = jnp.concatenate(
        [_pad2(gate(params["bhh"], g), 1, DnP) for g in range(3)], axis=1)
    wr_b = _pad2(params["wr"], DnP, OutP).astype(bf16)
    br_p = _pad2(params["br"], 1, OutP)

    # --- kernel 1: per-node projections ---------------------------------------------
    pinned1 = lambda shape: pl.BlockSpec(shape, lambda i: (0, 0))
    xr1, xc1, ar, ac = pl.pallas_call(
        node_proj_kernel,
        grid=(NP // TN,),
        in_specs=[
            pl.BlockSpec((TN, DnP), lambda i: (i, 0)),        # x
            pinned1((DnP, HP)), pinned1((1, HP)),             # wn, bn
            pinned1((1, HP)), pinned1((1, HP)),               # war, wac (rows)
            pinned1((DnP, HP)), pinned1((DnP, HP)),           # w1r, w1c
        ],
        out_specs=[
            pl.BlockSpec((TN, HP), lambda i: (i, 0)),
            pl.BlockSpec((TN, HP), lambda i: (i, 0)),
            pl.BlockSpec((TN, 1), lambda i: (i, 0)),
            pl.BlockSpec((TN, 1), lambda i: (i, 0)),
        ],
        out_shape=[
            jax.ShapeDtypeStruct((NP, HP), bf16),
            jax.ShapeDtypeStruct((NP, HP), bf16),
            jax.ShapeDtypeStruct((NP, 1), f32),
            jax.ShapeDtypeStruct((NP, 1), f32),
        ],
        compiler_params=pltpu.CompilerParams(dimension_semantics=("parallel",)),
    )(x_p, wn_b, bn_p, war_r, wac_r, w1r_b, w1c_b)

    # --- glue: gathers by edge index + the GLOBAL edge softmax (O(E) / O(E*De)) -------
    s1 = jnp.take(xr1, row, axis=0) + jnp.take(xc1, col, axis=0)        # [E, HP] bf16
    s1 = jnp.pad(s1, ((0, EP - E), (0, 0)))

    # attention(cat[xp_r, xp_c, edge_proj(ea)]) == ar[row] + ac[col] + ea @ (we@wae) + bias
    v_fold = params["we"] @ params["wae"]                               # [De, 1]
    att_bias = (params["be"] @ params["wae"])[0, 0] + params["ba"][0, 0]
    logits = (jnp.take(ar, row, axis=0) + jnp.take(ac, col, axis=0)
              + edge_attr.astype(f32) @ v_fold + att_bias)              # [E, 1]
    shifted = logits - jnp.max(logits)
    denom = jnp.maximum(jnp.sum(jnp.exp(shifted)), 1e-30)               # guard degenerate case
    alpha = jnp.exp(shifted) / denom                                    # softmax over edges

    # One lane-packed side stream: lane 0 = alpha, lane 1 = destination node id.
    side = jnp.concatenate([alpha, col.astype(f32)[:, None]], axis=1)   # [E, 2] f32
    side = jnp.pad(side, ((0, EP - E), (0, 0)))                         # padded edges: alpha=0

    # --- kernel 2: streamed message MLP + attention-weighted scatter ------------------
    stream = lambda cols: pl.BlockSpec((TE, cols), lambda t: (t, 0))
    pinned = lambda shape: pl.BlockSpec(shape, lambda t: (0, 0))

    flops = int(2 * EP * (DeP * HP + HP * HP + HP * DnP + NP * DnP))
    transc = int(2 * EP * HP)
    bytes_acc = int(EP * (2 * HP + 2 * DeP + 8)
                    + 2 * (DeP * HP + HP * HP + HP * DnP)
                    + 4 * (3 * HP + DnP + NP * DnP))
    edge_vmem_est = int(2 * TE * (2 * HP + 2 * DeP + 4 * LANE)
                        + 4 * (DeP * HP + HP * HP + HP * DnP)
                        + 8 * NP * DnP)

    agg = pl.pallas_call(
        functools.partial(edge_msg_scatter_kernel, exact_gelu=exact_gelu),
        grid=(n_edge_tiles,),
        in_specs=[
            stream(HP), stream(DeP), stream(2),               # s1, ea, [alpha|col]
            pinned((DeP, HP)), pinned((1, HP)),               # w1e, b1
            pinned((HP, HP)), pinned((1, HP)),                # w2, b2
            pinned((HP, DnP)), pinned((1, DnP)),              # w3, b3
        ],
        out_specs=pl.BlockSpec((NP, DnP), lambda t: (0, 0)),  # resident accumulator
        out_shape=jax.ShapeDtypeStruct((NP, DnP), f32),
        compiler_params=pltpu.CompilerParams(
            dimension_semantics=("arbitrary",),
            vmem_limit_bytes=_vmem_limit_bytes(edge_vmem_est)),
        cost_estimate=pl.CostEstimate(
            flops=flops, transcendentals=transc, bytes_accessed=bytes_acc),
    )(s1, ea_bf, side, w1e_b, b1_p, w2_b, b2_p, w3_b, b3_p)

    # --- kernel 3: GRUCell (fused gates) + reshape Linear ------------------------------
    pinned3 = lambda shape: pl.BlockSpec(shape, lambda i: (0, 0))
    out_p = pl.pallas_call(
        gru_reshape_kernel,
        grid=(NP // TN,),
        in_specs=[
            pl.BlockSpec((TN, DnP), lambda i: (i, 0)),        # aggregated messages
            pl.BlockSpec((TN, DnP), lambda i: (i, 0)),        # x (hidden state)
            pinned3((DnP, 3 * DnP)), pinned3((DnP, 3 * DnP)), # fused wih, whh
            pinned3((1, 3 * DnP)), pinned3((1, 3 * DnP)),     # fused bih, bhh
            pinned3((DnP, OutP)), pinned3((1, OutP)),         # wr, br
        ],
        out_specs=pl.BlockSpec((TN, OutP), lambda i: (i, 0)),
        out_shape=jax.ShapeDtypeStruct((NP, OutP), f32),
        compiler_params=pltpu.CompilerParams(dimension_semantics=("parallel",)),
    )(agg, x_p, wih3_b, whh3_b, bih3_p, bhh3_p, wr_b, br_p)

    return out_p[:N, :out_dim]


# --------------------------------------------------------------------------- #
# Pure-JAX reference mirroring the PyTorch forward (erf-exact GELU, f32)       #
# --------------------------------------------------------------------------- #
def _reference_forward(x, edge_index, edge_attr, params):
    row, col = edge_index[0], edge_index[1]
    xr, xc = x[row], x[col]
    xp = x @ params["wn"] + params["bn"]
    ep = edge_attr @ params["we"] + params["be"]
    wa = jnp.concatenate([params["war"], params["wac"], params["wae"]], axis=0)
    logits = jnp.concatenate([xp[row], xp[col], ep], axis=-1) @ wa + params["ba"]
    alpha = jax.nn.softmax(logits, axis=0)
    w1 = jnp.concatenate([params["w1r"], params["w1c"], params["w1e"]], axis=0)
    m = jnp.concatenate([xr, xc, edge_attr], axis=-1)
    m = jax.nn.gelu(m @ w1 + params["b1"], approximate=False)
    m = jax.nn.gelu(m @ params["w2"] + params["b2"], approximate=False)
    m = m @ params["w3"] + params["b3"]
    wm = alpha * m
    agg = jnp.zeros_like(x).at[col].add(wm)
    Dn = x.shape[1]
    gi = agg @ params["wih"] + params["bih"]
    gh = x @ params["whh"] + params["bhh"]
    r = jax.nn.sigmoid(gi[:, :Dn] + gh[:, :Dn])
    z = jax.nn.sigmoid(gi[:, Dn:2 * Dn] + gh[:, Dn:2 * Dn])
    n = jnp.tanh(gi[:, 2 * Dn:] + r * gh[:, 2 * Dn:])
    h = (1.0 - z) * n + z * x
    return h @ params["wr"] + params["br"]


if __name__ == "__main__":
    node_dim, edge_dim, hidden_dim, out_dim = 8, 4, 16, 8
    N, E = 64, 1200   # enough edges for multiple (512-row) edge tiles + padding

    key = jax.random.PRNGKey(0)
    kx, ke, kp = jax.random.split(key, 3)

    x = jax.random.normal(kx, (N, node_dim), jnp.float32)
    edge_attr = jax.random.normal(ke, (E, edge_dim), jnp.float32)
    row = (jnp.arange(E, dtype=jnp.int32) * 7 + 3) % N
    col = (jnp.arange(E, dtype=jnp.int32) * 5 + 1) % N
    edge_index = jnp.stack([row, col], axis=0)

    params = make_params(kp, node_dim, edge_dim, hidden_dim, out_dim)

    try:
        out = gnn_layer_forward(x, edge_index, edge_attr, params,
                                out_dim=out_dim, exact_gelu=True)
        out = jax.block_until_ready(out)
    except Exception:
        # Portability fallback: erf (exact GELU) lowering unavailable -> tanh approx.
        out = gnn_layer_forward(x, edge_index, edge_attr, params,
                                out_dim=out_dim, exact_gelu=False)
        out = jax.block_until_ready(out)

    ref = _reference_forward(x, edge_index, edge_attr, params)
    assert out.shape == (N, out_dim)
    max_err = float(jnp.max(jnp.abs(out - ref)))
    assert jnp.allclose(out, ref, atol=2e-2, rtol=2e-2), (
        f"mismatch vs JAX reference, max|err|={max_err}")

    print("KERNEL_OK")
</pallas_src>

<mosaic_0001>
module attributes {stable_mosaic.version = 11 : i64} {
  func.func @node_proj_kernel(%arg0: i32, %arg1: memref<128x128xf32, #tpu.memory_space<vmem>>, %arg2: memref<128x128xbf16, #tpu.memory_space<vmem>>, %arg3: memref<1x128xf32, #tpu.memory_space<vmem>>, %arg4: memref<1x128xf32, #tpu.memory_space<vmem>>, %arg5: memref<1x128xf32, #tpu.memory_space<vmem>>, %arg6: memref<128x128xbf16, #tpu.memory_space<vmem>>, %arg7: memref<128x128xbf16, #tpu.memory_space<vmem>>, %arg8: memref<128x128xbf16, #tpu.memory_space<vmem>>, %arg9: memref<128x128xbf16, #tpu.memory_space<vmem>>, %arg10: memref<128x1xf32, #tpu.memory_space<vmem>>, %arg11: memref<128x1xf32, #tpu.memory_space<vmem>>) attributes {dimension_semantics = [#tpu.dimension_semantics<parallel>], iteration_bounds = array<i64: 1>, scalar_prefetch = 0 : i64, scratch_operands = 0 : i64, tpu.core_type = #tpu.core_type<tc>, window_params = [{transform_indices = @transform_0, window_bounds = array<i64: 128, 128>}, {pipeline_mode = #tpu.pipeline_mode<synchronous>, transform_indices = @transform_1, window_bounds = array<i64: 128, 128>}, {pipeline_mode = #tpu.pipeline_mode<synchronous>, transform_indices = @transform_2, window_bounds = array<i64: 1, 128>}, {pipeline_mode = #tpu.pipeline_mode<synchronous>, transform_indices = @transform_3, window_bounds = array<i64: 1, 128>}, {pipeline_mode = #tpu.pipeline_mode<synchronous>, transform_indices = @transform_4, window_bounds = array<i64: 1, 128>}, {pipeline_mode = #tpu.pipeline_mode<synchronous>, transform_indices = @transform_5, window_bounds = array<i64: 128, 128>}, {pipeline_mode = #tpu.pipeline_mode<synchronous>, transform_indices = @transform_6, window_bounds = array<i64: 128, 128>}, {transform_indices = @transform_7, window_bounds = array<i64: 128, 128>}, {transform_indices = @transform_8, window_bounds = array<i64: 128, 128>}, {transform_indices = @transform_9, window_bounds = array<i64: 128, 1>}, {transform_indices = @transform_10, window_bounds = array<i64: 128, 1>}]} {
    %c0 = arith.constant 0 : index
    %c0_0 = arith.constant 0 : index
    %0 = vector.load %arg1[%c0, %c0_0] : memref<128x128xf32, #tpu.memory_space<vmem>>, vector<128x128xf32>
    %1 = arith.truncf %0 : vector<128x128xf32> to vector<128x128xbf16>
    %c0_1 = arith.constant 0 : index
    %c0_2 = arith.constant 0 : index
    %2 = vector.load %arg2[%c0_1, %c0_2] : memref<128x128xbf16, #tpu.memory_space<vmem>>, vector<128x128xbf16>
    %cst = arith.constant dense<0.000000e+00> : vector<128x128xf32>
    %3 = tpu.matmul %1, %2, %cst {dimension_numbers = #tpu.dot_dimension_numbers<[1], [0], [0], [1], [0, 0, 1, 1], [], []>} : vector<128x128xbf16>, vector<128x128xbf16>, vector<128x128xf32> -> vector<128x128xf32>
    %c0_3 = arith.constant 0 : index
    %c0_4 = arith.constant 0 : index
    %4 = vector.load %arg3[%c0_3, %c0_4] : memref<1x128xf32, #tpu.memory_space<vmem>>, vector<1x128xf32>
    %5 = vector.broadcast %4 : vector<1x128xf32> to vector<128x128xf32>
    %6 = arith.addf %3, %5 : vector<128x128xf32>
    %c0_5 = arith.constant 0 : index
    %c0_6 = arith.constant 0 : index
    %7 = vector.load %arg4[%c0_5, %c0_6] : memref<1x128xf32, #tpu.memory_space<vmem>>, vector<1x128xf32>
    %8 = vector.broadcast %7 : vector<1x128xf32> to vector<128x128xf32>
    %9 = arith.mulf %6, %8 : vector<128x128xf32>
    %cst_7 = arith.constant dense<0.000000e+00> : vector<128xf32>
    %10 = vector.multi_reduction <add>, %9, %cst_7 [1] : vector<128x128xf32> to vector<128xf32>
    %11 = vector.shape_cast %10 : vector<128xf32> to vector<128x1xf32>
    %c0_8 = arith.constant 0 : index
    %c0_9 = arith.constant 0 : index
    %12 = vector.load %arg10[%c0_8, %c0_9] : memref<128x1xf32, #tpu.memory_space<vmem>>, vector<128x1xf32>
    tpu.vector_store %arg10[%c0_8, %c0_9], %11 {strides = array<i32>} : memref<128x1xf32, #tpu.memory_space<vmem>>, vector<128x1xf32>,
    %c0_10 = arith.constant 0 : index
    %c0_11 = arith.constant 0 : index
    %13 = vector.load %arg5[%c0_10, %c0_11] : memref<1x128xf32, #tpu.memory_space<vmem>>, vector<1x128xf32>
    %14 = vector.broadcast %13 : vector<1x128xf32> to vector<128x128xf32>
    %15 = arith.mulf %6, %14 : vector<128x128xf32>
    %cst_12 = arith.constant dense<0.000000e+00> : vector<128xf32>
    %16 = vector.multi_reduction <add>, %15, %cst_12 [1] : vector<128x128xf32> to vector<128xf32>
    %17 = vector.shape_cast %16 : vector<128xf32> to vector<128x1xf32>
    %c0_13 = arith.constant 0 : index
    %c0_14 = arith.constant 0 : index
    %18 = vector.load %arg11[%c0_13, %c0_14] : memref<128x1xf32, #tpu.memory_space<vmem>>, vector<128x1xf32>
    tpu.vector_store %arg11[%c0_13, %c0_14], %17 {strides = array<i32>} : memref<128x1xf32, #tpu.memory_space<vmem>>, vector<128x1xf32>,
    %c0_15 = arith.constant 0 : index
    %c0_16 = arith.constant 0 : index
    %19 = vector.load %arg6[%c0_15, %c0_16] : memref<128x128xbf16, #tpu.memory_space<vmem>>, vector<128x128xbf16>
    %cst_17 = arith.constant dense<0.000000e+00> : vector<128x128xf32>
    %20 = tpu.matmul %1, %19, %cst_17 {dimension_numbers = #tpu.dot_dimension_numbers<[1], [0], [0], [1], [0, 0, 1, 1], [], []>} : vector<128x128xbf16>, vector<128x128xbf16>, vector<128x128xf32> -> vector<128x128xf32>
    %21 = arith.truncf %20 : vector<128x128xf32> to vector<128x128xbf16>
    %c0_18 = arith.constant 0 : index
    %c0_19 = arith.constant 0 : index
    %22 = vector.load %arg8[%c0_18, %c0_19] : memref<128x128xbf16, #tpu.memory_space<vmem>>, vector<128x128xbf16>
    tpu.vector_store %arg8[%c0_18, %c0_19], %21 {strides = array<i32>} : memref<128x128xbf16, #tpu.memory_space<vmem>>, vector<128x128xbf16>,
    %c0_20 = arith.constant 0 : index
    %c0_21 = arith.constant 0 : index
    %23 = vector.load %arg7[%c0_20, %c0_21] : memref<128x128xbf16, #tpu.memory_space<vmem>>, vector<128x128xbf16>
    %cst_22 = arith.constant dense<0.000000e+00> : vector<128x128xf32>
    %24 = tpu.matmul %1, %23, %cst_22 {dimension_numbers = #tpu.dot_dimension_numbers<[1], [0], [0], [1], [0, 0, 1, 1], [], []>} : vector<128x128xbf16>, vector<128x128xbf16>, vector<128x128xf32> -> vector<128x128xf32>
    %25 = arith.truncf %24 : vector<128x128xf32> to vector<128x128xbf16>
    %c0_23 = arith.constant 0 : index
    %c0_24 = arith.constant 0 : index
    %26 = vector.load %arg9[%c0_23, %c0_24] : memref<128x128xbf16, #tpu.memory_space<vmem>>, vector<128x128xbf16>
    tpu.vector_store %arg9[%c0_23, %c0_24], %25 {strides = array<i32>} : memref<128x128xbf16, #tpu.memory_space<vmem>>, vector<128x128xbf16>,
    return
  }
  func.func @transform_0(%arg0: i32) -> (i32, i32) {
    %c0_i32 = arith.constant 0 : i32
    %c0_i32_0 = arith.constant 0 : i32
    return %arg0, %c0_i32 : i32, i32
  }
  func.func @transform_1(%arg0: i32) -> (i32, i32) {
    %c0_i32 = arith.constant 0 : i32
    %c0_i32_0 = arith.constant 0 : i32
    %c0_i32_1 = arith.constant 0 : i32
    return %c0_i32, %c0_i32_0 : i32, i32
  }
  func.func @transform_2(%arg0: i32) -> (i32, i32) {
    %c0_i32 = arith.constant 0 : i32
    %c0_i32_0 = arith.constant 0 : i32
    %c0_i32_1 = arith.constant 0 : i32
    return %c0_i32, %c0_i32_0 : i32, i32
  }
  func.func @transform_3(%arg0: i32) -> (i32, i32) {
    %c0_i32 = arith.constant 0 : i32
    %c0_i32_0 = arith.constant 0 : i32
    %c0_i32_1 = arith.constant 0 : i32
    return %c0_i32, %c0_i32_0 : i32, i32
  }
  func.func @transform_4(%arg0: i32) -> (i32, i32) {
    %c0_i32 = arith.constant 0 : i32
    %c0_i32_0 = arith.constant 0 : i32
    %c0_i32_1 = arith.constant 0 : i32
    return %c0_i32, %c0_i32_0 : i32, i32
  }
  func.func @transform_5(%arg0: i32) -> (i32, i32) {
    %c0_i32 = arith.constant 0 : i32
    %c0_i32_0 = arith.constant 0 : i32
    %c0_i32_1 = arith.constant 0 : i32
    return %c0_i32, %c0_i32_0 : i32, i32
  }
  func.func @transform_6(%arg0: i32) -> (i32, i32) {
    %c0_i32 = arith.constant 0 : i32
    %c0_i32_0 = arith.constant 0 : i32
    %c0_i32_1 = arith.constant 0 : i32
    return %c0_i32, %c0_i32_0 : i32, i32
  }
  func.func @transform_7(%arg0: i32) -> (i32, i32) {
    %c0_i32 = arith.constant 0 : i32
    %c0_i32_0 = arith.constant 0 : i32
    return %arg0, %c0_i32 : i32, i32
  }
  func.func @transform_8(%arg0: i32) -> (i32, i32) {
    %c0_i32 = arith.constant 0 : i32
    %c0_i32_0 = arith.constant 0 : i32
    return %arg0, %c0_i32 : i32, i32
  }
  func.func @transform_9(%arg0: i32) -> (i32, i32) {
    %c0_i32 = arith.constant 0 : i32
    %c0_i32_0 = arith.constant 0 : i32
    return %arg0, %c0_i32 : i32, i32
  }
  func.func @transform_10(%arg0: i32) -> (i32, i32) {
    %c0_i32 = arith.constant 0 : i32
    %c0_i32_0 = arith.constant 0 : i32
    return %arg0, %c0_i32 : i32, i32
  }
}

module attributes {stable_mosaic.version = 11 : i64} {
  func.func @edge_msg_scatter_kernel(%arg0: i32, %arg1: memref<512x128xbf16, #tpu.memory_space<vmem>>, %arg2: memref<512x128xbf16, #tpu.memory_space<vmem>>, %arg3: memref<512x2xf32, #tpu.memory_space<vmem>>, %arg4: memref<128x128xbf16, #tpu.memory_space<vmem>>, %arg5: memref<1x128xf32, #tpu.memory_space<vmem>>, %arg6: memref<128x128xbf16, #tpu.memory_space<vmem>>, %arg7: memref<1x128xf32, #tpu.memory_space<vmem>>, %arg8: memref<128x128xbf16, #tpu.memory_space<vmem>>, %arg9: memref<1x128xf32, #tpu.memory_space<vmem>>, %arg10: memref<128x128xf32, #tpu.memory_space<vmem>>) attributes {dimension_semantics = [#tpu.dimension_semantics<arbitrary>], iteration_bounds = array<i64: 3>, scalar_prefetch = 0 : i64, scratch_operands = 0 : i64, tpu.core_type = #tpu.core_type<tc>, window_params = [{transform_indices = @transform_0, window_bounds = array<i64: 512, 128>}, {transform_indices = @transform_1, window_bounds = array<i64: 512, 128>}, {transform_indices = @transform_2, window_bounds = array<i64: 512, 2>}, {pipeline_mode = #tpu.pipeline_mode<synchronous>, transform_indices = @transform_3, window_bounds = array<i64: 128, 128>}, {pipeline_mode = #tpu.pipeline_mode<synchronous>, transform_indices = @transform_4, window_bounds = array<i64: 1, 128>}, {pipeline_mode = #tpu.pipeline_mode<synchronous>, transform_indices = @transform_5, window_bounds = array<i64: 128, 128>}, {pipeline_mode = #tpu.pipeline_mode<synchronous>, transform_indices = @transform_6, window_bounds = array<i64: 1, 128>}, {pipeline_mode = #tpu.pipeline_mode<synchronous>, transform_indices = @transform_7, window_bounds = array<i64: 128, 128>}, {pipeline_mode = #tpu.pipeline_mode<synchronous>, transform_indices = @transform_8, window_bounds = array<i64: 1, 128>}, {pipeline_mode = #tpu.pipeline_mode<synchronous>, transform_indices = @transform_9, window_bounds = array<i64: 128, 128>}]} {
    %c0_i32 = arith.constant 0 : i32
    %0 = arith.cmpi eq, %arg0, %c0_i32 : i32
    %1 = arith.extui %0 : i1 to i32
    %c0_i32_0 = arith.constant 0 : i32
    %2 = arith.cmpi ne, %1, %c0_i32_0 : i32
    scf.if %2 {
      %cst_35 = arith.constant 0.000000e+00 : f32
      %68 = vector.broadcast %cst_35 : f32 to vector<128x128xf32>
      %c0_36 = arith.constant 0 : index
      %c0_37 = arith.constant 0 : index
      %69 = vector.load %arg10[%c0_36, %c0_37] : memref<128x128xf32, #tpu.memory_space<vmem>>, vector<128x128xf32>
      tpu.vector_store %arg10[%c0_36, %c0_37], %68 {strides = array<i32>} : memref<128x128xf32, #tpu.memory_space<vmem>>, vector<128x128xf32>,
    } else {
    }
    %c0 = arith.constant 0 : index
    %c0_1 = arith.constant 0 : index
    %3 = vector.load %arg3[%c0, %c0_1] : memref<512x2xf32, #tpu.memory_space<vmem>>, vector<512x2xf32>
    %4 = vector.extract_strided_slice %3 {offsets = [0, 0], sizes = [512, 1], strides = [1, 1]} : vector<512x2xf32> to vector<512x1xf32>
    %5 = vector.extract_strided_slice %3 {offsets = [0, 1], sizes = [512, 1], strides = [1, 1]} : vector<512x2xf32> to vector<512x1xf32>
    %6 = arith.fptosi %5 : vector<512x1xf32> to vector<512x1xi32>
    %c0_2 = arith.constant 0 : index
    %c0_3 = arith.constant 0 : index
    %7 = vector.load %arg1[%c0_2, %c0_3] : memref<512x128xbf16, #tpu.memory_space<vmem>>, vector<512x128xbf16>
    %8 = arith.extf %7 : vector<512x128xbf16> to vector<512x128xf32>
    %c0_4 = arith.constant 0 : index
    %c0_5 = arith.constant 0 : index
    %9 = vector.load %arg2[%c0_4, %c0_5] : memref<512x128xbf16, #tpu.memory_space<vmem>>, vector<512x128xbf16>
    %c0_6 = arith.constant 0 : index
    %c0_7 = arith.constant 0 : index
    %10 = vector.load %arg4[%c0_6, %c0_7] : memref<128x128xbf16, #tpu.memory_space<vmem>>, vector<128x128xbf16>
    %cst = arith.constant dense<0.000000e+00> : vector<512x128xf32>
    %11 = tpu.matmul %9, %10, %cst {dimension_numbers = #tpu.dot_dimension_numbers<[1], [0], [0], [1], [0, 0, 1, 1], [], []>} : vector<512x128xbf16>, vector<128x128xbf16>, vector<512x128xf32> -> vector<512x128xf32>
    %12 = arith.addf %8, %11 : vector<512x128xf32>
    %c0_8 = arith.constant 0 : index
    %c0_9 = arith.constant 0 : index
    %13 = vector.load %arg5[%c0_8, %c0_9] : memref<1x128xf32, #tpu.memory_space<vmem>>, vector<1x128xf32>
    %14 = vector.broadcast %13 : vector<1x128xf32> to vector<512x128xf32>
    %15 = arith.addf %12, %14 : vector<512x128xf32>
    %16 = arith.mulf %15, %15 : vector<512x128xf32>
    %17 = arith.mulf %15, %16 : vector<512x128xf32>
    %cst_10 = arith.constant 4.471500e-02 : f32
    %18 = vector.broadcast %cst_10 : f32 to vector<512x128xf32>
    %19 = arith.mulf %18, %17 : vector<512x128xf32>
    %20 = arith.addf %15, %19 : vector<512x128xf32>
    %cst_11 = arith.constant 0.797884583 : f32
    %21 = vector.broadcast %cst_11 : f32 to vector<512x128xf32>
    %22 = arith.mulf %21, %20 : vector<512x128xf32>
    %23 = math.tanh %22 : vector<512x128xf32>
    %cst_12 = arith.constant 1.000000e+00 : f32
    %24 = vector.broadcast %cst_12 : f32 to vector<512x128xf32>
    %25 = arith.addf %24, %23 : vector<512x128xf32>
    %cst_13 = arith.constant 5.000000e-01 : f32
    %26 = vector.broadcast %cst_13 : f32 to vector<512x128xf32>
    %27 = arith.mulf %26, %25 : vector<512x128xf32>
    %28 = arith.mulf %15, %27 : vector<512x128xf32>
    %29 = arith.truncf %28 : vector<512x128xf32> to vector<512x128xbf16>
    %c0_14 = arith.constant 0 : index
    %c0_15 = arith.constant 0 : index
    %30 = vector.load %arg6[%c0_14, %c0_15] : memref<128x128xbf16, #tpu.memory_space<vmem>>, vector<128x128xbf16>
    %cst_16 = arith.constant dense<0.000000e+00> : vector<512x128xf32>
    %31 = tpu.matmul %29, %30, %cst_16 {dimension_numbers = #tpu.dot_dimension_numbers<[1], [0], [0], [1], [0, 0, 1, 1], [], []>} : vector<512x128xbf16>, vector<128x128xbf16>, vector<512x128xf32> -> vector<512x128xf32>
    %c0_17 = arith.constant 0 : index
    %c0_18 = arith.constant 0 : index
    %32 = vector.load %arg7[%c0_17, %c0_18] : memref<1x128xf32, #tpu.memory_space<vmem>>, vector<1x128xf32>
    %33 = vector.broadcast %32 : vector<1x128xf32> to vector<512x128xf32>
    %34 = arith.addf %31, %33 : vector<512x128xf32>
    %35 = arith.mulf %34, %34 : vector<512x128xf32>
    %36 = arith.mulf %34, %35 : vector<512x128xf32>
    %cst_19 = arith.constant 4.471500e-02 : f32
    %37 = vector.broadcast %cst_19 : f32 to vector<512x128xf32>
    %38 = arith.mulf %37, %36 : vector<512x128xf32>
    %39 = arith.addf %34, %38 : vector<512x128xf32>
    %cst_20 = arith.constant 0.797884583 : f32
    %40 = vector.broadcast %cst_20 : f32 to vector<512x128xf32>
    %41 = arith.mulf %40, %39 : vector<512x128xf32>
    %42 = math.tanh %41 : vector<512x128xf32>
    %cst_21 = arith.constant 1.000000e+00 : f32
    %43 = vector.broadcast %cst_21 : f32 to vector<512x128xf32>
    %44 = arith.addf %43, %42 : vector<512x128xf32>
    %cst_22 = arith.constant 5.000000e-01 : f32
    %45 = vector.broadcast %cst_22 : f32 to vector<512x128xf32>
    %46 = arith.mulf %45, %44 : vector<512x128xf32>
    %47 = arith.mulf %34, %46 : vector<512x128xf32>
    %48 = arith.truncf %47 : vector<512x128xf32> to vector<512x128xbf16>
    %c0_23 = arith.constant 0 : index
    %c0_24 = arith.constant 0 : index
    %49 = vector.load %arg8[%c0_23, %c0_24] : memref<128x128xbf16, #tpu.memory_space<vmem>>, vector<128x128xbf16>
    %cst_25 = arith.constant dense<0.000000e+00> : vector<512x128xf32>
    %50 = tpu.matmul %48, %49, %cst_25 {dimension_numbers = #tpu.dot_dimension_numbers<[1], [0], [0], [1], [0, 0, 1, 1], [], []>} : vector<512x128xbf16>, vector<128x128xbf16>, vector<512x128xf32> -> vector<512x128xf32>
    %c0_26 = arith.constant 0 : index
    %c0_27 = arith.constant 0 : index
    %51 = vector.load %arg9[%c0_26, %c0_27] : memref<1x128xf32, #tpu.memory_space<vmem>>, vector<1x128xf32>
    %52 = vector.broadcast %51 : vector<1x128xf32> to vector<512x128xf32>
    %53 = arith.addf %50, %52 : vector<512x128xf32>
    %54 = vector.broadcast %4 : vector<512x1xf32> to vector<512x128xf32>
    %55 = arith.mulf %54, %53 : vector<512x128xf32>
    %56 = arith.truncf %55 : vector<512x128xf32> to vector<512x128xbf16>
    %57 = tpu.iota {dimensions = array<i32: 1>} : vector<512x128xi32>
    %58 = vector.broadcast %6 : vector<512x1xi32> to vector<512x128xi32>
    %59 = arith.cmpi eq, %57, %58 : vector<512x128xi32>
    %cst_28 = arith.constant 1.000000e+00 : f32
    %cst_29 = arith.constant 0.000000e+00 : f32
    %60 = vector.broadcast %cst_28 : f32 to vector<512x128xf32>
    %61 = vector.broadcast %cst_29 : f32 to vector<512x128xf32>
    %62 = arith.select %59, %60, %61 : vector<512x128xi1>, vector<512x128xf32>
    %63 = arith.truncf %62 : vector<512x128xf32> to vector<512x128xbf16>
    %cst_30 = arith.constant dense<0.000000e+00> : vector<128x128xf32>
    %64 = tpu.matmul %63, %56, %cst_30 {dimension_numbers = #tpu.dot_dimension_numbers<[0], [0], [1], [1], [0, 1, 1, 1], [], []>} : vector<512x128xbf16>, vector<512x128xbf16>, vector<128x128xf32> -> vector<128x128xf32>
    %c0_31 = arith.constant 0 : index
    %c0_32 = arith.constant 0 : index
    %65 = vector.load %arg10[%c0_31, %c0_32] : memref<128x128xf32, #tpu.memory_space<vmem>>, vector<128x128xf32>
    %66 = arith.addf %65, %64 : vector<128x128xf32>
    %c0_33 = arith.constant 0 : index
    %c0_34 = arith.constant 0 : index
    %67 = vector.load %arg10[%c0_33, %c0_34] : memref<128x128xf32, #tpu.memory_space<vmem>>, vector<128x128xf32>
    tpu.vector_store %arg10[%c0_33, %c0_34], %66 {strides = array<i32>} : memref<128x128xf32, #tpu.memory_space<vmem>>, vector<128x128xf32>,
    return
  }
  func.func @transform_0(%arg0: i32) -> (i32, i32) {
    %c0_i32 = arith.constant 0 : i32
    %c0_i32_0 = arith.constant 0 : i32
    return %arg0, %c0_i32 : i32, i32
  }
  func.func @transform_1(%arg0: i32) -> (i32, i32) {
    %c0_i32 = arith.constant 0 : i32
    %c0_i32_0 = arith.constant 0 : i32
    return %arg0, %c0_i32 : i32, i32
  }
  func.func @transform_2(%arg0: i32) -> (i32, i32) {
    %c0_i32 = arith.constant 0 : i32
    %c0_i32_0 = arith.constant 0 : i32
    return %arg0, %c0_i32 : i32, i32
  }
  func.func @transform_3(%arg0: i32) -> (i32, i32) {
    %c0_i32 = arith.constant 0 : i32
    %c0_i32_0 = arith.constant 0 : i32
    %c0_i32_1 = arith.constant 0 : i32
    return %c0_i32, %c0_i32_0 : i32, i32
  }
  func.func @transform_4(%arg0: i32) -> (i32, i32) {
    %c0_i32 = arith.constant 0 : i32
    %c0_i32_0 = arith.constant 0 : i32
    %c0_i32_1 = arith.constant 0 : i32
    return %c0_i32, %c0_i32_0 : i32, i32
  }
  func.func @transform_5(%arg0: i32) -> (i32, i32) {
    %c0_i32 = arith.constant 0 : i32
    %c0_i32_0 = arith.constant 0 : i32
    %c0_i32_1 = arith.constant 0 : i32
    return %c0_i32, %c0_i32_0 : i32, i32
  }
  func.func @transform_6(%arg0: i32) -> (i32, i32) {
    %c0_i32 = arith.constant 0 : i32
    %c0_i32_0 = arith.constant 0 : i32
    %c0_i32_1 = arith.constant 0 : i32
    return %c0_i32, %c0_i32_0 : i32, i32
  }
  func.func @transform_7(%arg0: i32) -> (i32, i32) {
    %c0_i32 = arith.constant 0 : i32
    %c0_i32_0 = arith.constant 0 : i32
    %c0_i32_1 = arith.constant 0 : i32
    return %c0_i32, %c0_i32_0 : i32, i32
  }
  func.func @transform_8(%arg0: i32) -> (i32, i32) {
    %c0_i32 = arith.constant 0 : i32
    %c0_i32_0 = arith.constant 0 : i32
    %c0_i32_1 = arith.constant 0 : i32
    return %c0_i32, %c0_i32_0 : i32, i32
  }
  func.func @transform_9(%arg0: i32) -> (i32, i32) {
    %c0_i32 = arith.constant 0 : i32
    %c0_i32_0 = arith.constant 0 : i32
    %c0_i32_1 = arith.constant 0 : i32
    return %c0_i32, %c0_i32_0 : i32, i32
  }
}

module attributes {stable_mosaic.version = 11 : i64} {
  func.func @gru_reshape_kernel(%arg0: i32, %arg1: memref<128x128xf32, #tpu.memory_space<vmem>>, %arg2: memref<128x128xf32, #tpu.memory_space<vmem>>, %arg3: memref<128x384xbf16, #tpu.memory_space<vmem>>, %arg4: memref<128x384xbf16, #tpu.memory_space<vmem>>, %arg5: memref<1x384xf32, #tpu.memory_space<vmem>>, %arg6: memref<1x384xf32, #tpu.memory_space<vmem>>, %arg7: memref<128x128xbf16, #tpu.memory_space<vmem>>, %arg8: memref<1x128xf32, #tpu.memory_space<vmem>>, %arg9: memref<128x128xf32, #tpu.memory_space<vmem>>) attributes {dimension_semantics = [#tpu.dimension_semantics<parallel>], iteration_bounds = array<i64: 1>, scalar_prefetch = 0 : i64, scratch_operands = 0 : i64, tpu.core_type = #tpu.core_type<tc>, window_params = [{transform_indices = @transform_0, window_bounds = array<i64: 128, 128>}, {transform_indices = @transform_1, window_bounds = array<i64: 128, 128>}, {pipeline_mode = #tpu.pipeline_mode<synchronous>, transform_indices = @transform_2, window_bounds = array<i64: 128, 384>}, {pipeline_mode = #tpu.pipeline_mode<synchronous>, transform_indices = @transform_3, window_bounds = array<i64: 128, 384>}, {pipeline_mode = #tpu.pipeline_mode<synchronous>, transform_indices = @transform_4, window_bounds = array<i64: 1, 384>}, {pipeline_mode = #tpu.pipeline_mode<synchronous>, transform_indices = @transform_5, window_bounds = array<i64: 1, 384>}, {pipeline_mode = #tpu.pipeline_mode<synchronous>, transform_indices = @transform_6, window_bounds = array<i64: 128, 128>}, {pipeline_mode = #tpu.pipeline_mode<synchronous>, transform_indices = @transform_7, window_bounds = array<i64: 1, 128>}, {transform_indices = @transform_8, window_bounds = array<i64: 128, 128>}]} {
    %c0 = arith.constant 0 : index
    %c0_0 = arith.constant 0 : index
    %0 = vector.load %arg1[%c0, %c0_0] : memref<128x128xf32, #tpu.memory_space<vmem>>, vector<128x128xf32>
    %c0_1 = arith.constant 0 : index
    %c0_2 = arith.constant 0 : index
    %1 = vector.load %arg2[%c0_1, %c0_2] : memref<128x128xf32, #tpu.memory_space<vmem>>, vector<128x128xf32>
    %2 = arith.truncf %0 : vector<128x128xf32> to vector<128x128xbf16>
    %c0_3 = arith.constant 0 : index
    %c0_4 = arith.constant 0 : index
    %3 = vector.load %arg3[%c0_3, %c0_4] : memref<128x384xbf16, #tpu.memory_space<vmem>>, vector<128x384xbf16>
    %cst = arith.constant dense<0.000000e+00> : vector<128x384xf32>
    %4 = tpu.matmul %2, %3, %cst {dimension_numbers = #tpu.dot_dimension_numbers<[1], [0], [0], [1], [0, 0, 1, 1], [], []>} : vector<128x128xbf16>, vector<128x384xbf16>, vector<128x384xf32> -> vector<128x384xf32>
    %c0_5 = arith.constant 0 : index
    %c0_6 = arith.constant 0 : index
    %5 = vector.load %arg5[%c0_5, %c0_6] : memref<1x384xf32, #tpu.memory_space<vmem>>, vector<1x384xf32>
    %6 = vector.broadcast %5 : vector<1x384xf32> to vector<128x384xf32>
    %7 = arith.addf %4, %6 : vector<128x384xf32>
    %8 = arith.truncf %1 : vector<128x128xf32> to vector<128x128xbf16>
    %c0_7 = arith.constant 0 : index
    %c0_8 = arith.constant 0 : index
    %9 = vector.load %arg4[%c0_7, %c0_8] : memref<128x384xbf16, #tpu.memory_space<vmem>>, vector<128x384xbf16>
    %cst_9 = arith.constant dense<0.000000e+00> : vector<128x384xf32>
    %10 = tpu.matmul %8, %9, %cst_9 {dimension_numbers = #tpu.dot_dimension_numbers<[1], [0], [0], [1], [0, 0, 1, 1], [], []>} : vector<128x128xbf16>, vector<128x384xbf16>, vector<128x384xf32> -> vector<128x384xf32>
    %c0_10 = arith.constant 0 : index
    %c0_11 = arith.constant 0 : index
    %11 = vector.load %arg6[%c0_10, %c0_11] : memref<1x384xf32, #tpu.memory_space<vmem>>, vector<1x384xf32>
    %12 = vector.broadcast %11 : vector<1x384xf32> to vector<128x384xf32>
    %13 = arith.addf %10, %12 : vector<128x384xf32>
    %14 = vector.extract_strided_slice %7 {offsets = [0, 0], sizes = [128, 128], strides = [1, 1]} : vector<128x384xf32> to vector<128x128xf32>
    %15 = vector.extract_strided_slice %13 {offsets = [0, 0], sizes = [128, 128], strides = [1, 1]} : vector<128x384xf32> to vector<128x128xf32>
    %16 = arith.addf %14, %15 : vector<128x128xf32>
    %17 = arith.negf %16 : vector<128x128xf32>
    %18 = math.exp %17 : vector<128x128xf32>
    %cst_12 = arith.constant 1.000000e+00 : f32
    %19 = vector.broadcast %cst_12 : f32 to vector<128x128xf32>
    %20 = arith.addf %19, %18 : vector<128x128xf32>
    %21 = arith.divf %19, %20 : vector<128x128xf32>
    %22 = vector.extract_strided_slice %7 {offsets = [0, 128], sizes = [128, 128], strides = [1, 1]} : vector<128x384xf32> to vector<128x128xf32>
    %23 = vector.extract_strided_slice %13 {offsets = [0, 128], sizes = [128, 128], strides = [1, 1]} : vector<128x384xf32> to vector<128x128xf32>
    %24 = arith.addf %22, %23 : vector<128x128xf32>
    %25 = arith.negf %24 : vector<128x128xf32>
    %26 = math.exp %25 : vector<128x128xf32>
    %cst_13 = arith.constant 1.000000e+00 : f32
    %27 = vector.broadcast %cst_13 : f32 to vector<128x128xf32>
    %28 = arith.addf %27, %26 : vector<128x128xf32>
    %29 = arith.divf %27, %28 : vector<128x128xf32>
    %30 = vector.extract_strided_slice %7 {offsets = [0, 256], sizes = [128, 128], strides = [1, 1]} : vector<128x384xf32> to vector<128x128xf32>
    %31 = vector.extract_strided_slice %13 {offsets = [0, 256], sizes = [128, 128], strides = [1, 1]} : vector<128x384xf32> to vector<128x128xf32>
    %32 = arith.mulf %21, %31 : vector<128x128xf32>
    %33 = arith.addf %30, %32 : vector<128x128xf32>
    %34 = math.tanh %33 : vector<128x128xf32>
    %cst_14 = arith.constant 1.000000e+00 : f32
    %35 = vector.broadcast %cst_14 : f32 to vector<128x128xf32>
    %36 = arith.subf %35, %29 : vector<128x128xf32>
    %37 = arith.mulf %36, %34 : vector<128x128xf32>
    %38 = arith.mulf %29, %1 : vector<128x128xf32>
    %39 = arith.addf %37, %38 : vector<128x128xf32>
    %40 = arith.truncf %39 : vector<128x128xf32> to vector<128x128xbf16>
    %c0_15 = arith.constant 0 : index
    %c0_16 = arith.constant 0 : index
    %41 = vector.load %arg7[%c0_15, %c0_16] : memref<128x128xbf16, #tpu.memory_space<vmem>>, vector<128x128xbf16>
    %cst_17 = arith.constant dense<0.000000e+00> : vector<128x128xf32>
    %42 = tpu.matmul %40, %41, %cst_17 {dimension_numbers = #tpu.dot_dimension_numbers<[1], [0], [0], [1], [0, 0, 1, 1], [], []>} : vector<128x128xbf16>, vector<128x128xbf16>, vector<128x128xf32> -> vector<128x128xf32>
    %c0_18 = arith.constant 0 : index
    %c0_19 = arith.constant 0 : index
    %43 = vector.load %arg8[%c0_18, %c0_19] : memref<1x128xf32, #tpu.memory_space<vmem>>, vector<1x128xf32>
    %44 = vector.broadcast %43 : vector<1x128xf32> to vector<128x128xf32>
    %45 = arith.addf %42, %44 : vector<128x128xf32>
    %c0_20 = arith.constant 0 : index
    %c0_21 = arith.constant 0 : index
    %46 = vector.load %arg9[%c0_20, %c0_21] : memref<128x128xf32, #tpu.memory_space<vmem>>, vector<128x128xf32>
    tpu.vector_store %arg9[%c0_20, %c0_21], %45 {strides = array<i32>} : memref<128x128xf32, #tpu.memory_space<vmem>>, vector<128x128xf32>,
    return
  }
  func.func @transform_0(%arg0: i32) -> (i32, i32) {
    %c0_i32 = arith.constant 0 : i32
    %c0_i32_0 = arith.constant 0 : i32
    return %arg0, %c0_i32 : i32, i32
  }
  func.func @transform_1(%arg0: i32) -> (i32, i32) {
    %c0_i32 = arith.constant 0 : i32
    %c0_i32_0 = arith.constant 0 : i32
    return %arg0, %c0_i32 : i32, i32
  }
  func.func @transform_2(%arg0: i32) -> (i32, i32) {
    %c0_i32 = arith.constant 0 : i32
    %c0_i32_0 = arith.constant 0 : i32
    %c0_i32_1 = arith.constant 0 : i32
    return %c0_i32, %c0_i32_0 : i32, i32
  }
  func.func @transform_3(%arg0: i32) -> (i32, i32) {
    %c0_i32 = arith.constant 0 : i32
    %c0_i32_0 = arith.constant 0 : i32
    %c0_i32_1 = arith.constant 0 : i32
    return %c0_i32, %c0_i32_0 : i32, i32
  }
  func.func @transform_4(%arg0: i32) -> (i32, i32) {
    %c0_i32 = arith.constant 0 : i32
    %c0_i32_0 = arith.constant 0 : i32
    %c0_i32_1 = arith.constant 0 : i32
    return %c0_i32, %c0_i32_0 : i32, i32
  }
  func.func @transform_5(%arg0: i32) -> (i32, i32) {
    %c0_i32 = arith.constant 0 : i32
    %c0_i32_0 = arith.constant 0 : i32
    %c0_i32_1 = arith.constant 0 : i32
    return %c0_i32, %c0_i32_0 : i32, i32
  }
  func.func @transform_6(%arg0: i32) -> (i32, i32) {
    %c0_i32 = arith.constant 0 : i32
    %c0_i32_0 = arith.constant 0 : i32
    %c0_i32_1 = arith.constant 0 : i32
    return %c0_i32, %c0_i32_0 : i32, i32
  }
  func.func @transform_7(%arg0: i32) -> (i32, i32) {
    %c0_i32 = arith.constant 0 : i32
    %c0_i32_0 = arith.constant 0 : i32
    %c0_i32_1 = arith.constant 0 : i32
    return %c0_i32, %c0_i32_0 : i32, i32
  }
  func.func @transform_8(%arg0: i32) -> (i32, i32) {
    %c0_i32 = arith.constant 0 : i32
    %c0_i32_0 = arith.constant 0 : i32
    return %arg0, %c0_i32 : i32, i32
  }
}

</mosaic_0001>

<llo_original>
// kernel: gnn_layer_forward.3
$region0: #{gnn_layer_forward.3}
  #allocation0 [shape = 'u32[]', space=smem, size = 0x4, offset = 0x4, fixed_abs, tag = 'smem constant byte address 0x4 - core index']
  #allocation1 [shape = 'u32[72,128]{1,0:T(1,128)}', space=vmem, size = 0x9000, scoped, tag = 'internal scratch']
  %s0 = inlined_call_operand.vmem [shape: f32[128,128], index: 0, kind: input, shape index: {}]
  %s1 = inlined_call_operand.vmem [shape: bf16[128,128], index: 1, kind: input, shape index: {}]
  %s2 = inlined_call_operand.vmem [shape: f32[1,128], index: 2, kind: input, shape index: {}]
  %s3 = inlined_call_operand.vmem [shape: f32[1,128], index: 3, kind: input, shape index: {}]
  %s4 = inlined_call_operand.vmem [shape: f32[1,128], index: 4, kind: input, shape index: {}]
  %s5 = inlined_call_operand.vmem [shape: bf16[128,128], index: 5, kind: input, shape index: {}]
  %s6 = inlined_call_operand.vmem [shape: bf16[128,128], index: 6, kind: input, shape index: {}]
  %s7 = inlined_call_operand.vmem [shape: bf16[128,128], index: 7, kind: output, shape index: {0}]
  %s8 = inlined_call_operand.vmem [shape: bf16[128,128], index: 8, kind: output, shape index: {1}]
  %s9 = inlined_call_operand.vmem [shape: f32[128,1], index: 9, kind: output, shape index: {2}]
  %s10 = inlined_call_operand.vmem [shape: f32[128,1], index: 10, kind: output, shape index: {3}]
  %11 = xla_tuple %s7, %s8, %s9, %s10
  %s12 = sld [smem:[#allocation0]]
  $region62: #{gnn_layer_forward.3} parent=0
    _
  %s14 = ssub.s32 1, %s12
  %s15 = scalar_select 0, %s14, %s12
  // Predicated region
  $region2: #{gnn_layer_forward.3} parent=0 // pred_check
    _
  $region3: #{gnn_layer_forward.3} parent=0 // pred_check_branch
    %17 = sbr.rel (0) target = $region5
  $region4: #{gnn_layer_forward.3} parent=0 // pred_region
    _
  $region5: #{gnn_layer_forward.3} parent=0 // pred_fallthru
    _
  // Predicated region
  $region6: #{gnn_layer_forward.3} parent=0 // pred_check
    _
  $region7: #{gnn_layer_forward.3} parent=0 // pred_check_branch
    %19 = sbr.rel (0) target = $region9
  $region8: #{gnn_layer_forward.3} parent=0 // pred_region
    _
  $region9: #{gnn_layer_forward.3} parent=0 // pred_fallthru
    _
  // Predicated region
  $region10: #{gnn_layer_forward.3} parent=0 // pred_check
    _
  $region11: #{gnn_layer_forward.3} parent=0 // pred_check_branch
    %21 = sbr.rel (0) target = $region13
  $region12: #{gnn_layer_forward.3} parent=0 // pred_region
    _
  $region13: #{gnn_layer_forward.3} parent=0 // pred_fallthru
    _
  // Predicated region
  $region14: #{gnn_layer_forward.3} parent=0 // pred_check
    _
  $region15: #{gnn_layer_forward.3} parent=0 // pred_check_branch
    %23 = sbr.rel (0) target = $region17
  $region16: #{gnn_layer_forward.3} parent=0 // pred_region
    _
  $region17: #{gnn_layer_forward.3} parent=0 // pred_fallthru
    _
  // Predicated region
  $region18: #{gnn_layer_forward.3} parent=0 // pred_check
    _
  $region19: #{gnn_layer_forward.3} parent=0 // pred_check_branch
    %25 = sbr.rel (0) target = $region21
  $region20: #{gnn_layer_forward.3} parent=0 // pred_region
    _
  $region21: #{gnn_layer_forward.3} parent=0 // pred_fallthru
    _
  // Predicated region
  $region22: #{gnn_layer_forward.3} parent=0 // pred_check
    _
  $region23: #{gnn_layer_forward.3} parent=0 // pred_check_branch
    %27 = sbr.rel (0) target = $region25
  $region24: #{gnn_layer_forward.3} parent=0 // pred_region
    _
  $region25: #{gnn_layer_forward.3} parent=0 // pred_fallthru
    _
  // Predicated region
  $region26: #{gnn_layer_forward.3} parent=0 // pred_check
    _
  $region27: #{gnn_layer_forward.3} parent=0 // pred_check_branch
    %29 = sbr.rel (0) target = $region29
  $region28: #{gnn_layer_forward.3} parent=0 // pred_region
    _
  $region29: #{gnn_layer_forward.3} parent=0 // pred_fallthru
    _
  %v30 = vld [vmem:[%s0] sm:$0xff]
  %v31 = vld [vmem:[%s0 + $0x8] sm:$0xff]
  %v32 = vld [vmem:[%s0 + $0x10] sm:$0xff]
  %v33 = vld [vmem:[%s0 + $0x18] sm:$0xff]
  %v34 = vld [vmem:[%s0 + $0x20] sm:$0xff]
  %v35 = vld [vmem:[%s0 + $0x28] sm:$0xff]
  %v36 = vld [vmem:[%s0 + $0x30] sm:$0xff]
  %v37 = vld [vmem:[%s0 + $0x38] sm:$0xff]
  %v38 = vld [vmem:[%s0 + $0x40] sm:$0xff]
  %v39 = vld [vmem:[%s0 + $0x48] sm:$0xff]
  %v40 = vld [vmem:[%s0 + $0x50] sm:$0xff]
  %v41 = vld [vmem:[%s0 + $0x58] sm:$0xff]
  %v42 = vld [vmem:[%s0 + $0x60] sm:$0xff]
  %v43 = vld [vmem:[%s0 + $0x68] sm:$0xff]
  %v44 = vld [vmem:[%s0 + $0x70] sm:$0xff]
  %v45 = vld [vmem:[%s0 + $0x78] sm:$0xff]
  %v46 = vpack.c.bf16 %v31, %v30
  %v47 = vpack.c.bf16 %v33, %v32
  %v48 = vpack.c.bf16 %v35, %v34
  %v49 = vpack.c.bf16 %v37, %v36
  %v50 = vpack.c.bf16 %v39, %v38
  %v51 = vpack.c.bf16 %v41, %v40
  %v52 = vpack.c.bf16 %v43, %v42
  %v53 = vpack.c.bf16 %v45, %v44
  %v54 = vld [vmem:[%s1] sm:$0xf]
  %v55 = vld [vmem:[%s1 + $0x4] sm:$0xf]
  %v56 = vld [vmem:[%s1 + $0x8] sm:$0xf]
  %v57 = vld [vmem:[%s1 + $0xc] sm:$0xf]
  %v58 = vld [vmem:[%s1 + $0x10] sm:$0xf]
  %v59 = vld [vmem:[%s1 + $0x14] sm:$0xf]
  %v60 = vld [vmem:[%s1 + $0x18] sm:$0xf]
  %v61 = vld [vmem:[%s1 + $0x1c] sm:$0xf]
  %v62 = vld [vmem:[%s1 + $0x20] sm:$0xf]
  %v63 = vld [vmem:[%s1 + $0x24] sm:$0xf]
  %v64 = vld [vmem:[%s1 + $0x28] sm:$0xf]
  %v65 = vld [vmem:[%s1 + $0x2c] sm:$0xf]
  %v66 = vld [vmem:[%s1 + $0x30] sm:$0xf]
  %v67 = vld [vmem:[%s1 + $0x34] sm:$0xf]
  %v68 = vld [vmem:[%s1 + $0x38] sm:$0xf]
  %v69 = vld [vmem:[%s1 + $0x3c] sm:$0xf]
  %v70 = vld [vmem:[%s2] sm:$0x1]
  %v72 = vperm.slane %v70, 0
  %v90 = vunpack.c.l.b16 %v54
  %v91 = vunpack.c.l.b16 %v55
  %v92 = vunpack.c.l.b16 %v56
  %v93 = vunpack.c.l.b16 %v57
  %v94 = vunpack.c.l.b16 %v58
  %v95 = vunpack.c.l.b16 %v59
  %v96 = vunpack.c.l.b16 %v60
  %v97 = vunpack.c.l.b16 %v61
  %v98 = vunpack.c.l.b16 %v62
  %v99 = vunpack.c.l.b16 %v63
  %v100 = vunpack.c.l.b16 %v64
  %v101 = vunpack.c.l.b16 %v65
  %v102 = vunpack.c.l.b16 %v66
  %v103 = vunpack.c.l.b16 %v67
  %v104 = vunpack.c.l.b16 %v68
  %v105 = vunpack.c.l.b16 %v69
  %v106 = vpack.c.b16 %v91, %v90
  %v107 = vpack.c.b16 %v93, %v92
  %v108 = vpack.c.b16 %v95, %v94
  %v109 = vpack.c.b16 %v97, %v96
  %v110 = vpack.c.b16 %v99, %v98
  %v111 = vpack.c.b16 %v101, %v100
  %v112 = vpack.c.b16 %v103, %v102
  %v113 = vpack.c.b16 %v105, %v104
  %122 = vmatpush.bf16.msra.mxu0 %v113
  %123 = vmatpush.bf16.msra.mxu0 %v112
  %124 = vmatpush.bf16.msra.mxu0 %v111
  %125 = vmatpush.bf16.msra.mxu0 %v110
  %126 = vmatpush.bf16.msra.mxu0 %v109
  %127 = vmatpush.bf16.msra.mxu0 %v108
  %128 = vmatpush.bf16.msra.mxu0 %v107
  %129 = vmatpush.bf16.msra.mxu0 %v106
  %130 = vmatmul.bf16.gmra.mxu0 %v46
  %v131 = vpop.f32.mrf.mxu0
  %v132 = vadd.f32 %v72, %v131
  %v133 = vpop.f32.mrf.mxu0
  %v134 = vadd.f32 %v72, %v133
  %135 = vmatmul.bf16.gmra.mxu0 %v47
  %v136 = vpop.f32.mrf.mxu0
  %v137 = vadd.f32 %v72, %v136
  %v138 = vpop.f32.mrf.mxu0
  %v139 = vadd.f32 %v72, %v138
  %140 = vmatmul.bf16.gmra.mxu0 %v48
  %v141 = vpop.f32.mrf.mxu0
  %v142 = vadd.f32 %v72, %v141
  %v143 = vpop.f32.mrf.mxu0
  %v144 = vadd.f32 %v72, %v143
  %145 = vmatmul.bf16.gmra.mxu0 %v49
  %v146 = vpop.f32.mrf.mxu0
  %v147 = vadd.f32 %v72, %v146
  %v148 = vpop.f32.mrf.mxu0
  %v149 = vadd.f32 %v72, %v148
  %150 = vmatmul.bf16.gmra.mxu0 %v50
  %v151 = vpop.f32.mrf.mxu0
  %v152 = vadd.f32 %v72, %v151
  %v153 = vpop.f32.mrf.mxu0
  %v154 = vadd.f32 %v72, %v153
  %155 = vmatmul.bf16.gmra.mxu0 %v51
  %v156 = vpop.f32.mrf.mxu0
  %v157 = vadd.f32 %v72, %v156
  %v158 = vpop.f32.mrf.mxu0
  %v159 = vadd.f32 %v72, %v158
  %160 = vmatmul.bf16.gmra.mxu0 %v52
  %v161 = vpop.f32.mrf.mxu0
  %v162 = vadd.f32 %v72, %v161
  %v163 = vpop.f32.mrf.mxu0
  %v164 = vadd.f32 %v72, %v163
  %165 = vmatmul.bf16.gmra.mxu0 %v53
  %v166 = vpop.f32.mrf.mxu0
  %v167 = vadd.f32 %v72, %v166
  %v168 = vpop.f32.mrf.mxu0
  %v169 = vadd.f32 %v72, %v168
  %170 = vdwg.mxu0
  %v171 = vld [vmem:[%s3] sm:$0x1]
  %v173 = vperm.slane %v171, 0
  %v175 = vmul.f32 %v132, %v173
  %v176 = vmul.f32 %v134, %v173
  %v177 = vmul.f32 %v137, %v173
  %v178 = vmul.f32 %v139, %v173
  %v179 = vmul.f32 %v142, %v173
  %v180 = vmul.f32 %v144, %v173
  %v181 = vmul.f32 %v147, %v173
  %v182 = vmul.f32 %v149, %v173
  %v183 = vmul.f32 %v152, %v173
  %v184 = vmul.f32 %v154, %v173
  %v185 = vmul.f32 %v157, %v173
  %v186 = vmul.f32 %v159, %v173
  %v187 = vmul.f32 %v162, %v173
  %v188 = vmul.f32 %v164, %v173
  %v189 = vmul.f32 %v167, %v173
  %v190 = vmul.f32 %v169, %v173
  %191 = vadd.xlane.f32.xlu0 %v175
  %v192 = vpop.xlane.xlu0 %191
  %193 = vadd.xlane.f32.xlu0 %v176
  %v194 = vpop.xlane.xlu0 %193
  %195 = vadd.xlane.f32.xlu0 %v177
  %v196 = vpop.xlane.xlu0 %195
  %197 = vadd.xlane.f32.xlu0 %v178
  %v198 = vpop.xlane.xlu0 %197
  %199 = vadd.xlane.f32.xlu0 %v179
  %v200 = vpop.xlane.xlu0 %199
  %201 = vadd.xlane.f32.xlu0 %v180
  %v202 = vpop.xlane.xlu0 %201
  %203 = vadd.xlane.f32.xlu0 %v181
  %v204 = vpop.xlane.xlu0 %203
  %205 = vadd.xlane.f32.xlu0 %v182
  %v206 = vpop.xlane.xlu0 %205
  %207 = vadd.xlane.f32.xlu0 %v183
  %v208 = vpop.xlane.xlu0 %207
  %209 = vadd.xlane.f32.xlu0 %v184
  %v210 = vpop.xlane.xlu0 %209
  %211 = vadd.xlane.f32.xlu0 %v185
  %v212 = vpop.xlane.xlu0 %211
  %213 = vadd.xlane.f32.xlu0 %v186
  %v214 = vpop.xlane.xlu0 %213
  %215 = vadd.xlane.f32.xlu0 %v187
  %v216 = vpop.xlane.xlu0 %215
  %217 = vadd.xlane.f32.xlu0 %v188
  %v218 = vpop.xlane.xlu0 %217
  %219 = vadd.xlane.f32.xlu0 %v189
  %v220 = vpop.xlane.xlu0 %219
  %221 = vadd.xlane.f32.xlu0 %v190
  %v222 = vpop.xlane.xlu0 %221
  %vm223 = vcmask 7168
  %224 = vst.msk [vmem:[%s9] sm:$0xff] %vm223, %v192
  %225 = vst.msk [vmem:[%s9 + $0x8] sm:$0xff] %vm223, %v194
  %226 = vst.msk [vmem:[%s9 + $0x10] sm:$0xff] %vm223, %v196
  %227 = vst.msk [vmem:[%s9 + $0x18] sm:$0xff] %vm223, %v198
  %228 = vst.msk [vmem:[%s9 + $0x20] sm:$0xff] %vm223, %v200
  %229 = vst.msk [vmem:[%s9 + $0x28] sm:$0xff] %vm223, %v202
  %230 = vst.msk [vmem:[%s9 + $0x30] sm:$0xff] %vm223, %v204
  %231 = vst.msk [vmem:[%s9 + $0x38] sm:$0xff] %vm223, %v206
  %232 = vst.msk [vmem:[%s9 + $0x40] sm:$0xff] %vm223, %v208
  %233 = vst.msk [vmem:[%s9 + $0x48] sm:$0xff] %vm223, %v210
  %234 = vst.msk [vmem:[%s9 + $0x50] sm:$0xff] %vm223, %v212
  %235 = vst.msk [vmem:[%s9 + $0x58] sm:$0xff] %vm223, %v214
  %236 = vst.msk [vmem:[%s9 + $0x60] sm:$0xff] %vm223, %v216
  %237 = vst.msk [vmem:[%s9 + $0x68] sm:$0xff] %vm223, %v218
  %238 = vst.msk [vmem:[%s9 + $0x70] sm:$0xff] %vm223, %v220
  %239 = vst.msk [vmem:[%s9 + $0x78] sm:$0xff] %vm223, %v222
  %v240 = vld [vmem:[%s4] sm:$0x1]
  %v242 = vperm.slane %v240, 0
  %v244 = vmul.f32 %v132, %v242
  %v245 = vmul.f32 %v134, %v242
  %v246 = vmul.f32 %v137, %v242
  %v247 = vmul.f32 %v139, %v242
  %v248 = vmul.f32 %v142, %v242
  %v249 = vmul.f32 %v144, %v242
  %v250 = vmul.f32 %v147, %v242
  %v251 = vmul.f32 %v149, %v242
  %v252 = vmul.f32 %v152, %v242
  %v253 = vmul.f32 %v154, %v242
  %v254 = vmul.f32 %v157, %v242
  %v255 = vmul.f32 %v159, %v242
  %v256 = vmul.f32 %v162, %v242
  %v257 = vmul.f32 %v164, %v242
  %v258 = vmul.f32 %v167, %v242
  %v259 = vmul.f32 %v169, %v242
  %260 = vadd.xlane.f32.xlu0 %v244
  %v261 = vpop.xlane.xlu0 %260
  %262 = vadd.xlane.f32.xlu0 %v245
  %v263 = vpop.xlane.xlu0 %262
  %264 = vadd.xlane.f32.xlu0 %v246
  %v265 = vpop.xlane.xlu0 %264
  %266 = vadd.xlane.f32.xlu0 %v247
  %v267 = vpop.xlane.xlu0 %266
  %268 = vadd.xlane.f32.xlu0 %v248
  %v269 = vpop.xlane.xlu0 %268
  %270 = vadd.xlane.f32.xlu0 %v249
  %v271 = vpop.xlane.xlu0 %270
  %272 = vadd.xlane.f32.xlu0 %v250
  %v273 = vpop.xlane.xlu0 %272
  %274 = vadd.xlane.f32.xlu0 %v251
  %v275 = vpop.xlane.xlu0 %274
  %276 = vadd.xlane.f32.xlu0 %v252
  %v277 = vpop.xlane.xlu0 %276
  %278 = vadd.xlane.f32.xlu0 %v253
  %v279 = vpop.xlane.xlu0 %278
  %280 = vadd.xlane.f32.xlu0 %v254
  %v281 = vpop.xlane.xlu0 %280
  %282 = vadd.xlane.f32.xlu0 %v255
  %v283 = vpop.xlane.xlu0 %282
  %284 = vadd.xlane.f32.xlu0 %v256
  %v285 = vpop.xlane.xlu0 %284
  %286 = vadd.xlane.f32.xlu0 %v257
  %v287 = vpop.xlane.xlu0 %286
  %288 = vadd.xlane.f32.xlu0 %v258
  %v289 = vpop.xlane.xlu0 %288
  %290 = vadd.xlane.f32.xlu0 %v259
  %v291 = vpop.xlane.xlu0 %290
  %292 = vst.msk [vmem:[%s10] sm:$0xff] %vm223, %v261
  %293 = vst.msk [vmem:[%s10 + $0x8] sm:$0xff] %vm223, %v263
  %294 = vst.msk [vmem:[%s10 + $0x10] sm:$0xff] %vm223, %v265
  %295 = vst.msk [vmem:[%s10 + $0x18] sm:$0xff] %vm223, %v267
  %296 = vst.msk [vmem:[%s10 + $0x20] sm:$0xff] %vm223, %v269
  %297 = vst.msk [vmem:[%s10 + $0x28] sm:$0xff] %vm223, %v271
  %298 = vst.msk [vmem:[%s10 + $0x30] sm:$0xff] %vm223, %v273
  %299 = vst.msk [vmem:[%s10 + $0x38] sm:$0xff] %vm223, %v275
  %300 = vst.msk [vmem:[%s10 + $0x40] sm:$0xff] %vm223, %v277
  %301 = vst.msk [vmem:[%s10 + $0x48] sm:$0xff] %vm223, %v279
  %302 = vst.msk [vmem:[%s10 + $0x50] sm:$0xff] %vm223, %v281
  %303 = vst.msk [vmem:[%s10 + $0x58] sm:$0xff] %vm223, %v283
  %304 = vst.msk [vmem:[%s10 + $0x60] sm:$0xff] %vm223, %v285
  %305 = vst.msk [vmem:[%s10 + $0x68] sm:$0xff] %vm223, %v287
  %306 = vst.msk [vmem:[%s10 + $0x70] sm:$0xff] %vm223, %v289
  %307 = vst.msk [vmem:[%s10 + $0x78] sm:$0xff] %vm223, %v291
  %v308 = vld [vmem:[%s5] sm:$0xf]
  %v309 = vld [vmem:[%s5 + $0x4] sm:$0xf]
  %v310 = vld [vmem:[%s5 + $0x8] sm:$0xf]
  %v311 = vld [vmem:[%s5 + $0xc] sm:$0xf]
  %v312 = vld [vmem:[%s5 + $0x10] sm:$0xf]
  %v313 = vld [vmem:[%s5 + $0x14] sm:$0xf]
  %v314 = vld [vmem:[%s5 + $0x18] sm:$0xf]
  %v315 = vld [vmem:[%s5 + $0x1c] sm:$0xf]
  %v316 = vld [vmem:[%s5 + $0x20] sm:$0xf]
  %v317 = vld [vmem:[%s5 + $0x24] sm:$0xf]
  %v318 = vld [vmem:[%s5 + $0x28] sm:$0xf]
  %v319 = vld [vmem:[%s5 + $0x2c] sm:$0xf]
  %v320 = vld [vmem:[%s5 + $0x30] sm:$0xf]
  %v321 = vld [vmem:[%s5 + $0x34] sm:$0xf]
  %v322 = vld [vmem:[%s5 + $0x38] sm:$0xf]
  %v323 = vld [vmem:[%s5 + $0x3c] sm:$0xf]
  %v340 = vunpack.c.l.b16 %v308
  %v341 = vunpack.c.l.b16 %v309
  %v342 = vunpack.c.l.b16 %v310
  %v343 = vunpack.c.l.b16 %v311
  %v344 = vunpack.c.l.b16 %v312
  %v345 = vunpack.c.l.b16 %v313
  %v346 = vunpack.c.l.b16 %v314
  %v347 = vunpack.c.l.b16 %v315
  %v348 = vunpack.c.l.b16 %v316
  %v349 = vunpack.c.l.b16 %v317
  %v350 = vunpack.c.l.b16 %v318
  %v351 = vunpack.c.l.b16 %v319
  %v352 = vunpack.c.l.b16 %v320
  %v353 = vunpack.c.l.b16 %v321
  %v354 = vunpack.c.l.b16 %v322
  %v355 = vunpack.c.l.b16 %v323
  %v356 = vpack.c.b16 %v341, %v340
  %v357 = vpack.c.b16 %v343, %v342
  %v358 = vpack.c.b16 %v345, %v344
  %v359 = vpack.c.b16 %v347, %v346
  %v360 = vpack.c.b16 %v349, %v348
  %v361 = vpack.c.b16 %v351, %v350
  %v362 = vpack.c.b16 %v353, %v352
  %v363 = vpack.c.b16 %v355, %v354
  %372 = vmatpush.bf16.msra.mxu0 %v363
  %373 = vmatpush.bf16.msra.mxu0 %v362
  %374 = vmatpush.bf16.msra.mxu0 %v361
  %375 = vmatpush.bf16.msra.mxu0 %v360
  %376 = vmatpush.bf16.msra.mxu0 %v359
  %377 = vmatpush.bf16.msra.mxu0 %v358
  %378 = vmatpush.bf16.msra.mxu0 %v357
  %379 = vmatpush.bf16.msra.mxu0 %v356
  %380 = vmatmul.bf16.gmra.mxu0 %v46
  %v381 = vpop.f32.mrf.mxu0
  %v382 = vadd.f32 0.0, %v381
  %v383 = vpop.f32.mrf.mxu0
  %v384 = vadd.f32 0.0, %v383
  %385 = vmatmul.bf16.gmra.mxu0 %v47
  %v386 = vpop.f32.mrf.mxu0
  %v387 = vadd.f32 0.0, %v386
  %v388 = vpop.f32.mrf.mxu0
  %v389 = vadd.f32 0.0, %v388
  %390 = vmatmul.bf16.gmra.mxu0 %v48
  %v391 = vpop.f32.mrf.mxu0
  %v392 = vadd.f32 0.0, %v391
  %v393 = vpop.f32.mrf.mxu0
  %v394 = vadd.f32 0.0, %v393
  %395 = vmatmul.bf16.gmra.mxu0 %v49
  %v396 = vpop.f32.mrf.mxu0
  %v397 = vadd.f32 0.0, %v396
  %v398 = vpop.f32.mrf.mxu0
  %v399 = vadd.f32 0.0, %v398
  %400 = vmatmul.bf16.gmra.mxu0 %v50
  %v401 = vpop.f32.mrf.mxu0
  %v402 = vadd.f32 0.0, %v401
  %v403 = vpop.f32.mrf.mxu0
  %v404 = vadd.f32 0.0, %v403
  %405 = vmatmul.bf16.gmra.mxu0 %v51
  %v406 = vpop.f32.mrf.mxu0
  %v407 = vadd.f32 0.0, %v406
  %v408 = vpop.f32.mrf.mxu0
  %v409 = vadd.f32 0.0, %v408
  %410 = vmatmul.bf16.gmra.mxu0 %v52
  %v411 = vpop.f32.mrf.mxu0
  %v412 = vadd.f32 0.0, %v411
  %v413 = vpop.f32.mrf.mxu0
  %v414 = vadd.f32 0.0, %v413
  %415 = vmatmul.bf16.gmra.mxu0 %v53
  %v416 = vpop.f32.mrf.mxu0
  %v417 = vadd.f32 0.0, %v416
  %v418 = vpop.f32.mrf.mxu0
  %v419 = vadd.f32 0.0, %v418
  %420 = vdwg.mxu0
  %v421 = vpack.c.bf16 %v382, %v382
  %v422 = vpack.c.bf16 %v384, %v384
  %v423 = vpack.c.bf16 %v387, %v387
  %v424 = vpack.c.bf16 %v389, %v389
  %v425 = vpack.c.bf16 %v392, %v392
  %v426 = vpack.c.bf16 %v394, %v394
  %v427 = vpack.c.bf16 %v397, %v397
  %v428 = vpack.c.bf16 %v399, %v399
  %v429 = vpack.c.bf16 %v402, %v402
  %v430 = vpack.c.bf16 %v404, %v404
  %v431 = vpack.c.bf16 %v407, %v407
  %v432 = vpack.c.bf16 %v409, %v409
  %v433 = vpack.c.bf16 %v412, %v412
  %v434 = vpack.c.bf16 %v414, %v414
  %v435 = vpack.c.bf16 %v417, %v417
  %v436 = vpack.c.bf16 %v419, %v419
  %437 = vst [vmem:[%s7] sm:$0xf] %v421
  %438 = vst [vmem:[%s7 + $0x4] sm:$0xf] %v422
  %439 = vst [vmem:[%s7 + $0x8] sm:$0xf] %v423
  %440 = vst [vmem:[%s7 + $0xc] sm:$0xf] %v424
  %441 = vst [vmem:[%s7 + $0x10] sm:$0xf] %v425
  %442 = vst [vmem:[%s7 + $0x14] sm:$0xf] %v426
  %443 = vst [vmem:[%s7 + $0x18] sm:$0xf] %v427
  %444 = vst [vmem:[%s7 + $0x1c] sm:$0xf] %v428
  %445 = vst [vmem:[%s7 + $0x20] sm:$0xf] %v429
  %446 = vst [vmem:[%s7 + $0x24] sm:$0xf] %v430
  %447 = vst [vmem:[%s7 + $0x28] sm:$0xf] %v431
  %448 = vst [vmem:[%s7 + $0x2c] sm:$0xf] %v432
  %449 = vst [vmem:[%s7 + $0x30] sm:$0xf] %v433
  %450 = vst [vmem:[%s7 + $0x34] sm:$0xf] %v434
  %451 = vst [vmem:[%s7 + $0x38] sm:$0xf] %v435
  %452 = vst [vmem:[%s7 + $0x3c] sm:$0xf] %v436
  %v453 = vld [vmem:[%s6] sm:$0xf]
  %v454 = vld [vmem:[%s6 + $0x4] sm:$0xf]
  %v455 = vld [vmem:[%s6 + $0x8] sm:$0xf]
  %v456 = vld [vmem:[%s6 + $0xc] sm:$0xf]
  %v457 = vld [vmem:[%s6 + $0x10] sm:$0xf]
  %v458 = vld [vmem:[%s6 + $0x14] sm:$0xf]
  %v459 = vld [vmem:[%s6 + $0x18] sm:$0xf]
  %v460 = vld [vmem:[%s6 + $0x1c] sm:$0xf]
  %v461 = vld [vmem:[%s6 + $0x20] sm:$0xf]
  %v462 = vld [vmem:[%s6 + $0x24] sm:$0xf]
  %v463 = vld [vmem:[%s6 + $0x28] sm:$0xf]
  %v464 = vld [vmem:[%s6 + $0x2c] sm:$0xf]
  %v465 = vld [vmem:[%s6 + $0x30] sm:$0xf]
  %v466 = vld [vmem:[%s6 + $0x34] sm:$0xf]
  %v467 = vld [vmem:[%s6 + $0x38] sm:$0xf]
  %v468 = vld [vmem:[%s6 + $0x3c] sm:$0xf]
  %v485 = vunpack.c.l.b16 %v453
  %v486 = vunpack.c.l.b16 %v454
  %v487 = vunpack.c.l.b16 %v455
  %v488 = vunpack.c.l.b16 %v456
  %v489 = vunpack.c.l.b16 %v457
  %v490 = vunpack.c.l.b16 %v458
  %v491 = vunpack.c.l.b16 %v459
  %v492 = vunpack.c.l.b16 %v460
  %v493 = vunpack.c.l.b16 %v461
  %v494 = vunpack.c.l.b16 %v462
  %v495 = vunpack.c.l.b16 %v463
  %v496 = vunpack.c.l.b16 %v464
  %v497 = vunpack.c.l.b16 %v465
  %v498 = vunpack.c.l.b16 %v466
  %v499 = vunpack.c.l.b16 %v467
  %v500 = vunpack.c.l.b16 %v468
  %v501 = vpack.c.b16 %v486, %v485
  %v502 = vpack.c.b16 %v488, %v487
  %v503 = vpack.c.b16 %v490, %v489
  %v504 = vpack.c.b16 %v492, %v491
  %v505 = vpack.c.b16 %v494, %v493
  %v506 = vpack.c.b16 %v496, %v495
  %v507 = vpack.c.b16 %v498, %v497
  %v508 = vpack.c.b16 %v500, %v499
  %517 = vmatpush.bf16.msra.mxu0 %v508
  %518 = vmatpush.bf16.msra.mxu0 %v507
  %519 = vmatpush.bf16.msra.mxu0 %v506
  %520 = vmatpush.bf16.msra.mxu0 %v505
  %521 = vmatpush.bf16.msra.mxu0 %v504
  %522 = vmatpush.bf16.msra.mxu0 %v503
  %523 = vmatpush.bf16.msra.mxu0 %v502
  %524 = vmatpush.bf16.msra.mxu0 %v501
  %525 = vmatmul.bf16.gmra.mxu0 %v46
  %v526 = vpop.f32.mrf.mxu0
  %v527 = vadd.f32 0.0, %v526
  %v528 = vpop.f32.mrf.mxu0
  %v529 = vadd.f32 0.0, %v528
  %530 = vmatmul.bf16.gmra.mxu0 %v47
  %v531 = vpop.f32.mrf.mxu0
  %v532 = vadd.f32 0.0, %v531
  %v533 = vpop.f32.mrf.mxu0
  %v534 = vadd.f32 0.0, %v533
  %535 = vmatmul.bf16.gmra.mxu0 %v48
  %v536 = vpop.f32.mrf.mxu0
  %v537 = vadd.f32 0.0, %v536
  %v538 = vpop.f32.mrf.mxu0
  %v539 = vadd.f32 0.0, %v538
  %540 = vmatmul.bf16.gmra.mxu0 %v49
  %v541 = vpop.f32.mrf.mxu0
  %v542 = vadd.f32 0.0, %v541
  %v543 = vpop.f32.mrf.mxu0
  %v544 = vadd.f32 0.0, %v543
  %545 = vmatmul.bf16.gmra.mxu0 %v50
  %v546 = vpop.f32.mrf.mxu0
  %v547 = vadd.f32 0.0, %v546
  %v548 = vpop.f32.mrf.mxu0
  %v549 = vadd.f32 0.0, %v548
  %550 = vmatmul.bf16.gmra.mxu0 %v51
  %v551 = vpop.f32.mrf.mxu0
  %v552 = vadd.f32 0.0, %v551
  %v553 = vpop.f32.mrf.mxu0
  %v554 = vadd.f32 0.0, %v553
  %555 = vmatmul.bf16.gmra.mxu0 %v52
  %v556 = vpop.f32.mrf.mxu0
  %v557 = vadd.f32 0.0, %v556
  %v558 = vpop.f32.mrf.mxu0
  %v559 = vadd.f32 0.0, %v558
  %560 = vmatmul.bf16.gmra.mxu0 %v53
  %v561 = vpop.f32.mrf.mxu0
  %v562 = vadd.f32 0.0, %v561
  %v563 = vpop.f32.mrf.mxu0
  %v564 = vadd.f32 0.0, %v563
  %565 = vdwg.mxu0
  %v566 = vpack.c.bf16 %v527, %v527
  %v567 = vpack.c.bf16 %v529, %v529
  %v568 = vpack.c.bf16 %v532, %v532
  %v569 = vpack.c.bf16 %v534, %v534
  %v570 = vpack.c.bf16 %v537, %v537
  %v571 = vpack.c.bf16 %v539, %v539
  %v572 = vpack.c.bf16 %v542, %v542
  %v573 = vpack.c.bf16 %v544, %v544
  %v574 = vpack.c.bf16 %v547, %v547
  %v575 = vpack.c.bf16 %v549, %v549
  %v576 = vpack.c.bf16 %v552, %v552
  %v577 = vpack.c.bf16 %v554, %v554
  %v578 = vpack.c.bf16 %v557, %v557
  %v579 = vpack.c.bf16 %v559, %v559
  %v580 = vpack.c.bf16 %v562, %v562
  %v581 = vpack.c.bf16 %v564, %v564
  %582 = vst [vmem:[%s8] sm:$0xf] %v566
  %583 = vst [vmem:[%s8 + $0x4] sm:$0xf] %v567
  %584 = vst [vmem:[%s8 + $0x8] sm:$0xf] %v568
  %585 = vst [vmem:[%s8 + $0xc] sm:$0xf] %v569
  %586 = vst [vmem:[%s8 + $0x10] sm:$0xf] %v570
  %587 = vst [vmem:[%s8 + $0x14] sm:$0xf] %v571
  %588 = vst [vmem:[%s8 + $0x18] sm:$0xf] %v572
  %589 = vst [vmem:[%s8 + $0x1c] sm:$0xf] %v573
  %590 = vst [vmem:[%s8 + $0x20] sm:$0xf] %v574
  %591 = vst [vmem:[%s8 + $0x24] sm:$0xf] %v575
  %592 = vst [vmem:[%s8 + $0x28] sm:$0xf] %v576
  %593 = vst [vmem:[%s8 + $0x2c] sm:$0xf] %v577
  %594 = vst [vmem:[%s8 + $0x30] sm:$0xf] %v578
  %595 = vst [vmem:[%s8 + $0x34] sm:$0xf] %v579
  %596 = vst [vmem:[%s8 + $0x38] sm:$0xf] %v580
  %597 = vst [vmem:[%s8 + $0x3c] sm:$0xf] %v581
  // Predicated region
  $region30: #{gnn_layer_forward.3} parent=0 // pred_check
    _
  $region31: #{gnn_layer_forward.3} parent=0 // pred_check_branch
    %599 = sbr.rel (0) target = $region33
  $region32: #{gnn_layer_forward.3} parent=0 // pred_region
    _
  $region33: #{gnn_layer_forward.3} parent=0 // pred_fallthru
    _
  // Predicated region
  $region34: #{gnn_layer_forward.3} parent=0 // pred_check
    _
  $region35: #{gnn_layer_forward.3} parent=0 // pred_check_branch
    %601 = sbr.rel (0) target = $region37
  $region36: #{gnn_layer_forward.3} parent=0 // pred_region
    _
  $region37: #{gnn_layer_forward.3} parent=0 // pred_fallthru
    _
  // Predicated region
  $region38: #{gnn_layer_forward.3} parent=0 // pred_check
    _
  $region39: #{gnn_layer_forward.3} parent=0 // pred_check_branch
    %603 = sbr.rel (0) target = $region41
  $region40: #{gnn_layer_forward.3} parent=0 // pred_region
    _
  $region41: #{gnn_layer_forward.3} parent=0 // pred_fallthru
    _
  // Predicated region
  $region42: #{gnn_layer_forward.3} parent=0 // pred_check
    _
  $region43: #{gnn_layer_forward.3} parent=0 // pred_check_branch
    %605 = sbr.rel (0) target = $region45
  $region44: #{gnn_layer_forward.3} parent=0 // pred_region
    _
  $region45: #{gnn_layer_forward.3} parent=0 // pred_fallthru
    _
  // Predicated region
  $region46: #{gnn_layer_forward.3} parent=0 // pred_check
    _
  $region47: #{gnn_layer_forward.3} parent=0 // pred_check_branch
    %607 = sbr.rel (0) target = $region49
  $region48: #{gnn_layer_forward.3} parent=0 // pred_region
    _
  $region49: #{gnn_layer_forward.3} parent=0 // pred_fallthru
    _
  // Predicated region
  $region50: #{gnn_layer_forward.3} parent=0 // pred_check
    _
  $region51: #{gnn_layer_forward.3} parent=0 // pred_check_branch
    %609 = sbr.rel (0) target = $region53
  $region52: #{gnn_layer_forward.3} parent=0 // pred_region
    _
  $region53: #{gnn_layer_forward.3} parent=0 // pred_fallthru
    _
  // Predicated region
  $region54: #{gnn_layer_forward.3} parent=0 // pred_check
    _
  $region55: #{gnn_layer_forward.3} parent=0 // pred_check_branch
    %611 = sbr.rel (0) target = $region57
  $region56: #{gnn_layer_forward.3} parent=0 // pred_region
    _
  $region57: #{gnn_layer_forward.3} parent=0 // pred_fallthru
    _
  // Predicated region
  $region58: #{gnn_layer_forward.3} parent=0 // pred_check
    _
  $region59: #{gnn_layer_forward.3} parent=0 // pred_check_branch
    %613 = sbr.rel (0) target = $region61
  $region60: #{gnn_layer_forward.3} parent=0 // pred_region
    _
  $region61: #{gnn_layer_forward.3} parent=0 // pred_fallthru
    _

// kernel: gnn_layer_forward.5
$region0: #{gnn_layer_forward.5}
  #allocation0 [shape = 'u32[]', space=smem, size = 0x4, offset = 0x4, fixed_abs, tag = 'smem constant byte address 0x4 - core index']
  #allocation1 [shape = 'u32[72,128]{1,0:T(1,128)}', space=vmem, size = 0x9000, scoped, tag = 'internal scratch']
  %s0 = inlined_call_operand.vmem [shape: f32[128,128], index: 0, kind: input, shape index: {}]
  %s1 = inlined_call_operand.vmem [shape: f32[128,128], index: 1, kind: input, shape index: {}]
  %s2 = inlined_call_operand.vmem [shape: bf16[128,384], index: 2, kind: input, shape index: {}]
  %s3 = inlined_call_operand.vmem [shape: bf16[128,384], index: 3, kind: input, shape index: {}]
  %s4 = inlined_call_operand.vmem [shape: f32[1,384], index: 4, kind: input, shape index: {}]
  %s5 = inlined_call_operand.vmem [shape: f32[1,384], index: 5, kind: input, shape index: {}]
  %s6 = inlined_call_operand.vmem [shape: bf16[128,128], index: 6, kind: input, shape index: {}]
  %s7 = inlined_call_operand.vmem [shape: f32[1,128], index: 7, kind: input, shape index: {}]
  %s8 = inlined_call_operand.vmem [shape: f32[128,128], index: 8, kind: output, shape index: {}]
  %s9 = sld [smem:[#allocation0]]
  $region42: #{gnn_layer_forward.5} parent=0
    _
  %s11 = ssub.s32 1, %s9
  %s12 = scalar_select 0, %s11, %s9
  // Predicated region
  $region2: #{gnn_layer_forward.5} parent=0 // pred_check
    _
  $region3: #{gnn_layer_forward.5} parent=0 // pred_check_branch
    %14 = sbr.rel (0) target = $region5
  $region4: #{gnn_layer_forward.5} parent=0 // pred_region
    _
  $region5: #{gnn_layer_forward.5} parent=0 // pred_fallthru
    _
  // Predicated region
  $region6: #{gnn_layer_forward.5} parent=0 // pred_check
    _
  $region7: #{gnn_layer_forward.5} parent=0 // pred_check_branch
    %16 = sbr.rel (0) target = $region9
  $region8: #{gnn_layer_forward.5} parent=0 // pred_region
    _
  $region9: #{gnn_layer_forward.5} parent=0 // pred_fallthru
    _
  // Predicated region
  $region10: #{gnn_layer_forward.5} parent=0 // pred_check
    _
  $region11: #{gnn_layer_forward.5} parent=0 // pred_check_branch
    %18 = sbr.rel (0) target = $region13
  $region12: #{gnn_layer_forward.5} parent=0 // pred_region
    _
  $region13: #{gnn_layer_forward.5} parent=0 // pred_fallthru
    _
  // Predicated region
  $region14: #{gnn_layer_forward.5} parent=0 // pred_check
    _
  $region15: #{gnn_layer_forward.5} parent=0 // pred_check_branch
    %20 = sbr.rel (0) target = $region17
  $region16: #{gnn_layer_forward.5} parent=0 // pred_region
    _
  $region17: #{gnn_layer_forward.5} parent=0 // pred_fallthru
    _
  // Predicated region
  $region18: #{gnn_layer_forward.5} parent=0 // pred_check
    _
  $region19: #{gnn_layer_forward.5} parent=0 // pred_check_branch
    %22 = sbr.rel (0) target = $region21
  $region20: #{gnn_layer_forward.5} parent=0 // pred_region
    _
  $region21: #{gnn_layer_forward.5} parent=0 // pred_fallthru
    _
  // Predicated region
  $region22: #{gnn_layer_forward.5} parent=0 // pred_check
    _
  $region23: #{gnn_layer_forward.5} parent=0 // pred_check_branch
    %24 = sbr.rel (0) target = $region25
  $region24: #{gnn_layer_forward.5} parent=0 // pred_region
    _
  $region25: #{gnn_layer_forward.5} parent=0 // pred_fallthru
    _
  // Predicated region
  $region26: #{gnn_layer_forward.5} parent=0 // pred_check
    _
  $region27: #{gnn_layer_forward.5} parent=0 // pred_check_branch
    %26 = sbr.rel (0) target = $region29
  $region28: #{gnn_layer_forward.5} parent=0 // pred_region
    _
  $region29: #{gnn_layer_forward.5} parent=0 // pred_fallthru
    _
  // Predicated region
  $region30: #{gnn_layer_forward.5} parent=0 // pred_check
    _
  $region31: #{gnn_layer_forward.5} parent=0 // pred_check_branch
    %28 = sbr.rel (0) target = $region33
  $region32: #{gnn_layer_forward.5} parent=0 // pred_region
    _
  $region33: #{gnn_layer_forward.5} parent=0 // pred_fallthru
    _
  %v29 = vld [vmem:[%s0] sm:$0xff]
  %v30 = vld [vmem:[%s0 + $0x8] sm:$0xff]
  %v31 = vld [vmem:[%s0 + $0x10] sm:$0xff]
  %v32 = vld [vmem:[%s0 + $0x18] sm:$0xff]
  %v33 = vld [vmem:[%s0 + $0x20] sm:$0xff]
  %v34 = vld [vmem:[%s0 + $0x28] sm:$0xff]
  %v35 = vld [vmem:[%s0 + $0x30] sm:$0xff]
  %v36 = vld [vmem:[%s0 + $0x38] sm:$0xff]
  %v37 = vld [vmem:[%s0 + $0x40] sm:$0xff]
  %v38 = vld [vmem:[%s0 + $0x48] sm:$0xff]
  %v39 = vld [vmem:[%s0 + $0x50] sm:$0xff]
  %v40 = vld [vmem:[%s0 + $0x58] sm:$0xff]
  %v41 = vld [vmem:[%s0 + $0x60] sm:$0xff]
  %v42 = vld [vmem:[%s0 + $0x68] sm:$0xff]
  %v43 = vld [vmem:[%s0 + $0x70] sm:$0xff]
  %v44 = vld [vmem:[%s0 + $0x78] sm:$0xff]
  %v45 = vld [vmem:[%s1] sm:$0xff]
  %v46 = vld [vmem:[%s1 + $0x8] sm:$0xff]
  %v47 = vld [vmem:[%s1 + $0x10] sm:$0xff]
  %v48 = vld [vmem:[%s1 + $0x18] sm:$0xff]
  %v49 = vld [vmem:[%s1 + $0x20] sm:$0xff]
  %v50 = vld [vmem:[%s1 + $0x28] sm:$0xff]
  %v51 = vld [vmem:[%s1 + $0x30] sm:$0xff]
  %v52 = vld [vmem:[%s1 + $0x38] sm:$0xff]
  %v53 = vld [vmem:[%s1 + $0x40] sm:$0xff]
  %v54 = vld [vmem:[%s1 + $0x48] sm:$0xff]
  %v55 = vld [vmem:[%s1 + $0x50] sm:$0xff]
  %v56 = vld [vmem:[%s1 + $0x58] sm:$0xff]
  %v57 = vld [vmem:[%s1 + $0x60] sm:$0xff]
  %v58 = vld [vmem:[%s1 + $0x68] sm:$0xff]
  %v59 = vld [vmem:[%s1 + $0x70] sm:$0xff]
  %v60 = vld [vmem:[%s1 + $0x78] sm:$0xff]
  %v61 = vpack.c.bf16 %v30, %v29
  %v62 = vpack.c.bf16 %v32, %v31
  %v63 = vpack.c.bf16 %v34, %v33
  %v64 = vpack.c.bf16 %v36, %v35
  %v65 = vpack.c.bf16 %v38, %v37
  %v66 = vpack.c.bf16 %v40, %v39
  %v67 = vpack.c.bf16 %v42, %v41
  %v68 = vpack.c.bf16 %v44, %v43
  %v69 = vld [vmem:[%s2] sm:$0xff]
  %v70 = vld [vmem:[%s2 + $0x8] sm:$0xf]
  %v71 = vld [vmem:[%s2 + $0xc] sm:$0xff]
  %v72 = vld [vmem:[%s2 + $0x14] sm:$0xf]
  %v73 = vld [vmem:[%s2 + $0x18] sm:$0xff]
  %v74 = vld [vmem:[%s2 + $0x20] sm:$0xf]
  %v75 = vld [vmem:[%s2 + $0x24] sm:$0xff]
  %v76 = vld [vmem:[%s2 + $0x2c] sm:$0xf]
  %v77 = vld [vmem:[%s2 + $0x30] sm:$0xff]
  %v78 = vld [vmem:[%s2 + $0x38] sm:$0xf]
  %v79 = vld [vmem:[%s2 + $0x3c] sm:$0xff]
  %v80 = vld [vmem:[%s2 + $0x44] sm:$0xf]
  %v81 = vld [vmem:[%s2 + $0x48] sm:$0xff]
  %v82 = vld [vmem:[%s2 + $0x50] sm:$0xf]
  %v83 = vld [vmem:[%s2 + $0x54] sm:$0xff]
  %v84 = vld [vmem:[%s2 + $0x5c] sm:$0xf]
  %v85 = vld [vmem:[%s2 + $0x60] sm:$0xff]
  %v86 = vld [vmem:[%s2 + $0x68] sm:$0xf]
  %v87 = vld [vmem:[%s2 + $0x6c] sm:$0xff]
  %v88 = vld [vmem:[%s2 + $0x74] sm:$0xf]
  %v89 = vld [vmem:[%s2 + $0x78] sm:$0xff]
  %v90 = vld [vmem:[%s2 + $0x80] sm:$0xf]
  %v91 = vld [vmem:[%s2 + $0x84] sm:$0xff]
  %v92 = vld [vmem:[%s2 + $0x8c] sm:$0xf]
  %v93 = vld [vmem:[%s2 + $0x90] sm:$0xff]
  %v94 = vld [vmem:[%s2 + $0x98] sm:$0xf]
  %v95 = vld [vmem:[%s2 + $0x9c] sm:$0xff]
  %v96 = vld [vmem:[%s2 + $0xa4] sm:$0xf]
  %v97 = vld [vmem:[%s2 + $0xa8] sm:$0xff]
  %v98 = vld [vmem:[%s2 + $0xb0] sm:$0xf]
  %v99 = vld [vmem:[%s2 + $0xb4] sm:$0xff]
  %v100 = vld [vmem:[%s2 + $0xbc] sm:$0xf]
  %v101 = vld [vmem:[%s4] sm:$0x7]
  %v103 = vperm.slane %v101, 0
  %v104 = vperm.slane %v101, 1
  %v105 = vperm.slane %v101, 2
  %v141 = vunpack.c.l.b16 %v69
  %v142 = vunpack.c.h.b16 %v69
  %v143 = vunpack.c.l.b16 %v70
  %v144 = vunpack.c.l.b16 %v71
  %v145 = vunpack.c.h.b16 %v71
  %v146 = vunpack.c.l.b16 %v72
  %v147 = vunpack.c.l.b16 %v73
  %v148 = vunpack.c.h.b16 %v73
  %v149 = vunpack.c.l.b16 %v74
  %v150 = vunpack.c.l.b16 %v75
  %v151 = vunpack.c.h.b16 %v75
  %v152 = vunpack.c.l.b16 %v76
  %v153 = vunpack.c.l.b16 %v77
  %v154 = vunpack.c.h.b16 %v77
  %v155 = vunpack.c.l.b16 %v78
  %v156 = vunpack.c.l.b16 %v79
  %v157 = vunpack.c.h.b16 %v79
  %v158 = vunpack.c.l.b16 %v80
  %v159 = vunpack.c.l.b16 %v81
  %v160 = vunpack.c.h.b16 %v81
  %v161 = vunpack.c.l.b16 %v82
  %v162 = vunpack.c.l.b16 %v83
  %v163 = vunpack.c.h.b16 %v83
  %v164 = vunpack.c.l.b16 %v84
  %v165 = vunpack.c.l.b16 %v85
  %v166 = vunpack.c.h.b16 %v85
  %v167 = vunpack.c.l.b16 %v86
  %v168 = vunpack.c.l.b16 %v87
  %v169 = vunpack.c.h.b16 %v87
  %v170 = vunpack.c.l.b16 %v88
  %v171 = vunpack.c.l.b16 %v89
  %v172 = vunpack.c.h.b16 %v89
  %v173 = vunpack.c.l.b16 %v90
  %v174 = vunpack.c.l.b16 %v91
  %v175 = vunpack.c.h.b16 %v91
  %v176 = vunpack.c.l.b16 %v92
  %v177 = vunpack.c.l.b16 %v93
  %v178 = vunpack.c.h.b16 %v93
  %v179 = vunpack.c.l.b16 %v94
  %v180 = vunpack.c.l.b16 %v95
  %v181 = vunpack.c.h.b16 %v95
  %v182 = vunpack.c.l.b16 %v96
  %v183 = vunpack.c.l.b16 %v97
  %v184 = vunpack.c.h.b16 %v97
  %v185 = vunpack.c.l.b16 %v98
  %v186 = vunpack.c.l.b16 %v99
  %v187 = vunpack.c.h.b16 %v99
  %v188 = vunpack.c.l.b16 %v100
  %v189 = vpack.c.b16 %v144, %v141
  %v190 = vpack.c.b16 %v145, %v142
  %v191 = vpack.c.b16 %v146, %v143
  %v192 = vpack.c.b16 %v150, %v147
  %v193 = vpack.c.b16 %v151, %v148
  %v194 = vpack.c.b16 %v152, %v149
  %v195 = vpack.c.b16 %v156, %v153
  %v196 = vpack.c.b16 %v157, %v154
  %v197 = vpack.c.b16 %v158, %v155
  %v198 = vpack.c.b16 %v162, %v159
  %v199 = vpack.c.b16 %v163, %v160
  %v200 = vpack.c.b16 %v164, %v161
  %v201 = vpack.c.b16 %v168, %v165
  %v202 = vpack.c.b16 %v169, %v166
  %v203 = vpack.c.b16 %v170, %v167
  %v204 = vpack.c.b16 %v174, %v171
  %v205 = vpack.c.b16 %v175, %v172
  %v206 = vpack.c.b16 %v176, %v173
  %v207 = vpack.c.b16 %v180, %v177
  %v208 = vpack.c.b16 %v181, %v178
  %v209 = vpack.c.b16 %v182, %v179
  %v210 = vpack.c.b16 %v186, %v183
  %v211 = vpack.c.b16 %v187, %v184
  %v212 = vpack.c.b16 %v188, %v185
  %237 = vmatpush.bf16.msra.mxu0 %v210
  %238 = vmatpush.bf16.msra.mxu0 %v207
  %239 = vmatpush.bf16.msra.mxu0 %v204
  %240 = vmatpush.bf16.msra.mxu0 %v201
  %241 = vmatpush.bf16.msra.mxu0 %v198
  %242 = vmatpush.bf16.msra.mxu0 %v195
  %243 = vmatpush.bf16.msra.mxu0 %v192
  %244 = vmatpush.bf16.msra.mxu0 %v189
  %245 = vmatmul.bf16.gmra.mxu0 %v61
  %v246 = vpop.f32.mrf.mxu0
  %v247 = vadd.f32 %v103, %v246
  %v248 = vpop.f32.mrf.mxu0
  %v249 = vadd.f32 %v103, %v248
  %250 = vmatmul.bf16.gmra.mxu0 %v62
  %v251 = vpop.f32.mrf.mxu0
  %v252 = vadd.f32 %v103, %v251
  %v253 = vpop.f32.mrf.mxu0
  %v254 = vadd.f32 %v103, %v253
  %255 = vmatmul.bf16.gmra.mxu0 %v63
  %v256 = vpop.f32.mrf.mxu0
  %v257 = vadd.f32 %v103, %v256
  %v258 = vpop.f32.mrf.mxu0
  %v259 = vadd.f32 %v103, %v258
  %260 = vmatmul.bf16.gmra.mxu0 %v64
  %v261 = vpop.f32.mrf.mxu0
  %v262 = vadd.f32 %v103, %v261
  %v263 = vpop.f32.mrf.mxu0
  %v264 = vadd.f32 %v103, %v263
  %265 = vmatmul.bf16.gmra.mxu0 %v65
  %v266 = vpop.f32.mrf.mxu0
  %v267 = vadd.f32 %v103, %v266
  %v268 = vpop.f32.mrf.mxu0
  %v269 = vadd.f32 %v103, %v268
  %270 = vmatmul.bf16.gmra.mxu0 %v66
  %v271 = vpop.f32.mrf.mxu0
  %v272 = vadd.f32 %v103, %v271
  %v273 = vpop.f32.mrf.mxu0
  %v274 = vadd.f32 %v103, %v273
  %275 = vmatmul.bf16.gmra.mxu0 %v67
  %v276 = vpop.f32.mrf.mxu0
  %v277 = vadd.f32 %v103, %v276
  %v278 = vpop.f32.mrf.mxu0
  %v279 = vadd.f32 %v103, %v278
  %280 = vmatmul.bf16.gmra.mxu0 %v68
  %v281 = vpop.f32.mrf.mxu0
  %v282 = vadd.f32 %v103, %v281
  %v283 = vpop.f32.mrf.mxu0
  %v284 = vadd.f32 %v103, %v283
  %285 = vdwg.mxu0
  %286 = vmatpush.bf16.msra.mxu0 %v211
  %287 = vmatpush.bf16.msra.mxu0 %v208
  %288 = vmatpush.bf16.msra.mxu0 %v205
  %289 = vmatpush.bf16.msra.mxu0 %v202
  %290 = vmatpush.bf16.msra.mxu0 %v199
  %291 = vmatpush.bf16.msra.mxu0 %v196
  %292 = vmatpush.bf16.msra.mxu0 %v193
  %293 = vmatpush.bf16.msra.mxu0 %v190
  %294 = vmatmul.bf16.gmra.mxu0 %v61
  %v295 = vpop.f32.mrf.mxu0
  %v296 = vadd.f32 %v104, %v295
  %v297 = vpop.f32.mrf.mxu0
  %v298 = vadd.f32 %v104, %v297
  %299 = vmatmul.bf16.gmra.mxu0 %v62
  %v300 = vpop.f32.mrf.mxu0
  %v301 = vadd.f32 %v104, %v300
  %v302 = vpop.f32.mrf.mxu0
  %v303 = vadd.f32 %v104, %v302
  %304 = vmatmul.bf16.gmra.mxu0 %v63
  %v305 = vpop.f32.mrf.mxu0
  %v306 = vadd.f32 %v104, %v305
  %v307 = vpop.f32.mrf.mxu0
  %v308 = vadd.f32 %v104, %v307
  %309 = vmatmul.bf16.gmra.mxu0 %v64
  %v310 = vpop.f32.mrf.mxu0
  %v311 = vadd.f32 %v104, %v310
  %v312 = vpop.f32.mrf.mxu0
  %v313 = vadd.f32 %v104, %v312
  %314 = vmatmul.bf16.gmra.mxu0 %v65
  %v315 = vpop.f32.mrf.mxu0
  %v316 = vadd.f32 %v104, %v315
  %v317 = vpop.f32.mrf.mxu0
  %v318 = vadd.f32 %v104, %v317
  %319 = vmatmul.bf16.gmra.mxu0 %v66
  %v320 = vpop.f32.mrf.mxu0
  %v321 = vadd.f32 %v104, %v320
  %v322 = vpop.f32.mrf.mxu0
  %v323 = vadd.f32 %v104, %v322
  %324 = vmatmul.bf16.gmra.mxu0 %v67
  %v325 = vpop.f32.mrf.mxu0
  %v326 = vadd.f32 %v104, %v325
  %v327 = vpop.f32.mrf.mxu0
  %v328 = vadd.f32 %v104, %v327
  %329 = vmatmul.bf16.gmra.mxu0 %v68
  %v330 = vpop.f32.mrf.mxu0
  %v331 = vadd.f32 %v104, %v330
  %v332 = vpop.f32.mrf.mxu0
  %v333 = vadd.f32 %v104, %v332
  %334 = vdwg.mxu0
  %335 = vmatpush.bf16.msra.mxu0 %v212
  %336 = vmatpush.bf16.msra.mxu0 %v209
  %337 = vmatpush.bf16.msra.mxu0 %v206
  %338 = vmatpush.bf16.msra.mxu0 %v203
  %339 = vmatpush.bf16.msra.mxu0 %v200
  %340 = vmatpush.bf16.msra.mxu0 %v197
  %341 = vmatpush.bf16.msra.mxu0 %v194
  %342 = vmatpush.bf16.msra.mxu0 %v191
  %343 = vmatmul.bf16.gmra.mxu0 %v61
  %v344 = vpop.f32.mrf.mxu0
  %v345 = vadd.f32 %v105, %v344
  %v346 = vpop.f32.mrf.mxu0
  %v347 = vadd.f32 %v105, %v346
  %348 = vmatmul.bf16.gmra.mxu0 %v62
  %v349 = vpop.f32.mrf.mxu0
  %v350 = vadd.f32 %v105, %v349
  %v351 = vpop.f32.mrf.mxu0
  %v352 = vadd.f32 %v105, %v351
  %353 = vmatmul.bf16.gmra.mxu0 %v63
  %v354 = vpop.f32.mrf.mxu0
  %v355 = vadd.f32 %v105, %v354
  %v356 = vpop.f32.mrf.mxu0
  %v357 = vadd.f32 %v105, %v356
  %358 = vmatmul.bf16.gmra.mxu0 %v64
  %v359 = vpop.f32.mrf.mxu0
  %v360 = vadd.f32 %v105, %v359
  %v361 = vpop.f32.mrf.mxu0
  %v362 = vadd.f32 %v105, %v361
  %363 = vmatmul.bf16.gmra.mxu0 %v65
  %v364 = vpop.f32.mrf.mxu0
  %v365 = vadd.f32 %v105, %v364
  %v366 = vpop.f32.mrf.mxu0
  %v367 = vadd.f32 %v105, %v366
  %368 = vmatmul.bf16.gmra.mxu0 %v66
  %v369 = vpop.f32.mrf.mxu0
  %v370 = vadd.f32 %v105, %v369
  %v371 = vpop.f32.mrf.mxu0
  %v372 = vadd.f32 %v105, %v371
  %373 = vmatmul.bf16.gmra.mxu0 %v67
  %v374 = vpop.f32.mrf.mxu0
  %v375 = vadd.f32 %v105, %v374
  %v376 = vpop.f32.mrf.mxu0
  %v377 = vadd.f32 %v105, %v376
  %378 = vmatmul.bf16.gmra.mxu0 %v68
  %v379 = vpop.f32.mrf.mxu0
  %v380 = vadd.f32 %v105, %v379
  %v381 = vpop.f32.mrf.mxu0
  %v382 = vadd.f32 %v105, %v381
  %383 = vdwg.mxu0
  %v384 = vpack.c.bf16 %v46, %v45
  %v385 = vpack.c.bf16 %v48, %v47
  %v386 = vpack.c.bf16 %v50, %v49
  %v387 = vpack.c.bf16 %v52, %v51
  %v388 = vpack.c.bf16 %v54, %v53
  %v389 = vpack.c.bf16 %v56, %v55
  %v390 = vpack.c.bf16 %v58, %v57
  %v391 = vpack.c.bf16 %v60, %v59
  %v392 = vld [vmem:[%s3] sm:$0xff]
  %v393 = vld [vmem:[%s3 + $0x8] sm:$0xf]
  %v394 = vld [vmem:[%s3 + $0xc] sm:$0xff]
  %v395 = vld [vmem:[%s3 + $0x14] sm:$0xf]
  %v396 = vld [vmem:[%s3 + $0x18] sm:$0xff]
  %v397 = vld [vmem:[%s3 + $0x20] sm:$0xf]
  %v398 = vld [vmem:[%s3 + $0x24] sm:$0xff]
  %v399 = vld [vmem:[%s3 + $0x2c] sm:$0xf]
  %v400 = vld [vmem:[%s3 + $0x30] sm:$0xff]
  %v401 = vld [vmem:[%s3 + $0x38] sm:$0xf]
  %v402 = vld [vmem:[%s3 + $0x3c] sm:$0xff]
  %v403 = vld [vmem:[%s3 + $0x44] sm:$0xf]
  %v404 = vld [vmem:[%s3 + $0x48] sm:$0xff]
  %v405 = vld [vmem:[%s3 + $0x50] sm:$0xf]
  %v406 = vld [vmem:[%s3 + $0x54] sm:$0xff]
  %v407 = vld [vmem:[%s3 + $0x5c] sm:$0xf]
  %v408 = vld [vmem:[%s3 + $0x60] sm:$0xff]
  %v409 = vld [vmem:[%s3 + $0x68] sm:$0xf]
  %v410 = vld [vmem:[%s3 + $0x6c] sm:$0xff]
  %v411 = vld [vmem:[%s3 + $0x74] sm:$0xf]
  %v412 = vld [vmem:[%s3 + $0x78] sm:$0xff]
  %v413 = vld [vmem:[%s3 + $0x80] sm:$0xf]
  %v414 = vld [vmem:[%s3 + $0x84] sm:$0xff]
  %v415 = vld [vmem:[%s3 + $0x8c] sm:$0xf]
  %v416 = vld [vmem:[%s3 + $0x90] sm:$0xff]
  %v417 = vld [vmem:[%s3 + $0x98] sm:$0xf]
  %v418 = vld [vmem:[%s3 + $0x9c] sm:$0xff]
  %v419 = vld [vmem:[%s3 + $0xa4] sm:$0xf]
  %v420 = vld [vmem:[%s3 + $0xa8] sm:$0xff]
  %v421 = vld [vmem:[%s3 + $0xb0] sm:$0xf]
  %v422 = vld [vmem:[%s3 + $0xb4] sm:$0xff]
  %v423 = vld [vmem:[%s3 + $0xbc] sm:$0xf]
  %v424 = vld [vmem:[%s5] sm:$0x7]
  %v426 = vperm.slane %v424, 0
  %v427 = vperm.slane %v424, 1
  %v428 = vperm.slane %v424, 2
  %v464 = vunpack.c.l.b16 %v392
  %v465 = vunpack.c.h.b16 %v392
  %v466 = vunpack.c.l.b16 %v393
  %v467 = vunpack.c.l.b16 %v394
  %v468 = vunpack.c.h.b16 %v394
  %v469 = vunpack.c.l.b16 %v395
  %v470 = vunpack.c.l.b16 %v396
  %v471 = vunpack.c.h.b16 %v396
  %v472 = vunpack.c.l.b16 %v397
  %v473 = vunpack.c.l.b16 %v398
  %v474 = vunpack.c.h.b16 %v398
  %v475 = vunpack.c.l.b16 %v399
  %v476 = vunpack.c.l.b16 %v400
  %v477 = vunpack.c.h.b16 %v400
  %v478 = vunpack.c.l.b16 %v401
  %v479 = vunpack.c.l.b16 %v402
  %v480 = vunpack.c.h.b16 %v402
  %v481 = vunpack.c.l.b16 %v403
  %v482 = vunpack.c.l.b16 %v404
  %v483 = vunpack.c.h.b16 %v404
  %v484 = vunpack.c.l.b16 %v405
  %v485 = vunpack.c.l.b16 %v406
  %v486 = vunpack.c.h.b16 %v406
  %v487 = vunpack.c.l.b16 %v407
  %v488 = vunpack.c.l.b16 %v408
  %v489 = vunpack.c.h.b16 %v408
  %v490 = vunpack.c.l.b16 %v409
  %v491 = vunpack.c.l.b16 %v410
  %v492 = vunpack.c.h.b16 %v410
  %v493 = vunpack.c.l.b16 %v411
  %v494 = vunpack.c.l.b16 %v412
  %v495 = vunpack.c.h.b16 %v412
  %v496 = vunpack.c.l.b16 %v413
  %v497 = vunpack.c.l.b16 %v414
  %v498 = vunpack.c.h.b16 %v414
  %v499 = vunpack.c.l.b16 %v415
  %v500 = vunpack.c.l.b16 %v416
  %v501 = vunpack.c.h.b16 %v416
  %v502 = vunpack.c.l.b16 %v417
  %v503 = vunpack.c.l.b16 %v418
  %v504 = vunpack.c.h.b16 %v418
  %v505 = vunpack.c.l.b16 %v419
  %v506 = vunpack.c.l.b16 %v420
  %v507 = vunpack.c.h.b16 %v420
  %v508 = vunpack.c.l.b16 %v421
  %v509 = vunpack.c.l.b16 %v422
  %v510 = vunpack.c.h.b16 %v422
  %v511 = vunpack.c.l.b16 %v423
  %v512 = vpack.c.b16 %v467, %v464
  %v513 = vpack.c.b16 %v468, %v465
  %v514 = vpack.c.b16 %v469, %v466
  %v515 = vpack.c.b16 %v473, %v470
  %v516 = vpack.c.b16 %v474, %v471
  %v517 = vpack.c.b16 %v475, %v472
  %v518 = vpack.c.b16 %v479, %v476
  %v519 = vpack.c.b16 %v480, %v477
  %v520 = vpack.c.b16 %v481, %v478
  %v521 = vpack.c.b16 %v485, %v482
  %v522 = vpack.c.b16 %v486, %v483
  %v523 = vpack.c.b16 %v487, %v484
  %v524 = vpack.c.b16 %v491, %v488
  %v525 = vpack.c.b16 %v492, %v489
  %v526 = vpack.c.b16 %v493, %v490
  %v527 = vpack.c.b16 %v497, %v494
  %v528 = vpack.c.b16 %v498, %v495
  %v529 = vpack.c.b16 %v499, %v496
  %v530 = vpack.c.b16 %v503, %v500
  %v531 = vpack.c.b16 %v504, %v501
  %v532 = vpack.c.b16 %v505, %v502
  %v533 = vpack.c.b16 %v509, %v506
  %v534 = vpack.c.b16 %v510, %v507
  %v535 = vpack.c.b16 %v511, %v508
  %560 = vmatpush.bf16.msra.mxu0 %v533
  %561 = vmatpush.bf16.msra.mxu0 %v530
  %562 = vmatpush.bf16.msra.mxu0 %v527
  %563 = vmatpush.bf16.msra.mxu0 %v524
  %564 = vmatpush.bf16.msra.mxu0 %v521
  %565 = vmatpush.bf16.msra.mxu0 %v518
  %566 = vmatpush.bf16.msra.mxu0 %v515
  %567 = vmatpush.bf16.msra.mxu0 %v512
  %568 = vmatmul.bf16.gmra.mxu0 %v384
  %v569 = vpop.f32.mrf.mxu0
  %v570 = vadd.f32 %v426, %v569
  %v571 = vpop.f32.mrf.mxu0
  %v572 = vadd.f32 %v426, %v571
  %573 = vmatmul.bf16.gmra.mxu0 %v385
  %v574 = vpop.f32.mrf.mxu0
  %v575 = vadd.f32 %v426, %v574
  %v576 = vpop.f32.mrf.mxu0
  %v577 = vadd.f32 %v426, %v576
  %578 = vmatmul.bf16.gmra.mxu0 %v386
  %v579 = vpop.f32.mrf.mxu0
  %v580 = vadd.f32 %v426, %v579
  %v581 = vpop.f32.mrf.mxu0
  %v582 = vadd.f32 %v426, %v581
  %583 = vmatmul.bf16.gmra.mxu0 %v387
  %v584 = vpop.f32.mrf.mxu0
  %v585 = vadd.f32 %v426, %v584
  %v586 = vpop.f32.mrf.mxu0
  %v587 = vadd.f32 %v426, %v586
  %588 = vmatmul.bf16.gmra.mxu0 %v388
  %v589 = vpop.f32.mrf.mxu0
  %v590 = vadd.f32 %v426, %v589
  %v591 = vpop.f32.mrf.mxu0
  %v592 = vadd.f32 %v426, %v591
  %593 = vmatmul.bf16.gmra.mxu0 %v389
  %v594 = vpop.f32.mrf.mxu0
  %v595 = vadd.f32 %v426, %v594
  %v596 = vpop.f32.mrf.mxu0
  %v597 = vadd.f32 %v426, %v596
  %598 = vmatmul.bf16.gmra.mxu0 %v390
  %v599 = vpop.f32.mrf.mxu0
  %v600 = vadd.f32 %v426, %v599
  %v601 = vpop.f32.mrf.mxu0
  %v602 = vadd.f32 %v426, %v601
  %603 = vmatmul.bf16.gmra.mxu0 %v391
  %v604 = vpop.f32.mrf.mxu0
  %v605 = vadd.f32 %v426, %v604
  %v606 = vpop.f32.mrf.mxu0
  %v607 = vadd.f32 %v426, %v606
  %608 = vdwg.mxu0
  %609 = vmatpush.bf16.msra.mxu0 %v534
  %610 = vmatpush.bf16.msra.mxu0 %v531
  %611 = vmatpush.bf16.msra.mxu0 %v528
  %612 = vmatpush.bf16.msra.mxu0 %v525
  %613 = vmatpush.bf16.msra.mxu0 %v522
  %614 = vmatpush.bf16.msra.mxu0 %v519
  %615 = vmatpush.bf16.msra.mxu0 %v516
  %616 = vmatpush.bf16.msra.mxu0 %v513
  %617 = vmatmul.bf16.gmra.mxu0 %v384
  %v618 = vpop.f32.mrf.mxu0
  %v619 = vadd.f32 %v427, %v618
  %v620 = vpop.f32.mrf.mxu0
  %v621 = vadd.f32 %v427, %v620
  %622 = vmatmul.bf16.gmra.mxu0 %v385
  %v623 = vpop.f32.mrf.mxu0
  %v624 = vadd.f32 %v427, %v623
  %v625 = vpop.f32.mrf.mxu0
  %v626 = vadd.f32 %v427, %v625
  %627 = vmatmul.bf16.gmra.mxu0 %v386
  %v628 = vpop.f32.mrf.mxu0
  %v629 = vadd.f32 %v427, %v628
  %v630 = vpop.f32.mrf.mxu0
  %v631 = vadd.f32 %v427, %v630
  %632 = vmatmul.bf16.gmra.mxu0 %v387
  %v633 = vpop.f32.mrf.mxu0
  %v634 = vadd.f32 %v427, %v633
  %v635 = vpop.f32.mrf.mxu0
  %v636 = vadd.f32 %v427, %v635
  %637 = vmatmul.bf16.gmra.mxu0 %v388
  %v638 = vpop.f32.mrf.mxu0
  %v639 = vadd.f32 %v427, %v638
  %v640 = vpop.f32.mrf.mxu0
  %v641 = vadd.f32 %v427, %v640
  %642 = vmatmul.bf16.gmra.mxu0 %v389
  %v643 = vpop.f32.mrf.mxu0
  %v644 = vadd.f32 %v427, %v643
  %v645 = vpop.f32.mrf.mxu0
  %v646 = vadd.f32 %v427, %v645
  %647 = vmatmul.bf16.gmra.mxu0 %v390
  %v648 = vpop.f32.mrf.mxu0
  %v649 = vadd.f32 %v427, %v648
  %v650 = vpop.f32.mrf.mxu0
  %v651 = vadd.f32 %v427, %v650
  %652 = vmatmul.bf16.gmra.mxu0 %v391
  %v653 = vpop.f32.mrf.mxu0
  %v654 = vadd.f32 %v427, %v653
  %v655 = vpop.f32.mrf.mxu0
  %v656 = vadd.f32 %v427, %v655
  %657 = vdwg.mxu0
  %658 = vmatpush.bf16.msra.mxu0 %v535
  %659 = vmatpush.bf16.msra.mxu0 %v532
  %660 = vmatpush.bf16.msra.mxu0 %v529
  %661 = vmatpush.bf16.msra.mxu0 %v526
  %662 = vmatpush.bf16.msra.mxu0 %v523
  %663 = vmatpush.bf16.msra.mxu0 %v520
  %664 = vmatpush.bf16.msra.mxu0 %v517
  %665 = vmatpush.bf16.msra.mxu0 %v514
  %666 = vmatmul.bf16.gmra.mxu0 %v384
  %v667 = vpop.f32.mrf.mxu0
  %v668 = vadd.f32 %v428, %v667
  %v669 = vpop.f32.mrf.mxu0
  %v670 = vadd.f32 %v428, %v669
  %671 = vmatmul.bf16.gmra.mxu0 %v385
  %v672 = vpop.f32.mrf.mxu0
  %v673 = vadd.f32 %v428, %v672
  %v674 = vpop.f32.mrf.mxu0
  %v675 = vadd.f32 %v428, %v674
  %676 = vmatmul.bf16.gmra.mxu0 %v386
  %v677 = vpop.f32.mrf.mxu0
  %v678 = vadd.f32 %v428, %v677
  %v679 = vpop.f32.mrf.mxu0
  %v680 = vadd.f32 %v428, %v679
  %681 = vmatmul.bf16.gmra.mxu0 %v387
  %v682 = vpop.f32.mrf.mxu0
  %v683 = vadd.f32 %v428, %v682
  %v684 = vpop.f32.mrf.mxu0
  %v685 = vadd.f32 %v428, %v684
  %686 = vmatmul.bf16.gmra.mxu0 %v388
  %v687 = vpop.f32.mrf.mxu0
  %v688 = vadd.f32 %v428, %v687
  %v689 = vpop.f32.mrf.mxu0
  %v690 = vadd.f32 %v428, %v689
  %691 = vmatmul.bf16.gmra.mxu0 %v389
  %v692 = vpop.f32.mrf.mxu0
  %v693 = vadd.f32 %v428, %v692
  %v694 = vpop.f32.mrf.mxu0
  %v695 = vadd.f32 %v428, %v694
  %696 = vmatmul.bf16.gmra.mxu0 %v390
  %v697 = vpop.f32.mrf.mxu0
  %v698 = vadd.f32 %v428, %v697
  %v699 = vpop.f32.mrf.mxu0
  %v700 = vadd.f32 %v428, %v699
  %701 = vmatmul.bf16.gmra.mxu0 %v391
  %v702 = vpop.f32.mrf.mxu0
  %v703 = vadd.f32 %v428, %v702
  %v704 = vpop.f32.mrf.mxu0
  %v705 = vadd.f32 %v428, %v704
  %706 = vdwg.mxu0
  %v707 = vadd.f32 %v247, %v570
  %v708 = vadd.f32 %v249, %v572
  %v709 = vadd.f32 %v252, %v575
  %v710 = vadd.f32 %v254, %v577
  %v711 = vadd.f32 %v257, %v580
  %v712 = vadd.f32 %v259, %v582
  %v713 = vadd.f32 %v262, %v585
  %v714 = vadd.f32 %v264, %v587
  %v715 = vadd.f32 %v267, %v590
  %v716 = vadd.f32 %v269, %v592
  %v717 = vadd.f32 %v272, %v595
  %v718 = vadd.f32 %v274, %v597
  %v719 = vadd.f32 %v277, %v600
  %v720 = vadd.f32 %v279, %v602
  %v721 = vadd.f32 %v282, %v605
  %v722 = vadd.f32 %v284, %v607
  %v723 = vxor.u32 %v707, 2147483648
  %v724 = vxor.u32 %v708, 2147483648
  %v725 = vxor.u32 %v709, 2147483648
  %v726 = vxor.u32 %v710, 2147483648
  %v727 = vxor.u32 %v711, 2147483648
  %v728 = vxor.u32 %v712, 2147483648
  %v729 = vxor.u32 %v713, 2147483648
  %v730 = vxor.u32 %v714, 2147483648
  %v731 = vxor.u32 %v715, 2147483648
  %v732 = vxor.u32 %v716, 2147483648
  %v733 = vxor.u32 %v717, 2147483648
  %v734 = vxor.u32 %v718, 2147483648
  %v735 = vxor.u32 %v719, 2147483648
  %v736 = vxor.u32 %v720, 2147483648
  %v737 = vxor.u32 %v721, 2147483648
  %v738 = vxor.u32 %v722, 2147483648
  %v739 = vmul.f32 %v723, 1.442695
  %v740 = vpow.pop %v739
  %v741 = vmul.f32 %v724, 1.442695
  %v742 = vpow.pop %v741
  %v743 = vmul.f32 %v725, 1.442695
  %v744 = vpow.pop %v743
  %v745 = vmul.f32 %v726, 1.442695
  %v746 = vpow.pop %v745
  %v747 = vmul.f32 %v727, 1.442695
  %v748 = vpow.pop %v747
  %v749 = vmul.f32 %v728, 1.442695
  %v750 = vpow.pop %v749
  %v751 = vmul.f32 %v729, 1.442695
  %v752 = vpow.pop %v751
  %v753 = vmul.f32 %v730, 1.442695
  %v754 = vpow.pop %v753
  %v755 = vmul.f32 %v731, 1.442695
  %v756 = vpow.pop %v755
  %v757 = vmul.f32 %v732, 1.442695
  %v758 = vpow.pop %v757
  %v759 = vmul.f32 %v733, 1.442695
  %v760 = vpow.pop %v759
  %v761 = vmul.f32 %v734, 1.442695
  %v762 = vpow.pop %v761
  %v763 = vmul.f32 %v735, 1.442695
  %v764 = vpow.pop %v763
  %v765 = vmul.f32 %v736, 1.442695
  %v766 = vpow.pop %v765
  %v767 = vmul.f32 %v737, 1.442695
  %v768 = vpow.pop %v767
  %v769 = vmul.f32 %v738, 1.442695
  %v770 = vpow.pop %v769
  %v771 = vadd.f32 %v740, 1.0
  %v772 = vadd.f32 %v742, 1.0
  %v773 = vadd.f32 %v744, 1.0
  %v774 = vadd.f32 %v746, 1.0
  %v775 = vadd.f32 %v748, 1.0
  %v776 = vadd.f32 %v750, 1.0
  %v777 = vadd.f32 %v752, 1.0
  %v778 = vadd.f32 %v754, 1.0
  %v779 = vadd.f32 %v756, 1.0
  %v780 = vadd.f32 %v758, 1.0
  %v781 = vadd.f32 %v760, 1.0
  %v782 = vadd.f32 %v762, 1.0
  %v783 = vadd.f32 %v764, 1.0
  %v784 = vadd.f32 %v766, 1.0
  %v785 = vadd.f32 %v768, 1.0
  %v786 = vadd.f32 %v770, 1.0
  %v787 = vrcp.pop %v771
  %v788 = vmul.f32 %v771, %v787
  %v789 = vsub.f32 1.0, %v788
  %v790 = vmul.f32 %v787, %v789
  %v791 = vadd.f32 %v787, %v790
  %vm792 = vweird.f32 %v771
  %vm793 = vweird.f32 %v787
  %vm794 = vmor %vm792, %vm793
  %v795 = vsel %vm794, %v787, %v791
  %v796 = vand.u32 2147483647, %v771
  %vm797 = vcmp.eq.f32.partialorder %v796, 8.507059e+37
  %v798 = vand.u32 %v771, 2147483648
  %v799 = vor.u32 1.1754944e-38, %v798
  %v800 = vsel %vm797, %v799, %v795
  %v801 = vmul.f32 1.0, %v800
  %v802 = vrcp.pop %v772
  %v803 = vmul.f32 %v772, %v802
  %v804 = vsub.f32 1.0, %v803
  %v805 = vmul.f32 %v802, %v804
  %v806 = vadd.f32 %v802, %v805
  %vm807 = vweird.f32 %v772
  %vm808 = vweird.f32 %v802
  %vm809 = vmor %vm807, %vm808
  %v810 = vsel %vm809, %v802, %v806
  %v811 = vand.u32 2147483647, %v772
  %vm812 = vcmp.eq.f32.partialorder %v811, 8.507059e+37
  %v813 = vand.u32 %v772, 2147483648
  %v814 = vor.u32 1.1754944e-38, %v813
  %v815 = vsel %vm812, %v814, %v810
  %v816 = vmul.f32 1.0, %v815
  %v817 = vrcp.pop %v773
  %v818 = vmul.f32 %v773, %v817
  %v819 = vsub.f32 1.0, %v818
  %v820 = vmul.f32 %v817, %v819
  %v821 = vadd.f32 %v817, %v820
  %vm822 = vweird.f32 %v773
  %vm823 = vweird.f32 %v817
  %vm824 = vmor %vm822, %vm823
  %v825 = vsel %vm824, %v817, %v821
  %v826 = vand.u32 2147483647, %v773
  %vm827 = vcmp.eq.f32.partialorder %v826, 8.507059e+37
  %v828 = vand.u32 %v773, 2147483648
  %v829 = vor.u32 1.1754944e-38, %v828
  %v830 = vsel %vm827, %v829, %v825
  %v831 = vmul.f32 1.0, %v830
  %v832 = vrcp.pop %v774
  %v833 = vmul.f32 %v774, %v832
  %v834 = vsub.f32 1.0, %v833
  %v835 = vmul.f32 %v832, %v834
  %v836 = vadd.f32 %v832, %v835
  %vm837 = vweird.f32 %v774
  %vm838 = vweird.f32 %v832
  %vm839 = vmor %vm837, %vm838
  %v840 = vsel %vm839, %v832, %v836
  %v841 = vand.u32 2147483647, %v774
  %vm842 = vcmp.eq.f32.partialorder %v841, 8.507059e+37
  %v843 = vand.u32 %v774, 2147483648
  %v844 = vor.u32 1.1754944e-38, %v843
  %v845 = vsel %vm842, %v844, %v840
  %v846 = vmul.f32 1.0, %v845
  %v847 = vrcp.pop %v775
  %v848 = vmul.f32 %v775, %v847
  %v849 = vsub.f32 1.0, %v848
  %v850 = vmul.f32 %v847, %v849
  %v851 = vadd.f32 %v847, %v850
  %vm852 = vweird.f32 %v775
  %vm853 = vweird.f32 %v847
  %vm854 = vmor %vm852, %vm853
  %v855 = vsel %vm854, %v847, %v851
  %v856 = vand.u32 2147483647, %v775
  %vm857 = vcmp.eq.f32.partialorder %v856, 8.507059e+37
  %v858 = vand.u32 %v775, 2147483648
  %v859 = vor.u32 1.1754944e-38, %v858
  %v860 = vsel %vm857, %v859, %v855
  %v861 = vmul.f32 1.0, %v860
  %v862 = vrcp.pop %v776
  %v863 = vmul.f32 %v776, %v862
  %v864 = vsub.f32 1.0, %v863
  %v865 = vmul.f32 %v862, %v864
  %v866 = vadd.f32 %v862, %v865
  %vm867 = vweird.f32 %v776
  %vm868 = vweird.f32 %v862
  %vm869 = vmor %vm867, %vm868
  %v870 = vsel %vm869, %v862, %v866
  %v871 = vand.u32 2147483647, %v776
  %vm872 = vcmp.eq.f32.partialorder %v871, 8.507059e+37
  %v873 = vand.u32 %v776, 2147483648
  %v874 = vor.u32 1.1754944e-38, %v873
  %v875 = vsel %vm872, %v874, %v870
  %v876 = vmul.f32 1.0, %v875
  %v877 = vrcp.pop %v777
  %v878 = vmul.f32 %v777, %v877
  %v879 = vsub.f32 1.0, %v878
  %v880 = vmul.f32 %v877, %v879
  %v881 = vadd.f32 %v877, %v880
  %vm882 = vweird.f32 %v777
  %vm883 = vweird.f32 %v877
  %vm884 = vmor %vm882, %vm883
  %v885 = vsel %vm884, %v877, %v881
  %v886 = vand.u32 2147483647, %v777
  %vm887 = vcmp.eq.f32.partialorder %v886, 8.507059e+37
  %v888 = vand.u32 %v777, 2147483648
  %v889 = vor.u32 1.1754944e-38, %v888
  %v890 = vsel %vm887, %v889, %v885
  %v891 = vmul.f32 1.0, %v890
  %v892 = vrcp.pop %v778
  %v893 = vmul.f32 %v778, %v892
  %v894 = vsub.f32 1.0, %v893
  %v895 = vmul.f32 %v892, %v894
  %v896 = vadd.f32 %v892, %v895
  %vm897 = vweird.f32 %v778
  %vm898 = vweird.f32 %v892
  %vm899 = vmor %vm897, %vm898
  %v900 = vsel %vm899, %v892, %v896
  %v901 = vand.u32 2147483647, %v778
  %vm902 = vcmp.eq.f32.partialorder %v901, 8.507059e+37
  %v903 = vand.u32 %v778, 2147483648
  %v904 = vor.u32 1.1754944e-38, %v903
  %v905 = vsel %vm902, %v904, %v900
  %v906 = vmul.f32 1.0, %v905
  %v907 = vrcp.pop %v779
  %v908 = vmul.f32 %v779, %v907
  %v909 = vsub.f32 1.0, %v908
  %v910 = vmul.f32 %v907, %v909
  %v911 = vadd.f32 %v907, %v910
  %vm912 = vweird.f32 %v779
  %vm913 = vweird.f32 %v907
  %vm914 = vmor %vm912, %vm913
  %v915 = vsel %vm914, %v907, %v911
  %v916 = vand.u32 2147483647, %v779
  %vm917 = vcmp.eq.f32.partialorder %v916, 8.507059e+37
  %v918 = vand.u32 %v779, 2147483648
  %v919 = vor.u32 1.1754944e-38, %v918
  %v920 = vsel %vm917, %v919, %v915
  %v921 = vmul.f32 1.0, %v920
  %v922 = vrcp.pop %v780
  %v923 = vmul.f32 %v780, %v922
  %v924 = vsub.f32 1.0, %v923
  %v925 = vmul.f32 %v922, %v924
  %v926 = vadd.f32 %v922, %v925
  %vm927 = vweird.f32 %v780
  %vm928 = vweird.f32 %v922
  %vm929 = vmor %vm927, %vm928
  %v930 = vsel %vm929, %v922, %v926
  %v931 = vand.u32 2147483647, %v780
  %vm932 = vcmp.eq.f32.partialorder %v931, 8.507059e+37
  %v933 = vand.u32 %v780, 2147483648
  %v934 = vor.u32 1.1754944e-38, %v933
  %v935 = vsel %vm932, %v934, %v930
  %v936 = vmul.f32 1.0, %v935
  %v937 = vrcp.pop %v781
  %v938 = vmul.f32 %v781, %v937
  %v939 = vsub.f32 1.0, %v938
  %v940 = vmul.f32 %v937, %v939
  %v941 = vadd.f32 %v937, %v940
  %vm942 = vweird.f32 %v781
  %vm943 = vweird.f32 %v937
  %vm944 = vmor %vm942, %vm943
  %v945 = vsel %vm944, %v937, %v941
  %v946 = vand.u32 2147483647, %v781
  %vm947 = vcmp.eq.f32.partialorder %v946, 8.507059e+37
  %v948 = vand.u32 %v781, 2147483648
  %v949 = vor.u32 1.1754944e-38, %v948
  %v950 = vsel %vm947, %v949, %v945
  %v951 = vmul.f32 1.0, %v950
  %v952 = vrcp.pop %v782
  %v953 = vmul.f32 %v782, %v952
  %v954 = vsub.f32 1.0, %v953
  %v955 = vmul.f32 %v952, %v954
  %v956 = vadd.f32 %v952, %v955
  %vm957 = vweird.f32 %v782
  %vm958 = vweird.f32 %v952
  %vm959 = vmor %vm957, %vm958
  %v960 = vsel %vm959, %v952, %v956
  %v961 = vand.u32 2147483647, %v782
  %vm962 = vcmp.eq.f32.partialorder %v961, 8.507059e+37
  %v963 = vand.u32 %v782, 2147483648
  %v964 = vor.u32 1.1754944e-38, %v963
  %v965 = vsel %vm962, %v964, %v960
  %v966 = vmul.f32 1.0, %v965
  %v967 = vrcp.pop %v783
  %v968 = vmul.f32 %v783, %v967
  %v969 = vsub.f32 1.0, %v968
  %v970 = vmul.f32 %v967, %v969
  %v971 = vadd.f32 %v967, %v970
  %vm972 = vweird.f32 %v783
  %vm973 = vweird.f32 %v967
  %vm974 = vmor %vm972, %vm973
  %v975 = vsel %vm974, %v967, %v971
  %v976 = vand.u32 2147483647, %v783
  %vm977 = vcmp.eq.f32.partialorder %v976, 8.507059e+37
  %v978 = vand.u32 %v783, 2147483648
  %v979 = vor.u32 1.1754944e-38, %v978
  %v980 = vsel %vm977, %v979, %v975
  %v981 = vmul.f32 1.0, %v980
  %v982 = vrcp.pop %v784
  %v983 = vmul.f32 %v784, %v982
  %v984 = vsub.f32 1.0, %v983
  %v985 = vmul.f32 %v982, %v984
  %v986 = vadd.f32 %v982, %v985
  %vm987 = vweird.f32 %v784
  %vm988 = vweird.f32 %v982
  %vm989 = vmor %vm987, %vm988
  %v990 = vsel %vm989, %v982, %v986
  %v991 = vand.u32 2147483647, %v784
  %vm992 = vcmp.eq.f32.partialorder %v991, 8.507059e+37
  %v993 = vand.u32 %v784, 2147483648
  %v994 = vor.u32 1.1754944e-38, %v993
  %v995 = vsel %vm992, %v994, %v990
  %v996 = vmul.f32 1.0, %v995
  %v997 = vrcp.pop %v785
  %v998 = vmul.f32 %v785, %v997
  %v999 = vsub.f32 1.0, %v998
  %v1000 = vmul.f32 %v997, %v999
  %v1001 = vadd.f32 %v997, %v1000
  %vm1002 = vweird.f32 %v785
  %vm1003 = vweird.f32 %v997
  %vm1004 = vmor %vm1002, %vm1003
  %v1005 = vsel %vm1004, %v997, %v1001
  %v1006 = vand.u32 2147483647, %v785
  %vm1007 = vcmp.eq.f32.partialorder %v1006, 8.507059e+37
  %v1008 = vand.u32 %v785, 2147483648
  %v1009 = vor.u32 1.1754944e-38, %v1008
  %v1010 = vsel %vm1007, %v1009, %v1005
  %v1011 = vmul.f32 1.0, %v1010
  %v1012 = vrcp.pop %v786
  %v1013 = vmul.f32 %v786, %v1012
  %v1014 = vsub.f32 1.0, %v1013
  %v1015 = vmul.f32 %v1012, %v1014
  %v1016 = vadd.f32 %v1012, %v1015
  %vm1017 = vweird.f32 %v786
  %vm1018 = vweird.f32 %v1012
  %vm1019 = vmor %vm1017, %vm1018
  %v1020 = vsel %vm1019, %v1012, %v1016
  %v1021 = vand.u32 2147483647, %v786
  %vm1022 = vcmp.eq.f32.partialorder %v1021, 8.507059e+37
  %v1023 = vand.u32 %v786, 2147483648
  %v1024 = vor.u32 1.1754944e-38, %v1023
  %v1025 = vsel %vm1022, %v1024, %v1020
  %v1026 = vmul.f32 1.0, %v1025
  %v1027 = vadd.f32 %v296, %v619
  %v1028 = vadd.f32 %v298, %v621
  %v1029 = vadd.f32 %v301, %v624
  %v1030 = vadd.f32 %v303, %v626
  %v1031 = vadd.f32 %v306, %v629
  %v1032 = vadd.f32 %v308, %v631
  %v1033 = vadd.f32 %v311, %v634
  %v1034 = vadd.f32 %v313, %v636
  %v1035 = vadd.f32 %v316, %v639
  %v1036 = vadd.f32 %v318, %v641
  %v1037 = vadd.f32 %v321, %v644
  %v1038 = vadd.f32 %v323, %v646
  %v1039 = vadd.f32 %v326, %v649
  %v1040 = vadd.f32 %v328, %v651
  %v1041 = vadd.f32 %v331, %v654
  %v1042 = vadd.f32 %v333, %v656
  %v1043 = vxor.u32 %v1027, 2147483648
  %v1044 = vxor.u32 %v1028, 2147483648
  %v1045 = vxor.u32 %v1029, 2147483648
  %v1046 = vxor.u32 %v1030, 2147483648
  %v1047 = vxor.u32 %v1031, 2147483648
  %v1048 = vxor.u32 %v1032, 2147483648
  %v1049 = vxor.u32 %v1033, 2147483648
  %v1050 = vxor.u32 %v1034, 2147483648
  %v1051 = vxor.u32 %v1035, 2147483648
  %v1052 = vxor.u32 %v1036, 2147483648
  %v1053 = vxor.u32 %v1037, 2147483648
  %v1054 = vxor.u32 %v1038, 2147483648
  %v1055 = vxor.u32 %v1039, 2147483648
  %v1056 = vxor.u32 %v1040, 2147483648
  %v1057 = vxor.u32 %v1041, 2147483648
  %v1058 = vxor.u32 %v1042, 2147483648
  %v1059 = vmul.f32 %v1043, 1.442695
  %v1060 = vpow.pop %v1059
  %v1061 = vmul.f32 %v1044, 1.442695
  %v1062 = vpow.pop %v1061
  %v1063 = vmul.f32 %v1045, 1.442695
  %v1064 = vpow.pop %v1063
  %v1065 = vmul.f32 %v1046, 1.442695
  %v1066 = vpow.pop %v1065
  %v1067 = vmul.f32 %v1047, 1.442695
  %v1068 = vpow.pop %v1067
  %v1069 = vmul.f32 %v1048, 1.442695
  %v1070 = vpow.pop %v1069
  %v1071 = vmul.f32 %v1049, 1.442695
  %v1072 = vpow.pop %v1071
  %v1073 = vmul.f32 %v1050, 1.442695
  %v1074 = vpow.pop %v1073
  %v1075 = vmul.f32 %v1051, 1.442695
  %v1076 = vpow.pop %v1075
  %v1077 = vmul.f32 %v1052, 1.442695
  %v1078 = vpow.pop %v1077
  %v1079 = vmul.f32 %v1053, 1.442695
  %v1080 = vpow.pop %v1079
  %v1081 = vmul.f32 %v1054, 1.442695
  %v1082 = vpow.pop %v1081
  %v1083 = vmul.f32 %v1055, 1.442695
  %v1084 = vpow.pop %v1083
  %v1085 = vmul.f32 %v1056, 1.442695
  %v1086 = vpow.pop %v1085
  %v1087 = vmul.f32 %v1057, 1.442695
  %v1088 = vpow.pop %v1087
  %v1089 = vmul.f32 %v1058, 1.442695
  %v1090 = vpow.pop %v1089
  %v1091 = vadd.f32 %v1060, 1.0
  %v1092 = vadd.f32 %v1062, 1.0
  %v1093 = vadd.f32 %v1064, 1.0
  %v1094 = vadd.f32 %v1066, 1.0
  %v1095 = vadd.f32 %v1068, 1.0
  %v1096 = vadd.f32 %v1070, 1.0
  %v1097 = vadd.f32 %v1072, 1.0
  %v1098 = vadd.f32 %v1074, 1.0
  %v1099 = vadd.f32 %v1076, 1.0
  %v1100 = vadd.f32 %v1078, 1.0
  %v1101 = vadd.f32 %v1080, 1.0
  %v1102 = vadd.f32 %v1082, 1.0
  %v1103 = vadd.f32 %v1084, 1.0
  %v1104 = vadd.f32 %v1086, 1.0
  %v1105 = vadd.f32 %v1088, 1.0
  %v1106 = vadd.f32 %v1090, 1.0
  %v1107 = vrcp.pop %v1091
  %v1108 = vmul.f32 %v1091, %v1107
  %v1109 = vsub.f32 1.0, %v1108
  %v1110 = vmul.f32 %v1107, %v1109
  %v1111 = vadd.f32 %v1107, %v1110
  %vm1112 = vweird.f32 %v1091
  %vm1113 = vweird.f32 %v1107
  %vm1114 = vmor %vm1112, %vm1113
  %v1115 = vsel %vm1114, %v1107, %v1111
  %v1116 = vand.u32 2147483647, %v1091
  %vm1117 = vcmp.eq.f32.partialorder %v1116, 8.507059e+37
  %v1118 = vand.u32 %v1091, 2147483648
  %v1119 = vor.u32 1.1754944e-38, %v1118
  %v1120 = vsel %vm1117, %v1119, %v1115
  %v1121 = vmul.f32 1.0, %v1120
  %v1122 = vrcp.pop %v1092
  %v1123 = vmul.f32 %v1092, %v1122
  %v1124 = vsub.f32 1.0, %v1123
  %v1125 = vmul.f32 %v1122, %v1124
  %v1126 = vadd.f32 %v1122, %v1125
  %vm1127 = vweird.f32 %v1092
  %vm1128 = vweird.f32 %v1122
  %vm1129 = vmor %vm1127, %vm1128
  %v1130 = vsel %vm1129, %v1122, %v1126
  %v1131 = vand.u32 2147483647, %v1092
  %vm1132 = vcmp.eq.f32.partialorder %v1131, 8.507059e+37
  %v1133 = vand.u32 %v1092, 2147483648
  %v1134 = vor.u32 1.1754944e-38, %v1133
  %v1135 = vsel %vm1132, %v1134, %v1130
  %v1136 = vmul.f32 1.0, %v1135
  %v1137 = vrcp.pop %v1093
  %v1138 = vmul.f32 %v1093, %v1137
  %v1139 = vsub.f32 1.0, %v1138
  %v1140 = vmul.f32 %v1137, %v1139
  %v1141 = vadd.f32 %v1137, %v1140
  %vm1142 = vweird.f32 %v1093
  %vm1143 = vweird.f32 %v1137
  %vm1144 = vmor %vm1142, %vm1143
  %v1145 = vsel %vm1144, %v1137, %v1141
  %v1146 = vand.u32 2147483647, %v1093
  %vm1147 = vcmp.eq.f32.partialorder %v1146, 8.507059e+37
  %v1148 = vand.u32 %v1093, 2147483648
  %v1149 = vor.u32 1.1754944e-38, %v1148
  %v1150 = vsel %vm1147, %v1149, %v1145
  %v1151 = vmul.f32 1.0, %v1150
  %v1152 = vrcp.pop %v1094
  %v1153 = vmul.f32 %v1094, %v1152
  %v1154 = vsub.f32 1.0, %v1153
  %v1155 = vmul.f32 %v1152, %v1154
  %v1156 = vadd.f32 %v1152, %v1155
  %vm1157 = vweird.f32 %v1094
  %vm1158 = vweird.f32 %v1152
  %vm1159 = vmor %vm1157, %vm1158
  %v1160 = vsel %vm1159, %v1152, %v1156
  %v1161 = vand.u32 2147483647, %v1094
  %vm1162 = vcmp.eq.f32.partialorder %v1161, 8.507059e+37
  %v1163 = vand.u32 %v1094, 2147483648
  %v1164 = vor.u32 1.1754944e-38, %v1163
  %v1165 = vsel %vm1162, %v1164, %v1160
  %v1166 = vmul.f32 1.0, %v1165
  %v1167 = vrcp.pop %v1095
  %v1168 = vmul.f32 %v1095, %v1167
  %v1169 = vsub.f32 1.0, %v1168
  %v1170 = vmul.f32 %v1167, %v1169
  %v1171 = vadd.f32 %v1167, %v1170
  %vm1172 = vweird.f32 %v1095
  %vm1173 = vweird.f32 %v1167
  %vm1174 = vmor %vm1172, %vm1173
  %v1175 = vsel %vm1174, %v1167, %v1171
  %v1176 = vand.u32 2147483647, %v1095
  %vm1177 = vcmp.eq.f32.partialorder %v1176, 8.507059e+37
  %v1178 = vand.u32 %v1095, 2147483648
  %v1179 = vor.u32 1.1754944e-38, %v1178
  %v1180 = vsel %vm1177, %v1179, %v1175
  %v1181 = vmul.f32 1.0, %v1180
  %v1182 = vrcp.pop %v1096
  %v1183 = vmul.f32 %v1096, %v1182
  %v1184 = vsub.f32 1.0, %v1183
  %v1185 = vmul.f32 %v1182, %v1184
  %v1186 = vadd.f32 %v1182, %v1185
  %vm1187 = vweird.f32 %v1096
  %vm1188 = vweird.f32 %v1182
  %vm1189 = vmor %vm1187, %vm1188
  %v1190 = vsel %vm1189, %v1182, %v1186
  %v1191 = vand.u32 2147483647, %v1096
  %vm1192 = vcmp.eq.f32.partialorder %v1191, 8.507059e+37
  %v1193 = vand.u32 %v1096, 2147483648
  %v1194 = vor.u32 1.1754944e-38, %v1193
  %v1195 = vsel %vm1192, %v1194, %v1190
  %v1196 = vmul.f32 1.0, %v1195
  %v1197 = vrcp.pop %v1097
  %v1198 = vmul.f32 %v1097, %v1197
  %v1199 = vsub.f32 1.0, %v1198
  %v1200 = vmul.f32 %v1197, %v1199
  %v1201 = vadd.f32 %v1197, %v1200
  %vm1202 = vweird.f32 %v1097
  %vm1203 = vweird.f32 %v1197
  %vm1204 = vmor %vm1202, %vm1203
  %v1205 = vsel %vm1204, %v1197, %v1201
  %v1206 = vand.u32 2147483647, %v1097
  %vm1207 = vcmp.eq.f32.partialorder %v1206, 8.507059e+37
  %v1208 = vand.u32 %v1097, 2147483648
  %v1209 = vor.u32 1.1754944e-38, %v1208
  %v1210 = vsel %vm1207, %v1209, %v1205
  %v1211 = vmul.f32 1.0, %v1210
  %v1212 = vrcp.pop %v1098
  %v1213 = vmul.f32 %v1098, %v1212
  %v1214 = vsub.f32 1.0, %v1213
  %v1215 = vmul.f32 %v1212, %v1214
  %v1216 = vadd.f32 %v1212, %v1215
  %vm1217 = vweird.f32 %v1098
  %vm1218 = vweird.f32 %v1212
  %vm1219 = vmor %vm1217, %vm1218
  %v1220 = vsel %vm1219, %v1212, %v1216
  %v1221 = vand.u32 2147483647, %v1098
  %vm1222 = vcmp.eq.f32.partialorder %v1221, 8.507059e+37
  %v1223 = vand.u32 %v1098, 2147483648
  %v1224 = vor.u32 1.1754944e-38, %v1223
  %v1225 = vsel %vm1222, %v1224, %v1220
  %v1226 = vmul.f32 1.0, %v1225
  %v1227 = vrcp.pop %v1099
  %v1228 = vmul.f32 %v1099, %v1227
  %v1229 = vsub.f32 1.0, %v1228
  %v1230 = vmul.f32 %v1227, %v1229
  %v1231 = vadd.f32 %v1227, %v1230
  %vm1232 = vweird.f32 %v1099
  %vm1233 = vweird.f32 %v1227
  %vm1234 = vmor %vm1232, %vm1233
  %v1235 = vsel %vm1234, %v1227, %v1231
  %v1236 = vand.u32 2147483647, %v1099
  %vm1237 = vcmp.eq.f32.partialorder %v1236, 8.507059e+37
  %v1238 = vand.u32 %v1099, 2147483648
  %v1239 = vor.u32 1.1754944e-38, %v1238
  %v1240 = vsel %vm1237, %v1239, %v1235
  %v1241 = vmul.f32 1.0, %v1240
  %v1242 = vrcp.pop %v1100
  %v1243 = vmul.f32 %v1100, %v1242
  %v1244 = vsub.f32 1.0, %v1243
  %v1245 = vmul.f32 %v1242, %v1244
  %v1246 = vadd.f32 %v1242, %v1245
  %vm1247 = vweird.f32 %v1100
  %vm1248 = vweird.f32 %v1242
  %vm1249 = vmor %vm1247, %vm1248
  %v1250 = vsel %vm1249, %v1242, %v1246
  %v1251 = vand.u32 2147483647, %v1100
  %vm1252 = vcmp.eq.f32.partialorder %v1251, 8.507059e+37
  %v1253 = vand.u32 %v1100, 2147483648
  %v1254 = vor.u32 1.1754944e-38, %v1253
  %v1255 = vsel %vm1252, %v1254, %v1250
  %v1256 = vmul.f32 1.0, %v1255
  %v1257 = vrcp.pop %v1101
  %v1258 = vmul.f32 %v1101, %v1257
  %v1259 = vsub.f32 1.0, %v1258
  %v1260 = vmul.f32 %v1257, %v1259
  %v1261 = vadd.f32 %v1257, %v1260
  %vm1262 = vweird.f32 %v1101
  %vm1263 = vweird.f32 %v1257
  %vm1264 = vmor %vm1262, %vm1263
  %v1265 = vsel %vm1264, %v1257, %v1261
  %v1266 = vand.u32 2147483647, %v1101
  %vm1267 = vcmp.eq.f32.partialorder %v1266, 8.507059e+37
  %v1268 = vand.u32 %v1101, 2147483648
  %v1269 = vor.u32 1.1754944e-38, %v1268
  %v1270 = vsel %vm1267, %v1269, %v1265
  %v1271 = vmul.f32 1.0, %v1270
  %v1272 = vrcp.pop %v1102
  %v1273 = vmul.f32 %v1102, %v1272
  %v1274 = vsub.f32 1.0, %v1273
  %v1275 = vmul.f32 %v1272, %v1274
  %v1276 = vadd.f32 %v1272, %v1275
  %vm1277 = vweird.f32 %v1102
  %vm1278 = vweird.f32 %v1272
  %vm1279 = vmor %vm1277, %vm1278
  %v1280 = vsel %vm1279, %v1272, %v1276
  %v1281 = vand.u32 2147483647, %v1102
  %vm1282 = vcmp.eq.f32.partialorder %v1281, 8.507059e+37
  %v1283 = vand.u32 %v1102, 2147483648
  %v1284 = vor.u32 1.1754944e-38, %v1283
  %v1285 = vsel %vm1282, %v1284, %v1280
  %v1286 = vmul.f32 1.0, %v1285
  %v1287 = vrcp.pop %v1103
  %v1288 = vmul.f32 %v1103, %v1287
  %v1289 = vsub.f32 1.0, %v1288
  %v1290 = vmul.f32 %v1287, %v1289
  %v1291 = vadd.f32 %v1287, %v1290
  %vm1292 = vweird.f32 %v1103
  %vm1293 = vweird.f32 %v1287
  %vm1294 = vmor %vm1292, %vm1293
  %v1295 = vsel %vm1294, %v1287, %v1291
  %v1296 = vand.u32 2147483647, %v1103
  %vm1297 = vcmp.eq.f32.partialorder %v1296, 8.507059e+37
  %v1298 = vand.u32 %v1103, 2147483648
  %v1299 = vor.u32 1.1754944e-38, %v1298
  %v1300 = vsel %vm1297, %v1299, %v1295
  %v1301 = vmul.f32 1.0, %v1300
  %v1302 = vrcp.pop %v1104
  %v1303 = vmul.f32 %v1104, %v1302
  %v1304 = vsub.f32 1.0, %v1303
  %v1305 = vmul.f32 %v1302, %v1304
  %v1306 = vadd.f32 %v1302, %v1305
  %vm1307 = vweird.f32 %v1104
  %vm1308 = vweird.f32 %v1302
  %vm1309 = vmor %vm1307, %vm1308
  %v1310 = vsel %vm1309, %v1302, %v1306
  %v1311 = vand.u32 2147483647, %v1104
  %vm1312 = vcmp.eq.f32.partialorder %v1311, 8.507059e+37
  %v1313 = vand.u32 %v1104, 2147483648
  %v1314 = vor.u32 1.1754944e-38, %v1313
  %v1315 = vsel %vm1312, %v1314, %v1310
  %v1316 = vmul.f32 1.0, %v1315
  %v1317 = vrcp.pop %v1105
  %v1318 = vmul.f32 %v1105, %v1317
  %v1319 = vsub.f32 1.0, %v1318
  %v1320 = vmul.f32 %v1317, %v1319
  %v1321 = vadd.f32 %v1317, %v1320
  %vm1322 = vweird.f32 %v1105
  %vm1323 = vweird.f32 %v1317
  %vm1324 = vmor %vm1322, %vm1323
  %v1325 = vsel %vm1324, %v1317, %v1321
  %v1326 = vand.u32 2147483647, %v1105
  %vm1327 = vcmp.eq.f32.partialorder %v1326, 8.507059e+37
  %v1328 = vand.u32 %v1105, 2147483648
  %v1329 = vor.u32 1.1754944e-38, %v1328
  %v1330 = vsel %vm1327, %v1329, %v1325
  %v1331 = vmul.f32 1.0, %v1330
  %v1332 = vrcp.pop %v1106
  %v1333 = vmul.f32 %v1106, %v1332
  %v1334 = vsub.f32 1.0, %v1333
  %v1335 = vmul.f32 %v1332, %v1334
  %v1336 = vadd.f32 %v1332, %v1335
  %vm1337 = vweird.f32 %v1106
  %vm1338 = vweird.f32 %v1332
  %vm1339 = vmor %vm1337, %vm1338
  %v1340 = vsel %vm1339, %v1332, %v1336
  %v1341 = vand.u32 2147483647, %v1106
  %vm1342 = vcmp.eq.f32.partialorder %v1341, 8.507059e+37
  %v1343 = vand.u32 %v1106, 2147483648
  %v1344 = vor.u32 1.1754944e-38, %v1343
  %v1345 = vsel %vm1342, %v1344, %v1340
  %v1346 = vmul.f32 1.0, %v1345
  %v1347 = vmul.f32 %v801, %v668
  %v1348 = vmul.f32 %v816, %v670
  %v1349 = vmul.f32 %v831, %v673
  %v1350 = vmul.f32 %v846, %v675
  %v1351 = vmul.f32 %v861, %v678
  %v1352 = vmul.f32 %v876, %v680
  %v1353 = vmul.f32 %v891, %v683
  %v1354 = vmul.f32 %v906, %v685
  %v1355 = vmul.f32 %v921, %v688
  %v1356 = vmul.f32 %v936, %v690
  %v1357 = vmul.f32 %v951, %v693
  %v1358 = vmul.f32 %v966, %v695
  %v1359 = vmul.f32 %v981, %v698
  %v1360 = vmul.f32 %v996, %v700
  %v1361 = vmul.f32 %v1011, %v703
  %v1362 = vmul.f32 %v1026, %v705
  %v1363 = vadd.f32 %v345, %v1347
  %v1364 = vadd.f32 %v347, %v1348
  %v1365 = vadd.f32 %v350, %v1349
  %v1366 = vadd.f32 %v352, %v1350
  %v1367 = vadd.f32 %v355, %v1351
  %v1368 = vadd.f32 %v357, %v1352
  %v1369 = vadd.f32 %v360, %v1353
  %v1370 = vadd.f32 %v362, %v1354
  %v1371 = vadd.f32 %v365, %v1355
  %v1372 = vadd.f32 %v367, %v1356
  %v1373 = vadd.f32 %v370, %v1357
  %v1374 = vadd.f32 %v372, %v1358
  %v1375 = vadd.f32 %v375, %v1359
  %v1376 = vadd.f32 %v377, %v1360
  %v1377 = vadd.f32 %v380, %v1361
  %v1378 = vadd.f32 %v382, %v1362
  %v1379 = vtanh.pop %v1363
  %v1380 = vtanh.pop %v1364
  %v1381 = vtanh.pop %v1365
  %v1382 = vtanh.pop %v1366
  %v1383 = vtanh.pop %v1367
  %v1384 = vtanh.pop %v1368
  %v1385 = vtanh.pop %v1369
  %v1386 = vtanh.pop %v1370
  %v1387 = vtanh.pop %v1371
  %v1388 = vtanh.pop %v1372
  %v1389 = vtanh.pop %v1373
  %v1390 = vtanh.pop %v1374
  %v1391 = vtanh.pop %v1375
  %v1392 = vtanh.pop %v1376
  %v1393 = vtanh.pop %v1377
  %v1394 = vtanh.pop %v1378
  %v1395 = vsub.f32 1.0, %v1121
  %v1396 = vsub.f32 1.0, %v1136
  %v1397 = vsub.f32 1.0, %v1151
  %v1398 = vsub.f32 1.0, %v1166
  %v1399 = vsub.f32 1.0, %v1181
  %v1400 = vsub.f32 1.0, %v1196
  %v1401 = vsub.f32 1.0, %v1211
  %v1402 = vsub.f32 1.0, %v1226
  %v1403 = vsub.f32 1.0, %v1241
  %v1404 = vsub.f32 1.0, %v1256
  %v1405 = vsub.f32 1.0, %v1271
  %v1406 = vsub.f32 1.0, %v1286
  %v1407 = vsub.f32 1.0, %v1301
  %v1408 = vsub.f32 1.0, %v1316
  %v1409 = vsub.f32 1.0, %v1331
  %v1410 = vsub.f32 1.0, %v1346
  %v1411 = vmul.f32 %v1395, %v1379
  %v1412 = vmul.f32 %v1396, %v1380
  %v1413 = vmul.f32 %v1397, %v1381
  %v1414 = vmul.f32 %v1398, %v1382
  %v1415 = vmul.f32 %v1399, %v1383
  %v1416 = vmul.f32 %v1400, %v1384
  %v1417 = vmul.f32 %v1401, %v1385
  %v1418 = vmul.f32 %v1402, %v1386
  %v1419 = vmul.f32 %v1403, %v1387
  %v1420 = vmul.f32 %v1404, %v1388
  %v1421 = vmul.f32 %v1405, %v1389
  %v1422 = vmul.f32 %v1406, %v1390
  %v1423 = vmul.f32 %v1407, %v1391
  %v1424 = vmul.f32 %v1408, %v1392
  %v1425 = vmul.f32 %v1409, %v1393
  %v1426 = vmul.f32 %v1410, %v1394
  %v1427 = vmul.f32 %v1121, %v45
  %v1428 = vmul.f32 %v1136, %v46
  %v1429 = vmul.f32 %v1151, %v47
  %v1430 = vmul.f32 %v1166, %v48
  %v1431 = vmul.f32 %v1181, %v49
  %v1432 = vmul.f32 %v1196, %v50
  %v1433 = vmul.f32 %v1211, %v51
  %v1434 = vmul.f32 %v1226, %v52
  %v1435 = vmul.f32 %v1241, %v53
  %v1436 = vmul.f32 %v1256, %v54
  %v1437 = vmul.f32 %v1271, %v55
  %v1438 = vmul.f32 %v1286, %v56
  %v1439 = vmul.f32 %v1301, %v57
  %v1440 = vmul.f32 %v1316, %v58
  %v1441 = vmul.f32 %v1331, %v59
  %v1442 = vmul.f32 %v1346, %v60
  %v1443 = vadd.f32 %v1411, %v1427
  %v1444 = vadd.f32 %v1412, %v1428
  %v1445 = vadd.f32 %v1413, %v1429
  %v1446 = vadd.f32 %v1414, %v1430
  %v1447 = vadd.f32 %v1415, %v1431
  %v1448 = vadd.f32 %v1416, %v1432
  %v1449 = vadd.f32 %v1417, %v1433
  %v1450 = vadd.f32 %v1418, %v1434
  %v1451 = vadd.f32 %v1419, %v1435
  %v1452 = vadd.f32 %v1420, %v1436
  %v1453 = vadd.f32 %v1421, %v1437
  %v1454 = vadd.f32 %v1422, %v1438
  %v1455 = vadd.f32 %v1423, %v1439
  %v1456 = vadd.f32 %v1424, %v1440
  %v1457 = vadd.f32 %v1425, %v1441
  %v1458 = vadd.f32 %v1426, %v1442
  %v1459 = vpack.c.bf16 %v1444, %v1443
  %v1460 = vpack.c.bf16 %v1446, %v1445
  %v1461 = vpack.c.bf16 %v1448, %v1447
  %v1462 = vpack.c.bf16 %v1450, %v1449
  %v1463 = vpack.c.bf16 %v1452, %v1451
  %v1464 = vpack.c.bf16 %v1454, %v1453
  %v1465 = vpack.c.bf16 %v1456, %v1455
  %v1466 = vpack.c.bf16 %v1458, %v1457
  %v1467 = vld [vmem:[%s6] sm:$0xf]
  %v1468 = vld [vmem:[%s6 + $0x4] sm:$0xf]
  %v1469 = vld [vmem:[%s6 + $0x8] sm:$0xf]
  %v1470 = vld [vmem:[%s6 + $0xc] sm:$0xf]
  %v1471 = vld [vmem:[%s6 + $0x10] sm:$0xf]
  %v1472 = vld [vmem:[%s6 + $0x14] sm:$0xf]
  %v1473 = vld [vmem:[%s6 + $0x18] sm:$0xf]
  %v1474 = vld [vmem:[%s6 + $0x1c] sm:$0xf]
  %v1475 = vld [vmem:[%s6 + $0x20] sm:$0xf]
  %v1476 = vld [vmem:[%s6 + $0x24] sm:$0xf]
  %v1477 = vld [vmem:[%s6 + $0x28] sm:$0xf]
  %v1478 = vld [vmem:[%s6 + $0x2c] sm:$0xf]
  %v1479 = vld [vmem:[%s6 + $0x30] sm:$0xf]
  %v1480 = vld [vmem:[%s6 + $0x34] sm:$0xf]
  %v1481 = vld [vmem:[%s6 + $0x38] sm:$0xf]
  %v1482 = vld [vmem:[%s6 + $0x3c] sm:$0xf]
  %v1483 = vld [vmem:[%s7] sm:$0x1]
  %v1485 = vperm.slane %v1483, 0
  %v1503 = vunpack.c.l.b16 %v1467
  %v1504 = vunpack.c.l.b16 %v1468
  %v1505 = vunpack.c.l.b16 %v1469
  %v1506 = vunpack.c.l.b16 %v1470
  %v1507 = vunpack.c.l.b16 %v1471
  %v1508 = vunpack.c.l.b16 %v1472
  %v1509 = vunpack.c.l.b16 %v1473
  %v1510 = vunpack.c.l.b16 %v1474
  %v1511 = vunpack.c.l.b16 %v1475
  %v1512 = vunpack.c.l.b16 %v1476
  %v1513 = vunpack.c.l.b16 %v1477
  %v1514 = vunpack.c.l.b16 %v1478
  %v1515 = vunpack.c.l.b16 %v1479
  %v1516 = vunpack.c.l.b16 %v1480
  %v1517 = vunpack.c.l.b16 %v1481
  %v1518 = vunpack.c.l.b16 %v1482
  %v1519 = vpack.c.b16 %v1504, %v1503
  %v1520 = vpack.c.b16 %v1506, %v1505
  %v1521 = vpack.c.b16 %v1508, %v1507
  %v1522 = vpack.c.b16 %v1510, %v1509
  %v1523 = vpack.c.b16 %v1512, %v1511
  %v1524 = vpack.c.b16 %v1514, %v1513
  %v1525 = vpack.c.b16 %v1516, %v1515
  %v1526 = vpack.c.b16 %v1518, %v1517
  %1535 = vmatpush.bf16.msra.mxu0 %v1526
  %1536 = vmatpush.bf16.msra.mxu0 %v1525
  %1537 = vmatpush.bf16.msra.mxu0 %v1524
  %1538 = vmatpush.bf16.msra.mxu0 %v1523
  %1539 = vmatpush.bf16.msra.mxu0 %v1522
  %1540 = vmatpush.bf16.msra.mxu0 %v1521
  %1541 = vmatpush.bf16.msra.mxu0 %v1520
  %1542 = vmatpush.bf16.msra.mxu0 %v1519
  %1543 = vmatmul.bf16.gmra.mxu0 %v1459
  %v1544 = vpop.f32.mrf.mxu0
  %v1545 = vadd.f32 %v1485, %v1544
  %v1546 = vpop.f32.mrf.mxu0
  %v1547 = vadd.f32 %v1485, %v1546
  %1548 = vmatmul.bf16.gmra.mxu0 %v1460
  %v1549 = vpop.f32.mrf.mxu0
  %v1550 = vadd.f32 %v1485, %v1549
  %v1551 = vpop.f32.mrf.mxu0
  %v1552 = vadd.f32 %v1485, %v1551
  %1553 = vmatmul.bf16.gmra.mxu0 %v1461
  %v1554 = vpop.f32.mrf.mxu0
  %v1555 = vadd.f32 %v1485, %v1554
  %v1556 = vpop.f32.mrf.mxu0
  %v1557 = vadd.f32 %v1485, %v1556
  %1558 = vmatmul.bf16.gmra.mxu0 %v1462
  %v1559 = vpop.f32.mrf.mxu0
  %v1560 = vadd.f32 %v1485, %v1559
  %v1561 = vpop.f32.mrf.mxu0
  %v1562 = vadd.f32 %v1485, %v1561
  %1563 = vmatmul.bf16.gmra.mxu0 %v1463
  %v1564 = vpop.f32.mrf.mxu0
  %v1565 = vadd.f32 %v1485, %v1564
  %v1566 = vpop.f32.mrf.mxu0
  %v1567 = vadd.f32 %v1485, %v1566
  %1568 = vmatmul.bf16.gmra.mxu0 %v1464
  %v1569 = vpop.f32.mrf.mxu0
  %v1570 = vadd.f32 %v1485, %v1569
  %v1571 = vpop.f32.mrf.mxu0
  %v1572 = vadd.f32 %v1485, %v1571
  %1573 = vmatmul.bf16.gmra.mxu0 %v1465
  %v1574 = vpop.f32.mrf.mxu0
  %v1575 = vadd.f32 %v1485, %v1574
  %v1576 = vpop.f32.mrf.mxu0
  %v1577 = vadd.f32 %v1485, %v1576
  %1578 = vmatmul.bf16.gmra.mxu0 %v1466
  %v1579 = vpop.f32.mrf.mxu0
  %v1580 = vadd.f32 %v1485, %v1579
  %v1581 = vpop.f32.mrf.mxu0
  %v1582 = vadd.f32 %v1485, %v1581
  %1583 = vdwg.mxu0
  %1584 = vst [vmem:[%s8] sm:$0xff] %v1545
  %1585 = vst [vmem:[%s8 + $0x8] sm:$0xff] %v1547
  %1586 = vst [vmem:[%s8 + $0x10] sm:$0xff] %v1550
  %1587 = vst [vmem:[%s8 + $0x18] sm:$0xff] %v1552
  %1588 = vst [vmem:[%s8 + $0x20] sm:$0xff] %v1555
  %1589 = vst [vmem:[%s8 + $0x28] sm:$0xff] %v1557
  %1590 = vst [vmem:[%s8 + $0x30] sm:$0xff] %v1560
  %1591 = vst [vmem:[%s8 + $0x38] sm:$0xff] %v1562
  %1592 = vst [vmem:[%s8 + $0x40] sm:$0xff] %v1565
  %1593 = vst [vmem:[%s8 + $0x48] sm:$0xff] %v1567
  %1594 = vst [vmem:[%s8 + $0x50] sm:$0xff] %v1570
  %1595 = vst [vmem:[%s8 + $0x58] sm:$0xff] %v1572
  %1596 = vst [vmem:[%s8 + $0x60] sm:$0xff] %v1575
  %1597 = vst [vmem:[%s8 + $0x68] sm:$0xff] %v1577
  %1598 = vst [vmem:[%s8 + $0x70] sm:$0xff] %v1580
  %1599 = vst [vmem:[%s8 + $0x78] sm:$0xff] %v1582
  // Predicated region
  $region34: #{gnn_layer_forward.5} parent=0 // pred_check
    _
  $region35: #{gnn_layer_forward.5} parent=0 // pred_check_branch
    %1601 = sbr.rel (0) target = $region37
  $region36: #{gnn_layer_forward.5} parent=0 // pred_region
    _
  $region37: #{gnn_layer_forward.5} parent=0 // pred_fallthru
    _
  // Predicated region
  $region38: #{gnn_layer_forward.5} parent=0 // pred_check
    _
  $region39: #{gnn_layer_forward.5} parent=0 // pred_check_branch
    %1603 = sbr.rel (0) target = $region41
  $region40: #{gnn_layer_forward.5} parent=0 // pred_region
    _
  $region41: #{gnn_layer_forward.5} parent=0 // pred_fallthru
    _

// kernel: gnn_layer_forward.4
$region0: #{gnn_layer_forward.4}
  #allocation0 [shape = 'u32[]', space=smem, size = 0x4, offset = 0x4, fixed_abs, tag = 'smem constant byte address 0x4 - core index']
  #allocation1 [shape = 'u32[72,128]{1,0:T(1,128)}', space=vmem, size = 0x9000, scoped, tag = 'internal scratch']
  %s0 = inlined_call_operand.vmem [shape: bf16[1536,128], index: 0, kind: input, shape index: {}]
  %s1 = inlined_call_operand.vmem [shape: bf16[1536,128], index: 1, kind: input, shape index: {}]
  %s2 = inlined_call_operand.vmem [shape: f32[1536,2], index: 2, kind: input, shape index: {}]
  %s3 = inlined_call_operand.vmem [shape: bf16[128,128], index: 3, kind: input, shape index: {}]
  %s4 = inlined_call_operand.vmem [shape: f32[1,128], index: 4, kind: input, shape index: {}]
  %s5 = inlined_call_operand.vmem [shape: bf16[128,128], index: 5, kind: input, shape index: {}]
  %s6 = inlined_call_operand.vmem [shape: f32[1,128], index: 6, kind: input, shape index: {}]
  %s7 = inlined_call_operand.vmem [shape: bf16[128,128], index: 7, kind: input, shape index: {}]
  %s8 = inlined_call_operand.vmem [shape: f32[1,128], index: 8, kind: input, shape index: {}]
  %s9 = inlined_call_operand.vmem [shape: f32[128,128], index: 9, kind: output, shape index: {}]
  %s10 = sld [smem:[#allocation0]]
  $region73: #{gnn_layer_forward.4} parent=0
    _
  %s12 = ssub.s32 1, %s10
  %s13 = scalar_select 0, %s12, %s10
  loop: start=0, step=1, limit=5
  $region2: #{gnn_layer_forward.4} parent=0 // loop_pre_header
    _
  $region3: #{gnn_layer_forward.4} parent=0 // loop_header
    %s15 = sphi 0, %s19
    %p16 = scmp.ge.s32.totalorder %s15, 5
    %s25 = sphi 0, %s27
    %s28 = sphi 0, %s25
    %s29 = sphi 0, %s28
    %s45 = sphi 0, %s29
    %s51 = sphi 0, %s53
    %s54 = sphi 0, %s51
    %s55 = sphi 0, %s54
    %s71 = sphi 0, %s55
    %s77 = sphi 0, %s79
    %s80 = sphi 0, %s77
    %s81 = sphi 0, %s80
    %s97 = sphi 0, %s81
    %s101 = sphi 0, %s101
    %s103 = sphi 0, %s101
    %s104 = sphi 0, %s103
    %s118 = sphi 0, %s104
    %s122 = sphi 0, %s122
    %s124 = sphi 0, %s122
    %s125 = sphi 0, %s124
    %s139 = sphi 0, %s125
    %s143 = sphi 0, %s143
    %s145 = sphi 0, %s143
    %s146 = sphi 0, %s145
    %s160 = sphi 0, %s146
    %s164 = sphi 0, %s164
    %s166 = sphi 0, %s164
    %s167 = sphi 0, %s166
    %s181 = sphi 0, %s167
    %s185 = sphi 0, %s185
    %s187 = sphi 0, %s185
    %s188 = sphi 0, %s187
    %s202 = sphi 0, %s188
    %s206 = sphi 0, %s206
    %s208 = sphi 0, %s206
    %s209 = sphi 0, %s208
    %s223 = sphi 0, %s209
    %s227 = sphi 0, %s227
    %s229 = sphi 0, %s227
    %s230 = sphi 0, %s229
    %s244 = sphi 0, %s230
  $region4: #{gnn_layer_forward.4} parent=0 // loop_header_branch
    %18 = sbr.rel (%p16) target = $region8
  $region5: #{gnn_layer_forward.4} parent=0 // loop_body
    %s20 = ssub.s32 %s15, 1
    %s21 = ssub.s32 %s15, 2
    %s22 = sadd.s32 %s15, 1
    %s23 = ssub.s32 %s15, %s22
    %p24 = scmp.eq.s32.totalorder %s23, 0
    %s26 = sadd.s32 %s25, 1
    %s27 = scalar_select %p24, %s25, %s26
    %p30 = pneg %p24
    %p31 = scmp.eq.s32.totalorder %s15, 2
    %p32 = por %p30, %p31
    %p33 = scmp.ne.s32.totalorder %s25, %s28
    %p34 = scmp.eq.s32.totalorder %s15, 0
    %p35 = por %p33, %p34
    %p36 = scmp.ne.s32.totalorder %s25, %s28
    %p37 = scmp.eq.s32.totalorder %s20, 2
    %p38 = por %p36, %p37
    %p39 = scmp.ne.s32.totalorder %s28, %s29
    %p40 = scmp.eq.s32.totalorder %s20, 0
    %p41 = por %p39, %p40
    %p42 = scmp.ne.s32.totalorder %s28, %s29
    %p43 = scmp.eq.s32.totalorder %s21, 2
    %p44 = por %p42, %p43
    %p46 = scmp.ne.s32.totalorder %s29, %s45
    %p47 = scmp.eq.s32.totalorder %s21, 0
    %p48 = por %p46, %p47
    %s49 = ssub.s32 %s15, %s22
    %p50 = scmp.eq.s32.totalorder %s49, 0
    %s52 = sadd.s32 %s51, 1
    %s53 = scalar_select %p50, %s51, %s52
    %p56 = pneg %p50
    %p57 = scmp.eq.s32.totalorder %s15, 2
    %p58 = por %p56, %p57
    %p59 = scmp.ne.s32.totalorder %s51, %s54
    %p60 = scmp.eq.s32.totalorder %s15, 0
    %p61 = por %p59, %p60
    %p62 = scmp.ne.s32.totalorder %s51, %s54
    %p63 = scmp.eq.s32.totalorder %s20, 2
    %p64 = por %p62, %p63
    %p65 = scmp.ne.s32.totalorder %s54, %s55
    %p66 = scmp.eq.s32.totalorder %s20, 0
    %p67 = por %p65, %p66
    %p68 = scmp.ne.s32.totalorder %s54, %s55
    %p69 = scmp.eq.s32.totalorder %s21, 2
    %p70 = por %p68, %p69
    %p72 = scmp.ne.s32.totalorder %s55, %s71
    %p73 = scmp.eq.s32.totalorder %s21, 0
    %p74 = por %p72, %p73
    %s75 = ssub.s32 %s15, %s22
    %p76 = scmp.eq.s32.totalorder %s75, 0
    %s78 = sadd.s32 %s77, 1
    %s79 = scalar_select %p76, %s77, %s78
    %p82 = pneg %p76
    %p83 = scmp.eq.s32.totalorder %s15, 2
    %p84 = por %p82, %p83
    %p85 = scmp.ne.s32.totalorder %s77, %s80
    %p86 = scmp.eq.s32.totalorder %s15, 0
    %p87 = por %p85, %p86
    %p88 = scmp.ne.s32.totalorder %s77, %s80
    %p89 = scmp.eq.s32.totalorder %s20, 2
    %p90 = por %p88, %p89
    %p91 = scmp.ne.s32.totalorder %s80, %s81
    %p92 = scmp.eq.s32.totalorder %s20, 0
    %p93 = por %p91, %p92
    %p94 = scmp.ne.s32.totalorder %s80, %s81
    %p95 = scmp.eq.s32.totalorder %s21, 2
    %p96 = por %p94, %p95
    %p98 = scmp.ne.s32.totalorder %s81, %s97
    %p99 = scmp.eq.s32.totalorder %s21, 0
    %p100 = por %p98, %p99
    %s102 = sadd.s32 %s101, 1
    %p105 = scmp.eq.s32.totalorder %s15, 2
    %p106 = scmp.ne.s32.totalorder %s101, %s103
    %p107 = scmp.eq.s32.totalorder %s15, 0
    %p108 = por %p106, %p107
    %p109 = scmp.ne.s32.totalorder %s101, %s103
    %p110 = scmp.eq.s32.totalorder %s20, 2
    %p111 = por %p109, %p110
    %p112 = scmp.ne.s32.totalorder %s103, %s104
    %p113 = scmp.eq.s32.totalorder %s20, 0
    %p114 = por %p112, %p113
    %p115 = scmp.ne.s32.totalorder %s103, %s104
    %p116 = scmp.eq.s32.totalorder %s21, 2
    %p117 = por %p115, %p116
    %p119 = scmp.ne.s32.totalorder %s104, %s118
    %p120 = scmp.eq.s32.totalorder %s21, 0
    %p121 = por %p119, %p120
    %s123 = sadd.s32 %s122, 1
    %p126 = scmp.eq.s32.totalorder %s15, 2
    %p127 = scmp.ne.s32.totalorder %s122, %s124
    %p128 = scmp.eq.s32.totalorder %s15, 0
    %p129 = por %p127, %p128
    %p130 = scmp.ne.s32.totalorder %s122, %s124
    %p131 = scmp.eq.s32.totalorder %s20, 2
    %p132 = por %p130, %p131
    %p133 = scmp.ne.s32.totalorder %s124, %s125
    %p134 = scmp.eq.s32.totalorder %s20, 0
    %p135 = por %p133, %p134
    %p136 = scmp.ne.s32.totalorder %s124, %s125
    %p137 = scmp.eq.s32.totalorder %s21, 2
    %p138 = por %p136, %p137
    %p140 = scmp.ne.s32.totalorder %s125, %s139
    %p141 = scmp.eq.s32.totalorder %s21, 0
    %p142 = por %p140, %p141
    %s144 = sadd.s32 %s143, 1
    %p147 = scmp.eq.s32.totalorder %s15, 2
    %p148 = scmp.ne.s32.totalorder %s143, %s145
    %p149 = scmp.eq.s32.totalorder %s15, 0
    %p150 = por %p148, %p149
    %p151 = scmp.ne.s32.totalorder %s143, %s145
    %p152 = scmp.eq.s32.totalorder %s20, 2
    %p153 = por %p151, %p152
    %p154 = scmp.ne.s32.totalorder %s145, %s146
    %p155 = scmp.eq.s32.totalorder %s20, 0
    %p156 = por %p154, %p155
    %p157 = scmp.ne.s32.totalorder %s145, %s146
    %p158 = scmp.eq.s32.totalorder %s21, 2
    %p159 = por %p157, %p158
    %p161 = scmp.ne.s32.totalorder %s146, %s160
    %p162 = scmp.eq.s32.totalorder %s21, 0
    %p163 = por %p161, %p162
    %s165 = sadd.s32 %s164, 1
    %p168 = scmp.eq.s32.totalorder %s15, 2
    %p169 = scmp.ne.s32.totalorder %s164, %s166
    %p170 = scmp.eq.s32.totalorder %s15, 0
    %p171 = por %p169, %p170
    %p172 = scmp.ne.s32.totalorder %s164, %s166
    %p173 = scmp.eq.s32.totalorder %s20, 2
    %p174 = por %p172, %p173
    %p175 = scmp.ne.s32.totalorder %s166, %s167
    %p176 = scmp.eq.s32.totalorder %s20, 0
    %p177 = por %p175, %p176
    %p178 = scmp.ne.s32.totalorder %s166, %s167
    %p179 = scmp.eq.s32.totalorder %s21, 2
    %p180 = por %p178, %p179
    %p182 = scmp.ne.s32.totalorder %s167, %s181
    %p183 = scmp.eq.s32.totalorder %s21, 0
    %p184 = por %p182, %p183
    %s186 = sadd.s32 %s185, 1
    %p189 = scmp.eq.s32.totalorder %s15, 2
    %p190 = scmp.ne.s32.totalorder %s185, %s187
    %p191 = scmp.eq.s32.totalorder %s15, 0
    %p192 = por %p190, %p191
    %p193 = scmp.ne.s32.totalorder %s185, %s187
    %p194 = scmp.eq.s32.totalorder %s20, 2
    %p195 = por %p193, %p194
    %p196 = scmp.ne.s32.totalorder %s187, %s188
    %p197 = scmp.eq.s32.totalorder %s20, 0
    %p198 = por %p196, %p197
    %p199 = scmp.ne.s32.totalorder %s187, %s188
    %p200 = scmp.eq.s32.totalorder %s21, 2
    %p201 = por %p199, %p200
    %p203 = scmp.ne.s32.totalorder %s188, %s202
    %p204 = scmp.eq.s32.totalorder %s21, 0
    %p205 = por %p203, %p204
    %s207 = sadd.s32 %s206, 1
    %p210 = scmp.eq.s32.totalorder %s15, 2
    %p211 = scmp.ne.s32.totalorder %s206, %s208
    %p212 = scmp.eq.s32.totalorder %s15, 0
    %p213 = por %p211, %p212
    %p214 = scmp.ne.s32.totalorder %s206, %s208
    %p215 = scmp.eq.s32.totalorder %s20, 2
    %p216 = por %p214, %p215
    %p217 = scmp.ne.s32.totalorder %s208, %s209
    %p218 = scmp.eq.s32.totalorder %s20, 0
    %p219 = por %p217, %p218
    %p220 = scmp.ne.s32.totalorder %s208, %s209
    %p221 = scmp.eq.s32.totalorder %s21, 2
    %p222 = por %p220, %p221
    %p224 = scmp.ne.s32.totalorder %s209, %s223
    %p225 = scmp.eq.s32.totalorder %s21, 0
    %p226 = por %p224, %p225
    %s228 = sadd.s32 %s227, 1
    %p231 = scmp.eq.s32.totalorder %s15, 2
    %p232 = scmp.ne.s32.totalorder %s227, %s229
    %p233 = scmp.eq.s32.totalorder %s15, 0
    %p234 = por %p232, %p233
    %p235 = scmp.ne.s32.totalorder %s227, %s229
    %p236 = scmp.eq.s32.totalorder %s20, 2
    %p237 = por %p235, %p236
    %p238 = scmp.ne.s32.totalorder %s229, %s230
    %p239 = scmp.eq.s32.totalorder %s20, 0
    %p240 = por %p238, %p239
    %p241 = scmp.ne.s32.totalorder %s229, %s230
    %p242 = scmp.eq.s32.totalorder %s21, 2
    %p243 = por %p241, %p242
    %p245 = scmp.ne.s32.totalorder %s230, %s244
    %p246 = scmp.eq.s32.totalorder %s21, 0
    %p247 = por %p245, %p246
    %p248 = scmp.le.s32.totalorder 1, %s15
    %p249 = scmp.lt.s32.totalorder %s15, 4
    %p250 = pnand %p248, %p249
    %p251 = pneg %p250
    // Predicated region
    $region9: #{gnn_layer_forward.4} parent=5 // pred_check
      _
    $region10: #{gnn_layer_forward.4} parent=5 // pred_check_branch
      %253 = sbr.rel (%p250) target = $region12
    $region11: #{gnn_layer_forward.4} parent=5 // pred_region
      %s254 = ssub.s32 %s15, 1
      // Predicated region
      $region13: #{gnn_layer_forward.4} parent=11 // pred_check
        %p255 = pneg %p114
      $region14: #{gnn_layer_forward.4} parent=11 // pred_check_branch
        %257 = sbr.rel (%p255) target = $region16
      $region15: #{gnn_layer_forward.4} parent=11 // pred_region
        _
      $region16: #{gnn_layer_forward.4} parent=11 // pred_fallthru
        _
      // Predicated region
      $region17: #{gnn_layer_forward.4} parent=11 // pred_check
        %p258 = pneg %p135
      $region18: #{gnn_layer_forward.4} parent=11 // pred_check_branch
        %260 = sbr.rel (%p258) target = $region20
      $region19: #{gnn_layer_forward.4} parent=11 // pred_region
        _
      $region20: #{gnn_layer_forward.4} parent=11 // pred_fallthru
        _
      // Predicated region
      $region21: #{gnn_layer_forward.4} parent=11 // pred_check
        %p261 = pneg %p156
      $region22: #{gnn_layer_forward.4} parent=11 // pred_check_branch
        %263 = sbr.rel (%p261) target = $region24
      $region23: #{gnn_layer_forward.4} parent=11 // pred_region
        _
      $region24: #{gnn_layer_forward.4} parent=11 // pred_fallthru
        _
      // Predicated region
      $region25: #{gnn_layer_forward.4} parent=11 // pred_check
        %p264 = pneg %p177
      $region26: #{gnn_layer_forward.4} parent=11 // pred_check_branch
        %266 = sbr.rel (%p264) target = $region28
      $region27: #{gnn_layer_forward.4} parent=11 // pred_region
        _
      $region28: #{gnn_layer_forward.4} parent=11 // pred_fallthru
        _
      // Predicated region
      $region29: #{gnn_layer_forward.4} parent=11 // pred_check
        %p267 = pneg %p198
      $region30: #{gnn_layer_forward.4} parent=11 // pred_check_branch
        %269 = sbr.rel (%p267) target = $region32
      $region31: #{gnn_layer_forward.4} parent=11 // pred_region
        _
      $region32: #{gnn_layer_forward.4} parent=11 // pred_fallthru
        _
      // Predicated region
      $region33: #{gnn_layer_forward.4} parent=11 // pred_check
        %p270 = pneg %p219
      $region34: #{gnn_layer_forward.4} parent=11 // pred_check_branch
        %272 = sbr.rel (%p270) target = $region36
      $region35: #{gnn_layer_forward.4} parent=11 // pred_region
        _
      $region36: #{gnn_layer_forward.4} parent=11 // pred_fallthru
        _
    $region12: #{gnn_layer_forward.4} parent=5 // pred_fallthru
      _
    %p273 = scmp.lt.s32.totalorder %s15, 3
    // Predicated region
    $region37: #{gnn_layer_forward.4} parent=5 // pred_check
      %p274 = pneg %p273
    $region38: #{gnn_layer_forward.4} parent=5 // pred_check_branch
      %276 = sbr.rel (%p274) target = $region40
    $region39: #{gnn_layer_forward.4} parent=5 // pred_region
      // Predicated region
      $region41: #{gnn_layer_forward.4} parent=39 // pred_check
        %p277 = pneg %p35
      $region42: #{gnn_layer_forward.4} parent=39 // pred_check_branch
        %279 = sbr.rel (%p277) target = $region44
      $region43: #{gnn_layer_forward.4} parent=39 // pred_region
        %s280 = smul.u32 64, %s15
        %p281 = scmp.lt.s32.totalorder %s280, 191
        %s282 = scalar_select %p281, %s280, 191
        %s283 = smul.addr %s282, 4
        %s284 = scalar_lea.vmem %s0, %s283
        %s285 = smul.u32 64, %s15
      $region44: #{gnn_layer_forward.4} parent=39 // pred_fallthru
        _
      // Predicated region
      $region45: #{gnn_layer_forward.4} parent=39 // pred_check
        %p286 = pneg %p61
      $region46: #{gnn_layer_forward.4} parent=39 // pred_check_branch
        %288 = sbr.rel (%p286) target = $region48
      $region47: #{gnn_layer_forward.4} parent=39 // pred_region
        %s289 = smul.u32 64, %s15
        %p290 = scmp.lt.s32.totalorder %s289, 191
        %s291 = scalar_select %p290, %s289, 191
        %s292 = smul.addr %s291, 4
        %s293 = scalar_lea.vmem %s1, %s292
        %s294 = smul.u32 64, %s15
      $region48: #{gnn_layer_forward.4} parent=39 // pred_fallthru
        _
      // Predicated region
      $region49: #{gnn_layer_forward.4} parent=39 // pred_check
        %p295 = pneg %p87
      $region50: #{gnn_layer_forward.4} parent=39 // pred_check_branch
        %297 = sbr.rel (%p295) target = $region52
      $region51: #{gnn_layer_forward.4} parent=39 // pred_region
        %s298 = smul.u32 64, %s15
        %p299 = scmp.lt.s32.totalorder %s298, 191
        %s300 = scalar_select %p299, %s298, 191
        %s301 = smul.addr %s300, 8
        %s302 = scalar_lea.vmem %s2, %s301
        %s303 = smul.u32 64, %s15
      $region52: #{gnn_layer_forward.4} parent=39 // pred_fallthru
        _
    $region40: #{gnn_layer_forward.4} parent=5 // pred_fallthru
      _
    %p304 = scmp.le.s32.totalorder 1, %s15
    %p305 = scmp.lt.s32.totalorder %s15, 4
    %p306 = pnand %p304, %p305
    %p307 = pneg %p306
    // Predicated region
    $region53: #{gnn_layer_forward.4} parent=5 // pred_check
      _
    $region54: #{gnn_layer_forward.4} parent=5 // pred_check_branch
      %309 = sbr.rel (%p306) target = $region56
    $region55: #{gnn_layer_forward.4} parent=5 // pred_region
      %s310 = ssub.s32 %s15, 1
      %s311 = smul.u32 64, %s20
      %p312 = scmp.lt.s32.totalorder %s311, 191
      %s313 = scalar_select %p312, %s311, 191
      %s314 = smul.addr %s313, 4
      %s315 = scalar_lea.vmem %s0, %s314
      %p316 = pneg %p41
      %p317 = pneg %p38
      %s318 = smul.u32 64, %s20
      %p319 = scmp.lt.s32.totalorder %s318, 191
      %s320 = scalar_select %p319, %s318, 191
      %s321 = smul.addr %s320, 4
      %s322 = scalar_lea.vmem %s1, %s321
      %p323 = pneg %p67
      %p324 = pneg %p64
      %s325 = smul.u32 64, %s20
      %p326 = scmp.lt.s32.totalorder %s325, 191
      %s327 = scalar_select %p326, %s325, 191
      %s328 = smul.addr %s327, 8
      %s329 = scalar_lea.vmem %s2, %s328
      %p330 = pneg %p93
      %p331 = pneg %p90
      %p332 = pneg %p114
      %p333 = pneg %p111
      %p334 = pneg %p135
      %p335 = pneg %p132
      %p336 = pneg %p156
      %p337 = pneg %p153
      %p338 = pneg %p177
      %p339 = pneg %p174
      %p340 = pneg %p198
      %p341 = pneg %p195
      %p342 = pneg %p219
      %p343 = pneg %p216
      %p344 = pneg %p240
      %p345 = pneg %p237
      %s346 = smul.u32 64, %s20
      %p347 = scmp.lt.s32.totalorder %s346, 191
      %s348 = scalar_select %p347, %s346, 191
      %s349 = smul.addr %s348, 4
      %s350 = scalar_lea.vmem %s0, %s349
      %s351 = smul.u32 64, %s20
      %s352 = smul.u32 64, %s20
      %p353 = scmp.lt.s32.totalorder %s352, 191
      %s354 = scalar_select %p353, %s352, 191
      %s355 = smul.addr %s354, 4
      %s356 = scalar_lea.vmem %s1, %s355
      %s357 = smul.u32 64, %s20
      %s358 = smul.u32 64, %s20
      %p359 = scmp.lt.s32.totalorder %s358, 191
      %s360 = scalar_select %p359, %s358, 191
      %s361 = smul.addr %s360, 8
      %s362 = scalar_lea.vmem %s2, %s361
      %s363 = smul.u32 64, %s20
      %p364 = scmp.eq.s32.totalorder %s20, 0
      // Predicated region
      $region57: #{gnn_layer_forward.4} parent=55 // pred_check
        %p365 = pneg %p364
      $region58: #{gnn_layer_forward.4} parent=55 // pred_check_branch
        %367 = sbr.rel (%p365) target = $region60
      $region59: #{gnn_layer_forward.4} parent=55 // pred_region
        %368 = vst [vmem:[%s9] sm:$0xff] 0.0
        %369 = vst [vmem:[%s9 + $0x8] sm:$0xff] 0.0
        %370 = vst [vmem:[%s9 + $0x10] sm:$0xff] 0.0
        %371 = vst [vmem:[%s9 + $0x18] sm:$0xff] 0.0
        %372 = vst [vmem:[%s9 + $0x20] sm:$0xff] 0.0
        %373 = vst [vmem:[%s9 + $0x28] sm:$0xff] 0.0
        %374 = vst [vmem:[%s9 + $0x30] sm:$0xff] 0.0
        %375 = vst [vmem:[%s9 + $0x38] sm:$0xff] 0.0
        %376 = vst [vmem:[%s9 + $0x40] sm:$0xff] 0.0
        %377 = vst [vmem:[%s9 + $0x48] sm:$0xff] 0.0
        %378 = vst [vmem:[%s9 + $0x50] sm:$0xff] 0.0
        %379 = vst [vmem:[%s9 + $0x58] sm:$0xff] 0.0
        %380 = vst [vmem:[%s9 + $0x60] sm:$0xff] 0.0
        %381 = vst [vmem:[%s9 + $0x68] sm:$0xff] 0.0
        %382 = vst [vmem:[%s9 + $0x70] sm:$0xff] 0.0
        %383 = vst [vmem:[%s9 + $0x78] sm:$0xff] 0.0
      $region60: #{gnn_layer_forward.4} parent=55 // pred_fallthru
        _
      %v384 = vld [vmem:[%s362] sm:$0xff]
      %v385 = vld [vmem:[%s362 + $0x8] sm:$0xff]
      %v386 = vld [vmem:[%s362 + $0x10] sm:$0xff]
      %v387 = vld [vmem:[%s362 + $0x18] sm:$0xff]
      %v388 = vld [vmem:[%s362 + $0x20] sm:$0xff]
      %v389 = vld [vmem:[%s362 + $0x28] sm:$0xff]
      %v390 = vld [vmem:[%s362 + $0x30] sm:$0xff]
      %v391 = vld [vmem:[%s362 + $0x38] sm:$0xff]
      %v392 = vld [vmem:[%s362 + $0x40] sm:$0xff]
      %v393 = vld [vmem:[%s362 + $0x48] sm:$0xff]
      %v394 = vld [vmem:[%s362 + $0x50] sm:$0xff]
      %v395 = vld [vmem:[%s362 + $0x58] sm:$0xff]
      %v396 = vld [vmem:[%s362 + $0x60] sm:$0xff]
      %v397 = vld [vmem:[%s362 + $0x68] sm:$0xff]
      %v398 = vld [vmem:[%s362 + $0x70] sm:$0xff]
      %v399 = vld [vmem:[%s362 + $0x78] sm:$0xff]
      %v400 = vld [vmem:[%s362 + $0x80] sm:$0xff]
      %v401 = vld [vmem:[%s362 + $0x88] sm:$0xff]
      %v402 = vld [vmem:[%s362 + $0x90] sm:$0xff]
      %v403 = vld [vmem:[%s362 + $0x98] sm:$0xff]
      %v404 = vld [vmem:[%s362 + $0xa0] sm:$0xff]
      %v405 = vld [vmem:[%s362 + $0xa8] sm:$0xff]
      %v406 = vld [vmem:[%s362 + $0xb0] sm:$0xff]
      %v407 = vld [vmem:[%s362 + $0xb8] sm:$0xff]
      %v408 = vld [vmem:[%s362 + $0xc0] sm:$0xff]
      %v409 = vld [vmem:[%s362 + $0xc8] sm:$0xff]
      %v410 = vld [vmem:[%s362 + $0xd0] sm:$0xff]
      %v411 = vld [vmem:[%s362 + $0xd8] sm:$0xff]
      %v412 = vld [vmem:[%s362 + $0xe0] sm:$0xff]
      %v413 = vld [vmem:[%s362 + $0xe8] sm:$0xff]
      %v414 = vld [vmem:[%s362 + $0xf0] sm:$0xff]
      %v415 = vld [vmem:[%s362 + $0xf8] sm:$0xff]
      %v416 = vld [vmem:[%s362 + $0x100] sm:$0xff]
      %v417 = vld [vmem:[%s362 + $0x108] sm:$0xff]
      %v418 = vld [vmem:[%s362 + $0x110] sm:$0xff]
      %v419 = vld [vmem:[%s362 + $0x118] sm:$0xff]
      %v420 = vld [vmem:[%s362 + $0x120] sm:$0xff]
      %v421 = vld [vmem:[%s362 + $0x128] sm:$0xff]
      %v422 = vld [vmem:[%s362 + $0x130] sm:$0xff]
      %v423 = vld [vmem:[%s362 + $0x138] sm:$0xff]
      %v424 = vld [vmem:[%s362 + $0x140] sm:$0xff]
      %v425 = vld [vmem:[%s362 + $0x148] sm:$0xff]
      %v426 = vld [vmem:[%s362 + $0x150] sm:$0xff]
      %v427 = vld [vmem:[%s362 + $0x158] sm:$0xff]
      %v428 = vld [vmem:[%s362 + $0x160] sm:$0xff]
      %v429 = vld [vmem:[%s362 + $0x168] sm:$0xff]
      %v430 = vld [vmem:[%s362 + $0x170] sm:$0xff]
      %v431 = vld [vmem:[%s362 + $0x178] sm:$0xff]
      %v432 = vld [vmem:[%s362 + $0x180] sm:$0xff]
      %v433 = vld [vmem:[%s362 + $0x188] sm:$0xff]
      %v434 = vld [vmem:[%s362 + $0x190] sm:$0xff]
      %v435 = vld [vmem:[%s362 + $0x198] sm:$0xff]
      %v436 = vld [vmem:[%s362 + $0x1a0] sm:$0xff]
      %v437 = vld [vmem:[%s362 + $0x1a8] sm:$0xff]
      %v438 = vld [vmem:[%s362 + $0x1b0] sm:$0xff]
      %v439 = vld [vmem:[%s362 + $0x1b8] sm:$0xff]
      %v440 = vld [vmem:[%s362 + $0x1c0] sm:$0xff]
      %v441 = vld [vmem:[%s362 + $0x1c8] sm:$0xff]
      %v442 = vld [vmem:[%s362 + $0x1d0] sm:$0xff]
      %v443 = vld [vmem:[%s362 + $0x1d8] sm:$0xff]
      %v444 = vld [vmem:[%s362 + $0x1e0] sm:$0xff]
      %v445 = vld [vmem:[%s362 + $0x1e8] sm:$0xff]
      %v446 = vld [vmem:[%s362 + $0x1f0] sm:$0xff]
      %v447 = vld [vmem:[%s362 + $0x1f8] sm:$0xff]
      %v448 = vcvt.f32.s32.to.zero.pseudo %v384
      %v449 = vcvt.f32.s32.to.zero.pseudo %v385
      %v450 = vcvt.f32.s32.to.zero.pseudo %v386
      %v451 = vcvt.f32.s32.to.zero.pseudo %v387
      %v452 = vcvt.f32.s32.to.zero.pseudo %v388
      %v453 = vcvt.f32.s32.to.zero.pseudo %v389
      %v454 = vcvt.f32.s32.to.zero.pseudo %v390
      %v455 = vcvt.f32.s32.to.zero.pseudo %v391
      %v456 = vcvt.f32.s32.to.zero.pseudo %v392
      %v457 = vcvt.f32.s32.to.zero.pseudo %v393
      %v458 = vcvt.f32.s32.to.zero.pseudo %v394
      %v459 = vcvt.f32.s32.to.zero.pseudo %v395
      %v460 = vcvt.f32.s32.to.zero.pseudo %v396
      %v461 = vcvt.f32.s32.to.zero.pseudo %v397
      %v462 = vcvt.f32.s32.to.zero.pseudo %v398
      %v463 = vcvt.f32.s32.to.zero.pseudo %v399
      %v464 = vcvt.f32.s32.to.zero.pseudo %v400
      %v465 = vcvt.f32.s32.to.zero.pseudo %v401
      %v466 = vcvt.f32.s32.to.zero.pseudo %v402
      %v467 = vcvt.f32.s32.to.zero.pseudo %v403
      %v468 = vcvt.f32.s32.to.zero.pseudo %v404
      %v469 = vcvt.f32.s32.to.zero.pseudo %v405
      %v470 = vcvt.f32.s32.to.zero.pseudo %v406
      %v471 = vcvt.f32.s32.to.zero.pseudo %v407
      %v472 = vcvt.f32.s32.to.zero.pseudo %v408
      %v473 = vcvt.f32.s32.to.zero.pseudo %v409
      %v474 = vcvt.f32.s32.to.zero.pseudo %v410
      %v475 = vcvt.f32.s32.to.zero.pseudo %v411
      %v476 = vcvt.f32.s32.to.zero.pseudo %v412
      %v477 = vcvt.f32.s32.to.zero.pseudo %v413
      %v478 = vcvt.f32.s32.to.zero.pseudo %v414
      %v479 = vcvt.f32.s32.to.zero.pseudo %v415
      %v480 = vcvt.f32.s32.to.zero.pseudo %v416
      %v481 = vcvt.f32.s32.to.zero.pseudo %v417
      %v482 = vcvt.f32.s32.to.zero.pseudo %v418
      %v483 = vcvt.f32.s32.to.zero.pseudo %v419
      %v484 = vcvt.f32.s32.to.zero.pseudo %v420
      %v485 = vcvt.f32.s32.to.zero.pseudo %v421
      %v486 = vcvt.f32.s32.to.zero.pseudo %v422
      %v487 = vcvt.f32.s32.to.zero.pseudo %v423
      %v488 = vcvt.f32.s32.to.zero.pseudo %v424
      %v489 = vcvt.f32.s32.to.zero.pseudo %v425
      %v490 = vcvt.f32.s32.to.zero.pseudo %v426
      %v491 = vcvt.f32.s32.to.zero.pseudo %v427
      %v492 = vcvt.f32.s32.to.zero.pseudo %v428
      %v493 = vcvt.f32.s32.to.zero.pseudo %v429
      %v494 = vcvt.f32.s32.to.zero.pseudo %v430
      %v495 = vcvt.f32.s32.to.zero.pseudo %v431
      %v496 = vcvt.f32.s32.to.zero.pseudo %v432
      %v497 = vcvt.f32.s32.to.zero.pseudo %v433
      %v498 = vcvt.f32.s32.to.zero.pseudo %v434
      %v499 = vcvt.f32.s32.to.zero.pseudo %v435
      %v500 = vcvt.f32.s32.to.zero.pseudo %v436
      %v501 = vcvt.f32.s32.to.zero.pseudo %v437
      %v502 = vcvt.f32.s32.to.zero.pseudo %v438
      %v503 = vcvt.f32.s32.to.zero.pseudo %v439
      %v504 = vcvt.f32.s32.to.zero.pseudo %v440
      %v505 = vcvt.f32.s32.to.zero.pseudo %v441
      %v506 = vcvt.f32.s32.to.zero.pseudo %v442
      %v507 = vcvt.f32.s32.to.zero.pseudo %v443
      %v508 = vcvt.f32.s32.to.zero.pseudo %v444
      %v509 = vcvt.f32.s32.to.zero.pseudo %v445
      %v510 = vcvt.f32.s32.to.zero.pseudo %v446
      %v511 = vcvt.f32.s32.to.zero.pseudo %v447
      %v512 = vld [vmem:[%s350] sm:$0xf]
      %v513 = vld [vmem:[%s350 + $0x4] sm:$0xf]
      %v514 = vld [vmem:[%s350 + $0x8] sm:$0xf]
      %v515 = vld [vmem:[%s350 + $0xc] sm:$0xf]
      %v516 = vld [vmem:[%s350 + $0x10] sm:$0xf]
      %v517 = vld [vmem:[%s350 + $0x14] sm:$0xf]
      %v518 = vld [vmem:[%s350 + $0x18] sm:$0xf]
      %v519 = vld [vmem:[%s350 + $0x1c] sm:$0xf]
      %v520 = vld [vmem:[%s350 + $0x20] sm:$0xf]
      %v521 = vld [vmem:[%s350 + $0x24] sm:$0xf]
      %v522 = vld [vmem:[%s350 + $0x28] sm:$0xf]
      %v523 = vld [vmem:[%s350 + $0x2c] sm:$0xf]
      %v524 = vld [vmem:[%s350 + $0x30] sm:$0xf]
      %v525 = vld [vmem:[%s350 + $0x34] sm:$0xf]
      %v526 = vld [vmem:[%s350 + $0x38] sm:$0xf]
      %v527 = vld [vmem:[%s350 + $0x3c] sm:$0xf]
      %v528 = vld [vmem:[%s350 + $0x40] sm:$0xf]
      %v529 = vld [vmem:[%s350 + $0x44] sm:$0xf]
      %v530 = vld [vmem:[%s350 + $0x48] sm:$0xf]
      %v531 = vld [vmem:[%s350 + $0x4c] sm:$0xf]
      %v532 = vld [vmem:[%s350 + $0x50] sm:$0xf]
      %v533 = vld [vmem:[%s350 + $0x54] sm:$0xf]
      %v534 = vld [vmem:[%s350 + $0x58] sm:$0xf]
      %v535 = vld [vmem:[%s350 + $0x5c] sm:$0xf]
      %v536 = vld [vmem:[%s350 + $0x60] sm:$0xf]
      %v537 = vld [vmem:[%s350 + $0x64] sm:$0xf]
      %v538 = vld [vmem:[%s350 + $0x68] sm:$0xf]
      %v539 = vld [vmem:[%s350 + $0x6c] sm:$0xf]
      %v540 = vld [vmem:[%s350 + $0x70] sm:$0xf]
      %v541 = vld [vmem:[%s350 + $0x74] sm:$0xf]
      %v542 = vld [vmem:[%s350 + $0x78] sm:$0xf]
      %v543 = vld [vmem:[%s350 + $0x7c] sm:$0xf]
      %v544 = vld [vmem:[%s350 + $0x80] sm:$0xf]
      %v545 = vld [vmem:[%s350 + $0x84] sm:$0xf]
      %v546 = vld [vmem:[%s350 + $0x88] sm:$0xf]
      %v547 = vld [vmem:[%s350 + $0x8c] sm:$0xf]
      %v548 = vld [vmem:[%s350 + $0x90] sm:$0xf]
      %v549 = vld [vmem:[%s350 + $0x94] sm:$0xf]
      %v550 = vld [vmem:[%s350 + $0x98] sm:$0xf]
      %v551 = vld [vmem:[%s350 + $0x9c] sm:$0xf]
      %v552 = vld [vmem:[%s350 + $0xa0] sm:$0xf]
      %v553 = vld [vmem:[%s350 + $0xa4] sm:$0xf]
      %v554 = vld [vmem:[%s350 + $0xa8] sm:$0xf]
      %v555 = vld [vmem:[%s350 + $0xac] sm:$0xf]
      %v556 = vld [vmem:[%s350 + $0xb0] sm:$0xf]
      %v557 = vld [vmem:[%s350 + $0xb4] sm:$0xf]
      %v558 = vld [vmem:[%s350 + $0xb8] sm:$0xf]
      %v559 = vld [vmem:[%s350 + $0xbc] sm:$0xf]
      %v560 = vld [vmem:[%s350 + $0xc0] sm:$0xf]
      %v561 = vld [vmem:[%s350 + $0xc4] sm:$0xf]
      %v562 = vld [vmem:[%s350 + $0xc8] sm:$0xf]
      %v563 = vld [vmem:[%s350 + $0xcc] sm:$0xf]
      %v564 = vld [vmem:[%s350 + $0xd0] sm:$0xf]
      %v565 = vld [vmem:[%s350 + $0xd4] sm:$0xf]
      %v566 = vld [vmem:[%s350 + $0xd8] sm:$0xf]
      %v567 = vld [vmem:[%s350 + $0xdc] sm:$0xf]
      %v568 = vld [vmem:[%s350 + $0xe0] sm:$0xf]
      %v569 = vld [vmem:[%s350 + $0xe4] sm:$0xf]
      %v570 = vld [vmem:[%s350 + $0xe8] sm:$0xf]
      %v571 = vld [vmem:[%s350 + $0xec] sm:$0xf]
      %v572 = vld [vmem:[%s350 + $0xf0] sm:$0xf]
      %v573 = vld [vmem:[%s350 + $0xf4] sm:$0xf]
      %v574 = vld [vmem:[%s350 + $0xf8] sm:$0xf]
      %v575 = vld [vmem:[%s350 + $0xfc] sm:$0xf]
      %v576 = vunpack.c.l.bf16 %v512
      %v577 = vunpack.c.l.bf16 %v513
      %v578 = vunpack.c.l.bf16 %v514
      %v579 = vunpack.c.l.bf16 %v515
      %v580 = vunpack.c.l.bf16 %v516
      %v581 = vunpack.c.l.bf16 %v517
      %v582 = vunpack.c.l.bf16 %v518
      %v583 = vunpack.c.l.bf16 %v519
      %v584 = vunpack.c.l.bf16 %v520
      %v585 = vunpack.c.l.bf16 %v521
      %v586 = vunpack.c.l.bf16 %v522
      %v587 = vunpack.c.l.bf16 %v523
      %v588 = vunpack.c.l.bf16 %v524
      %v589 = vunpack.c.l.bf16 %v525
      %v590 = vunpack.c.l.bf16 %v526
      %v591 = vunpack.c.l.bf16 %v527
      %v592 = vunpack.c.l.bf16 %v528
      %v593 = vunpack.c.l.bf16 %v529
      %v594 = vunpack.c.l.bf16 %v530
      %v595 = vunpack.c.l.bf16 %v531
      %v596 = vunpack.c.l.bf16 %v532
      %v597 = vunpack.c.l.bf16 %v533
      %v598 = vunpack.c.l.bf16 %v534
      %v599 = vunpack.c.l.bf16 %v535
      %v600 = vunpack.c.l.bf16 %v536
      %v601 = vunpack.c.l.bf16 %v537
      %v602 = vunpack.c.l.bf16 %v538
      %v603 = vunpack.c.l.bf16 %v539
      %v604 = vunpack.c.l.bf16 %v540
      %v605 = vunpack.c.l.bf16 %v541
      %v606 = vunpack.c.l.bf16 %v542
      %v607 = vunpack.c.l.bf16 %v543
      %v608 = vunpack.c.l.bf16 %v544
      %v609 = vunpack.c.l.bf16 %v545
      %v610 = vunpack.c.l.bf16 %v546
      %v611 = vunpack.c.l.bf16 %v547
      %v612 = vunpack.c.l.bf16 %v548
      %v613 = vunpack.c.l.bf16 %v549
      %v614 = vunpack.c.l.bf16 %v550
      %v615 = vunpack.c.l.bf16 %v551
      %v616 = vunpack.c.l.bf16 %v552
      %v617 = vunpack.c.l.bf16 %v553
      %v618 = vunpack.c.l.bf16 %v554
      %v619 = vunpack.c.l.bf16 %v555
      %v620 = vunpack.c.l.bf16 %v556
      %v621 = vunpack.c.l.bf16 %v557
      %v622 = vunpack.c.l.bf16 %v558
      %v623 = vunpack.c.l.bf16 %v559
      %v624 = vunpack.c.l.bf16 %v560
      %v625 = vunpack.c.l.bf16 %v561
      %v626 = vunpack.c.l.bf16 %v562
      %v627 = vunpack.c.l.bf16 %v563
      %v628 = vunpack.c.l.bf16 %v564
      %v629 = vunpack.c.l.bf16 %v565
      %v630 = vunpack.c.l.bf16 %v566
      %v631 = vunpack.c.l.bf16 %v567
      %v632 = vunpack.c.l.bf16 %v568
      %v633 = vunpack.c.l.bf16 %v569
      %v634 = vunpack.c.l.bf16 %v570
      %v635 = vunpack.c.l.bf16 %v571
      %v636 = vunpack.c.l.bf16 %v572
      %v637 = vunpack.c.l.bf16 %v573
      %v638 = vunpack.c.l.bf16 %v574
      %v639 = vunpack.c.l.bf16 %v575
      %v640 = vld [vmem:[%s356] sm:$0xf]
      %v641 = vld [vmem:[%s356 + $0x4] sm:$0xf]
      %v642 = vld [vmem:[%s356 + $0x8] sm:$0xf]
      %v643 = vld [vmem:[%s356 + $0xc] sm:$0xf]
      %v644 = vld [vmem:[%s356 + $0x10] sm:$0xf]
      %v645 = vld [vmem:[%s356 + $0x14] sm:$0xf]
      %v646 = vld [vmem:[%s356 + $0x18] sm:$0xf]
      %v647 = vld [vmem:[%s356 + $0x1c] sm:$0xf]
      %v648 = vld [vmem:[%s356 + $0x20] sm:$0xf]
      %v649 = vld [vmem:[%s356 + $0x24] sm:$0xf]
      %v650 = vld [vmem:[%s356 + $0x28] sm:$0xf]
      %v651 = vld [vmem:[%s356 + $0x2c] sm:$0xf]
      %v652 = vld [vmem:[%s356 + $0x30] sm:$0xf]
      %v653 = vld [vmem:[%s356 + $0x34] sm:$0xf]
      %v654 = vld [vmem:[%s356 + $0x38] sm:$0xf]
      %v655 = vld [vmem:[%s356 + $0x3c] sm:$0xf]
      %v656 = vld [vmem:[%s356 + $0x40] sm:$0xf]
      %v657 = vld [vmem:[%s356 + $0x44] sm:$0xf]
      %v658 = vld [vmem:[%s356 + $0x48] sm:$0xf]
      %v659 = vld [vmem:[%s356 + $0x4c] sm:$0xf]
      %v660 = vld [vmem:[%s356 + $0x50] sm:$0xf]
      %v661 = vld [vmem:[%s356 + $0x54] sm:$0xf]
      %v662 = vld [vmem:[%s356 + $0x58] sm:$0xf]
      %v663 = vld [vmem:[%s356 + $0x5c] sm:$0xf]
      %v664 = vld [vmem:[%s356 + $0x60] sm:$0xf]
      %v665 = vld [vmem:[%s356 + $0x64] sm:$0xf]
      %v666 = vld [vmem:[%s356 + $0x68] sm:$0xf]
      %v667 = vld [vmem:[%s356 + $0x6c] sm:$0xf]
      %v668 = vld [vmem:[%s356 + $0x70] sm:$0xf]
      %v669 = vld [vmem:[%s356 + $0x74] sm:$0xf]
      %v670 = vld [vmem:[%s356 + $0x78] sm:$0xf]
      %v671 = vld [vmem:[%s356 + $0x7c] sm:$0xf]
      %v672 = vld [vmem:[%s356 + $0x80] sm:$0xf]
      %v673 = vld [vmem:[%s356 + $0x84] sm:$0xf]
      %v674 = vld [vmem:[%s356 + $0x88] sm:$0xf]
      %v675 = vld [vmem:[%s356 + $0x8c] sm:$0xf]
      %v676 = vld [vmem:[%s356 + $0x90] sm:$0xf]
      %v677 = vld [vmem:[%s356 + $0x94] sm:$0xf]
      %v678 = vld [vmem:[%s356 + $0x98] sm:$0xf]
      %v679 = vld [vmem:[%s356 + $0x9c] sm:$0xf]
      %v680 = vld [vmem:[%s356 + $0xa0] sm:$0xf]
      %v681 = vld [vmem:[%s356 + $0xa4] sm:$0xf]
      %v682 = vld [vmem:[%s356 + $0xa8] sm:$0xf]
      %v683 = vld [vmem:[%s356 + $0xac] sm:$0xf]
      %v684 = vld [vmem:[%s356 + $0xb0] sm:$0xf]
      %v685 = vld [vmem:[%s356 + $0xb4] sm:$0xf]
      %v686 = vld [vmem:[%s356 + $0xb8] sm:$0xf]
      %v687 = vld [vmem:[%s356 + $0xbc] sm:$0xf]
      %v688 = vld [vmem:[%s356 + $0xc0] sm:$0xf]
      %v689 = vld [vmem:[%s356 + $0xc4] sm:$0xf]
      %v690 = vld [vmem:[%s356 + $0xc8] sm:$0xf]
      %v691 = vld [vmem:[%s356 + $0xcc] sm:$0xf]
      %v692 = vld [vmem:[%s356 + $0xd0] sm:$0xf]
      %v693 = vld [vmem:[%s356 + $0xd4] sm:$0xf]
      %v694 = vld [vmem:[%s356 + $0xd8] sm:$0xf]
      %v695 = vld [vmem:[%s356 + $0xdc] sm:$0xf]
      %v696 = vld [vmem:[%s356 + $0xe0] sm:$0xf]
      %v697 = vld [vmem:[%s356 + $0xe4] sm:$0xf]
      %v698 = vld [vmem:[%s356 + $0xe8] sm:$0xf]
      %v699 = vld [vmem:[%s356 + $0xec] sm:$0xf]
      %v700 = vld [vmem:[%s356 + $0xf0] sm:$0xf]
      %v701 = vld [vmem:[%s356 + $0xf4] sm:$0xf]
      %v702 = vld [vmem:[%s356 + $0xf8] sm:$0xf]
      %v703 = vld [vmem:[%s356 + $0xfc] sm:$0xf]
      %v704 = vld [vmem:[%s3] sm:$0xf]
      %v705 = vld [vmem:[%s3 + $0x4] sm:$0xf]
      %v706 = vld [vmem:[%s3 + $0x8] sm:$0xf]
      %v707 = vld [vmem:[%s3 + $0xc] sm:$0xf]
      %v708 = vld [vmem:[%s3 + $0x10] sm:$0xf]
      %v709 = vld [vmem:[%s3 + $0x14] sm:$0xf]
      %v710 = vld [vmem:[%s3 + $0x18] sm:$0xf]
      %v711 = vld [vmem:[%s3 + $0x1c] sm:$0xf]
      %v712 = vld [vmem:[%s3 + $0x20] sm:$0xf]
      %v713 = vld [vmem:[%s3 + $0x24] sm:$0xf]
      %v714 = vld [vmem:[%s3 + $0x28] sm:$0xf]
      %v715 = vld [vmem:[%s3 + $0x2c] sm:$0xf]
      %v716 = vld [vmem:[%s3 + $0x30] sm:$0xf]
      %v717 = vld [vmem:[%s3 + $0x34] sm:$0xf]
      %v718 = vld [vmem:[%s3 + $0x38] sm:$0xf]
      %v719 = vld [vmem:[%s3 + $0x3c] sm:$0xf]
      %v784 = vunpack.c.l.b16 %v640
      %v785 = vunpack.c.l.b16 %v641
      %v786 = vunpack.c.l.b16 %v642
      %v787 = vunpack.c.l.b16 %v643
      %v788 = vunpack.c.l.b16 %v644
      %v789 = vunpack.c.l.b16 %v645
      %v790 = vunpack.c.l.b16 %v646
      %v791 = vunpack.c.l.b16 %v647
      %v792 = vunpack.c.l.b16 %v648
      %v793 = vunpack.c.l.b16 %v649
      %v794 = vunpack.c.l.b16 %v650
      %v795 = vunpack.c.l.b16 %v651
      %v796 = vunpack.c.l.b16 %v652
      %v797 = vunpack.c.l.b16 %v653
      %v798 = vunpack.c.l.b16 %v654
      %v799 = vunpack.c.l.b16 %v655
      %v800 = vunpack.c.l.b16 %v656
      %v801 = vunpack.c.l.b16 %v657
      %v802 = vunpack.c.l.b16 %v658
      %v803 = vunpack.c.l.b16 %v659
      %v804 = vunpack.c.l.b16 %v660
      %v805 = vunpack.c.l.b16 %v661
      %v806 = vunpack.c.l.b16 %v662
      %v807 = vunpack.c.l.b16 %v663
      %v808 = vunpack.c.l.b16 %v664
      %v809 = vunpack.c.l.b16 %v665
      %v810 = vunpack.c.l.b16 %v666
      %v811 = vunpack.c.l.b16 %v667
      %v812 = vunpack.c.l.b16 %v668
      %v813 = vunpack.c.l.b16 %v669
      %v814 = vunpack.c.l.b16 %v670
      %v815 = vunpack.c.l.b16 %v671
      %v816 = vunpack.c.l.b16 %v672
      %v817 = vunpack.c.l.b16 %v673
      %v818 = vunpack.c.l.b16 %v674
      %v819 = vunpack.c.l.b16 %v675
      %v820 = vunpack.c.l.b16 %v676
      %v821 = vunpack.c.l.b16 %v677
      %v822 = vunpack.c.l.b16 %v678
      %v823 = vunpack.c.l.b16 %v679
      %v824 = vunpack.c.l.b16 %v680
      %v825 = vunpack.c.l.b16 %v681
      %v826 = vunpack.c.l.b16 %v682
      %v827 = vunpack.c.l.b16 %v683
      %v828 = vunpack.c.l.b16 %v684
      %v829 = vunpack.c.l.b16 %v685
      %v830 = vunpack.c.l.b16 %v686
      %v831 = vunpack.c.l.b16 %v687
      %v832 = vunpack.c.l.b16 %v688
      %v833 = vunpack.c.l.b16 %v689
      %v834 = vunpack.c.l.b16 %v690
      %v835 = vunpack.c.l.b16 %v691
      %v836 = vunpack.c.l.b16 %v692
      %v837 = vunpack.c.l.b16 %v693
      %v838 = vunpack.c.l.b16 %v694
      %v839 = vunpack.c.l.b16 %v695
      %v840 = vunpack.c.l.b16 %v696
      %v841 = vunpack.c.l.b16 %v697
      %v842 = vunpack.c.l.b16 %v698
      %v843 = vunpack.c.l.b16 %v699
      %v844 = vunpack.c.l.b16 %v700
      %v845 = vunpack.c.l.b16 %v701
      %v846 = vunpack.c.l.b16 %v702
      %v847 = vunpack.c.l.b16 %v703
      %v848 = vpack.c.b16 %v785, %v784
      %v849 = vpack.c.b16 %v787, %v786
      %v850 = vpack.c.b16 %v789, %v788
      %v851 = vpack.c.b16 %v791, %v790
      %v852 = vpack.c.b16 %v793, %v792
      %v853 = vpack.c.b16 %v795, %v794
      %v854 = vpack.c.b16 %v797, %v796
      %v855 = vpack.c.b16 %v799, %v798
      %v856 = vpack.c.b16 %v801, %v800
      %v857 = vpack.c.b16 %v803, %v802
      %v858 = vpack.c.b16 %v805, %v804
      %v859 = vpack.c.b16 %v807, %v806
      %v860 = vpack.c.b16 %v809, %v808
      %v861 = vpack.c.b16 %v811, %v810
      %v862 = vpack.c.b16 %v813, %v812
      %v863 = vpack.c.b16 %v815, %v814
      %v864 = vpack.c.b16 %v817, %v816
      %v865 = vpack.c.b16 %v819, %v818
      %v866 = vpack.c.b16 %v821, %v820
      %v867 = vpack.c.b16 %v823, %v822
      %v868 = vpack.c.b16 %v825, %v824
      %v869 = vpack.c.b16 %v827, %v826
      %v870 = vpack.c.b16 %v829, %v828
      %v871 = vpack.c.b16 %v831, %v830
      %v872 = vpack.c.b16 %v833, %v832
      %v873 = vpack.c.b16 %v835, %v834
      %v874 = vpack.c.b16 %v837, %v836
      %v875 = vpack.c.b16 %v839, %v838
      %v876 = vpack.c.b16 %v841, %v840
      %v877 = vpack.c.b16 %v843, %v842
      %v878 = vpack.c.b16 %v845, %v844
      %v879 = vpack.c.b16 %v847, %v846
      %v928 = vunpack.c.l.b16 %v704
      %v929 = vunpack.c.l.b16 %v705
      %v930 = vunpack.c.l.b16 %v706
      %v931 = vunpack.c.l.b16 %v707
      %v932 = vunpack.c.l.b16 %v708
      %v933 = vunpack.c.l.b16 %v709
      %v934 = vunpack.c.l.b16 %v710
      %v935 = vunpack.c.l.b16 %v711
      %v936 = vunpack.c.l.b16 %v712
      %v937 = vunpack.c.l.b16 %v713
      %v938 = vunpack.c.l.b16 %v714
      %v939 = vunpack.c.l.b16 %v715
      %v940 = vunpack.c.l.b16 %v716
      %v941 = vunpack.c.l.b16 %v717
      %v942 = vunpack.c.l.b16 %v718
      %v943 = vunpack.c.l.b16 %v719
      %v944 = vpack.c.b16 %v929, %v928
      %v945 = vpack.c.b16 %v931, %v930
      %v946 = vpack.c.b16 %v933, %v932
      %v947 = vpack.c.b16 %v935, %v934
      %v948 = vpack.c.b16 %v937, %v936
      %v949 = vpack.c.b16 %v939, %v938
      %v950 = vpack.c.b16 %v941, %v940
      %v951 = vpack.c.b16 %v943, %v942
      %960 = vmatpush.bf16.msra.mxu0 %v951
      %961 = vmatpush.bf16.msra.mxu0 %v950
      %962 = vmatpush.bf16.msra.mxu0 %v949
      %963 = vmatpush.bf16.msra.mxu0 %v948
      %964 = vmatpush.bf16.msra.mxu0 %v947
      %965 = vmatpush.bf16.msra.mxu0 %v946
      %966 = vmatpush.bf16.msra.mxu0 %v945
      %967 = vmatpush.bf16.msra.mxu0 %v944
      %968 = vmatmul.bf16.gmra.mxu0 %v848
      %v969 = vpop.f32.mrf.mxu0
      %v970 = vadd.f32 0.0, %v969
      %v971 = vpop.f32.mrf.mxu0
      %v972 = vadd.f32 0.0, %v971
      %973 = vmatmul.bf16.gmra.mxu0 %v849
      %v974 = vpop.f32.mrf.mxu0
      %v975 = vadd.f32 0.0, %v974
      %v976 = vpop.f32.mrf.mxu0
      %v977 = vadd.f32 0.0, %v976
      %978 = vmatmul.bf16.gmra.mxu0 %v850
      %v979 = vpop.f32.mrf.mxu0
      %v980 = vadd.f32 0.0, %v979
      %v981 = vpop.f32.mrf.mxu0
      %v982 = vadd.f32 0.0, %v981
      %983 = vmatmul.bf16.gmra.mxu0 %v851
      %v984 = vpop.f32.mrf.mxu0
      %v985 = vadd.f32 0.0, %v984
      %v986 = vpop.f32.mrf.mxu0
      %v987 = vadd.f32 0.0, %v986
      %988 = vmatmul.bf16.gmra.mxu0 %v852
      %v989 = vpop.f32.mrf.mxu0
      %v990 = vadd.f32 0.0, %v989
      %v991 = vpop.f32.mrf.mxu0
      %v992 = vadd.f32 0.0, %v991
      %993 = vmatmul.bf16.gmra.mxu0 %v853
      %v994 = vpop.f32.mrf.mxu0
      %v995 = vadd.f32 0.0, %v994
      %v996 = vpop.f32.mrf.mxu0
      %v997 = vadd.f32 0.0, %v996
      %998 = vmatmul.bf16.gmra.mxu0 %v854
      %v999 = vpop.f32.mrf.mxu0
      %v1000 = vadd.f32 0.0, %v999
      %v1001 = vpop.f32.mrf.mxu0
      %v1002 = vadd.f32 0.0, %v1001
      %1003 = vmatmul.bf16.gmra.mxu0 %v855
      %v1004 = vpop.f32.mrf.mxu0
      %v1005 = vadd.f32 0.0, %v1004
      %v1006 = vpop.f32.mrf.mxu0
      %v1007 = vadd.f32 0.0, %v1006
      %1008 = vmatmul.bf16.gmra.mxu0 %v856
      %v1009 = vpop.f32.mrf.mxu0
      %v1010 = vadd.f32 0.0, %v1009
      %v1011 = vpop.f32.mrf.mxu0
      %v1012 = vadd.f32 0.0, %v1011
      %1013 = vmatmul.bf16.gmra.mxu0 %v857
      %v1014 = vpop.f32.mrf.mxu0
      %v1015 = vadd.f32 0.0, %v1014
      %v1016 = vpop.f32.mrf.mxu0
      %v1017 = vadd.f32 0.0, %v1016
      %1018 = vmatmul.bf16.gmra.mxu0 %v858
      %v1019 = vpop.f32.mrf.mxu0
      %v1020 = vadd.f32 0.0, %v1019
      %v1021 = vpop.f32.mrf.mxu0
      %v1022 = vadd.f32 0.0, %v1021
      %1023 = vmatmul.bf16.gmra.mxu0 %v859
      %v1024 = vpop.f32.mrf.mxu0
      %v1025 = vadd.f32 0.0, %v1024
      %v1026 = vpop.f32.mrf.mxu0
      %v1027 = vadd.f32 0.0, %v1026
      %1028 = vmatmul.bf16.gmra.mxu0 %v860
      %v1029 = vpop.f32.mrf.mxu0
      %v1030 = vadd.f32 0.0, %v1029
      %v1031 = vpop.f32.mrf.mxu0
      %v1032 = vadd.f32 0.0, %v1031
      %1033 = vmatmul.bf16.gmra.mxu0 %v861
      %v1034 = vpop.f32.mrf.mxu0
      %v1035 = vadd.f32 0.0, %v1034
      %v1036 = vpop.f32.mrf.mxu0
      %v1037 = vadd.f32 0.0, %v1036
      %1038 = vmatmul.bf16.gmra.mxu0 %v862
      %v1039 = vpop.f32.mrf.mxu0
      %v1040 = vadd.f32 0.0, %v1039
      %v1041 = vpop.f32.mrf.mxu0
      %v1042 = vadd.f32 0.0, %v1041
      %1043 = vmatmul.bf16.gmra.mxu0 %v863
      %v1044 = vpop.f32.mrf.mxu0
      %v1045 = vadd.f32 0.0, %v1044
      %v1046 = vpop.f32.mrf.mxu0
      %v1047 = vadd.f32 0.0, %v1046
      %1048 = vmatmul.bf16.gmra.mxu0 %v864
      %v1049 = vpop.f32.mrf.mxu0
      %v1050 = vadd.f32 0.0, %v1049
      %v1051 = vpop.f32.mrf.mxu0
      %v1052 = vadd.f32 0.0, %v1051
      %1053 = vmatmul.bf16.gmra.mxu0 %v865
      %v1054 = vpop.f32.mrf.mxu0
      %v1055 = vadd.f32 0.0, %v1054
      %v1056 = vpop.f32.mrf.mxu0
      %v1057 = vadd.f32 0.0, %v1056
      %1058 = vmatmul.bf16.gmra.mxu0 %v866
      %v1059 = vpop.f32.mrf.mxu0
      %v1060 = vadd.f32 0.0, %v1059
      %v1061 = vpop.f32.mrf.mxu0
      %v1062 = vadd.f32 0.0, %v1061
      %1063 = vmatmul.bf16.gmra.mxu0 %v867
      %v1064 = vpop.f32.mrf.mxu0
      %v1065 = vadd.f32 0.0, %v1064
      %v1066 = vpop.f32.mrf.mxu0
      %v1067 = vadd.f32 0.0, %v1066
      %1068 = vmatmul.bf16.gmra.mxu0 %v868
      %v1069 = vpop.f32.mrf.mxu0
      %v1070 = vadd.f32 0.0, %v1069
      %v1071 = vpop.f32.mrf.mxu0
      %v1072 = vadd.f32 0.0, %v1071
      %1073 = vmatmul.bf16.gmra.mxu0 %v869
      %v1074 = vpop.f32.mrf.mxu0
      %v1075 = vadd.f32 0.0, %v1074
      %v1076 = vpop.f32.mrf.mxu0
      %v1077 = vadd.f32 0.0, %v1076
      %1078 = vmatmul.bf16.gmra.mxu0 %v870
      %v1079 = vpop.f32.mrf.mxu0
      %v1080 = vadd.f32 0.0, %v1079
      %v1081 = vpop.f32.mrf.mxu0
      %v1082 = vadd.f32 0.0, %v1081
      %1083 = vmatmul.bf16.gmra.mxu0 %v871
      %v1084 = vpop.f32.mrf.mxu0
      %v1085 = vadd.f32 0.0, %v1084
      %v1086 = vpop.f32.mrf.mxu0
      %v1087 = vadd.f32 0.0, %v1086
      %1088 = vmatmul.bf16.gmra.mxu0 %v872
      %v1089 = vpop.f32.mrf.mxu0
      %v1090 = vadd.f32 0.0, %v1089
      %v1091 = vpop.f32.mrf.mxu0
      %v1092 = vadd.f32 0.0, %v1091
      %1093 = vmatmul.bf16.gmra.mxu0 %v873
      %v1094 = vpop.f32.mrf.mxu0
      %v1095 = vadd.f32 0.0, %v1094
      %v1096 = vpop.f32.mrf.mxu0
      %v1097 = vadd.f32 0.0, %v1096
      %1098 = vmatmul.bf16.gmra.mxu0 %v874
      %v1099 = vpop.f32.mrf.mxu0
      %v1100 = vadd.f32 0.0, %v1099
      %v1101 = vpop.f32.mrf.mxu0
      %v1102 = vadd.f32 0.0, %v1101
      %1103 = vmatmul.bf16.gmra.mxu0 %v875
      %v1104 = vpop.f32.mrf.mxu0
      %v1105 = vadd.f32 0.0, %v1104
      %v1106 = vpop.f32.mrf.mxu0
      %v1107 = vadd.f32 0.0, %v1106
      %1108 = vmatmul.bf16.gmra.mxu0 %v876
      %v1109 = vpop.f32.mrf.mxu0
      %v1110 = vadd.f32 0.0, %v1109
      %v1111 = vpop.f32.mrf.mxu0
      %v1112 = vadd.f32 0.0, %v1111
      %1113 = vmatmul.bf16.gmra.mxu0 %v877
      %v1114 = vpop.f32.mrf.mxu0
      %v1115 = vadd.f32 0.0, %v1114
      %v1116 = vpop.f32.mrf.mxu0
      %v1117 = vadd.f32 0.0, %v1116
      %1118 = vmatmul.bf16.gmra.mxu0 %v878
      %v1119 = vpop.f32.mrf.mxu0
      %v1120 = vadd.f32 0.0, %v1119
      %v1121 = vpop.f32.mrf.mxu0
      %v1122 = vadd.f32 0.0, %v1121
      %1123 = vmatmul.bf16.gmra.mxu0 %v879
      %v1124 = vpop.f32.mrf.mxu0
      %v1125 = vadd.f32 0.0, %v1124
      %v1126 = vpop.f32.mrf.mxu0
      %v1127 = vadd.f32 0.0, %v1126
      %1128 = vdwg.mxu0
      %v1129 = vadd.f32 %v576, %v970
      %v1130 = vadd.f32 %v577, %v972
      %v1131 = vadd.f32 %v578, %v975
      %v1132 = vadd.f32 %v579, %v977
      %v1133 = vadd.f32 %v580, %v980
      %v1134 = vadd.f32 %v581, %v982
      %v1135 = vadd.f32 %v582, %v985
      %v1136 = vadd.f32 %v583, %v987
      %v1137 = vadd.f32 %v584, %v990
      %v1138 = vadd.f32 %v585, %v992
      %v1139 = vadd.f32 %v586, %v995
      %v1140 = vadd.f32 %v587, %v997
      %v1141 = vadd.f32 %v588, %v1000
      %v1142 = vadd.f32 %v589, %v1002
      %v1143 = vadd.f32 %v590, %v1005
      %v1144 = vadd.f32 %v591, %v1007
      %v1145 = vadd.f32 %v592, %v1010
      %v1146 = vadd.f32 %v593, %v1012
      %v1147 = vadd.f32 %v594, %v1015
      %v1148 = vadd.f32 %v595, %v1017
      %v1149 = vadd.f32 %v596, %v1020
      %v1150 = vadd.f32 %v597, %v1022
      %v1151 = vadd.f32 %v598, %v1025
      %v1152 = vadd.f32 %v599, %v1027
      %v1153 = vadd.f32 %v600, %v1030
      %v1154 = vadd.f32 %v601, %v1032
      %v1155 = vadd.f32 %v602, %v1035
      %v1156 = vadd.f32 %v603, %v1037
      %v1157 = vadd.f32 %v604, %v1040
      %v1158 = vadd.f32 %v605, %v1042
      %v1159 = vadd.f32 %v606, %v1045
      %v1160 = vadd.f32 %v607, %v1047
      %v1161 = vadd.f32 %v608, %v1050
      %v1162 = vadd.f32 %v609, %v1052
      %v1163 = vadd.f32 %v610, %v1055
      %v1164 = vadd.f32 %v611, %v1057
      %v1165 = vadd.f32 %v612, %v1060
      %v1166 = vadd.f32 %v613, %v1062
      %v1167 = vadd.f32 %v614, %v1065
      %v1168 = vadd.f32 %v615, %v1067
      %v1169 = vadd.f32 %v616, %v1070
      %v1170 = vadd.f32 %v617, %v1072
      %v1171 = vadd.f32 %v618, %v1075
      %v1172 = vadd.f32 %v619, %v1077
      %v1173 = vadd.f32 %v620, %v1080
      %v1174 = vadd.f32 %v621, %v1082
      %v1175 = vadd.f32 %v622, %v1085
      %v1176 = vadd.f32 %v623, %v1087
      %v1177 = vadd.f32 %v624, %v1090
      %v1178 = vadd.f32 %v625, %v1092
      %v1179 = vadd.f32 %v626, %v1095
      %v1180 = vadd.f32 %v627, %v1097
      %v1181 = vadd.f32 %v628, %v1100
      %v1182 = vadd.f32 %v629, %v1102
      %v1183 = vadd.f32 %v630, %v1105
      %v1184 = vadd.f32 %v631, %v1107
      %v1185 = vadd.f32 %v632, %v1110
      %v1186 = vadd.f32 %v633, %v1112
      %v1187 = vadd.f32 %v634, %v1115
      %v1188 = vadd.f32 %v635, %v1117
      %v1189 = vadd.f32 %v636, %v1120
      %v1190 = vadd.f32 %v637, %v1122
      %v1191 = vadd.f32 %v638, %v1125
      %v1192 = vadd.f32 %v639, %v1127
      %v1193 = vld [vmem:[%s4] sm:$0x1]
      %v1195 = vperm.slane %v1193, 0
      %v1197 = vadd.f32 %v1129, %v1195
      %v1198 = vadd.f32 %v1130, %v1195
      %v1199 = vadd.f32 %v1131, %v1195
      %v1200 = vadd.f32 %v1132, %v1195
      %v1201 = vadd.f32 %v1133, %v1195
      %v1202 = vadd.f32 %v1134, %v1195
      %v1203 = vadd.f32 %v1135, %v1195
      %v1204 = vadd.f32 %v1136, %v1195
      %v1205 = vadd.f32 %v1137, %v1195
      %v1206 = vadd.f32 %v1138, %v1195
      %v1207 = vadd.f32 %v1139, %v1195
      %v1208 = vadd.f32 %v1140, %v1195
      %v1209 = vadd.f32 %v1141, %v1195
      %v1210 = vadd.f32 %v1142, %v1195
      %v1211 = vadd.f32 %v1143, %v1195
      %v1212 = vadd.f32 %v1144, %v1195
      %v1213 = vadd.f32 %v1145, %v1195
      %v1214 = vadd.f32 %v1146, %v1195
      %v1215 = vadd.f32 %v1147, %v1195
      %v1216 = vadd.f32 %v1148, %v1195
      %v1217 = vadd.f32 %v1149, %v1195
      %v1218 = vadd.f32 %v1150, %v1195
      %v1219 = vadd.f32 %v1151, %v1195
      %v1220 = vadd.f32 %v1152, %v1195
      %v1221 = vadd.f32 %v1153, %v1195
      %v1222 = vadd.f32 %v1154, %v1195
      %v1223 = vadd.f32 %v1155, %v1195
      %v1224 = vadd.f32 %v1156, %v1195
      %v1225 = vadd.f32 %v1157, %v1195
      %v1226 = vadd.f32 %v1158, %v1195
      %v1227 = vadd.f32 %v1159, %v1195
      %v1228 = vadd.f32 %v1160, %v1195
      %v1229 = vadd.f32 %v1161, %v1195
      %v1230 = vadd.f32 %v1162, %v1195
      %v1231 = vadd.f32 %v1163, %v1195
      %v1232 = vadd.f32 %v1164, %v1195
      %v1233 = vadd.f32 %v1165, %v1195
      %v1234 = vadd.f32 %v1166, %v1195
      %v1235 = vadd.f32 %v1167, %v1195
      %v1236 = vadd.f32 %v1168, %v1195
      %v1237 = vadd.f32 %v1169, %v1195
      %v1238 = vadd.f32 %v1170, %v1195
      %v1239 = vadd.f32 %v1171, %v1195
      %v1240 = vadd.f32 %v1172, %v1195
      %v1241 = vadd.f32 %v1173, %v1195
      %v1242 = vadd.f32 %v1174, %v1195
      %v1243 = vadd.f32 %v1175, %v1195
      %v1244 = vadd.f32 %v1176, %v1195
      %v1245 = vadd.f32 %v1177, %v1195
      %v1246 = vadd.f32 %v1178, %v1195
      %v1247 = vadd.f32 %v1179, %v1195
      %v1248 = vadd.f32 %v1180, %v1195
      %v1249 = vadd.f32 %v1181, %v1195
      %v1250 = vadd.f32 %v1182, %v1195
      %v1251 = vadd.f32 %v1183, %v1195
      %v1252 = vadd.f32 %v1184, %v1195
      %v1253 = vadd.f32 %v1185, %v1195
      %v1254 = vadd.f32 %v1186, %v1195
      %v1255 = vadd.f32 %v1187, %v1195
      %v1256 = vadd.f32 %v1188, %v1195
      %v1257 = vadd.f32 %v1189, %v1195
      %v1258 = vadd.f32 %v1190, %v1195
      %v1259 = vadd.f32 %v1191, %v1195
      %v1260 = vadd.f32 %v1192, %v1195
      %v1261 = vmul.f32 %v1197, %v1197
      %v1262 = vmul.f32 %v1198, %v1198
      %v1263 = vmul.f32 %v1199, %v1199
      %v1264 = vmul.f32 %v1200, %v1200
      %v1265 = vmul.f32 %v1201, %v1201
      %v1266 = vmul.f32 %v1202, %v1202
      %v1267 = vmul.f32 %v1203, %v1203
      %v1268 = vmul.f32 %v1204, %v1204
      %v1269 = vmul.f32 %v1205, %v1205
      %v1270 = vmul.f32 %v1206, %v1206
      %v1271 = vmul.f32 %v1207, %v1207
      %v1272 = vmul.f32 %v1208, %v1208
      %v1273 = vmul.f32 %v1209, %v1209
      %v1274 = vmul.f32 %v1210, %v1210
      %v1275 = vmul.f32 %v1211, %v1211
      %v1276 = vmul.f32 %v1212, %v1212
      %v1277 = vmul.f32 %v1213, %v1213
      %v1278 = vmul.f32 %v1214, %v1214
      %v1279 = vmul.f32 %v1215, %v1215
      %v1280 = vmul.f32 %v1216, %v1216
      %v1281 = vmul.f32 %v1217, %v1217
      %v1282 = vmul.f32 %v1218, %v1218
      %v1283 = vmul.f32 %v1219, %v1219
      %v1284 = vmul.f32 %v1220, %v1220
      %v1285 = vmul.f32 %v1221, %v1221
      %v1286 = vmul.f32 %v1222, %v1222
      %v1287 = vmul.f32 %v1223, %v1223
      %v1288 = vmul.f32 %v1224, %v1224
      %v1289 = vmul.f32 %v1225, %v1225
      %v1290 = vmul.f32 %v1226, %v1226
      %v1291 = vmul.f32 %v1227, %v1227
      %v1292 = vmul.f32 %v1228, %v1228
      %v1293 = vmul.f32 %v1229, %v1229
      %v1294 = vmul.f32 %v1230, %v1230
      %v1295 = vmul.f32 %v1231, %v1231
      %v1296 = vmul.f32 %v1232, %v1232
      %v1297 = vmul.f32 %v1233, %v1233
      %v1298 = vmul.f32 %v1234, %v1234
      %v1299 = vmul.f32 %v1235, %v1235
      %v1300 = vmul.f32 %v1236, %v1236
      %v1301 = vmul.f32 %v1237, %v1237
      %v1302 = vmul.f32 %v1238, %v1238
      %v1303 = vmul.f32 %v1239, %v1239
      %v1304 = vmul.f32 %v1240, %v1240
      %v1305 = vmul.f32 %v1241, %v1241
      %v1306 = vmul.f32 %v1242, %v1242
      %v1307 = vmul.f32 %v1243, %v1243
      %v1308 = vmul.f32 %v1244, %v1244
      %v1309 = vmul.f32 %v1245, %v1245
      %v1310 = vmul.f32 %v1246, %v1246
      %v1311 = vmul.f32 %v1247, %v1247
      %v1312 = vmul.f32 %v1248, %v1248
      %v1313 = vmul.f32 %v1249, %v1249
      %v1314 = vmul.f32 %v1250, %v1250
      %v1315 = vmul.f32 %v1251, %v1251
      %v1316 = vmul.f32 %v1252, %v1252
      %v1317 = vmul.f32 %v1253, %v1253
      %v1318 = vmul.f32 %v1254, %v1254
      %v1319 = vmul.f32 %v1255, %v1255
      %v1320 = vmul.f32 %v1256, %v1256
      %v1321 = vmul.f32 %v1257, %v1257
      %v1322 = vmul.f32 %v1258, %v1258
      %v1323 = vmul.f32 %v1259, %v1259
      %v1324 = vmul.f32 %v1260, %v1260
      %v1325 = vmul.f32 %v1197, %v1261
      %v1326 = vmul.f32 %v1198, %v1262
      %v1327 = vmul.f32 %v1199, %v1263
      %v1328 = vmul.f32 %v1200, %v1264
      %v1329 = vmul.f32 %v1201, %v1265
      %v1330 = vmul.f32 %v1202, %v1266
      %v1331 = vmul.f32 %v1203, %v1267
      %v1332 = vmul.f32 %v1204, %v1268
      %v1333 = vmul.f32 %v1205, %v1269
      %v1334 = vmul.f32 %v1206, %v1270
      %v1335 = vmul.f32 %v1207, %v1271
      %v1336 = vmul.f32 %v1208, %v1272
      %v1337 = vmul.f32 %v1209, %v1273
      %v1338 = vmul.f32 %v1210, %v1274
      %v1339 = vmul.f32 %v1211, %v1275
      %v1340 = vmul.f32 %v1212, %v1276
      %v1341 = vmul.f32 %v1213, %v1277
      %v1342 = vmul.f32 %v1214, %v1278
      %v1343 = vmul.f32 %v1215, %v1279
      %v1344 = vmul.f32 %v1216, %v1280
      %v1345 = vmul.f32 %v1217, %v1281
      %v1346 = vmul.f32 %v1218, %v1282
      %v1347 = vmul.f32 %v1219, %v1283
      %v1348 = vmul.f32 %v1220, %v1284
      %v1349 = vmul.f32 %v1221, %v1285
      %v1350 = vmul.f32 %v1222, %v1286
      %v1351 = vmul.f32 %v1223, %v1287
      %v1352 = vmul.f32 %v1224, %v1288
      %v1353 = vmul.f32 %v1225, %v1289
      %v1354 = vmul.f32 %v1226, %v1290
      %v1355 = vmul.f32 %v1227, %v1291
      %v1356 = vmul.f32 %v1228, %v1292
      %v1357 = vmul.f32 %v1229, %v1293
      %v1358 = vmul.f32 %v1230, %v1294
      %v1359 = vmul.f32 %v1231, %v1295
      %v1360 = vmul.f32 %v1232, %v1296
      %v1361 = vmul.f32 %v1233, %v1297
      %v1362 = vmul.f32 %v1234, %v1298
      %v1363 = vmul.f32 %v1235, %v1299
      %v1364 = vmul.f32 %v1236, %v1300
      %v1365 = vmul.f32 %v1237, %v1301
      %v1366 = vmul.f32 %v1238, %v1302
      %v1367 = vmul.f32 %v1239, %v1303
      %v1368 = vmul.f32 %v1240, %v1304
      %v1369 = vmul.f32 %v1241, %v1305
      %v1370 = vmul.f32 %v1242, %v1306
      %v1371 = vmul.f32 %v1243, %v1307
      %v1372 = vmul.f32 %v1244, %v1308
      %v1373 = vmul.f32 %v1245, %v1309
      %v1374 = vmul.f32 %v1246, %v1310
      %v1375 = vmul.f32 %v1247, %v1311
      %v1376 = vmul.f32 %v1248, %v1312
      %v1377 = vmul.f32 %v1249, %v1313
      %v1378 = vmul.f32 %v1250, %v1314
      %v1379 = vmul.f32 %v1251, %v1315
      %v1380 = vmul.f32 %v1252, %v1316
      %v1381 = vmul.f32 %v1253, %v1317
      %v1382 = vmul.f32 %v1254, %v1318
      %v1383 = vmul.f32 %v1255, %v1319
      %v1384 = vmul.f32 %v1256, %v1320
      %v1385 = vmul.f32 %v1257, %v1321
      %v1386 = vmul.f32 %v1258, %v1322
      %v1387 = vmul.f32 %v1259, %v1323
      %v1388 = vmul.f32 %v1260, %v1324
      %v1389 = vmul.f32 %v1325, 0.044715
      %v1390 = vmul.f32 %v1326, 0.044715
      %v1391 = vmul.f32 %v1327, 0.044715
      %v1392 = vmul.f32 %v1328, 0.044715
      %v1393 = vmul.f32 %v1329, 0.044715
      %v1394 = vmul.f32 %v1330, 0.044715
      %v1395 = vmul.f32 %v1331, 0.044715
      %v1396 = vmul.f32 %v1332, 0.044715
      %v1397 = vmul.f32 %v1333, 0.044715
      %v1398 = vmul.f32 %v1334, 0.044715
      %v1399 = vmul.f32 %v1335, 0.044715
      %v1400 = vmul.f32 %v1336, 0.044715
      %v1401 = vmul.f32 %v1337, 0.044715
      %v1402 = vmul.f32 %v1338, 0.044715
      %v1403 = vmul.f32 %v1339, 0.044715
      %v1404 = vmul.f32 %v1340, 0.044715
      %v1405 = vmul.f32 %v1341, 0.044715
      %v1406 = vmul.f32 %v1342, 0.044715
      %v1407 = vmul.f32 %v1343, 0.044715
      %v1408 = vmul.f32 %v1344, 0.044715
      %v1409 = vmul.f32 %v1345, 0.044715
      %v1410 = vmul.f32 %v1346, 0.044715
      %v1411 = vmul.f32 %v1347, 0.044715
      %v1412 = vmul.f32 %v1348, 0.044715
      %v1413 = vmul.f32 %v1349, 0.044715
      %v1414 = vmul.f32 %v1350, 0.044715
      %v1415 = vmul.f32 %v1351, 0.044715
      %v1416 = vmul.f32 %v1352, 0.044715
      %v1417 = vmul.f32 %v1353, 0.044715
      %v1418 = vmul.f32 %v1354, 0.044715
      %v1419 = vmul.f32 %v1355, 0.044715
      %v1420 = vmul.f32 %v1356, 0.044715
      %v1421 = vmul.f32 %v1357, 0.044715
      %v1422 = vmul.f32 %v1358, 0.044715
      %v1423 = vmul.f32 %v1359, 0.044715
      %v1424 = vmul.f32 %v1360, 0.044715
      %v1425 = vmul.f32 %v1361, 0.044715
      %v1426 = vmul.f32 %v1362, 0.044715
      %v1427 = vmul.f32 %v1363, 0.044715
      %v1428 = vmul.f32 %v1364, 0.044715
      %v1429 = vmul.f32 %v1365, 0.044715
      %v1430 = vmul.f32 %v1366, 0.044715
      %v1431 = vmul.f32 %v1367, 0.044715
      %v1432 = vmul.f32 %v1368, 0.044715
      %v1433 = vmul.f32 %v1369, 0.044715
      %v1434 = vmul.f32 %v1370, 0.044715
      %v1435 = vmul.f32 %v1371, 0.044715
      %v1436 = vmul.f32 %v1372, 0.044715
      %v1437 = vmul.f32 %v1373, 0.044715
      %v1438 = vmul.f32 %v1374, 0.044715
      %v1439 = vmul.f32 %v1375, 0.044715
      %v1440 = vmul.f32 %v1376, 0.044715
      %v1441 = vmul.f32 %v1377, 0.044715
      %v1442 = vmul.f32 %v1378, 0.044715
      %v1443 = vmul.f32 %v1379, 0.044715
      %v1444 = vmul.f32 %v1380, 0.044715
      %v1445 = vmul.f32 %v1381, 0.044715
      %v1446 = vmul.f32 %v1382, 0.044715
      %v1447 = vmul.f32 %v1383, 0.044715
      %v1448 = vmul.f32 %v1384, 0.044715
      %v1449 = vmul.f32 %v1385, 0.044715
      %v1450 = vmul.f32 %v1386, 0.044715
      %v1451 = vmul.f32 %v1387, 0.044715
      %v1452 = vmul.f32 %v1388, 0.044715
      %v1453 = vadd.f32 %v1197, %v1389
      %v1454 = vadd.f32 %v1198, %v1390
      %v1455 = vadd.f32 %v1199, %v1391
      %v1456 = vadd.f32 %v1200, %v1392
      %v1457 = vadd.f32 %v1201, %v1393
      %v1458 = vadd.f32 %v1202, %v1394
      %v1459 = vadd.f32 %v1203, %v1395
      %v1460 = vadd.f32 %v1204, %v1396
      %v1461 = vadd.f32 %v1205, %v1397
      %v1462 = vadd.f32 %v1206, %v1398
      %v1463 = vadd.f32 %v1207, %v1399
      %v1464 = vadd.f32 %v1208, %v1400
      %v1465 = vadd.f32 %v1209, %v1401
      %v1466 = vadd.f32 %v1210, %v1402
      %v1467 = vadd.f32 %v1211, %v1403
      %v1468 = vadd.f32 %v1212, %v1404
      %v1469 = vadd.f32 %v1213, %v1405
      %v1470 = vadd.f32 %v1214, %v1406
      %v1471 = vadd.f32 %v1215, %v1407
      %v1472 = vadd.f32 %v1216, %v1408
      %v1473 = vadd.f32 %v1217, %v1409
      %v1474 = vadd.f32 %v1218, %v1410
      %v1475 = vadd.f32 %v1219, %v1411
      %v1476 = vadd.f32 %v1220, %v1412
      %v1477 = vadd.f32 %v1221, %v1413
      %v1478 = vadd.f32 %v1222, %v1414
      %v1479 = vadd.f32 %v1223, %v1415
      %v1480 = vadd.f32 %v1224, %v1416
      %v1481 = vadd.f32 %v1225, %v1417
      %v1482 = vadd.f32 %v1226, %v1418
      %v1483 = vadd.f32 %v1227, %v1419
      %v1484 = vadd.f32 %v1228, %v1420
      %v1485 = vadd.f32 %v1229, %v1421
      %v1486 = vadd.f32 %v1230, %v1422
      %v1487 = vadd.f32 %v1231, %v1423
      %v1488 = vadd.f32 %v1232, %v1424
      %v1489 = vadd.f32 %v1233, %v1425
      %v1490 = vadd.f32 %v1234, %v1426
      %v1491 = vadd.f32 %v1235, %v1427
      %v1492 = vadd.f32 %v1236, %v1428
      %v1493 = vadd.f32 %v1237, %v1429
      %v1494 = vadd.f32 %v1238, %v1430
      %v1495 = vadd.f32 %v1239, %v1431
      %v1496 = vadd.f32 %v1240, %v1432
      %v1497 = vadd.f32 %v1241, %v1433
      %v1498 = vadd.f32 %v1242, %v1434
      %v1499 = vadd.f32 %v1243, %v1435
      %v1500 = vadd.f32 %v1244, %v1436
      %v1501 = vadd.f32 %v1245, %v1437
      %v1502 = vadd.f32 %v1246, %v1438
      %v1503 = vadd.f32 %v1247, %v1439
      %v1504 = vadd.f32 %v1248, %v1440
      %v1505 = vadd.f32 %v1249, %v1441
      %v1506 = vadd.f32 %v1250, %v1442
      %v1507 = vadd.f32 %v1251, %v1443
      %v1508 = vadd.f32 %v1252, %v1444
      %v1509 = vadd.f32 %v1253, %v1445
      %v1510 = vadd.f32 %v1254, %v1446
      %v1511 = vadd.f32 %v1255, %v1447
      %v1512 = vadd.f32 %v1256, %v1448
      %v1513 = vadd.f32 %v1257, %v1449
      %v1514 = vadd.f32 %v1258, %v1450
      %v1515 = vadd.f32 %v1259, %v1451
      %v1516 = vadd.f32 %v1260, %v1452
      %v1517 = vmul.f32 %v1453, 0.7978846
      %v1518 = vmul.f32 %v1454, 0.7978846
      %v1519 = vmul.f32 %v1455, 0.7978846
      %v1520 = vmul.f32 %v1456, 0.7978846
      %v1521 = vmul.f32 %v1457, 0.7978846
      %v1522 = vmul.f32 %v1458, 0.7978846
      %v1523 = vmul.f32 %v1459, 0.7978846
      %v1524 = vmul.f32 %v1460, 0.7978846
      %v1525 = vmul.f32 %v1461, 0.7978846
      %v1526 = vmul.f32 %v1462, 0.7978846
      %v1527 = vmul.f32 %v1463, 0.7978846
      %v1528 = vmul.f32 %v1464, 0.7978846
      %v1529 = vmul.f32 %v1465, 0.7978846
      %v1530 = vmul.f32 %v1466, 0.7978846
      %v1531 = vmul.f32 %v1467, 0.7978846
      %v1532 = vmul.f32 %v1468, 0.7978846
      %v1533 = vmul.f32 %v1469, 0.7978846
      %v1534 = vmul.f32 %v1470, 0.7978846
      %v1535 = vmul.f32 %v1471, 0.7978846
      %v1536 = vmul.f32 %v1472, 0.7978846
      %v1537 = vmul.f32 %v1473, 0.7978846
      %v1538 = vmul.f32 %v1474, 0.7978846
      %v1539 = vmul.f32 %v1475, 0.7978846
      %v1540 = vmul.f32 %v1476, 0.7978846
      %v1541 = vmul.f32 %v1477, 0.7978846
      %v1542 = vmul.f32 %v1478, 0.7978846
      %v1543 = vmul.f32 %v1479, 0.7978846
      %v1544 = vmul.f32 %v1480, 0.7978846
      %v1545 = vmul.f32 %v1481, 0.7978846
      %v1546 = vmul.f32 %v1482, 0.7978846
      %v1547 = vmul.f32 %v1483, 0.7978846
      %v1548 = vmul.f32 %v1484, 0.7978846
      %v1549 = vmul.f32 %v1485, 0.7978846
      %v1550 = vmul.f32 %v1486, 0.7978846
      %v1551 = vmul.f32 %v1487, 0.7978846
      %v1552 = vmul.f32 %v1488, 0.7978846
      %v1553 = vmul.f32 %v1489, 0.7978846
      %v1554 = vmul.f32 %v1490, 0.7978846
      %v1555 = vmul.f32 %v1491, 0.7978846
      %v1556 = vmul.f32 %v1492, 0.7978846
      %v1557 = vmul.f32 %v1493, 0.7978846
      %v1558 = vmul.f32 %v1494, 0.7978846
      %v1559 = vmul.f32 %v1495, 0.7978846
      %v1560 = vmul.f32 %v1496, 0.7978846
      %v1561 = vmul.f32 %v1497, 0.7978846
      %v1562 = vmul.f32 %v1498, 0.7978846
      %v1563 = vmul.f32 %v1499, 0.7978846
      %v1564 = vmul.f32 %v1500, 0.7978846
      %v1565 = vmul.f32 %v1501, 0.7978846
      %v1566 = vmul.f32 %v1502, 0.7978846
      %v1567 = vmul.f32 %v1503, 0.7978846
      %v1568 = vmul.f32 %v1504, 0.7978846
      %v1569 = vmul.f32 %v1505, 0.7978846
      %v1570 = vmul.f32 %v1506, 0.7978846
      %v1571 = vmul.f32 %v1507, 0.7978846
      %v1572 = vmul.f32 %v1508, 0.7978846
      %v1573 = vmul.f32 %v1509, 0.7978846
      %v1574 = vmul.f32 %v1510, 0.7978846
      %v1575 = vmul.f32 %v1511, 0.7978846
      %v1576 = vmul.f32 %v1512, 0.7978846
      %v1577 = vmul.f32 %v1513, 0.7978846
      %v1578 = vmul.f32 %v1514, 0.7978846
      %v1579 = vmul.f32 %v1515, 0.7978846
      %v1580 = vmul.f32 %v1516, 0.7978846
      %v1581 = vtanh.pop %v1517
      %v1582 = vtanh.pop %v1518
      %v1583 = vtanh.pop %v1519
      %v1584 = vtanh.pop %v1520
      %v1585 = vtanh.pop %v1521
      %v1586 = vtanh.pop %v1522
      %v1587 = vtanh.pop %v1523
      %v1588 = vtanh.pop %v1524
      %v1589 = vtanh.pop %v1525
      %v1590 = vtanh.pop %v1526
      %v1591 = vtanh.pop %v1527
      %v1592 = vtanh.pop %v1528
      %v1593 = vtanh.pop %v1529
      %v1594 = vtanh.pop %v1530
      %v1595 = vtanh.pop %v1531
      %v1596 = vtanh.pop %v1532
      %v1597 = vtanh.pop %v1533
      %v1598 = vtanh.pop %v1534
      %v1599 = vtanh.pop %v1535
      %v1600 = vtanh.pop %v1536
      %v1601 = vtanh.pop %v1537
      %v1602 = vtanh.pop %v1538
      %v1603 = vtanh.pop %v1539
      %v1604 = vtanh.pop %v1540
      %v1605 = vtanh.pop %v1541
      %v1606 = vtanh.pop %v1542
      %v1607 = vtanh.pop %v1543
      %v1608 = vtanh.pop %v1544
      %v1609 = vtanh.pop %v1545
      %v1610 = vtanh.pop %v1546
      %v1611 = vtanh.pop %v1547
      %v1612 = vtanh.pop %v1548
      %v1613 = vtanh.pop %v1549
      %v1614 = vtanh.pop %v1550
      %v1615 = vtanh.pop %v1551
      %v1616 = vtanh.pop %v1552
      %v1617 = vtanh.pop %v1553
      %v1618 = vtanh.pop %v1554
      %v1619 = vtanh.pop %v1555
      %v1620 = vtanh.pop %v1556
      %v1621 = vtanh.pop %v1557
      %v1622 = vtanh.pop %v1558
      %v1623 = vtanh.pop %v1559
      %v1624 = vtanh.pop %v1560
      %v1625 = vtanh.pop %v1561
      %v1626 = vtanh.pop %v1562
      %v1627 = vtanh.pop %v1563
      %v1628 = vtanh.pop %v1564
      %v1629 = vtanh.pop %v1565
      %v1630 = vtanh.pop %v1566
      %v1631 = vtanh.pop %v1567
      %v1632 = vtanh.pop %v1568
      %v1633 = vtanh.pop %v1569
      %v1634 = vtanh.pop %v1570
      %v1635 = vtanh.pop %v1571
      %v1636 = vtanh.pop %v1572
      %v1637 = vtanh.pop %v1573
      %v1638 = vtanh.pop %v1574
      %v1639 = vtanh.pop %v1575
      %v1640 = vtanh.pop %v1576
      %v1641 = vtanh.pop %v1577
      %v1642 = vtanh.pop %v1578
      %v1643 = vtanh.pop %v1579
      %v1644 = vtanh.pop %v1580
      %v1645 = vadd.f32 %v1581, 1.0
      %v1646 = vadd.f32 %v1582, 1.0
      %v1647 = vadd.f32 %v1583, 1.0
      %v1648 = vadd.f32 %v1584, 1.0
      %v1649 = vadd.f32 %v1585, 1.0
      %v1650 = vadd.f32 %v1586, 1.0
      %v1651 = vadd.f32 %v1587, 1.0
      %v1652 = vadd.f32 %v1588, 1.0
      %v1653 = vadd.f32 %v1589, 1.0
      %v1654 = vadd.f32 %v1590, 1.0
      %v1655 = vadd.f32 %v1591, 1.0
      %v1656 = vadd.f32 %v1592, 1.0
      %v1657 = vadd.f32 %v1593, 1.0
      %v1658 = vadd.f32 %v1594, 1.0
      %v1659 = vadd.f32 %v1595, 1.0
      %v1660 = vadd.f32 %v1596, 1.0
      %v1661 = vadd.f32 %v1597, 1.0
      %v1662 = vadd.f32 %v1598, 1.0
      %v1663 = vadd.f32 %v1599, 1.0
      %v1664 = vadd.f32 %v1600, 1.0
      %v1665 = vadd.f32 %v1601, 1.0
      %v1666 = vadd.f32 %v1602, 1.0
      %v1667 = vadd.f32 %v1603, 1.0
      %v1668 = vadd.f32 %v1604, 1.0
      %v1669 = vadd.f32 %v1605, 1.0
      %v1670 = vadd.f32 %v1606, 1.0
      %v1671 = vadd.f32 %v1607, 1.0
      %v1672 = vadd.f32 %v1608, 1.0
      %v1673 = vadd.f32 %v1609, 1.0
      %v1674 = vadd.f32 %v1610, 1.0
      %v1675 = vadd.f32 %v1611, 1.0
      %v1676 = vadd.f32 %v1612, 1.0
      %v1677 = vadd.f32 %v1613, 1.0
      %v1678 = vadd.f32 %v1614, 1.0
      %v1679 = vadd.f32 %v1615, 1.0
      %v1680 = vadd.f32 %v1616, 1.0
      %v1681 = vadd.f32 %v1617, 1.0
      %v1682 = vadd.f32 %v1618, 1.0
      %v1683 = vadd.f32 %v1619, 1.0
      %v1684 = vadd.f32 %v1620, 1.0
      %v1685 = vadd.f32 %v1621, 1.0
      %v1686 = vadd.f32 %v1622, 1.0
      %v1687 = vadd.f32 %v1623, 1.0
      %v1688 = vadd.f32 %v1624, 1.0
      %v1689 = vadd.f32 %v1625, 1.0
      %v1690 = vadd.f32 %v1626, 1.0
      %v1691 = vadd.f32 %v1627, 1.0
      %v1692 = vadd.f32 %v1628, 1.0
      %v1693 = vadd.f32 %v1629, 1.0
      %v1694 = vadd.f32 %v1630, 1.0
      %v1695 = vadd.f32 %v1631, 1.0
      %v1696 = vadd.f32 %v1632, 1.0
      %v1697 = vadd.f32 %v1633, 1.0
      %v1698 = vadd.f32 %v1634, 1.0
      %v1699 = vadd.f32 %v1635, 1.0
      %v1700 = vadd.f32 %v1636, 1.0
      %v1701 = vadd.f32 %v1637, 1.0
      %v1702 = vadd.f32 %v1638, 1.0
      %v1703 = vadd.f32 %v1639, 1.0
      %v1704 = vadd.f32 %v1640, 1.0
      %v1705 = vadd.f32 %v1641, 1.0
      %v1706 = vadd.f32 %v1642, 1.0
      %v1707 = vadd.f32 %v1643, 1.0
      %v1708 = vadd.f32 %v1644, 1.0
      %v1709 = vmul.f32 %v1645, 0.5
      %v1710 = vmul.f32 %v1646, 0.5
      %v1711 = vmul.f32 %v1647, 0.5
      %v1712 = vmul.f32 %v1648, 0.5
      %v1713 = vmul.f32 %v1649, 0.5
      %v1714 = vmul.f32 %v1650, 0.5
      %v1715 = vmul.f32 %v1651, 0.5
      %v1716 = vmul.f32 %v1652, 0.5
      %v1717 = vmul.f32 %v1653, 0.5
      %v1718 = vmul.f32 %v1654, 0.5
      %v1719 = vmul.f32 %v1655, 0.5
      %v1720 = vmul.f32 %v1656, 0.5
      %v1721 = vmul.f32 %v1657, 0.5
      %v1722 = vmul.f32 %v1658, 0.5
      %v1723 = vmul.f32 %v1659, 0.5
      %v1724 = vmul.f32 %v1660, 0.5
      %v1725 = vmul.f32 %v1661, 0.5
      %v1726 = vmul.f32 %v1662, 0.5
      %v1727 = vmul.f32 %v1663, 0.5
      %v1728 = vmul.f32 %v1664, 0.5
      %v1729 = vmul.f32 %v1665, 0.5
      %v1730 = vmul.f32 %v1666, 0.5
      %v1731 = vmul.f32 %v1667, 0.5
      %v1732 = vmul.f32 %v1668, 0.5
      %v1733 = vmul.f32 %v1669, 0.5
      %v1734 = vmul.f32 %v1670, 0.5
      %v1735 = vmul.f32 %v1671, 0.5
      %v1736 = vmul.f32 %v1672, 0.5
      %v1737 = vmul.f32 %v1673, 0.5
      %v1738 = vmul.f32 %v1674, 0.5
      %v1739 = vmul.f32 %v1675, 0.5
      %v1740 = vmul.f32 %v1676, 0.5
      %v1741 = vmul.f32 %v1677, 0.5
      %v1742 = vmul.f32 %v1678, 0.5
      %v1743 = vmul.f32 %v1679, 0.5
      %v1744 = vmul.f32 %v1680, 0.5
      %v1745 = vmul.f32 %v1681, 0.5
      %v1746 = vmul.f32 %v1682, 0.5
      %v1747 = vmul.f32 %v1683, 0.5
      %v1748 = vmul.f32 %v1684, 0.5
      %v1749 = vmul.f32 %v1685, 0.5
      %v1750 = vmul.f32 %v1686, 0.5
      %v1751 = vmul.f32 %v1687, 0.5
      %v1752 = vmul.f32 %v1688, 0.5
      %v1753 = vmul.f32 %v1689, 0.5
      %v1754 = vmul.f32 %v1690, 0.5
      %v1755 = vmul.f32 %v1691, 0.5
      %v1756 = vmul.f32 %v1692, 0.5
      %v1757 = vmul.f32 %v1693, 0.5
      %v1758 = vmul.f32 %v1694, 0.5
      %v1759 = vmul.f32 %v1695, 0.5
      %v1760 = vmul.f32 %v1696, 0.5
      %v1761 = vmul.f32 %v1697, 0.5
      %v1762 = vmul.f32 %v1698, 0.5
      %v1763 = vmul.f32 %v1699, 0.5
      %v1764 = vmul.f32 %v1700, 0.5
      %v1765 = vmul.f32 %v1701, 0.5
      %v1766 = vmul.f32 %v1702, 0.5
      %v1767 = vmul.f32 %v1703, 0.5
      %v1768 = vmul.f32 %v1704, 0.5
      %v1769 = vmul.f32 %v1705, 0.5
      %v1770 = vmul.f32 %v1706, 0.5
      %v1771 = vmul.f32 %v1707, 0.5
      %v1772 = vmul.f32 %v1708, 0.5
      %v1773 = vmul.f32 %v1197, %v1709
      %v1774 = vmul.f32 %v1198, %v1710
      %v1775 = vmul.f32 %v1199, %v1711
      %v1776 = vmul.f32 %v1200, %v1712
      %v1777 = vmul.f32 %v1201, %v1713
      %v1778 = vmul.f32 %v1202, %v1714
      %v1779 = vmul.f32 %v1203, %v1715
      %v1780 = vmul.f32 %v1204, %v1716
      %v1781 = vmul.f32 %v1205, %v1717
      %v1782 = vmul.f32 %v1206, %v1718
      %v1783 = vmul.f32 %v1207, %v1719
      %v1784 = vmul.f32 %v1208, %v1720
      %v1785 = vmul.f32 %v1209, %v1721
      %v1786 = vmul.f32 %v1210, %v1722
      %v1787 = vmul.f32 %v1211, %v1723
      %v1788 = vmul.f32 %v1212, %v1724
      %v1789 = vmul.f32 %v1213, %v1725
      %v1790 = vmul.f32 %v1214, %v1726
      %v1791 = vmul.f32 %v1215, %v1727
      %v1792 = vmul.f32 %v1216, %v1728
      %v1793 = vmul.f32 %v1217, %v1729
      %v1794 = vmul.f32 %v1218, %v1730
      %v1795 = vmul.f32 %v1219, %v1731
      %v1796 = vmul.f32 %v1220, %v1732
      %v1797 = vmul.f32 %v1221, %v1733
      %v1798 = vmul.f32 %v1222, %v1734
      %v1799 = vmul.f32 %v1223, %v1735
      %v1800 = vmul.f32 %v1224, %v1736
      %v1801 = vmul.f32 %v1225, %v1737
      %v1802 = vmul.f32 %v1226, %v1738
      %v1803 = vmul.f32 %v1227, %v1739
      %v1804 = vmul.f32 %v1228, %v1740
      %v1805 = vmul.f32 %v1229, %v1741
      %v1806 = vmul.f32 %v1230, %v1742
      %v1807 = vmul.f32 %v1231, %v1743
      %v1808 = vmul.f32 %v1232, %v1744
      %v1809 = vmul.f32 %v1233, %v1745
      %v1810 = vmul.f32 %v1234, %v1746
      %v1811 = vmul.f32 %v1235, %v1747
      %v1812 = vmul.f32 %v1236, %v1748
      %v1813 = vmul.f32 %v1237, %v1749
      %v1814 = vmul.f32 %v1238, %v1750
      %v1815 = vmul.f32 %v1239, %v1751
      %v1816 = vmul.f32 %v1240, %v1752
      %v1817 = vmul.f32 %v1241, %v1753
      %v1818 = vmul.f32 %v1242, %v1754
      %v1819 = vmul.f32 %v1243, %v1755
      %v1820 = vmul.f32 %v1244, %v1756
      %v1821 = vmul.f32 %v1245, %v1757
      %v1822 = vmul.f32 %v1246, %v1758
      %v1823 = vmul.f32 %v1247, %v1759
      %v1824 = vmul.f32 %v1248, %v1760
      %v1825 = vmul.f32 %v1249, %v1761
      %v1826 = vmul.f32 %v1250, %v1762
      %v1827 = vmul.f32 %v1251, %v1763
      %v1828 = vmul.f32 %v1252, %v1764
      %v1829 = vmul.f32 %v1253, %v1765
      %v1830 = vmul.f32 %v1254, %v1766
      %v1831 = vmul.f32 %v1255, %v1767
      %v1832 = vmul.f32 %v1256, %v1768
      %v1833 = vmul.f32 %v1257, %v1769
      %v1834 = vmul.f32 %v1258, %v1770
      %v1835 = vmul.f32 %v1259, %v1771
      %v1836 = vmul.f32 %v1260, %v1772
      %v1837 = vpack.c.bf16 %v1774, %v1773
      %v1838 = vpack.c.bf16 %v1776, %v1775
      %v1839 = vpack.c.bf16 %v1778, %v1777
      %v1840 = vpack.c.bf16 %v1780, %v1779
      %v1841 = vpack.c.bf16 %v1782, %v1781
      %v1842 = vpack.c.bf16 %v1784, %v1783
      %v1843 = vpack.c.bf16 %v1786, %v1785
      %v1844 = vpack.c.bf16 %v1788, %v1787
      %v1845 = vpack.c.bf16 %v1790, %v1789
      %v1846 = vpack.c.bf16 %v1792, %v1791
      %v1847 = vpack.c.bf16 %v1794, %v1793
      %v1848 = vpack.c.bf16 %v1796, %v1795
      %v1849 = vpack.c.bf16 %v1798, %v1797
      %v1850 = vpack.c.bf16 %v1800, %v1799
      %v1851 = vpack.c.bf16 %v1802, %v1801
      %v1852 = vpack.c.bf16 %v1804, %v1803
      %v1853 = vpack.c.bf16 %v1806, %v1805
      %v1854 = vpack.c.bf16 %v1808, %v1807
      %v1855 = vpack.c.bf16 %v1810, %v1809
      %v1856 = vpack.c.bf16 %v1812, %v1811
      %v1857 = vpack.c.bf16 %v1814, %v1813
      %v1858 = vpack.c.bf16 %v1816, %v1815
      %v1859 = vpack.c.bf16 %v1818, %v1817
      %v1860 = vpack.c.bf16 %v1820, %v1819
      %v1861 = vpack.c.bf16 %v1822, %v1821
      %v1862 = vpack.c.bf16 %v1824, %v1823
      %v1863 = vpack.c.bf16 %v1826, %v1825
      %v1864 = vpack.c.bf16 %v1828, %v1827
      %v1865 = vpack.c.bf16 %v1830, %v1829
      %v1866 = vpack.c.bf16 %v1832, %v1831
      %v1867 = vpack.c.bf16 %v1834, %v1833
      %v1868 = vpack.c.bf16 %v1836, %v1835
      %v1869 = vld [vmem:[%s5] sm:$0xf]
      %v1870 = vld [vmem:[%s5 + $0x4] sm:$0xf]
      %v1871 = vld [vmem:[%s5 + $0x8] sm:$0xf]
      %v1872 = vld [vmem:[%s5 + $0xc] sm:$0xf]
      %v1873 = vld [vmem:[%s5 + $0x10] sm:$0xf]
      %v1874 = vld [vmem:[%s5 + $0x14] sm:$0xf]
      %v1875 = vld [vmem:[%s5 + $0x18] sm:$0xf]
      %v1876 = vld [vmem:[%s5 + $0x1c] sm:$0xf]
      %v1877 = vld [vmem:[%s5 + $0x20] sm:$0xf]
      %v1878 = vld [vmem:[%s5 + $0x24] sm:$0xf]
      %v1879 = vld [vmem:[%s5 + $0x28] sm:$0xf]
      %v1880 = vld [vmem:[%s5 + $0x2c] sm:$0xf]
      %v1881 = vld [vmem:[%s5 + $0x30] sm:$0xf]
      %v1882 = vld [vmem:[%s5 + $0x34] sm:$0xf]
      %v1883 = vld [vmem:[%s5 + $0x38] sm:$0xf]
      %v1884 = vld [vmem:[%s5 + $0x3c] sm:$0xf]
      %v1885 = vld [vmem:[%s6] sm:$0x1]
      %v1887 = vperm.slane %v1885, 0
      %v1905 = vunpack.c.l.b16 %v1869
      %v1906 = vunpack.c.l.b16 %v1870
      %v1907 = vunpack.c.l.b16 %v1871
      %v1908 = vunpack.c.l.b16 %v1872
      %v1909 = vunpack.c.l.b16 %v1873
      %v1910 = vunpack.c.l.b16 %v1874
      %v1911 = vunpack.c.l.b16 %v1875
      %v1912 = vunpack.c.l.b16 %v1876
      %v1913 = vunpack.c.l.b16 %v1877
      %v1914 = vunpack.c.l.b16 %v1878
      %v1915 = vunpack.c.l.b16 %v1879
      %v1916 = vunpack.c.l.b16 %v1880
      %v1917 = vunpack.c.l.b16 %v1881
      %v1918 = vunpack.c.l.b16 %v1882
      %v1919 = vunpack.c.l.b16 %v1883
      %v1920 = vunpack.c.l.b16 %v1884
      %v1921 = vpack.c.b16 %v1906, %v1905
      %v1922 = vpack.c.b16 %v1908, %v1907
      %v1923 = vpack.c.b16 %v1910, %v1909
      %v1924 = vpack.c.b16 %v1912, %v1911
      %v1925 = vpack.c.b16 %v1914, %v1913
      %v1926 = vpack.c.b16 %v1916, %v1915
      %v1927 = vpack.c.b16 %v1918, %v1917
      %v1928 = vpack.c.b16 %v1920, %v1919
      %1937 = vmatpush.bf16.msra.mxu0 %v1928
      %1938 = vmatpush.bf16.msra.mxu0 %v1927
      %1939 = vmatpush.bf16.msra.mxu0 %v1926
      %1940 = vmatpush.bf16.msra.mxu0 %v1925
      %1941 = vmatpush.bf16.msra.mxu0 %v1924
      %1942 = vmatpush.bf16.msra.mxu0 %v1923
      %1943 = vmatpush.bf16.msra.mxu0 %v1922
      %1944 = vmatpush.bf16.msra.mxu0 %v1921
      %1945 = vmatmul.bf16.gmra.mxu0 %v1837
      %v1946 = vpop.f32.mrf.mxu0
      %v1947 = vadd.f32 %v1887, %v1946
      %v1948 = vpop.f32.mrf.mxu0
      %v1949 = vadd.f32 %v1887, %v1948
      %1950 = vmatmul.bf16.gmra.mxu0 %v1838
      %v1951 = vpop.f32.mrf.mxu0
      %v1952 = vadd.f32 %v1887, %v1951
      %v1953 = vpop.f32.mrf.mxu0
      %v1954 = vadd.f32 %v1887, %v1953
      %1955 = vmatmul.bf16.gmra.mxu0 %v1839
      %v1956 = vpop.f32.mrf.mxu0
      %v1957 = vadd.f32 %v1887, %v1956
      %v1958 = vpop.f32.mrf.mxu0
      %v1959 = vadd.f32 %v1887, %v1958
      %1960 = vmatmul.bf16.gmra.mxu0 %v1840
      %v1961 = vpop.f32.mrf.mxu0
      %v1962 = vadd.f32 %v1887, %v1961
      %v1963 = vpop.f32.mrf.mxu0
      %v1964 = vadd.f32 %v1887, %v1963
      %1965 = vmatmul.bf16.gmra.mxu0 %v1841
      %v1966 = vpop.f32.mrf.mxu0
      %v1967 = vadd.f32 %v1887, %v1966
      %v1968 = vpop.f32.mrf.mxu0
      %v1969 = vadd.f32 %v1887, %v1968
      %1970 = vmatmul.bf16.gmra.mxu0 %v1842
      %v1971 = vpop.f32.mrf.mxu0
      %v1972 = vadd.f32 %v1887, %v1971
      %v1973 = vpop.f32.mrf.mxu0
      %v1974 = vadd.f32 %v1887, %v1973
      %1975 = vmatmul.bf16.gmra.mxu0 %v1843
      %v1976 = vpop.f32.mrf.mxu0
      %v1977 = vadd.f32 %v1887, %v1976
      %v1978 = vpop.f32.mrf.mxu0
      %v1979 = vadd.f32 %v1887, %v1978
      %1980 = vmatmul.bf16.gmra.mxu0 %v1844
      %v1981 = vpop.f32.mrf.mxu0
      %v1982 = vadd.f32 %v1887, %v1981
      %v1983 = vpop.f32.mrf.mxu0
      %v1984 = vadd.f32 %v1887, %v1983
      %1985 = vmatmul.bf16.gmra.mxu0 %v1845
      %v1986 = vpop.f32.mrf.mxu0
      %v1987 = vadd.f32 %v1887, %v1986
      %v1988 = vpop.f32.mrf.mxu0
      %v1989 = vadd.f32 %v1887, %v1988
      %1990 = vmatmul.bf16.gmra.mxu0 %v1846
      %v1991 = vpop.f32.mrf.mxu0
      %v1992 = vadd.f32 %v1887, %v1991
      %v1993 = vpop.f32.mrf.mxu0
      %v1994 = vadd.f32 %v1887, %v1993
      %1995 = vmatmul.bf16.gmra.mxu0 %v1847
      %v1996 = vpop.f32.mrf.mxu0
      %v1997 = vadd.f32 %v1887, %v1996
      %v1998 = vpop.f32.mrf.mxu0
      %v1999 = vadd.f32 %v1887, %v1998
      %2000 = vmatmul.bf16.gmra.mxu0 %v1848
      %v2001 = vpop.f32.mrf.mxu0
      %v2002 = vadd.f32 %v1887, %v2001
      %v2003 = vpop.f32.mrf.mxu0
      %v2004 = vadd.f32 %v1887, %v2003
      %2005 = vmatmul.bf16.gmra.mxu0 %v1849
      %v2006 = vpop.f32.mrf.mxu0
      %v2007 = vadd.f32 %v1887, %v2006
      %v2008 = vpop.f32.mrf.mxu0
      %v2009 = vadd.f32 %v1887, %v2008
      %2010 = vmatmul.bf16.gmra.mxu0 %v1850
      %v2011 = vpop.f32.mrf.mxu0
      %v2012 = vadd.f32 %v1887, %v2011
      %v2013 = vpop.f32.mrf.mxu0
      %v2014 = vadd.f32 %v1887, %v2013
      %2015 = vmatmul.bf16.gmra.mxu0 %v1851
      %v2016 = vpop.f32.mrf.mxu0
      %v2017 = vadd.f32 %v1887, %v2016
      %v2018 = vpop.f32.mrf.mxu0
      %v2019 = vadd.f32 %v1887, %v2018
      %2020 = vmatmul.bf16.gmra.mxu0 %v1852
      %v2021 = vpop.f32.mrf.mxu0
      %v2022 = vadd.f32 %v1887, %v2021
      %v2023 = vpop.f32.mrf.mxu0
      %v2024 = vadd.f32 %v1887, %v2023
      %2025 = vmatmul.bf16.gmra.mxu0 %v1853
      %v2026 = vpop.f32.mrf.mxu0
      %v2027 = vadd.f32 %v1887, %v2026
      %v2028 = vpop.f32.mrf.mxu0
      %v2029 = vadd.f32 %v1887, %v2028
      %2030 = vmatmul.bf16.gmra.mxu0 %v1854
      %v2031 = vpop.f32.mrf.mxu0
      %v2032 = vadd.f32 %v1887, %v2031
      %v2033 = vpop.f32.mrf.mxu0
      %v2034 = vadd.f32 %v1887, %v2033
      %2035 = vmatmul.bf16.gmra.mxu0 %v1855
      %v2036 = vpop.f32.mrf.mxu0
      %v2037 = vadd.f32 %v1887, %v2036
      %v2038 = vpop.f32.mrf.mxu0
      %v2039 = vadd.f32 %v1887, %v2038
      %2040 = vmatmul.bf16.gmra.mxu0 %v1856
      %v2041 = vpop.f32.mrf.mxu0
      %v2042 = vadd.f32 %v1887, %v2041
      %v2043 = vpop.f32.mrf.mxu0
      %v2044 = vadd.f32 %v1887, %v2043
      %2045 = vmatmul.bf16.gmra.mxu0 %v1857
      %v2046 = vpop.f32.mrf.mxu0
      %v2047 = vadd.f32 %v1887, %v2046
      %v2048 = vpop.f32.mrf.mxu0
      %v2049 = vadd.f32 %v1887, %v2048
      %2050 = vmatmul.bf16.gmra.mxu0 %v1858
      %v2051 = vpop.f32.mrf.mxu0
      %v2052 = vadd.f32 %v1887, %v2051
      %v2053 = vpop.f32.mrf.mxu0
      %v2054 = vadd.f32 %v1887, %v2053
      %2055 = vmatmul.bf16.gmra.mxu0 %v1859
      %v2056 = vpop.f32.mrf.mxu0
      %v2057 = vadd.f32 %v1887, %v2056
      %v2058 = vpop.f32.mrf.mxu0
      %v2059 = vadd.f32 %v1887, %v2058
      %2060 = vmatmul.bf16.gmra.mxu0 %v1860
      %v2061 = vpop.f32.mrf.mxu0
      %v2062 = vadd.f32 %v1887, %v2061
      %v2063 = vpop.f32.mrf.mxu0
      %v2064 = vadd.f32 %v1887, %v2063
      %2065 = vmatmul.bf16.gmra.mxu0 %v1861
      %v2066 = vpop.f32.mrf.mxu0
      %v2067 = vadd.f32 %v1887, %v2066
      %v2068 = vpop.f32.mrf.mxu0
      %v2069 = vadd.f32 %v1887, %v2068
      %2070 = vmatmul.bf16.gmra.mxu0 %v1862
      %v2071 = vpop.f32.mrf.mxu0
      %v2072 = vadd.f32 %v1887, %v2071
      %v2073 = vpop.f32.mrf.mxu0
      %v2074 = vadd.f32 %v1887, %v2073
      %2075 = vmatmul.bf16.gmra.mxu0 %v1863
      %v2076 = vpop.f32.mrf.mxu0
      %v2077 = vadd.f32 %v1887, %v2076
      %v2078 = vpop.f32.mrf.mxu0
      %v2079 = vadd.f32 %v1887, %v2078
      %2080 = vmatmul.bf16.gmra.mxu0 %v1864
      %v2081 = vpop.f32.mrf.mxu0
      %v2082 = vadd.f32 %v1887, %v2081
      %v2083 = vpop.f32.mrf.mxu0
      %v2084 = vadd.f32 %v1887, %v2083
      %2085 = vmatmul.bf16.gmra.mxu0 %v1865
      %v2086 = vpop.f32.mrf.mxu0
      %v2087 = vadd.f32 %v1887, %v2086
      %v2088 = vpop.f32.mrf.mxu0
      %v2089 = vadd.f32 %v1887, %v2088
      %2090 = vmatmul.bf16.gmra.mxu0 %v1866
      %v2091 = vpop.f32.mrf.mxu0
      %v2092 = vadd.f32 %v1887, %v2091
      %v2093 = vpop.f32.mrf.mxu0
      %v2094 = vadd.f32 %v1887, %v2093
      %2095 = vmatmul.bf16.gmra.mxu0 %v1867
      %v2096 = vpop.f32.mrf.mxu0
      %v2097 = vadd.f32 %v1887, %v2096
      %v2098 = vpop.f32.mrf.mxu0
      %v2099 = vadd.f32 %v1887, %v2098
      %2100 = vmatmul.bf16.gmra.mxu0 %v1868
      %v2101 = vpop.f32.mrf.mxu0
      %v2102 = vadd.f32 %v1887, %v2101
      %v2103 = vpop.f32.mrf.mxu0
      %v2104 = vadd.f32 %v1887, %v2103
      %2105 = vdwg.mxu0
      %v2106 = vmul.f32 %v1947, %v1947
      %v2107 = vmul.f32 %v1949, %v1949
      %v2108 = vmul.f32 %v1952, %v1952
      %v2109 = vmul.f32 %v1954, %v1954
      %v2110 = vmul.f32 %v1957, %v1957
      %v2111 = vmul.f32 %v1959, %v1959
      %v2112 = vmul.f32 %v1962, %v1962
      %v2113 = vmul.f32 %v1964, %v1964
      %v2114 = vmul.f32 %v1967, %v1967
      %v2115 = vmul.f32 %v1969, %v1969
      %v2116 = vmul.f32 %v1972, %v1972
      %v2117 = vmul.f32 %v1974, %v1974
      %v2118 = vmul.f32 %v1977, %v1977
      %v2119 = vmul.f32 %v1979, %v1979
      %v2120 = vmul.f32 %v1982, %v1982
      %v2121 = vmul.f32 %v1984, %v1984
      %v2122 = vmul.f32 %v1987, %v1987
      %v2123 = vmul.f32 %v1989, %v1989
      %v2124 = vmul.f32 %v1992, %v1992
      %v2125 = vmul.f32 %v1994, %v1994
      %v2126 = vmul.f32 %v1997, %v1997
      %v2127 = vmul.f32 %v1999, %v1999
      %v2128 = vmul.f32 %v2002, %v2002
      %v2129 = vmul.f32 %v2004, %v2004
      %v2130 = vmul.f32 %v2007, %v2007
      %v2131 = vmul.f32 %v2009, %v2009
      %v2132 = vmul.f32 %v2012, %v2012
      %v2133 = vmul.f32 %v2014, %v2014
      %v2134 = vmul.f32 %v2017, %v2017
      %v2135 = vmul.f32 %v2019, %v2019
      %v2136 = vmul.f32 %v2022, %v2022
      %v2137 = vmul.f32 %v2024, %v2024
      %v2138 = vmul.f32 %v2027, %v2027
      %v2139 = vmul.f32 %v2029, %v2029
      %v2140 = vmul.f32 %v2032, %v2032
      %v2141 = vmul.f32 %v2034, %v2034
      %v2142 = vmul.f32 %v2037, %v2037
      %v2143 = vmul.f32 %v2039, %v2039
      %v2144 = vmul.f32 %v2042, %v2042
      %v2145 = vmul.f32 %v2044, %v2044
      %v2146 = vmul.f32 %v2047, %v2047
      %v2147 = vmul.f32 %v2049, %v2049
      %v2148 = vmul.f32 %v2052, %v2052
      %v2149 = vmul.f32 %v2054, %v2054
      %v2150 = vmul.f32 %v2057, %v2057
      %v2151 = vmul.f32 %v2059, %v2059
      %v2152 = vmul.f32 %v2062, %v2062
      %v2153 = vmul.f32 %v2064, %v2064
      %v2154 = vmul.f32 %v2067, %v2067
      %v2155 = vmul.f32 %v2069, %v2069
      %v2156 = vmul.f32 %v2072, %v2072
      %v2157 = vmul.f32 %v2074, %v2074
      %v2158 = vmul.f32 %v2077, %v2077
      %v2159 = vmul.f32 %v2079, %v2079
      %v2160 = vmul.f32 %v2082, %v2082
      %v2161 = vmul.f32 %v2084, %v2084
      %v2162 = vmul.f32 %v2087, %v2087
      %v2163 = vmul.f32 %v2089, %v2089
      %v2164 = vmul.f32 %v2092, %v2092
      %v2165 = vmul.f32 %v2094, %v2094
      %v2166 = vmul.f32 %v2097, %v2097
      %v2167 = vmul.f32 %v2099, %v2099
      %v2168 = vmul.f32 %v2102, %v2102
      %v2169 = vmul.f32 %v2104, %v2104
      %v2170 = vmul.f32 %v1947, %v2106
      %v2171 = vmul.f32 %v1949, %v2107
      %v2172 = vmul.f32 %v1952, %v2108
      %v2173 = vmul.f32 %v1954, %v2109
      %v2174 = vmul.f32 %v1957, %v2110
      %v2175 = vmul.f32 %v1959, %v2111
      %v2176 = vmul.f32 %v1962, %v2112
      %v2177 = vmul.f32 %v1964, %v2113
      %v2178 = vmul.f32 %v1967, %v2114
      %v2179 = vmul.f32 %v1969, %v2115
      %v2180 = vmul.f32 %v1972, %v2116
      %v2181 = vmul.f32 %v1974, %v2117
      %v2182 = vmul.f32 %v1977, %v2118
      %v2183 = vmul.f32 %v1979, %v2119
      %v2184 = vmul.f32 %v1982, %v2120
      %v2185 = vmul.f32 %v1984, %v2121
      %v2186 = vmul.f32 %v1987, %v2122
      %v2187 = vmul.f32 %v1989, %v2123
      %v2188 = vmul.f32 %v1992, %v2124
      %v2189 = vmul.f32 %v1994, %v2125
      %v2190 = vmul.f32 %v1997, %v2126
      %v2191 = vmul.f32 %v1999, %v2127
      %v2192 = vmul.f32 %v2002, %v2128
      %v2193 = vmul.f32 %v2004, %v2129
      %v2194 = vmul.f32 %v2007, %v2130
      %v2195 = vmul.f32 %v2009, %v2131
      %v2196 = vmul.f32 %v2012, %v2132
      %v2197 = vmul.f32 %v2014, %v2133
      %v2198 = vmul.f32 %v2017, %v2134
      %v2199 = vmul.f32 %v2019, %v2135
      %v2200 = vmul.f32 %v2022, %v2136
      %v2201 = vmul.f32 %v2024, %v2137
      %v2202 = vmul.f32 %v2027, %v2138
      %v2203 = vmul.f32 %v2029, %v2139
      %v2204 = vmul.f32 %v2032, %v2140
      %v2205 = vmul.f32 %v2034, %v2141
      %v2206 = vmul.f32 %v2037, %v2142
      %v2207 = vmul.f32 %v2039, %v2143
      %v2208 = vmul.f32 %v2042, %v2144
      %v2209 = vmul.f32 %v2044, %v2145
      %v2210 = vmul.f32 %v2047, %v2146
      %v2211 = vmul.f32 %v2049, %v2147
      %v2212 = vmul.f32 %v2052, %v2148
      %v2213 = vmul.f32 %v2054, %v2149
      %v2214 = vmul.f32 %v2057, %v2150
      %v2215 = vmul.f32 %v2059, %v2151
      %v2216 = vmul.f32 %v2062, %v2152
      %v2217 = vmul.f32 %v2064, %v2153
      %v2218 = vmul.f32 %v2067, %v2154
      %v2219 = vmul.f32 %v2069, %v2155
      %v2220 = vmul.f32 %v2072, %v2156
      %v2221 = vmul.f32 %v2074, %v2157
      %v2222 = vmul.f32 %v2077, %v2158
      %v2223 = vmul.f32 %v2079, %v2159
      %v2224 = vmul.f32 %v2082, %v2160
      %v2225 = vmul.f32 %v2084, %v2161
      %v2226 = vmul.f32 %v2087, %v2162
      %v2227 = vmul.f32 %v2089, %v2163
      %v2228 = vmul.f32 %v2092, %v2164
      %v2229 = vmul.f32 %v2094, %v2165
      %v2230 = vmul.f32 %v2097, %v2166
      %v2231 = vmul.f32 %v2099, %v2167
      %v2232 = vmul.f32 %v2102, %v2168
      %v2233 = vmul.f32 %v2104, %v2169
      %v2234 = vmul.f32 %v2170, 0.044715
      %v2235 = vmul.f32 %v2171, 0.044715
      %v2236 = vmul.f32 %v2172, 0.044715
      %v2237 = vmul.f32 %v2173, 0.044715
      %v2238 = vmul.f32 %v2174, 0.044715
      %v2239 = vmul.f32 %v2175, 0.044715
      %v2240 = vmul.f32 %v2176, 0.044715
      %v2241 = vmul.f32 %v2177, 0.044715
      %v2242 = vmul.f32 %v2178, 0.044715
      %v2243 = vmul.f32 %v2179, 0.044715
      %v2244 = vmul.f32 %v2180, 0.044715
      %v2245 = vmul.f32 %v2181, 0.044715
      %v2246 = vmul.f32 %v2182, 0.044715
      %v2247 = vmul.f32 %v2183, 0.044715
      %v2248 = vmul.f32 %v2184, 0.044715
      %v2249 = vmul.f32 %v2185, 0.044715
      %v2250 = vmul.f32 %v2186, 0.044715
      %v2251 = vmul.f32 %v2187, 0.044715
      %v2252 = vmul.f32 %v2188, 0.044715
      %v2253 = vmul.f32 %v2189, 0.044715
      %v2254 = vmul.f32 %v2190, 0.044715
      %v2255 = vmul.f32 %v2191, 0.044715
      %v2256 = vmul.f32 %v2192, 0.044715
      %v2257 = vmul.f32 %v2193, 0.044715
      %v2258 = vmul.f32 %v2194, 0.044715
      %v2259 = vmul.f32 %v2195, 0.044715
      %v2260 = vmul.f32 %v2196, 0.044715
      %v2261 = vmul.f32 %v2197, 0.044715
      %v2262 = vmul.f32 %v2198, 0.044715
      %v2263 = vmul.f32 %v2199, 0.044715
      %v2264 = vmul.f32 %v2200, 0.044715
      %v2265 = vmul.f32 %v2201, 0.044715
      %v2266 = vmul.f32 %v2202, 0.044715
      %v2267 = vmul.f32 %v2203, 0.044715
      %v2268 = vmul.f32 %v2204, 0.044715
      %v2269 = vmul.f32 %v2205, 0.044715
      %v2270 = vmul.f32 %v2206, 0.044715
      %v2271 = vmul.f32 %v2207, 0.044715
      %v2272 = vmul.f32 %v2208, 0.044715
      %v2273 = vmul.f32 %v2209, 0.044715
      %v2274 = vmul.f32 %v2210, 0.044715
      %v2275 = vmul.f32 %v2211, 0.044715
      %v2276 = vmul.f32 %v2212, 0.044715
      %v2277 = vmul.f32 %v2213, 0.044715
      %v2278 = vmul.f32 %v2214, 0.044715
      %v2279 = vmul.f32 %v2215, 0.044715
      %v2280 = vmul.f32 %v2216, 0.044715
      %v2281 = vmul.f32 %v2217, 0.044715
      %v2282 = vmul.f32 %v2218, 0.044715
      %v2283 = vmul.f32 %v2219, 0.044715
      %v2284 = vmul.f32 %v2220, 0.044715
      %v2285 = vmul.f32 %v2221, 0.044715
      %v2286 = vmul.f32 %v2222, 0.044715
      %v2287 = vmul.f32 %v2223, 0.044715
      %v2288 = vmul.f32 %v2224, 0.044715
      %v2289 = vmul.f32 %v2225, 0.044715
      %v2290 = vmul.f32 %v2226, 0.044715
      %v2291 = vmul.f32 %v2227, 0.044715
      %v2292 = vmul.f32 %v2228, 0.044715
      %v2293 = vmul.f32 %v2229, 0.044715
      %v2294 = vmul.f32 %v2230, 0.044715
      %v2295 = vmul.f32 %v2231, 0.044715
      %v2296 = vmul.f32 %v2232, 0.044715
      %v2297 = vmul.f32 %v2233, 0.044715
      %v2298 = vadd.f32 %v1947, %v2234
      %v2299 = vadd.f32 %v1949, %v2235
      %v2300 = vadd.f32 %v1952, %v2236
      %v2301 = vadd.f32 %v1954, %v2237
      %v2302 = vadd.f32 %v1957, %v2238
      %v2303 = vadd.f32 %v1959, %v2239
      %v2304 = vadd.f32 %v1962, %v2240
      %v2305 = vadd.f32 %v1964, %v2241
      %v2306 = vadd.f32 %v1967, %v2242
      %v2307 = vadd.f32 %v1969, %v2243
      %v2308 = vadd.f32 %v1972, %v2244
      %v2309 = vadd.f32 %v1974, %v2245
      %v2310 = vadd.f32 %v1977, %v2246
      %v2311 = vadd.f32 %v1979, %v2247
      %v2312 = vadd.f32 %v1982, %v2248
      %v2313 = vadd.f32 %v1984, %v2249
      %v2314 = vadd.f32 %v1987, %v2250
      %v2315 = vadd.f32 %v1989, %v2251
      %v2316 = vadd.f32 %v1992, %v2252
      %v2317 = vadd.f32 %v1994, %v2253
      %v2318 = vadd.f32 %v1997, %v2254
      %v2319 = vadd.f32 %v1999, %v2255
      %v2320 = vadd.f32 %v2002, %v2256
      %v2321 = vadd.f32 %v2004, %v2257
      %v2322 = vadd.f32 %v2007, %v2258
      %v2323 = vadd.f32 %v2009, %v2259
      %v2324 = vadd.f32 %v2012, %v2260
      %v2325 = vadd.f32 %v2014, %v2261
      %v2326 = vadd.f32 %v2017, %v2262
      %v2327 = vadd.f32 %v2019, %v2263
      %v2328 = vadd.f32 %v2022, %v2264
      %v2329 = vadd.f32 %v2024, %v2265
      %v2330 = vadd.f32 %v2027, %v2266
      %v2331 = vadd.f32 %v2029, %v2267
      %v2332 = vadd.f32 %v2032, %v2268
      %v2333 = vadd.f32 %v2034, %v2269
      %v2334 = vadd.f32 %v2037, %v2270
      %v2335 = vadd.f32 %v2039, %v2271
      %v2336 = vadd.f32 %v2042, %v2272
      %v2337 = vadd.f32 %v2044, %v2273
      %v2338 = vadd.f32 %v2047, %v2274
      %v2339 = vadd.f32 %v2049, %v2275
      %v2340 = vadd.f32 %v2052, %v2276
      %v2341 = vadd.f32 %v2054, %v2277
      %v2342 = vadd.f32 %v2057, %v2278
      %v2343 = vadd.f32 %v2059, %v2279
      %v2344 = vadd.f32 %v2062, %v2280
      %v2345 = vadd.f32 %v2064, %v2281
      %v2346 = vadd.f32 %v2067, %v2282
      %v2347 = vadd.f32 %v2069, %v2283
      %v2348 = vadd.f32 %v2072, %v2284
      %v2349 = vadd.f32 %v2074, %v2285
      %v2350 = vadd.f32 %v2077, %v2286
      %v2351 = vadd.f32 %v2079, %v2287
      %v2352 = vadd.f32 %v2082, %v2288
      %v2353 = vadd.f32 %v2084, %v2289
      %v2354 = vadd.f32 %v2087, %v2290
      %v2355 = vadd.f32 %v2089, %v2291
      %v2356 = vadd.f32 %v2092, %v2292
      %v2357 = vadd.f32 %v2094, %v2293
      %v2358 = vadd.f32 %v2097, %v2294
      %v2359 = vadd.f32 %v2099, %v2295
      %v2360 = vadd.f32 %v2102, %v2296
      %v2361 = vadd.f32 %v2104, %v2297
      %v2362 = vmul.f32 %v2298, 0.7978846
      %v2363 = vmul.f32 %v2299, 0.7978846
      %v2364 = vmul.f32 %v2300, 0.7978846
      %v2365 = vmul.f32 %v2301, 0.7978846
      %v2366 = vmul.f32 %v2302, 0.7978846
      %v2367 = vmul.f32 %v2303, 0.7978846
      %v2368 = vmul.f32 %v2304, 0.7978846
      %v2369 = vmul.f32 %v2305, 0.7978846
      %v2370 = vmul.f32 %v2306, 0.7978846
      %v2371 = vmul.f32 %v2307, 0.7978846
      %v2372 = vmul.f32 %v2308, 0.7978846
      %v2373 = vmul.f32 %v2309, 0.7978846
      %v2374 = vmul.f32 %v2310, 0.7978846
      %v2375 = vmul.f32 %v2311, 0.7978846
      %v2376 = vmul.f32 %v2312, 0.7978846
      %v2377 = vmul.f32 %v2313, 0.7978846
      %v2378 = vmul.f32 %v2314, 0.7978846
      %v2379 = vmul.f32 %v2315, 0.7978846
      %v2380 = vmul.f32 %v2316, 0.7978846
      %v2381 = vmul.f32 %v2317, 0.7978846
      %v2382 = vmul.f32 %v2318, 0.7978846
      %v2383 = vmul.f32 %v2319, 0.7978846
      %v2384 = vmul.f32 %v2320, 0.7978846
      %v2385 = vmul.f32 %v2321, 0.7978846
      %v2386 = vmul.f32 %v2322, 0.7978846
      %v2387 = vmul.f32 %v2323, 0.7978846
      %v2388 = vmul.f32 %v2324, 0.7978846
      %v2389 = vmul.f32 %v2325, 0.7978846
      %v2390 = vmul.f32 %v2326, 0.7978846
      %v2391 = vmul.f32 %v2327, 0.7978846
      %v2392 = vmul.f32 %v2328, 0.7978846
      %v2393 = vmul.f32 %v2329, 0.7978846
      %v2394 = vmul.f32 %v2330, 0.7978846
      %v2395 = vmul.f32 %v2331, 0.7978846
      %v2396 = vmul.f32 %v2332, 0.7978846
      %v2397 = vmul.f32 %v2333, 0.7978846
      %v2398 = vmul.f32 %v2334, 0.7978846
      %v2399 = vmul.f32 %v2335, 0.7978846
      %v2400 = vmul.f32 %v2336, 0.7978846
      %v2401 = vmul.f32 %v2337, 0.7978846
      %v2402 = vmul.f32 %v2338, 0.7978846
      %v2403 = vmul.f32 %v2339, 0.7978846
      %v2404 = vmul.f32 %v2340, 0.7978846
      %v2405 = vmul.f32 %v2341, 0.7978846
      %v2406 = vmul.f32 %v2342, 0.7978846
      %v2407 = vmul.f32 %v2343, 0.7978846
      %v2408 = vmul.f32 %v2344, 0.7978846
      %v2409 = vmul.f32 %v2345, 0.7978846
      %v2410 = vmul.f32 %v2346, 0.7978846
      %v2411 = vmul.f32 %v2347, 0.7978846
      %v2412 = vmul.f32 %v2348, 0.7978846
      %v2413 = vmul.f32 %v2349, 0.7978846
      %v2414 = vmul.f32 %v2350, 0.7978846
      %v2415 = vmul.f32 %v2351, 0.7978846
      %v2416 = vmul.f32 %v2352, 0.7978846
      %v2417 = vmul.f32 %v2353, 0.7978846
      %v2418 = vmul.f32 %v2354, 0.7978846
      %v2419 = vmul.f32 %v2355, 0.7978846
      %v2420 = vmul.f32 %v2356, 0.7978846
      %v2421 = vmul.f32 %v2357, 0.7978846
      %v2422 = vmul.f32 %v2358, 0.7978846
      %v2423 = vmul.f32 %v2359, 0.7978846
      %v2424 = vmul.f32 %v2360, 0.7978846
      %v2425 = vmul.f32 %v2361, 0.7978846
      %v2426 = vtanh.pop %v2362
      %v2427 = vtanh.pop %v2363
      %v2428 = vtanh.pop %v2364
      %v2429 = vtanh.pop %v2365
      %v2430 = vtanh.pop %v2366
      %v2431 = vtanh.pop %v2367
      %v2432 = vtanh.pop %v2368
      %v2433 = vtanh.pop %v2369
      %v2434 = vtanh.pop %v2370
      %v2435 = vtanh.pop %v2371
      %v2436 = vtanh.pop %v2372
      %v2437 = vtanh.pop %v2373
      %v2438 = vtanh.pop %v2374
      %v2439 = vtanh.pop %v2375
      %v2440 = vtanh.pop %v2376
      %v2441 = vtanh.pop %v2377
      %v2442 = vtanh.pop %v2378
      %v2443 = vtanh.pop %v2379
      %v2444 = vtanh.pop %v2380
      %v2445 = vtanh.pop %v2381
      %v2446 = vtanh.pop %v2382
      %v2447 = vtanh.pop %v2383
      %v2448 = vtanh.pop %v2384
      %v2449 = vtanh.pop %v2385
      %v2450 = vtanh.pop %v2386
      %v2451 = vtanh.pop %v2387
      %v2452 = vtanh.pop %v2388
      %v2453 = vtanh.pop %v2389
      %v2454 = vtanh.pop %v2390
      %v2455 = vtanh.pop %v2391
      %v2456 = vtanh.pop %v2392
      %v2457 = vtanh.pop %v2393
      %v2458 = vtanh.pop %v2394
      %v2459 = vtanh.pop %v2395
      %v2460 = vtanh.pop %v2396
      %v2461 = vtanh.pop %v2397
      %v2462 = vtanh.pop %v2398
      %v2463 = vtanh.pop %v2399
      %v2464 = vtanh.pop %v2400
      %v2465 = vtanh.pop %v2401
      %v2466 = vtanh.pop %v2402
      %v2467 = vtanh.pop %v2403
      %v2468 = vtanh.pop %v2404
      %v2469 = vtanh.pop %v2405
      %v2470 = vtanh.pop %v2406
      %v2471 = vtanh.pop %v2407
      %v2472 = vtanh.pop %v2408
      %v2473 = vtanh.pop %v2409
      %v2474 = vtanh.pop %v2410
      %v2475 = vtanh.pop %v2411
      %v2476 = vtanh.pop %v2412
      %v2477 = vtanh.pop %v2413
      %v2478 = vtanh.pop %v2414
      %v2479 = vtanh.pop %v2415
      %v2480 = vtanh.pop %v2416
      %v2481 = vtanh.pop %v2417
      %v2482 = vtanh.pop %v2418
      %v2483 = vtanh.pop %v2419
      %v2484 = vtanh.pop %v2420
      %v2485 = vtanh.pop %v2421
      %v2486 = vtanh.pop %v2422
      %v2487 = vtanh.pop %v2423
      %v2488 = vtanh.pop %v2424
      %v2489 = vtanh.pop %v2425
      %v2490 = vadd.f32 %v2426, 1.0
      %v2491 = vadd.f32 %v2427, 1.0
      %v2492 = vadd.f32 %v2428, 1.0
      %v2493 = vadd.f32 %v2429, 1.0
      %v2494 = vadd.f32 %v2430, 1.0
      %v2495 = vadd.f32 %v2431, 1.0
      %v2496 = vadd.f32 %v2432, 1.0
      %v2497 = vadd.f32 %v2433, 1.0
      %v2498 = vadd.f32 %v2434, 1.0
      %v2499 = vadd.f32 %v2435, 1.0
      %v2500 = vadd.f32 %v2436, 1.0
      %v2501 = vadd.f32 %v2437, 1.0
      %v2502 = vadd.f32 %v2438, 1.0
      %v2503 = vadd.f32 %v2439, 1.0
      %v2504 = vadd.f32 %v2440, 1.0
      %v2505 = vadd.f32 %v2441, 1.0
      %v2506 = vadd.f32 %v2442, 1.0
      %v2507 = vadd.f32 %v2443, 1.0
      %v2508 = vadd.f32 %v2444, 1.0
      %v2509 = vadd.f32 %v2445, 1.0
      %v2510 = vadd.f32 %v2446, 1.0
      %v2511 = vadd.f32 %v2447, 1.0
      %v2512 = vadd.f32 %v2448, 1.0
      %v2513 = vadd.f32 %v2449, 1.0
      %v2514 = vadd.f32 %v2450, 1.0
      %v2515 = vadd.f32 %v2451, 1.0
      %v2516 = vadd.f32 %v2452, 1.0
      %v2517 = vadd.f32 %v2453, 1.0
      %v2518 = vadd.f32 %v2454, 1.0
      %v2519 = vadd.f32 %v2455, 1.0
      %v2520 = vadd.f32 %v2456, 1.0
      %v2521 = vadd.f32 %v2457, 1.0
      %v2522 = vadd.f32 %v2458, 1.0
      %v2523 = vadd.f32 %v2459, 1.0
      %v2524 = vadd.f32 %v2460, 1.0
      %v2525 = vadd.f32 %v2461, 1.0
      %v2526 = vadd.f32 %v2462, 1.0
      %v2527 = vadd.f32 %v2463, 1.0
      %v2528 = vadd.f32 %v2464, 1.0
      %v2529 = vadd.f32 %v2465, 1.0
      %v2530 = vadd.f32 %v2466, 1.0
      %v2531 = vadd.f32 %v2467, 1.0
      %v2532 = vadd.f32 %v2468, 1.0
      %v2533 = vadd.f32 %v2469, 1.0
      %v2534 = vadd.f32 %v2470, 1.0
      %v2535 = vadd.f32 %v2471, 1.0
      %v2536 = vadd.f32 %v2472, 1.0
      %v2537 = vadd.f32 %v2473, 1.0
      %v2538 = vadd.f32 %v2474, 1.0
      %v2539 = vadd.f32 %v2475, 1.0
      %v2540 = vadd.f32 %v2476, 1.0
      %v2541 = vadd.f32 %v2477, 1.0
      %v2542 = vadd.f32 %v2478, 1.0
      %v2543 = vadd.f32 %v2479, 1.0
      %v2544 = vadd.f32 %v2480, 1.0
      %v2545 = vadd.f32 %v2481, 1.0
      %v2546 = vadd.f32 %v2482, 1.0
      %v2547 = vadd.f32 %v2483, 1.0
      %v2548 = vadd.f32 %v2484, 1.0
      %v2549 = vadd.f32 %v2485, 1.0
      %v2550 = vadd.f32 %v2486, 1.0
      %v2551 = vadd.f32 %v2487, 1.0
      %v2552 = vadd.f32 %v2488, 1.0
      %v2553 = vadd.f32 %v2489, 1.0
      %v2554 = vmul.f32 %v2490, 0.5
      %v2555 = vmul.f32 %v2491, 0.5
      %v2556 = vmul.f32 %v2492, 0.5
      %v2557 = vmul.f32 %v2493, 0.5
      %v2558 = vmul.f32 %v2494, 0.5
      %v2559 = vmul.f32 %v2495, 0.5
      %v2560 = vmul.f32 %v2496, 0.5
      %v2561 = vmul.f32 %v2497, 0.5
      %v2562 = vmul.f32 %v2498, 0.5
      %v2563 = vmul.f32 %v2499, 0.5
      %v2564 = vmul.f32 %v2500, 0.5
      %v2565 = vmul.f32 %v2501, 0.5
      %v2566 = vmul.f32 %v2502, 0.5
      %v2567 = vmul.f32 %v2503, 0.5
      %v2568 = vmul.f32 %v2504, 0.5
      %v2569 = vmul.f32 %v2505, 0.5
      %v2570 = vmul.f32 %v2506, 0.5
      %v2571 = vmul.f32 %v2507, 0.5
      %v2572 = vmul.f32 %v2508, 0.5
      %v2573 = vmul.f32 %v2509, 0.5
      %v2574 = vmul.f32 %v2510, 0.5
      %v2575 = vmul.f32 %v2511, 0.5
      %v2576 = vmul.f32 %v2512, 0.5
      %v2577 = vmul.f32 %v2513, 0.5
      %v2578 = vmul.f32 %v2514, 0.5
      %v2579 = vmul.f32 %v2515, 0.5
      %v2580 = vmul.f32 %v2516, 0.5
      %v2581 = vmul.f32 %v2517, 0.5
      %v2582 = vmul.f32 %v2518, 0.5
      %v2583 = vmul.f32 %v2519, 0.5
      %v2584 = vmul.f32 %v2520, 0.5
      %v2585 = vmul.f32 %v2521, 0.5
      %v2586 = vmul.f32 %v2522, 0.5
      %v2587 = vmul.f32 %v2523, 0.5
      %v2588 = vmul.f32 %v2524, 0.5
      %v2589 = vmul.f32 %v2525, 0.5
      %v2590 = vmul.f32 %v2526, 0.5
      %v2591 = vmul.f32 %v2527, 0.5
      %v2592 = vmul.f32 %v2528, 0.5
      %v2593 = vmul.f32 %v2529, 0.5
      %v2594 = vmul.f32 %v2530, 0.5
      %v2595 = vmul.f32 %v2531, 0.5
      %v2596 = vmul.f32 %v2532, 0.5
      %v2597 = vmul.f32 %v2533, 0.5
      %v2598 = vmul.f32 %v2534, 0.5
      %v2599 = vmul.f32 %v2535, 0.5
      %v2600 = vmul.f32 %v2536, 0.5
      %v2601 = vmul.f32 %v2537, 0.5
      %v2602 = vmul.f32 %v2538, 0.5
      %v2603 = vmul.f32 %v2539, 0.5
      %v2604 = vmul.f32 %v2540, 0.5
      %v2605 = vmul.f32 %v2541, 0.5
      %v2606 = vmul.f32 %v2542, 0.5
      %v2607 = vmul.f32 %v2543, 0.5
      %v2608 = vmul.f32 %v2544, 0.5
      %v2609 = vmul.f32 %v2545, 0.5
      %v2610 = vmul.f32 %v2546, 0.5
      %v2611 = vmul.f32 %v2547, 0.5
      %v2612 = vmul.f32 %v2548, 0.5
      %v2613 = vmul.f32 %v2549, 0.5
      %v2614 = vmul.f32 %v2550, 0.5
      %v2615 = vmul.f32 %v2551, 0.5
      %v2616 = vmul.f32 %v2552, 0.5
      %v2617 = vmul.f32 %v2553, 0.5
      %v2618 = vmul.f32 %v1947, %v2554
      %v2619 = vmul.f32 %v1949, %v2555
      %v2620 = vmul.f32 %v1952, %v2556
      %v2621 = vmul.f32 %v1954, %v2557
      %v2622 = vmul.f32 %v1957, %v2558
      %v2623 = vmul.f32 %v1959, %v2559
      %v2624 = vmul.f32 %v1962, %v2560
      %v2625 = vmul.f32 %v1964, %v2561
      %v2626 = vmul.f32 %v1967, %v2562
      %v2627 = vmul.f32 %v1969, %v2563
      %v2628 = vmul.f32 %v1972, %v2564
      %v2629 = vmul.f32 %v1974, %v2565
      %v2630 = vmul.f32 %v1977, %v2566
      %v2631 = vmul.f32 %v1979, %v2567
      %v2632 = vmul.f32 %v1982, %v2568
      %v2633 = vmul.f32 %v1984, %v2569
      %v2634 = vmul.f32 %v1987, %v2570
      %v2635 = vmul.f32 %v1989, %v2571
      %v2636 = vmul.f32 %v1992, %v2572
      %v2637 = vmul.f32 %v1994, %v2573
      %v2638 = vmul.f32 %v1997, %v2574
      %v2639 = vmul.f32 %v1999, %v2575
      %v2640 = vmul.f32 %v2002, %v2576
      %v2641 = vmul.f32 %v2004, %v2577
      %v2642 = vmul.f32 %v2007, %v2578
      %v2643 = vmul.f32 %v2009, %v2579
      %v2644 = vmul.f32 %v2012, %v2580
      %v2645 = vmul.f32 %v2014, %v2581
      %v2646 = vmul.f32 %v2017, %v2582
      %v2647 = vmul.f32 %v2019, %v2583
      %v2648 = vmul.f32 %v2022, %v2584
      %v2649 = vmul.f32 %v2024, %v2585
      %v2650 = vmul.f32 %v2027, %v2586
      %v2651 = vmul.f32 %v2029, %v2587
      %v2652 = vmul.f32 %v2032, %v2588
      %v2653 = vmul.f32 %v2034, %v2589
      %v2654 = vmul.f32 %v2037, %v2590
      %v2655 = vmul.f32 %v2039, %v2591
      %v2656 = vmul.f32 %v2042, %v2592
      %v2657 = vmul.f32 %v2044, %v2593
      %v2658 = vmul.f32 %v2047, %v2594
      %v2659 = vmul.f32 %v2049, %v2595
      %v2660 = vmul.f32 %v2052, %v2596
      %v2661 = vmul.f32 %v2054, %v2597
      %v2662 = vmul.f32 %v2057, %v2598
      %v2663 = vmul.f32 %v2059, %v2599
      %v2664 = vmul.f32 %v2062, %v2600
      %v2665 = vmul.f32 %v2064, %v2601
      %v2666 = vmul.f32 %v2067, %v2602
      %v2667 = vmul.f32 %v2069, %v2603
      %v2668 = vmul.f32 %v2072, %v2604
      %v2669 = vmul.f32 %v2074, %v2605
      %v2670 = vmul.f32 %v2077, %v2606
      %v2671 = vmul.f32 %v2079, %v2607
      %v2672 = vmul.f32 %v2082, %v2608
      %v2673 = vmul.f32 %v2084, %v2609
      %v2674 = vmul.f32 %v2087, %v2610
      %v2675 = vmul.f32 %v2089, %v2611
      %v2676 = vmul.f32 %v2092, %v2612
      %v2677 = vmul.f32 %v2094, %v2613
      %v2678 = vmul.f32 %v2097, %v2614
      %v2679 = vmul.f32 %v2099, %v2615
      %v2680 = vmul.f32 %v2102, %v2616
      %v2681 = vmul.f32 %v2104, %v2617
      %v2682 = vpack.c.bf16 %v2619, %v2618
      %v2683 = vpack.c.bf16 %v2621, %v2620
      %v2684 = vpack.c.bf16 %v2623, %v2622
      %v2685 = vpack.c.bf16 %v2625, %v2624
      %v2686 = vpack.c.bf16 %v2627, %v2626
      %v2687 = vpack.c.bf16 %v2629, %v2628
      %v2688 = vpack.c.bf16 %v2631, %v2630
      %v2689 = vpack.c.bf16 %v2633, %v2632
      %v2690 = vpack.c.bf16 %v2635, %v2634
      %v2691 = vpack.c.bf16 %v2637, %v2636
      %v2692 = vpack.c.bf16 %v2639, %v2638
      %v2693 = vpack.c.bf16 %v2641, %v2640
      %v2694 = vpack.c.bf16 %v2643, %v2642
      %v2695 = vpack.c.bf16 %v2645, %v2644
      %v2696 = vpack.c.bf16 %v2647, %v2646
      %v2697 = vpack.c.bf16 %v2649, %v2648
      %v2698 = vpack.c.bf16 %v2651, %v2650
      %v2699 = vpack.c.bf16 %v2653, %v2652
      %v2700 = vpack.c.bf16 %v2655, %v2654
      %v2701 = vpack.c.bf16 %v2657, %v2656
      %v2702 = vpack.c.bf16 %v2659, %v2658
      %v2703 = vpack.c.bf16 %v2661, %v2660
      %v2704 = vpack.c.bf16 %v2663, %v2662
      %v2705 = vpack.c.bf16 %v2665, %v2664
      %v2706 = vpack.c.bf16 %v2667, %v2666
      %v2707 = vpack.c.bf16 %v2669, %v2668
      %v2708 = vpack.c.bf16 %v2671, %v2670
      %v2709 = vpack.c.bf16 %v2673, %v2672
      %v2710 = vpack.c.bf16 %v2675, %v2674
      %v2711 = vpack.c.bf16 %v2677, %v2676
      %v2712 = vpack.c.bf16 %v2679, %v2678
      %v2713 = vpack.c.bf16 %v2681, %v2680
      %v2714 = vld [vmem:[%s7] sm:$0xf]
      %v2715 = vld [vmem:[%s7 + $0x4] sm:$0xf]
      %v2716 = vld [vmem:[%s7 + $0x8] sm:$0xf]
      %v2717 = vld [vmem:[%s7 + $0xc] sm:$0xf]
      %v2718 = vld [vmem:[%s7 + $0x10] sm:$0xf]
      %v2719 = vld [vmem:[%s7 + $0x14] sm:$0xf]
      %v2720 = vld [vmem:[%s7 + $0x18] sm:$0xf]
      %v2721 = vld [vmem:[%s7 + $0x1c] sm:$0xf]
      %v2722 = vld [vmem:[%s7 + $0x20] sm:$0xf]
      %v2723 = vld [vmem:[%s7 + $0x24] sm:$0xf]
      %v2724 = vld [vmem:[%s7 + $0x28] sm:$0xf]
      %v2725 = vld [vmem:[%s7 + $0x2c] sm:$0xf]
      %v2726 = vld [vmem:[%s7 + $0x30] sm:$0xf]
      %v2727 = vld [vmem:[%s7 + $0x34] sm:$0xf]
      %v2728 = vld [vmem:[%s7 + $0x38] sm:$0xf]
      %v2729 = vld [vmem:[%s7 + $0x3c] sm:$0xf]
      %v2730 = vld [vmem:[%s8] sm:$0x1]
      %v2732 = vperm.slane %v2730, 0
      %v2750 = vunpack.c.l.b16 %v2714
      %v2751 = vunpack.c.l.b16 %v2715
      %v2752 = vunpack.c.l.b16 %v2716
      %v2753 = vunpack.c.l.b16 %v2717
      %v2754 = vunpack.c.l.b16 %v2718
      %v2755 = vunpack.c.l.b16 %v2719
      %v2756 = vunpack.c.l.b16 %v2720
      %v2757 = vunpack.c.l.b16 %v2721
      %v2758 = vunpack.c.l.b16 %v2722
      %v2759 = vunpack.c.l.b16 %v2723
      %v2760 = vunpack.c.l.b16 %v2724
      %v2761 = vunpack.c.l.b16 %v2725
      %v2762 = vunpack.c.l.b16 %v2726
      %v2763 = vunpack.c.l.b16 %v2727
      %v2764 = vunpack.c.l.b16 %v2728
      %v2765 = vunpack.c.l.b16 %v2729
      %v2766 = vpack.c.b16 %v2751, %v2750
      %v2767 = vpack.c.b16 %v2753, %v2752
      %v2768 = vpack.c.b16 %v2755, %v2754
      %v2769 = vpack.c.b16 %v2757, %v2756
      %v2770 = vpack.c.b16 %v2759, %v2758
      %v2771 = vpack.c.b16 %v2761, %v2760
      %v2772 = vpack.c.b16 %v2763, %v2762
      %v2773 = vpack.c.b16 %v2765, %v2764
      %2782 = vmatpush.bf16.msra.mxu0 %v2773
      %2783 = vmatpush.bf16.msra.mxu0 %v2772
      %2784 = vmatpush.bf16.msra.mxu0 %v2771
      %2785 = vmatpush.bf16.msra.mxu0 %v2770
      %2786 = vmatpush.bf16.msra.mxu0 %v2769
      %2787 = vmatpush.bf16.msra.mxu0 %v2768
      %2788 = vmatpush.bf16.msra.mxu0 %v2767
      %2789 = vmatpush.bf16.msra.mxu0 %v2766
      %2790 = vmatmul.bf16.gmra.mxu0 %v2682
      %v2791 = vpop.f32.mrf.mxu0
      %v2792 = vadd.f32 %v2732, %v2791
      %v2793 = vpop.f32.mrf.mxu0
      %v2794 = vadd.f32 %v2732, %v2793
      %2795 = vmatmul.bf16.gmra.mxu0 %v2683
      %v2796 = vpop.f32.mrf.mxu0
      %v2797 = vadd.f32 %v2732, %v2796
      %v2798 = vpop.f32.mrf.mxu0
      %v2799 = vadd.f32 %v2732, %v2798
      %2800 = vmatmul.bf16.gmra.mxu0 %v2684
      %v2801 = vpop.f32.mrf.mxu0
      %v2802 = vadd.f32 %v2732, %v2801
      %v2803 = vpop.f32.mrf.mxu0
      %v2804 = vadd.f32 %v2732, %v2803
      %2805 = vmatmul.bf16.gmra.mxu0 %v2685
      %v2806 = vpop.f32.mrf.mxu0
      %v2807 = vadd.f32 %v2732, %v2806
      %v2808 = vpop.f32.mrf.mxu0
      %v2809 = vadd.f32 %v2732, %v2808
      %2810 = vmatmul.bf16.gmra.mxu0 %v2686
      %v2811 = vpop.f32.mrf.mxu0
      %v2812 = vadd.f32 %v2732, %v2811
      %v2813 = vpop.f32.mrf.mxu0
      %v2814 = vadd.f32 %v2732, %v2813
      %2815 = vmatmul.bf16.gmra.mxu0 %v2687
      %v2816 = vpop.f32.mrf.mxu0
      %v2817 = vadd.f32 %v2732, %v2816
      %v2818 = vpop.f32.mrf.mxu0
      %v2819 = vadd.f32 %v2732, %v2818
      %2820 = vmatmul.bf16.gmra.mxu0 %v2688
      %v2821 = vpop.f32.mrf.mxu0
      %v2822 = vadd.f32 %v2732, %v2821
      %v2823 = vpop.f32.mrf.mxu0
      %v2824 = vadd.f32 %v2732, %v2823
      %2825 = vmatmul.bf16.gmra.mxu0 %v2689
      %v2826 = vpop.f32.mrf.mxu0
      %v2827 = vadd.f32 %v2732, %v2826
      %v2828 = vpop.f32.mrf.mxu0
      %v2829 = vadd.f32 %v2732, %v2828
      %2830 = vmatmul.bf16.gmra.mxu0 %v2690
      %v2831 = vpop.f32.mrf.mxu0
      %v2832 = vadd.f32 %v2732, %v2831
      %v2833 = vpop.f32.mrf.mxu0
      %v2834 = vadd.f32 %v2732, %v2833
      %2835 = vmatmul.bf16.gmra.mxu0 %v2691
      %v2836 = vpop.f32.mrf.mxu0
      %v2837 = vadd.f32 %v2732, %v2836
      %v2838 = vpop.f32.mrf.mxu0
      %v2839 = vadd.f32 %v2732, %v2838
      %2840 = vmatmul.bf16.gmra.mxu0 %v2692
      %v2841 = vpop.f32.mrf.mxu0
      %v2842 = vadd.f32 %v2732, %v2841
      %v2843 = vpop.f32.mrf.mxu0
      %v2844 = vadd.f32 %v2732, %v2843
      %2845 = vmatmul.bf16.gmra.mxu0 %v2693
      %v2846 = vpop.f32.mrf.mxu0
      %v2847 = vadd.f32 %v2732, %v2846
      %v2848 = vpop.f32.mrf.mxu0
      %v2849 = vadd.f32 %v2732, %v2848
      %2850 = vmatmul.bf16.gmra.mxu0 %v2694
      %v2851 = vpop.f32.mrf.mxu0
      %v2852 = vadd.f32 %v2732, %v2851
      %v2853 = vpop.f32.mrf.mxu0
      %v2854 = vadd.f32 %v2732, %v2853
      %2855 = vmatmul.bf16.gmra.mxu0 %v2695
      %v2856 = vpop.f32.mrf.mxu0
      %v2857 = vadd.f32 %v2732, %v2856
      %v2858 = vpop.f32.mrf.mxu0
      %v2859 = vadd.f32 %v2732, %v2858
      %2860 = vmatmul.bf16.gmra.mxu0 %v2696
      %v2861 = vpop.f32.mrf.mxu0
      %v2862 = vadd.f32 %v2732, %v2861
      %v2863 = vpop.f32.mrf.mxu0
      %v2864 = vadd.f32 %v2732, %v2863
      %2865 = vmatmul.bf16.gmra.mxu0 %v2697
      %v2866 = vpop.f32.mrf.mxu0
      %v2867 = vadd.f32 %v2732, %v2866
      %v2868 = vpop.f32.mrf.mxu0
      %v2869 = vadd.f32 %v2732, %v2868
      %2870 = vmatmul.bf16.gmra.mxu0 %v2698
      %v2871 = vpop.f32.mrf.mxu0
      %v2872 = vadd.f32 %v2732, %v2871
      %v2873 = vpop.f32.mrf.mxu0
      %v2874 = vadd.f32 %v2732, %v2873
      %2875 = vmatmul.bf16.gmra.mxu0 %v2699
      %v2876 = vpop.f32.mrf.mxu0
      %v2877 = vadd.f32 %v2732, %v2876
      %v2878 = vpop.f32.mrf.mxu0
      %v2879 = vadd.f32 %v2732, %v2878
      %2880 = vmatmul.bf16.gmra.mxu0 %v2700
      %v2881 = vpop.f32.mrf.mxu0
      %v2882 = vadd.f32 %v2732, %v2881
      %v2883 = vpop.f32.mrf.mxu0
      %v2884 = vadd.f32 %v2732, %v2883
      %2885 = vmatmul.bf16.gmra.mxu0 %v2701
      %v2886 = vpop.f32.mrf.mxu0
      %v2887 = vadd.f32 %v2732, %v2886
      %v2888 = vpop.f32.mrf.mxu0
      %v2889 = vadd.f32 %v2732, %v2888
      %2890 = vmatmul.bf16.gmra.mxu0 %v2702
      %v2891 = vpop.f32.mrf.mxu0
      %v2892 = vadd.f32 %v2732, %v2891
      %v2893 = vpop.f32.mrf.mxu0
      %v2894 = vadd.f32 %v2732, %v2893
      %2895 = vmatmul.bf16.gmra.mxu0 %v2703
      %v2896 = vpop.f32.mrf.mxu0
      %v2897 = vadd.f32 %v2732, %v2896
      %v2898 = vpop.f32.mrf.mxu0
      %v2899 = vadd.f32 %v2732, %v2898
      %2900 = vmatmul.bf16.gmra.mxu0 %v2704
      %v2901 = vpop.f32.mrf.mxu0
      %v2902 = vadd.f32 %v2732, %v2901
      %v2903 = vpop.f32.mrf.mxu0
      %v2904 = vadd.f32 %v2732, %v2903
      %2905 = vmatmul.bf16.gmra.mxu0 %v2705
      %v2906 = vpop.f32.mrf.mxu0
      %v2907 = vadd.f32 %v2732, %v2906
      %v2908 = vpop.f32.mrf.mxu0
      %v2909 = vadd.f32 %v2732, %v2908
      %2910 = vmatmul.bf16.gmra.mxu0 %v2706
      %v2911 = vpop.f32.mrf.mxu0
      %v2912 = vadd.f32 %v2732, %v2911
      %v2913 = vpop.f32.mrf.mxu0
      %v2914 = vadd.f32 %v2732, %v2913
      %2915 = vmatmul.bf16.gmra.mxu0 %v2707
      %v2916 = vpop.f32.mrf.mxu0
      %v2917 = vadd.f32 %v2732, %v2916
      %v2918 = vpop.f32.mrf.mxu0
      %v2919 = vadd.f32 %v2732, %v2918
      %2920 = vmatmul.bf16.gmra.mxu0 %v2708
      %v2921 = vpop.f32.mrf.mxu0
      %v2922 = vadd.f32 %v2732, %v2921
      %v2923 = vpop.f32.mrf.mxu0
      %v2924 = vadd.f32 %v2732, %v2923
      %2925 = vmatmul.bf16.gmra.mxu0 %v2709
      %v2926 = vpop.f32.mrf.mxu0
      %v2927 = vadd.f32 %v2732, %v2926
      %v2928 = vpop.f32.mrf.mxu0
      %v2929 = vadd.f32 %v2732, %v2928
      %2930 = vmatmul.bf16.gmra.mxu0 %v2710
      %v2931 = vpop.f32.mrf.mxu0
      %v2932 = vadd.f32 %v2732, %v2931
      %v2933 = vpop.f32.mrf.mxu0
      %v2934 = vadd.f32 %v2732, %v2933
      %2935 = vmatmul.bf16.gmra.mxu0 %v2711
      %v2936 = vpop.f32.mrf.mxu0
      %v2937 = vadd.f32 %v2732, %v2936
      %v2938 = vpop.f32.mrf.mxu0
      %v2939 = vadd.f32 %v2732, %v2938
      %2940 = vmatmul.bf16.gmra.mxu0 %v2712
      %v2941 = vpop.f32.mrf.mxu0
      %v2942 = vadd.f32 %v2732, %v2941
      %v2943 = vpop.f32.mrf.mxu0
      %v2944 = vadd.f32 %v2732, %v2943
      %2945 = vmatmul.bf16.gmra.mxu0 %v2713
      %v2946 = vpop.f32.mrf.mxu0
      %v2947 = vadd.f32 %v2732, %v2946
      %v2948 = vpop.f32.mrf.mxu0
      %v2949 = vadd.f32 %v2732, %v2948
      %2950 = vdwg.mxu0
      %2952 = vset.pattern.permute.xlu0 0
      %2953 = vperm.xlu0 %2952, %v384
      %v2954 = vpop.permute.xlu0 %2953
      %2957 = vset.pattern.permute.xlu0 0
      %2958 = vperm.xlu0 %2957, %v385
      %v2959 = vpop.permute.xlu0 %2958
      %2962 = vset.pattern.permute.xlu0 0
      %2963 = vperm.xlu0 %2962, %v386
      %v2964 = vpop.permute.xlu0 %2963
      %2967 = vset.pattern.permute.xlu0 0
      %2968 = vperm.xlu0 %2967, %v387
      %v2969 = vpop.permute.xlu0 %2968
      %2972 = vset.pattern.permute.xlu0 0
      %2973 = vperm.xlu0 %2972, %v388
      %v2974 = vpop.permute.xlu0 %2973
      %2977 = vset.pattern.permute.xlu0 0
      %2978 = vperm.xlu0 %2977, %v389
      %v2979 = vpop.permute.xlu0 %2978
      %2982 = vset.pattern.permute.xlu0 0
      %2983 = vperm.xlu0 %2982, %v390
      %v2984 = vpop.permute.xlu0 %2983
      %2987 = vset.pattern.permute.xlu0 0
      %2988 = vperm.xlu0 %2987, %v391
      %v2989 = vpop.permute.xlu0 %2988
      %2992 = vset.pattern.permute.xlu0 0
      %2993 = vperm.xlu0 %2992, %v392
      %v2994 = vpop.permute.xlu0 %2993
      %2997 = vset.pattern.permute.xlu0 0
      %2998 = vperm.xlu0 %2997, %v393
      %v2999 = vpop.permute.xlu0 %2998
      %3002 = vset.pattern.permute.xlu0 0
      %3003 = vperm.xlu0 %3002, %v394
      %v3004 = vpop.permute.xlu0 %3003
      %3007 = vset.pattern.permute.xlu0 0
      %3008 = vperm.xlu0 %3007, %v395
      %v3009 = vpop.permute.xlu0 %3008
      %3012 = vset.pattern.permute.xlu0 0
      %3013 = vperm.xlu0 %3012, %v396
      %v3014 = vpop.permute.xlu0 %3013
      %3017 = vset.pattern.permute.xlu0 0
      %3018 = vperm.xlu0 %3017, %v397
      %v3019 = vpop.permute.xlu0 %3018
      %3022 = vset.pattern.permute.xlu0 0
      %3023 = vperm.xlu0 %3022, %v398
      %v3024 = vpop.permute.xlu0 %3023
      %3027 = vset.pattern.permute.xlu0 0
      %3028 = vperm.xlu0 %3027, %v399
      %v3029 = vpop.permute.xlu0 %3028
      %3032 = vset.pattern.permute.xlu0 0
      %3033 = vperm.xlu0 %3032, %v400
      %v3034 = vpop.permute.xlu0 %3033
      %3037 = vset.pattern.permute.xlu0 0
      %3038 = vperm.xlu0 %3037, %v401
      %v3039 = vpop.permute.xlu0 %3038
      %3042 = vset.pattern.permute.xlu0 0
      %3043 = vperm.xlu0 %3042, %v402
      %v3044 = vpop.permute.xlu0 %3043
      %3047 = vset.pattern.permute.xlu0 0
      %3048 = vperm.xlu0 %3047, %v403
      %v3049 = vpop.permute.xlu0 %3048
      %3052 = vset.pattern.permute.xlu0 0
      %3053 = vperm.xlu0 %3052, %v404
      %v3054 = vpop.permute.xlu0 %3053
      %3057 = vset.pattern.permute.xlu0 0
      %3058 = vperm.xlu0 %3057, %v405
      %v3059 = vpop.permute.xlu0 %3058
      %3062 = vset.pattern.permute.xlu0 0
      %3063 = vperm.xlu0 %3062, %v406
      %v3064 = vpop.permute.xlu0 %3063
      %3067 = vset.pattern.permute.xlu0 0
      %3068 = vperm.xlu0 %3067, %v407
      %v3069 = vpop.permute.xlu0 %3068
      %3072 = vset.pattern.permute.xlu0 0
      %3073 = vperm.xlu0 %3072, %v408
      %v3074 = vpop.permute.xlu0 %3073
      %3077 = vset.pattern.permute.xlu0 0
      %3078 = vperm.xlu0 %3077, %v409
      %v3079 = vpop.permute.xlu0 %3078
      %3082 = vset.pattern.permute.xlu0 0
      %3083 = vperm.xlu0 %3082, %v410
      %v3084 = vpop.permute.xlu0 %3083
      %3087 = vset.pattern.permute.xlu0 0
      %3088 = vperm.xlu0 %3087, %v411
      %v3089 = vpop.permute.xlu0 %3088
      %3092 = vset.pattern.permute.xlu0 0
      %3093 = vperm.xlu0 %3092, %v412
      %v3094 = vpop.permute.xlu0 %3093
      %3097 = vset.pattern.permute.xlu0 0
      %3098 = vperm.xlu0 %3097, %v413
      %v3099 = vpop.permute.xlu0 %3098
      %3102 = vset.pattern.permute.xlu0 0
      %3103 = vperm.xlu0 %3102, %v414
      %v3104 = vpop.permute.xlu0 %3103
      %3107 = vset.pattern.permute.xlu0 0
      %3108 = vperm.xlu0 %3107, %v415
      %v3109 = vpop.permute.xlu0 %3108
      %3112 = vset.pattern.permute.xlu0 0
      %3113 = vperm.xlu0 %3112, %v416
      %v3114 = vpop.permute.xlu0 %3113
      %3117 = vset.pattern.permute.xlu0 0
      %3118 = vperm.xlu0 %3117, %v417
      %v3119 = vpop.permute.xlu0 %3118
      %3122 = vset.pattern.permute.xlu0 0
      %3123 = vperm.xlu0 %3122, %v418
      %v3124 = vpop.permute.xlu0 %3123
      %3127 = vset.pattern.permute.xlu0 0
      %3128 = vperm.xlu0 %3127, %v419
      %v3129 = vpop.permute.xlu0 %3128
      %3132 = vset.pattern.permute.xlu0 0
      %3133 = vperm.xlu0 %3132, %v420
      %v3134 = vpop.permute.xlu0 %3133
      %3137 = vset.pattern.permute.xlu0 0
      %3138 = vperm.xlu0 %3137, %v421
      %v3139 = vpop.permute.xlu0 %3138
      %3142 = vset.pattern.permute.xlu0 0
      %3143 = vperm.xlu0 %3142, %v422
      %v3144 = vpop.permute.xlu0 %3143
      %3147 = vset.pattern.permute.xlu0 0
      %3148 = vperm.xlu0 %3147, %v423
      %v3149 = vpop.permute.xlu0 %3148
      %3152 = vset.pattern.permute.xlu0 0
      %3153 = vperm.xlu0 %3152, %v424
      %v3154 = vpop.permute.xlu0 %3153
      %3157 = vset.pattern.permute.xlu0 0
      %3158 = vperm.xlu0 %3157, %v425
      %v3159 = vpop.permute.xlu0 %3158
      %3162 = vset.pattern.permute.xlu0 0
      %3163 = vperm.xlu0 %3162, %v426
      %v3164 = vpop.permute.xlu0 %3163
      %3167 = vset.pattern.permute.xlu0 0
      %3168 = vperm.xlu0 %3167, %v427
      %v3169 = vpop.permute.xlu0 %3168
      %3172 = vset.pattern.permute.xlu0 0
      %3173 = vperm.xlu0 %3172, %v428
      %v3174 = vpop.permute.xlu0 %3173
      %3177 = vset.pattern.permute.xlu0 0
      %3178 = vperm.xlu0 %3177, %v429
      %v3179 = vpop.permute.xlu0 %3178
      %3182 = vset.pattern.permute.xlu0 0
      %3183 = vperm.xlu0 %3182, %v430
      %v3184 = vpop.permute.xlu0 %3183
      %3187 = vset.pattern.permute.xlu0 0
      %3188 = vperm.xlu0 %3187, %v431
      %v3189 = vpop.permute.xlu0 %3188
      %3192 = vset.pattern.permute.xlu0 0
      %3193 = vperm.xlu0 %3192, %v432
      %v3194 = vpop.permute.xlu0 %3193
      %3197 = vset.pattern.permute.xlu0 0
      %3198 = vperm.xlu0 %3197, %v433
      %v3199 = vpop.permute.xlu0 %3198
      %3202 = vset.pattern.permute.xlu0 0
      %3203 = vperm.xlu0 %3202, %v434
      %v3204 = vpop.permute.xlu0 %3203
      %3207 = vset.pattern.permute.xlu0 0
      %3208 = vperm.xlu0 %3207, %v435
      %v3209 = vpop.permute.xlu0 %3208
      %3212 = vset.pattern.permute.xlu0 0
      %3213 = vperm.xlu0 %3212, %v436
      %v3214 = vpop.permute.xlu0 %3213
      %3217 = vset.pattern.permute.xlu0 0
      %3218 = vperm.xlu0 %3217, %v437
      %v3219 = vpop.permute.xlu0 %3218
      %3222 = vset.pattern.permute.xlu0 0
      %3223 = vperm.xlu0 %3222, %v438
      %v3224 = vpop.permute.xlu0 %3223
      %3227 = vset.pattern.permute.xlu0 0
      %3228 = vperm.xlu0 %3227, %v439
      %v3229 = vpop.permute.xlu0 %3228
      %3232 = vset.pattern.permute.xlu0 0
      %3233 = vperm.xlu0 %3232, %v440
      %v3234 = vpop.permute.xlu0 %3233
      %3237 = vset.pattern.permute.xlu0 0
      %3238 = vperm.xlu0 %3237, %v441
      %v3239 = vpop.permute.xlu0 %3238
      %3242 = vset.pattern.permute.xlu0 0
      %3243 = vperm.xlu0 %3242, %v442
      %v3244 = vpop.permute.xlu0 %3243
      %3247 = vset.pattern.permute.xlu0 0
      %3248 = vperm.xlu0 %3247, %v443
      %v3249 = vpop.permute.xlu0 %3248
      %3252 = vset.pattern.permute.xlu0 0
      %3253 = vperm.xlu0 %3252, %v444
      %v3254 = vpop.permute.xlu0 %3253
      %3257 = vset.pattern.permute.xlu0 0
      %3258 = vperm.xlu0 %3257, %v445
      %v3259 = vpop.permute.xlu0 %3258
      %3262 = vset.pattern.permute.xlu0 0
      %3263 = vperm.xlu0 %3262, %v446
      %v3264 = vpop.permute.xlu0 %3263
      %3267 = vset.pattern.permute.xlu0 0
      %3268 = vperm.xlu0 %3267, %v447
      %v3269 = vpop.permute.xlu0 %3268
      %v3271 = vmul.f32 %v2954, %v2792
      %v3272 = vmul.f32 %v2959, %v2794
      %v3273 = vmul.f32 %v2964, %v2797
      %v3274 = vmul.f32 %v2969, %v2799
      %v3275 = vmul.f32 %v2974, %v2802
      %v3276 = vmul.f32 %v2979, %v2804
      %v3277 = vmul.f32 %v2984, %v2807
      %v3278 = vmul.f32 %v2989, %v2809
      %v3279 = vmul.f32 %v2994, %v2812
      %v3280 = vmul.f32 %v2999, %v2814
      %v3281 = vmul.f32 %v3004, %v2817
      %v3282 = vmul.f32 %v3009, %v2819
      %v3283 = vmul.f32 %v3014, %v2822
      %v3284 = vmul.f32 %v3019, %v2824
      %v3285 = vmul.f32 %v3024, %v2827
      %v3286 = vmul.f32 %v3029, %v2829
      %v3287 = vmul.f32 %v3034, %v2832
      %v3288 = vmul.f32 %v3039, %v2834
      %v3289 = vmul.f32 %v3044, %v2837
      %v3290 = vmul.f32 %v3049, %v2839
      %v3291 = vmul.f32 %v3054, %v2842
      %v3292 = vmul.f32 %v3059, %v2844
      %v3293 = vmul.f32 %v3064, %v2847
      %v3294 = vmul.f32 %v3069, %v2849
      %v3295 = vmul.f32 %v3074, %v2852
      %v3296 = vmul.f32 %v3079, %v2854
      %v3297 = vmul.f32 %v3084, %v2857
      %v3298 = vmul.f32 %v3089, %v2859
      %v3299 = vmul.f32 %v3094, %v2862
      %v3300 = vmul.f32 %v3099, %v2864
      %v3301 = vmul.f32 %v3104, %v2867
      %v3302 = vmul.f32 %v3109, %v2869
      %v3303 = vmul.f32 %v3114, %v2872
      %v3304 = vmul.f32 %v3119, %v2874
      %v3305 = vmul.f32 %v3124, %v2877
      %v3306 = vmul.f32 %v3129, %v2879
      %v3307 = vmul.f32 %v3134, %v2882
      %v3308 = vmul.f32 %v3139, %v2884
      %v3309 = vmul.f32 %v3144, %v2887
      %v3310 = vmul.f32 %v3149, %v2889
      %v3311 = vmul.f32 %v3154, %v2892
      %v3312 = vmul.f32 %v3159, %v2894
      %v3313 = vmul.f32 %v3164, %v2897
      %v3314 = vmul.f32 %v3169, %v2899
      %v3315 = vmul.f32 %v3174, %v2902
      %v3316 = vmul.f32 %v3179, %v2904
      %v3317 = vmul.f32 %v3184, %v2907
      %v3318 = vmul.f32 %v3189, %v2909
      %v3319 = vmul.f32 %v3194, %v2912
      %v3320 = vmul.f32 %v3199, %v2914
      %v3321 = vmul.f32 %v3204, %v2917
      %v3322 = vmul.f32 %v3209, %v2919
      %v3323 = vmul.f32 %v3214, %v2922
      %v3324 = vmul.f32 %v3219, %v2924
      %v3325 = vmul.f32 %v3224, %v2927
      %v3326 = vmul.f32 %v3229, %v2929
      %v3327 = vmul.f32 %v3234, %v2932
      %v3328 = vmul.f32 %v3239, %v2934
      %v3329 = vmul.f32 %v3244, %v2937
      %v3330 = vmul.f32 %v3249, %v2939
      %v3331 = vmul.f32 %v3254, %v2942
      %v3332 = vmul.f32 %v3259, %v2944
      %v3333 = vmul.f32 %v3264, %v2947
      %v3334 = vmul.f32 %v3269, %v2949
      %v3335 = vpack.c.bf16 %v3272, %v3271
      %v3336 = vpack.c.bf16 %v3274, %v3273
      %v3337 = vpack.c.bf16 %v3276, %v3275
      %v3338 = vpack.c.bf16 %v3278, %v3277
      %v3339 = vpack.c.bf16 %v3280, %v3279
      %v3340 = vpack.c.bf16 %v3282, %v3281
      %v3341 = vpack.c.bf16 %v3284, %v3283
      %v3342 = vpack.c.bf16 %v3286, %v3285
      %v3343 = vpack.c.bf16 %v3288, %v3287
      %v3344 = vpack.c.bf16 %v3290, %v3289
      %v3345 = vpack.c.bf16 %v3292, %v3291
      %v3346 = vpack.c.bf16 %v3294, %v3293
      %v3347 = vpack.c.bf16 %v3296, %v3295
      %v3348 = vpack.c.bf16 %v3298, %v3297
      %v3349 = vpack.c.bf16 %v3300, %v3299
      %v3350 = vpack.c.bf16 %v3302, %v3301
      %v3351 = vpack.c.bf16 %v3304, %v3303
      %v3352 = vpack.c.bf16 %v3306, %v3305
      %v3353 = vpack.c.bf16 %v3308, %v3307
      %v3354 = vpack.c.bf16 %v3310, %v3309
      %v3355 = vpack.c.bf16 %v3312, %v3311
      %v3356 = vpack.c.bf16 %v3314, %v3313
      %v3357 = vpack.c.bf16 %v3316, %v3315
      %v3358 = vpack.c.bf16 %v3318, %v3317
      %v3359 = vpack.c.bf16 %v3320, %v3319
      %v3360 = vpack.c.bf16 %v3322, %v3321
      %v3361 = vpack.c.bf16 %v3324, %v3323
      %v3362 = vpack.c.bf16 %v3326, %v3325
      %v3363 = vpack.c.bf16 %v3328, %v3327
      %v3364 = vpack.c.bf16 %v3330, %v3329
      %v3365 = vpack.c.bf16 %v3332, %v3331
      %v3366 = vpack.c.bf16 %v3334, %v3333
      %v3367 = vlaneseq
      %v3368 = vand.u32 %v3367, 127
      %3369 = vset.pattern.permute.xlu0 1
      %3370 = vperm.xlu0 %3369, %v448
      %v3371 = vpop.permute.xlu0 %3370
      %3372 = vset.pattern.permute.xlu0 1
      %3373 = vperm.xlu0 %3372, %v449
      %v3374 = vpop.permute.xlu0 %3373
      %3375 = vset.pattern.permute.xlu0 1
      %3376 = vperm.xlu0 %3375, %v450
      %v3377 = vpop.permute.xlu0 %3376
      %3378 = vset.pattern.permute.xlu0 1
      %3379 = vperm.xlu0 %3378, %v451
      %v3380 = vpop.permute.xlu0 %3379
      %3381 = vset.pattern.permute.xlu0 1
      %3382 = vperm.xlu0 %3381, %v452
      %v3383 = vpop.permute.xlu0 %3382
      %3384 = vset.pattern.permute.xlu0 1
      %3385 = vperm.xlu0 %3384, %v453
      %v3386 = vpop.permute.xlu0 %3385
      %3387 = vset.pattern.permute.xlu0 1
      %3388 = vperm.xlu0 %3387, %v454
      %v3389 = vpop.permute.xlu0 %3388
      %3390 = vset.pattern.permute.xlu0 1
      %3391 = vperm.xlu0 %3390, %v455
      %v3392 = vpop.permute.xlu0 %3391
      %3393 = vset.pattern.permute.xlu0 1
      %3394 = vperm.xlu0 %3393, %v456
      %v3395 = vpop.permute.xlu0 %3394
      %3396 = vset.pattern.permute.xlu0 1
      %3397 = vperm.xlu0 %3396, %v457
      %v3398 = vpop.permute.xlu0 %3397
      %3399 = vset.pattern.permute.xlu0 1
      %3400 = vperm.xlu0 %3399, %v458
      %v3401 = vpop.permute.xlu0 %3400
      %3402 = vset.pattern.permute.xlu0 1
      %3403 = vperm.xlu0 %3402, %v459
      %v3404 = vpop.permute.xlu0 %3403
      %3405 = vset.pattern.permute.xlu0 1
      %3406 = vperm.xlu0 %3405, %v460
      %v3407 = vpop.permute.xlu0 %3406
      %3408 = vset.pattern.permute.xlu0 1
      %3409 = vperm.xlu0 %3408, %v461
      %v3410 = vpop.permute.xlu0 %3409
      %3411 = vset.pattern.permute.xlu0 1
      %3412 = vperm.xlu0 %3411, %v462
      %v3413 = vpop.permute.xlu0 %3412
      %3414 = vset.pattern.permute.xlu0 1
      %3415 = vperm.xlu0 %3414, %v463
      %v3416 = vpop.permute.xlu0 %3415
      %3417 = vset.pattern.permute.xlu0 1
      %3418 = vperm.xlu0 %3417, %v464
      %v3419 = vpop.permute.xlu0 %3418
      %3420 = vset.pattern.permute.xlu0 1
      %3421 = vperm.xlu0 %3420, %v465
      %v3422 = vpop.permute.xlu0 %3421
      %3423 = vset.pattern.permute.xlu0 1
      %3424 = vperm.xlu0 %3423, %v466
      %v3425 = vpop.permute.xlu0 %3424
      %3426 = vset.pattern.permute.xlu0 1
      %3427 = vperm.xlu0 %3426, %v467
      %v3428 = vpop.permute.xlu0 %3427
      %3429 = vset.pattern.permute.xlu0 1
      %3430 = vperm.xlu0 %3429, %v468
      %v3431 = vpop.permute.xlu0 %3430
      %3432 = vset.pattern.permute.xlu0 1
      %3433 = vperm.xlu0 %3432, %v469
      %v3434 = vpop.permute.xlu0 %3433
      %3435 = vset.pattern.permute.xlu0 1
      %3436 = vperm.xlu0 %3435, %v470
      %v3437 = vpop.permute.xlu0 %3436
      %3438 = vset.pattern.permute.xlu0 1
      %3439 = vperm.xlu0 %3438, %v471
      %v3440 = vpop.permute.xlu0 %3439
      %3441 = vset.pattern.permute.xlu0 1
      %3442 = vperm.xlu0 %3441, %v472
      %v3443 = vpop.permute.xlu0 %3442
      %3444 = vset.pattern.permute.xlu0 1
      %3445 = vperm.xlu0 %3444, %v473
      %v3446 = vpop.permute.xlu0 %3445
      %3447 = vset.pattern.permute.xlu0 1
      %3448 = vperm.xlu0 %3447, %v474
      %v3449 = vpop.permute.xlu0 %3448
      %3450 = vset.pattern.permute.xlu0 1
      %3451 = vperm.xlu0 %3450, %v475
      %v3452 = vpop.permute.xlu0 %3451
      %3453 = vset.pattern.permute.xlu0 1
      %3454 = vperm.xlu0 %3453, %v476
      %v3455 = vpop.permute.xlu0 %3454
      %3456 = vset.pattern.permute.xlu0 1
      %3457 = vperm.xlu0 %3456, %v477
      %v3458 = vpop.permute.xlu0 %3457
      %3459 = vset.pattern.permute.xlu0 1
      %3460 = vperm.xlu0 %3459, %v478
      %v3461 = vpop.permute.xlu0 %3460
      %3462 = vset.pattern.permute.xlu0 1
      %3463 = vperm.xlu0 %3462, %v479
      %v3464 = vpop.permute.xlu0 %3463
      %3465 = vset.pattern.permute.xlu0 1
      %3466 = vperm.xlu0 %3465, %v480
      %v3467 = vpop.permute.xlu0 %3466
      %3468 = vset.pattern.permute.xlu0 1
      %3469 = vperm.xlu0 %3468, %v481
      %v3470 = vpop.permute.xlu0 %3469
      %3471 = vset.pattern.permute.xlu0 1
      %3472 = vperm.xlu0 %3471, %v482
      %v3473 = vpop.permute.xlu0 %3472
      %3474 = vset.pattern.permute.xlu0 1
      %3475 = vperm.xlu0 %3474, %v483
      %v3476 = vpop.permute.xlu0 %3475
      %3477 = vset.pattern.permute.xlu0 1
      %3478 = vperm.xlu0 %3477, %v484
      %v3479 = vpop.permute.xlu0 %3478
      %3480 = vset.pattern.permute.xlu0 1
      %3481 = vperm.xlu0 %3480, %v485
      %v3482 = vpop.permute.xlu0 %3481
      %3483 = vset.pattern.permute.xlu0 1
      %3484 = vperm.xlu0 %3483, %v486
      %v3485 = vpop.permute.xlu0 %3484
      %3486 = vset.pattern.permute.xlu0 1
      %3487 = vperm.xlu0 %3486, %v487
      %v3488 = vpop.permute.xlu0 %3487
      %3489 = vset.pattern.permute.xlu0 1
      %3490 = vperm.xlu0 %3489, %v488
      %v3491 = vpop.permute.xlu0 %3490
      %3492 = vset.pattern.permute.xlu0 1
      %3493 = vperm.xlu0 %3492, %v489
      %v3494 = vpop.permute.xlu0 %3493
      %3495 = vset.pattern.permute.xlu0 1
      %3496 = vperm.xlu0 %3495, %v490
      %v3497 = vpop.permute.xlu0 %3496
      %3498 = vset.pattern.permute.xlu0 1
      %3499 = vperm.xlu0 %3498, %v491
      %v3500 = vpop.permute.xlu0 %3499
      %3501 = vset.pattern.permute.xlu0 1
      %3502 = vperm.xlu0 %3501, %v492
      %v3503 = vpop.permute.xlu0 %3502
      %3504 = vset.pattern.permute.xlu0 1
      %3505 = vperm.xlu0 %3504, %v493
      %v3506 = vpop.permute.xlu0 %3505
      %3507 = vset.pattern.permute.xlu0 1
      %3508 = vperm.xlu0 %3507, %v494
      %v3509 = vpop.permute.xlu0 %3508
      %3510 = vset.pattern.permute.xlu0 1
      %3511 = vperm.xlu0 %3510, %v495
      %v3512 = vpop.permute.xlu0 %3511
      %3513 = vset.pattern.permute.xlu0 1
      %3514 = vperm.xlu0 %3513, %v496
      %v3515 = vpop.permute.xlu0 %3514
      %3516 = vset.pattern.permute.xlu0 1
      %3517 = vperm.xlu0 %3516, %v497
      %v3518 = vpop.permute.xlu0 %3517
      %3519 = vset.pattern.permute.xlu0 1
      %3520 = vperm.xlu0 %3519, %v498
      %v3521 = vpop.permute.xlu0 %3520
      %3522 = vset.pattern.permute.xlu0 1
      %3523 = vperm.xlu0 %3522, %v499
      %v3524 = vpop.permute.xlu0 %3523
      %3525 = vset.pattern.permute.xlu0 1
      %3526 = vperm.xlu0 %3525, %v500
      %v3527 = vpop.permute.xlu0 %3526
      %3528 = vset.pattern.permute.xlu0 1
      %3529 = vperm.xlu0 %3528, %v501
      %v3530 = vpop.permute.xlu0 %3529
      %3531 = vset.pattern.permute.xlu0 1
      %3532 = vperm.xlu0 %3531, %v502
      %v3533 = vpop.permute.xlu0 %3532
      %3534 = vset.pattern.permute.xlu0 1
      %3535 = vperm.xlu0 %3534, %v503
      %v3536 = vpop.permute.xlu0 %3535
      %3537 = vset.pattern.permute.xlu0 1
      %3538 = vperm.xlu0 %3537, %v504
      %v3539 = vpop.permute.xlu0 %3538
      %3540 = vset.pattern.permute.xlu0 1
      %3541 = vperm.xlu0 %3540, %v505
      %v3542 = vpop.permute.xlu0 %3541
      %3543 = vset.pattern.permute.xlu0 1
      %3544 = vperm.xlu0 %3543, %v506
      %v3545 = vpop.permute.xlu0 %3544
      %3546 = vset.pattern.permute.xlu0 1
      %3547 = vperm.xlu0 %3546, %v507
      %v3548 = vpop.permute.xlu0 %3547
      %3549 = vset.pattern.permute.xlu0 1
      %3550 = vperm.xlu0 %3549, %v508
      %v3551 = vpop.permute.xlu0 %3550
      %3552 = vset.pattern.permute.xlu0 1
      %3553 = vperm.xlu0 %3552, %v509
      %v3554 = vpop.permute.xlu0 %3553
      %3555 = vset.pattern.permute.xlu0 1
      %3556 = vperm.xlu0 %3555, %v510
      %v3557 = vpop.permute.xlu0 %3556
      %3558 = vset.pattern.permute.xlu0 1
      %3559 = vperm.xlu0 %3558, %v511
      %v3560 = vpop.permute.xlu0 %3559
      %vm3561 = vcmp.eq.s32.totalorder %v3368, %v3371
      %vm3562 = vcmp.eq.s32.totalorder %v3368, %v3374
      %vm3563 = vcmp.eq.s32.totalorder %v3368, %v3377
      %vm3564 = vcmp.eq.s32.totalorder %v3368, %v3380
      %vm3565 = vcmp.eq.s32.totalorder %v3368, %v3383
      %vm3566 = vcmp.eq.s32.totalorder %v3368, %v3386
      %vm3567 = vcmp.eq.s32.totalorder %v3368, %v3389
      %vm3568 = vcmp.eq.s32.totalorder %v3368, %v3392
      %vm3569 = vcmp.eq.s32.totalorder %v3368, %v3395
      %vm3570 = vcmp.eq.s32.totalorder %v3368, %v3398
      %vm3571 = vcmp.eq.s32.totalorder %v3368, %v3401
      %vm3572 = vcmp.eq.s32.totalorder %v3368, %v3404
      %vm3573 = vcmp.eq.s32.totalorder %v3368, %v3407
      %vm3574 = vcmp.eq.s32.totalorder %v3368, %v3410
      %vm3575 = vcmp.eq.s32.totalorder %v3368, %v3413
      %vm3576 = vcmp.eq.s32.totalorder %v3368, %v3416
      %vm3577 = vcmp.eq.s32.totalorder %v3368, %v3419
      %vm3578 = vcmp.eq.s32.totalorder %v3368, %v3422
      %vm3579 = vcmp.eq.s32.totalorder %v3368, %v3425
      %vm3580 = vcmp.eq.s32.totalorder %v3368, %v3428
      %vm3581 = vcmp.eq.s32.totalorder %v3368, %v3431
      %vm3582 = vcmp.eq.s32.totalorder %v3368, %v3434
      %vm3583 = vcmp.eq.s32.totalorder %v3368, %v3437
      %vm3584 = vcmp.eq.s32.totalorder %v3368, %v3440
      %vm3585 = vcmp.eq.s32.totalorder %v3368, %v3443
      %vm3586 = vcmp.eq.s32.totalorder %v3368, %v3446
      %vm3587 = vcmp.eq.s32.totalorder %v3368, %v3449
      %vm3588 = vcmp.eq.s32.totalorder %v3368, %v3452
      %vm3589 = vcmp.eq.s32.totalorder %v3368, %v3455
      %vm3590 = vcmp.eq.s32.totalorder %v3368, %v3458
      %vm3591 = vcmp.eq.s32.totalorder %v3368, %v3461
      %vm3592 = vcmp.eq.s32.totalorder %v3368, %v3464
      %vm3593 = vcmp.eq.s32.totalorder %v3368, %v3467
      %vm3594 = vcmp.eq.s32.totalorder %v3368, %v3470
      %vm3595 = vcmp.eq.s32.totalorder %v3368, %v3473
      %vm3596 = vcmp.eq.s32.totalorder %v3368, %v3476
      %vm3597 = vcmp.eq.s32.totalorder %v3368, %v3479
      %vm3598 = vcmp.eq.s32.totalorder %v3368, %v3482
      %vm3599 = vcmp.eq.s32.totalorder %v3368, %v3485
      %vm3600 = vcmp.eq.s32.totalorder %v3368, %v3488
      %vm3601 = vcmp.eq.s32.totalorder %v3368, %v3491
      %vm3602 = vcmp.eq.s32.totalorder %v3368, %v3494
      %vm3603 = vcmp.eq.s32.totalorder %v3368, %v3497
      %vm3604 = vcmp.eq.s32.totalorder %v3368, %v3500
      %vm3605 = vcmp.eq.s32.totalorder %v3368, %v3503
      %vm3606 = vcmp.eq.s32.totalorder %v3368, %v3506
      %vm3607 = vcmp.eq.s32.totalorder %v3368, %v3509
      %vm3608 = vcmp.eq.s32.totalorder %v3368, %v3512
      %vm3609 = vcmp.eq.s32.totalorder %v3368, %v3515
      %vm3610 = vcmp.eq.s32.totalorder %v3368, %v3518
      %vm3611 = vcmp.eq.s32.totalorder %v3368, %v3521
      %vm3612 = vcmp.eq.s32.totalorder %v3368, %v3524
      %vm3613 = vcmp.eq.s32.totalorder %v3368, %v3527
      %vm3614 = vcmp.eq.s32.totalorder %v3368, %v3530
      %vm3615 = vcmp.eq.s32.totalorder %v3368, %v3533
      %vm3616 = vcmp.eq.s32.totalorder %v3368, %v3536
      %vm3617 = vcmp.eq.s32.totalorder %v3368, %v3539
      %vm3618 = vcmp.eq.s32.totalorder %v3368, %v3542
      %vm3619 = vcmp.eq.s32.totalorder %v3368, %v3545
      %vm3620 = vcmp.eq.s32.totalorder %v3368, %v3548
      %vm3621 = vcmp.eq.s32.totalorder %v3368, %v3551
      %vm3622 = vcmp.eq.s32.totalorder %v3368, %v3554
      %vm3623 = vcmp.eq.s32.totalorder %v3368, %v3557
      %vm3624 = vcmp.eq.s32.totalorder %v3368, %v3560
      %v3625 = vsel %vm3561, 1.0, 0.0
      %v3626 = vsel %vm3562, 1.0, 0.0
      %v3627 = vsel %vm3563, 1.0, 0.0
      %v3628 = vsel %vm3564, 1.0, 0.0
      %v3629 = vsel %vm3565, 1.0, 0.0
      %v3630 = vsel %vm3566, 1.0, 0.0
      %v3631 = vsel %vm3567, 1.0, 0.0
      %v3632 = vsel %vm3568, 1.0, 0.0
      %v3633 = vsel %vm3569, 1.0, 0.0
      %v3634 = vsel %vm3570, 1.0, 0.0
      %v3635 = vsel %vm3571, 1.0, 0.0
      %v3636 = vsel %vm3572, 1.0, 0.0
      %v3637 = vsel %vm3573, 1.0, 0.0
      %v3638 = vsel %vm3574, 1.0, 0.0
      %v3639 = vsel %vm3575, 1.0, 0.0
      %v3640 = vsel %vm3576, 1.0, 0.0
      %v3641 = vsel %vm3577, 1.0, 0.0
      %v3642 = vsel %vm3578, 1.0, 0.0
      %v3643 = vsel %vm3579, 1.0, 0.0
      %v3644 = vsel %vm3580, 1.0, 0.0
      %v3645 = vsel %vm3581, 1.0, 0.0
      %v3646 = vsel %vm3582, 1.0, 0.0
      %v3647 = vsel %vm3583, 1.0, 0.0
      %v3648 = vsel %vm3584, 1.0, 0.0
      %v3649 = vsel %vm3585, 1.0, 0.0
      %v3650 = vsel %vm3586, 1.0, 0.0
      %v3651 = vsel %vm3587, 1.0, 0.0
      %v3652 = vsel %vm3588, 1.0, 0.0
      %v3653 = vsel %vm3589, 1.0, 0.0
      %v3654 = vsel %vm3590, 1.0, 0.0
      %v3655 = vsel %vm3591, 1.0, 0.0
      %v3656 = vsel %vm3592, 1.0, 0.0
      %v3657 = vsel %vm3593, 1.0, 0.0
      %v3658 = vsel %vm3594, 1.0, 0.0
      %v3659 = vsel %vm3595, 1.0, 0.0
      %v3660 = vsel %vm3596, 1.0, 0.0
      %v3661 = vsel %vm3597, 1.0, 0.0
      %v3662 = vsel %vm3598, 1.0, 0.0
      %v3663 = vsel %vm3599, 1.0, 0.0
      %v3664 = vsel %vm3600, 1.0, 0.0
      %v3665 = vsel %vm3601, 1.0, 0.0
      %v3666 = vsel %vm3602, 1.0, 0.0
      %v3667 = vsel %vm3603, 1.0, 0.0
      %v3668 = vsel %vm3604, 1.0, 0.0
      %v3669 = vsel %vm3605, 1.0, 0.0
      %v3670 = vsel %vm3606, 1.0, 0.0
      %v3671 = vsel %vm3607, 1.0, 0.0
      %v3672 = vsel %vm3608, 1.0, 0.0
      %v3673 = vsel %vm3609, 1.0, 0.0
      %v3674 = vsel %vm3610, 1.0, 0.0
      %v3675 = vsel %vm3611, 1.0, 0.0
      %v3676 = vsel %vm3612, 1.0, 0.0
      %v3677 = vsel %vm3613, 1.0, 0.0
      %v3678 = vsel %vm3614, 1.0, 0.0
      %v3679 = vsel %vm3615, 1.0, 0.0
      %v3680 = vsel %vm3616, 1.0, 0.0
      %v3681 = vsel %vm3617, 1.0, 0.0
      %v3682 = vsel %vm3618, 1.0, 0.0
      %v3683 = vsel %vm3619, 1.0, 0.0
      %v3684 = vsel %vm3620, 1.0, 0.0
      %v3685 = vsel %vm3621, 1.0, 0.0
      %v3686 = vsel %vm3622, 1.0, 0.0
      %v3687 = vsel %vm3623, 1.0, 0.0
      %v3688 = vsel %vm3624, 1.0, 0.0
      %v3689 = vpack.c.bf16 %v3626, %v3625
      %v3690 = vpack.c.bf16 %v3628, %v3627
      %v3691 = vpack.c.bf16 %v3630, %v3629
      %v3692 = vpack.c.bf16 %v3632, %v3631
      %v3693 = vpack.c.bf16 %v3634, %v3633
      %v3694 = vpack.c.bf16 %v3636, %v3635
      %v3695 = vpack.c.bf16 %v3638, %v3637
      %v3696 = vpack.c.bf16 %v3640, %v3639
      %v3697 = vpack.c.bf16 %v3642, %v3641
      %v3698 = vpack.c.bf16 %v3644, %v3643
      %v3699 = vpack.c.bf16 %v3646, %v3645
      %v3700 = vpack.c.bf16 %v3648, %v3647
      %v3701 = vpack.c.bf16 %v3650, %v3649
      %v3702 = vpack.c.bf16 %v3652, %v3651
      %v3703 = vpack.c.bf16 %v3654, %v3653
      %v3704 = vpack.c.bf16 %v3656, %v3655
      %v3705 = vpack.c.bf16 %v3658, %v3657
      %v3706 = vpack.c.bf16 %v3660, %v3659
      %v3707 = vpack.c.bf16 %v3662, %v3661
      %v3708 = vpack.c.bf16 %v3664, %v3663
      %v3709 = vpack.c.bf16 %v3666, %v3665
      %v3710 = vpack.c.bf16 %v3668, %v3667
      %v3711 = vpack.c.bf16 %v3670, %v3669
      %v3712 = vpack.c.bf16 %v3672, %v3671
      %v3713 = vpack.c.bf16 %v3674, %v3673
      %v3714 = vpack.c.bf16 %v3676, %v3675
      %v3715 = vpack.c.bf16 %v3678, %v3677
      %v3716 = vpack.c.bf16 %v3680, %v3679
      %v3717 = vpack.c.bf16 %v3682, %v3681
      %v3718 = vpack.c.bf16 %v3684, %v3683
      %v3719 = vpack.c.bf16 %v3686, %v3685
      %v3720 = vpack.c.bf16 %v3688, %v3687
      %3721 = vxpose.xlu0.c.b16.start [1/8] %v3689, 128
      %3722 = vxpose.xlu0.c.b16.cont [2/8] %v3690, 128
      %3723 = vxpose.xlu0.c.b16.cont [3/8] %v3691, 128
      %3724 = vxpose.xlu0.c.b16.cont [4/8] %v3692, 128
      %3725 = vxpose.xlu0.c.b16.cont [5/8] %v3693, 128
      %3726 = vxpose.xlu0.c.b16.cont [6/8] %v3694, 128
      %3727 = vxpose.xlu0.c.b16.cont [7/8] %v3695, 128
      %3728 = vxpose.xlu0.c.b16.end [8/8] %v3696, 128
      %v3729 = vpop.trf.xlu0
      %v3730 = vpop.trf.xlu0
      %v3731 = vpop.trf.xlu0
      %v3732 = vpop.trf.xlu0
      %v3733 = vpop.trf.xlu0
      %v3734 = vpop.trf.xlu0
      %v3735 = vpop.trf.xlu0
      %v3736 = vpop.trf.xlu0
      %3737 = vxpose.xlu0.c.b16.start [1/8] %v3697, 128
      %3738 = vxpose.xlu0.c.b16.cont [2/8] %v3698, 128
      %3739 = vxpose.xlu0.c.b16.cont [3/8] %v3699, 128
      %3740 = vxpose.xlu0.c.b16.cont [4/8] %v3700, 128
      %3741 = vxpose.xlu0.c.b16.cont [5/8] %v3701, 128
      %3742 = vxpose.xlu0.c.b16.cont [6/8] %v3702, 128
      %3743 = vxpose.xlu0.c.b16.cont [7/8] %v3703, 128
      %3744 = vxpose.xlu0.c.b16.end [8/8] %v3704, 128
      %v3745 = vpop.trf.xlu0
      %v3746 = vpop.trf.xlu0
      %v3747 = vpop.trf.xlu0
      %v3748 = vpop.trf.xlu0
      %v3749 = vpop.trf.xlu0
      %v3750 = vpop.trf.xlu0
      %v3751 = vpop.trf.xlu0
      %v3752 = vpop.trf.xlu0
      %3753 = vxpose.xlu0.c.b16.start [1/8] %v3705, 128
      %3754 = vxpose.xlu0.c.b16.cont [2/8] %v3706, 128
      %3755 = vxpose.xlu0.c.b16.cont [3/8] %v3707, 128
      %3756 = vxpose.xlu0.c.b16.cont [4/8] %v3708, 128
      %3757 = vxpose.xlu0.c.b16.cont [5/8] %v3709, 128
      %3758 = vxpose.xlu0.c.b16.cont [6/8] %v3710, 128
      %3759 = vxpose.xlu0.c.b16.cont [7/8] %v3711, 128
      %3760 = vxpose.xlu0.c.b16.end [8/8] %v3712, 128
      %v3761 = vpop.trf.xlu0
      %v3762 = vpop.trf.xlu0
      %v3763 = vpop.trf.xlu0
      %v3764 = vpop.trf.xlu0
      %v3765 = vpop.trf.xlu0
      %v3766 = vpop.trf.xlu0
      %v3767 = vpop.trf.xlu0
      %v3768 = vpop.trf.xlu0
      %3769 = vxpose.xlu0.c.b16.start [1/8] %v3713, 128
      %3770 = vxpose.xlu0.c.b16.cont [2/8] %v3714, 128
      %3771 = vxpose.xlu0.c.b16.cont [3/8] %v3715, 128
      %3772 = vxpose.xlu0.c.b16.cont [4/8] %v3716, 128
      %3773 = vxpose.xlu0.c.b16.cont [5/8] %v3717, 128
      %3774 = vxpose.xlu0.c.b16.cont [6/8] %v3718, 128
      %3775 = vxpose.xlu0.c.b16.cont [7/8] %v3719, 128
      %3776 = vxpose.xlu0.c.b16.end [8/8] %v3720, 128
      %v3777 = vpop.trf.xlu0
      %v3778 = vpop.trf.xlu0
      %v3779 = vpop.trf.xlu0
      %v3780 = vpop.trf.xlu0
      %v3781 = vpop.trf.xlu0
      %v3782 = vpop.trf.xlu0
      %v3783 = vpop.trf.xlu0
      %v3784 = vpop.trf.xlu0
      %3785 = vmatpush.bf16.msra.mxu0 %v3342
      %3786 = vmatpush.bf16.msra.mxu0 %v3341
      %3787 = vmatpush.bf16.msra.mxu0 %v3340
      %3788 = vmatpush.bf16.msra.mxu0 %v3339
      %3789 = vmatpush.bf16.msra.mxu0 %v3338
      %3790 = vmatpush.bf16.msra.mxu0 %v3337
      %3791 = vmatpush.bf16.msra.mxu0 %v3336
      %3792 = vmatpush.bf16.msra.mxu0 %v3335
      %3793 = vmatmul.bf16.gmra.mxu0 %v3729
      %v3794 = vpop.f32.mrf.mxu0
      %v3795 = vadd.f32 0.0, %v3794
      %v3796 = vpop.f32.mrf.mxu0
      %v3797 = vadd.f32 0.0, %v3796
      %3798 = vmatmul.bf16.gmra.mxu0 %v3730
      %v3799 = vpop.f32.mrf.mxu0
      %v3800 = vadd.f32 0.0, %v3799
      %v3801 = vpop.f32.mrf.mxu0
      %v3802 = vadd.f32 0.0, %v3801
      %3803 = vmatmul.bf16.gmra.mxu0 %v3731
      %v3804 = vpop.f32.mrf.mxu0
      %v3805 = vadd.f32 0.0, %v3804
      %v3806 = vpop.f32.mrf.mxu0
      %v3807 = vadd.f32 0.0, %v3806
      %3808 = vmatmul.bf16.gmra.mxu0 %v3732
      %v3809 = vpop.f32.mrf.mxu0
      %v3810 = vadd.f32 0.0, %v3809
      %v3811 = vpop.f32.mrf.mxu0
      %v3812 = vadd.f32 0.0, %v3811
      %3813 = vmatmul.bf16.gmra.mxu0 %v3733
      %v3814 = vpop.f32.mrf.mxu0
      %v3815 = vadd.f32 0.0, %v3814
      %v3816 = vpop.f32.mrf.mxu0
      %v3817 = vadd.f32 0.0, %v3816
      %3818 = vmatmul.bf16.gmra.mxu0 %v3734
      %v3819 = vpop.f32.mrf.mxu0
      %v3820 = vadd.f32 0.0, %v3819
      %v3821 = vpop.f32.mrf.mxu0
      %v3822 = vadd.f32 0.0, %v3821
      %3823 = vmatmul.bf16.gmra.mxu0 %v3735
      %v3824 = vpop.f32.mrf.mxu0
      %v3825 = vadd.f32 0.0, %v3824
      %v3826 = vpop.f32.mrf.mxu0
      %v3827 = vadd.f32 0.0, %v3826
      %3828 = vmatmul.bf16.gmra.mxu0 %v3736
      %v3829 = vpop.f32.mrf.mxu0
      %v3830 = vadd.f32 0.0, %v3829
      %v3831 = vpop.f32.mrf.mxu0
      %v3832 = vadd.f32 0.0, %v3831
      %3833 = vdwg.mxu0
      %3834 = vmatpush.bf16.msra.mxu0 %v3350
      %3835 = vmatpush.bf16.msra.mxu0 %v3349
      %3836 = vmatpush.bf16.msra.mxu0 %v3348
      %3837 = vmatpush.bf16.msra.mxu0 %v3347
      %3838 = vmatpush.bf16.msra.mxu0 %v3346
      %3839 = vmatpush.bf16.msra.mxu0 %v3345
      %3840 = vmatpush.bf16.msra.mxu0 %v3344
      %3841 = vmatpush.bf16.msra.mxu0 %v3343
      %3842 = vmatmul.bf16.gmra.mxu0 %v3745
      %v3843 = vpop.f32.mrf.mxu0
      %v3844 = vadd.f32 %v3795, %v3843
      %v3845 = vpop.f32.mrf.mxu0
      %v3846 = vadd.f32 %v3797, %v3845
      %3847 = vmatmul.bf16.gmra.mxu0 %v3746
      %v3848 = vpop.f32.mrf.mxu0
      %v3849 = vadd.f32 %v3800, %v3848
      %v3850 = vpop.f32.mrf.mxu0
      %v3851 = vadd.f32 %v3802, %v3850
      %3852 = vmatmul.bf16.gmra.mxu0 %v3747
      %v3853 = vpop.f32.mrf.mxu0
      %v3854 = vadd.f32 %v3805, %v3853
      %v3855 = vpop.f32.mrf.mxu0
      %v3856 = vadd.f32 %v3807, %v3855
      %3857 = vmatmul.bf16.gmra.mxu0 %v3748
      %v3858 = vpop.f32.mrf.mxu0
      %v3859 = vadd.f32 %v3810, %v3858
      %v3860 = vpop.f32.mrf.mxu0
      %v3861 = vadd.f32 %v3812, %v3860
      %3862 = vmatmul.bf16.gmra.mxu0 %v3749
      %v3863 = vpop.f32.mrf.mxu0
      %v3864 = vadd.f32 %v3815, %v3863
      %v3865 = vpop.f32.mrf.mxu0
      %v3866 = vadd.f32 %v3817, %v3865
      %3867 = vmatmul.bf16.gmra.mxu0 %v3750
      %v3868 = vpop.f32.mrf.mxu0
      %v3869 = vadd.f32 %v3820, %v3868
      %v3870 = vpop.f32.mrf.mxu0
      %v3871 = vadd.f32 %v3822, %v3870
      %3872 = vmatmul.bf16.gmra.mxu0 %v3751
      %v3873 = vpop.f32.mrf.mxu0
      %v3874 = vadd.f32 %v3825, %v3873
      %v3875 = vpop.f32.mrf.mxu0
      %v3876 = vadd.f32 %v3827, %v3875
      %3877 = vmatmul.bf16.gmra.mxu0 %v3752
      %v3878 = vpop.f32.mrf.mxu0
      %v3879 = vadd.f32 %v3830, %v3878
      %v3880 = vpop.f32.mrf.mxu0
      %v3881 = vadd.f32 %v3832, %v3880
      %3882 = vdwg.mxu0
      %3883 = vmatpush.bf16.msra.mxu0 %v3358
      %3884 = vmatpush.bf16.msra.mxu0 %v3357
      %3885 = vmatpush.bf16.msra.mxu0 %v3356
      %3886 = vmatpush.bf16.msra.mxu0 %v3355
      %3887 = vmatpush.bf16.msra.mxu0 %v3354
      %3888 = vmatpush.bf16.msra.mxu0 %v3353
      %3889 = vmatpush.bf16.msra.mxu0 %v3352
      %3890 = vmatpush.bf16.msra.mxu0 %v3351
      %3891 = vmatmul.bf16.gmra.mxu0 %v3761
      %v3892 = vpop.f32.mrf.mxu0
      %v3893 = vadd.f32 %v3844, %v3892
      %v3894 = vpop.f32.mrf.mxu0
      %v3895 = vadd.f32 %v3846, %v3894
      %3896 = vmatmul.bf16.gmra.mxu0 %v3762
      %v3897 = vpop.f32.mrf.mxu0
      %v3898 = vadd.f32 %v3849, %v3897
      %v3899 = vpop.f32.mrf.mxu0
      %v3900 = vadd.f32 %v3851, %v3899
      %3901 = vmatmul.bf16.gmra.mxu0 %v3763
      %v3902 = vpop.f32.mrf.mxu0
      %v3903 = vadd.f32 %v3854, %v3902
      %v3904 = vpop.f32.mrf.mxu0
      %v3905 = vadd.f32 %v3856, %v3904
      %3906 = vmatmul.bf16.gmra.mxu0 %v3764
      %v3907 = vpop.f32.mrf.mxu0
      %v3908 = vadd.f32 %v3859, %v3907
      %v3909 = vpop.f32.mrf.mxu0
      %v3910 = vadd.f32 %v3861, %v3909
      %3911 = vmatmul.bf16.gmra.mxu0 %v3765
      %v3912 = vpop.f32.mrf.mxu0
      %v3913 = vadd.f32 %v3864, %v3912
      %v3914 = vpop.f32.mrf.mxu0
      %v3915 = vadd.f32 %v3866, %v3914
      %3916 = vmatmul.bf16.gmra.mxu0 %v3766
      %v3917 = vpop.f32.mrf.mxu0
      %v3918 = vadd.f32 %v3869, %v3917
      %v3919 = vpop.f32.mrf.mxu0
      %v3920 = vadd.f32 %v3871, %v3919
      %3921 = vmatmul.bf16.gmra.mxu0 %v3767
      %v3922 = vpop.f32.mrf.mxu0
      %v3923 = vadd.f32 %v3874, %v3922
      %v3924 = vpop.f32.mrf.mxu0
      %v3925 = vadd.f32 %v3876, %v3924
      %3926 = vmatmul.bf16.gmra.mxu0 %v3768
      %v3927 = vpop.f32.mrf.mxu0
      %v3928 = vadd.f32 %v3879, %v3927
      %v3929 = vpop.f32.mrf.mxu0
      %v3930 = vadd.f32 %v3881, %v3929
      %3931 = vdwg.mxu0
      %3932 = vmatpush.bf16.msra.mxu0 %v3366
      %3933 = vmatpush.bf16.msra.mxu0 %v3365
      %3934 = vmatpush.bf16.msra.mxu0 %v3364
      %3935 = vmatpush.bf16.msra.mxu0 %v3363
      %3936 = vmatpush.bf16.msra.mxu0 %v3362
      %3937 = vmatpush.bf16.msra.mxu0 %v3361
      %3938 = vmatpush.bf16.msra.mxu0 %v3360
      %3939 = vmatpush.bf16.msra.mxu0 %v3359
      %3940 = vmatmul.bf16.gmra.mxu0 %v3777
      %v3941 = vpop.f32.mrf.mxu0
      %v3942 = vadd.f32 %v3893, %v3941
      %v3943 = vpop.f32.mrf.mxu0
      %v3944 = vadd.f32 %v3895, %v3943
      %3945 = vmatmul.bf16.gmra.mxu0 %v3778
      %v3946 = vpop.f32.mrf.mxu0
      %v3947 = vadd.f32 %v3898, %v3946
      %v3948 = vpop.f32.mrf.mxu0
      %v3949 = vadd.f32 %v3900, %v3948
      %3950 = vmatmul.bf16.gmra.mxu0 %v3779
      %v3951 = vpop.f32.mrf.mxu0
      %v3952 = vadd.f32 %v3903, %v3951
      %v3953 = vpop.f32.mrf.mxu0
      %v3954 = vadd.f32 %v3905, %v3953
      %3955 = vmatmul.bf16.gmra.mxu0 %v3780
      %v3956 = vpop.f32.mrf.mxu0
      %v3957 = vadd.f32 %v3908, %v3956
      %v3958 = vpop.f32.mrf.mxu0
      %v3959 = vadd.f32 %v3910, %v3958
      %3960 = vmatmul.bf16.gmra.mxu0 %v3781
      %v3961 = vpop.f32.mrf.mxu0
      %v3962 = vadd.f32 %v3913, %v3961
      %v3963 = vpop.f32.mrf.mxu0
      %v3964 = vadd.f32 %v3915, %v3963
      %3965 = vmatmul.bf16.gmra.mxu0 %v3782
      %v3966 = vpop.f32.mrf.mxu0
      %v3967 = vadd.f32 %v3918, %v3966
      %v3968 = vpop.f32.mrf.mxu0
      %v3969 = vadd.f32 %v3920, %v3968
      %3970 = vmatmul.bf16.gmra.mxu0 %v3783
      %v3971 = vpop.f32.mrf.mxu0
      %v3972 = vadd.f32 %v3923, %v3971
      %v3973 = vpop.f32.mrf.mxu0
      %v3974 = vadd.f32 %v3925, %v3973
      %3975 = vmatmul.bf16.gmra.mxu0 %v3784
      %v3976 = vpop.f32.mrf.mxu0
      %v3977 = vadd.f32 %v3928, %v3976
      %v3978 = vpop.f32.mrf.mxu0
      %v3979 = vadd.f32 %v3930, %v3978
      %3980 = vdwg.mxu0
      %v3981 = vld [vmem:[%s9] sm:$0xff]
      %v3982 = vld [vmem:[%s9 + $0x8] sm:$0xff]
      %v3983 = vld [vmem:[%s9 + $0x10] sm:$0xff]
      %v3984 = vld [vmem:[%s9 + $0x18] sm:$0xff]
      %v3985 = vld [vmem:[%s9 + $0x20] sm:$0xff]
      %v3986 = vld [vmem:[%s9 + $0x28] sm:$0xff]
      %v3987 = vld [vmem:[%s9 + $0x30] sm:$0xff]
      %v3988 = vld [vmem:[%s9 + $0x38] sm:$0xff]
      %v3989 = vld [vmem:[%s9 + $0x40] sm:$0xff]
      %v3990 = vld [vmem:[%s9 + $0x48] sm:$0xff]
      %v3991 = vld [vmem:[%s9 + $0x50] sm:$0xff]
      %v3992 = vld [vmem:[%s9 + $0x58] sm:$0xff]
      %v3993 = vld [vmem:[%s9 + $0x60] sm:$0xff]
      %v3994 = vld [vmem:[%s9 + $0x68] sm:$0xff]
      %v3995 = vld [vmem:[%s9 + $0x70] sm:$0xff]
      %v3996 = vld [vmem:[%s9 + $0x78] sm:$0xff]
      %v3997 = vadd.f32 %v3981, %v3942
      %v3998 = vadd.f32 %v3982, %v3944
      %v3999 = vadd.f32 %v3983, %v3947
      %v4000 = vadd.f32 %v3984, %v3949
      %v4001 = vadd.f32 %v3985, %v3952
      %v4002 = vadd.f32 %v3986, %v3954
      %v4003 = vadd.f32 %v3987, %v3957
      %v4004 = vadd.f32 %v3988, %v3959
      %v4005 = vadd.f32 %v3989, %v3962
      %v4006 = vadd.f32 %v3990, %v3964
      %v4007 = vadd.f32 %v3991, %v3967
      %v4008 = vadd.f32 %v3992, %v3969
      %v4009 = vadd.f32 %v3993, %v3972
      %v4010 = vadd.f32 %v3994, %v3974
      %v4011 = vadd.f32 %v3995, %v3977
      %v4012 = vadd.f32 %v3996, %v3979
      %4013 = vst [vmem:[%s9] sm:$0xff] %v3997
      %4014 = vst [vmem:[%s9 + $0x8] sm:$0xff] %v3998
      %4015 = vst [vmem:[%s9 + $0x10] sm:$0xff] %v3999
      %4016 = vst [vmem:[%s9 + $0x18] sm:$0xff] %v4000
      %4017 = vst [vmem:[%s9 + $0x20] sm:$0xff] %v4001
      %4018 = vst [vmem:[%s9 + $0x28] sm:$0xff] %v4002
      %4019 = vst [vmem:[%s9 + $0x30] sm:$0xff] %v4003
      %4020 = vst [vmem:[%s9 + $0x38] sm:$0xff] %v4004
      %4021 = vst [vmem:[%s9 + $0x40] sm:$0xff] %v4005
      %4022 = vst [vmem:[%s9 + $0x48] sm:$0xff] %v4006
      %4023 = vst [vmem:[%s9 + $0x50] sm:$0xff] %v4007
      %4024 = vst [vmem:[%s9 + $0x58] sm:$0xff] %v4008
      %4025 = vst [vmem:[%s9 + $0x60] sm:$0xff] %v4009
      %4026 = vst [vmem:[%s9 + $0x68] sm:$0xff] %v4010
      %4027 = vst [vmem:[%s9 + $0x70] sm:$0xff] %v4011
      %4028 = vst [vmem:[%s9 + $0x78] sm:$0xff] %v4012
      // Predicated region
      $region61: #{gnn_layer_forward.4} parent=55 // pred_check
        %p4029 = pneg %p237
      $region62: #{gnn_layer_forward.4} parent=55 // pred_check_branch
        %4031 = sbr.rel (%p4029) target = $region64
      $region63: #{gnn_layer_forward.4} parent=55 // pred_region
        _
      $region64: #{gnn_layer_forward.4} parent=55 // pred_fallthru
        _
      // Predicated region
      $region65: #{gnn_layer_forward.4} parent=55 // pred_check
        %p4032 = pneg %p237
      $region66: #{gnn_layer_forward.4} parent=55 // pred_check_branch
        %4034 = sbr.rel (%p4032) target = $region68
      $region67: #{gnn_layer_forward.4} parent=55 // pred_region
        _
      $region68: #{gnn_layer_forward.4} parent=55 // pred_fallthru
        _
    $region56: #{gnn_layer_forward.4} parent=5 // pred_fallthru
      _
    %p4035 = scmp.le.s32.totalorder 2, %s15
    // Predicated region
    $region69: #{gnn_layer_forward.4} parent=5 // pred_check
      %p4036 = pneg %p4035
    $region70: #{gnn_layer_forward.4} parent=5 // pred_check_branch
      %4038 = sbr.rel (%p4036) target = $region72
    $region71: #{gnn_layer_forward.4} parent=5 // pred_region
      %s4039 = ssub.s32 %s15, 2
    $region72: #{gnn_layer_forward.4} parent=5 // pred_fallthru
      _
  $region6: #{gnn_layer_forward.4} parent=0 // loop_footer
    %s19 = sadd.s32 1, %s15
  $region7: #{gnn_layer_forward.4} parent=0 // loop_footer_branch
    %14 = sbr.rel target = $region3
  $region8: #{gnn_layer_forward.4} parent=0 // loop_exit
    _

</llo_original>
